<compile_context>
chip_gen: v7x
topology: tpu7x:2x2x1
jax: 0.10.0
libtpu: 0.0.40
codegen_flags: <defaults>
</compile_context>

<pallas_src>
import math
import functools

import jax
import jax.numpy as jnp
from jax.experimental import pallas as pl
from jax.experimental.pallas import tpu as pltpu

BN_EPS = 1e-5                    # bn_eps in the reference module
LANE = 128                       # TPU lane width
NODE_ALIGN = 256                 # node padding granularity == conv M tile
GC_NODE_TILE = 256               # graph-conv M tile (256-wide MXU on v6e/v7x)
BN_NODE_TILE = 512               # preferred tile for mem-bound BN passes
MATMUL_DTYPE = jnp.bfloat16      # MXU input dtype (f32 accumulate)
GC_VMEM_LIMIT = 48 * 1024 * 1024     # fits v7x's 64 MiB physical VMEM
BN_VMEM_LIMIT = 32 * 1024 * 1024


def _round_up(x, m):
    return ((x + m - 1) // m) * m


def _bn_tile(n_pad):
    for t in (1024, BN_NODE_TILE, NODE_ALIGN):
        if n_pad % t == 0:
            return t
    return n_pad


# --------------------------- BN statistics kernel ----------------------------
def _make_bn_stats_kernel(n_real):
    def kernel(x_ref, mean_ref, var_ref, sum_sc, sq_sc):
        i = pl.program_id(0)

        @pl.when(i == 0)
        def _():
            sum_sc[...] = jnp.zeros_like(sum_sc)
            sq_sc[...] = jnp.zeros_like(sq_sc)

        x = x_ref[...].astype(jnp.float32)
        sum_sc[...] += jnp.sum(x, axis=0, keepdims=True)
        sq_sc[...] += jnp.sum(x * x, axis=0, keepdims=True)

        @pl.when(i == pl.num_programs(0) - 1)
        def _():
            inv_n = 1.0 / float(n_real)
            m = sum_sc[...] * inv_n
            mean_ref[...] = m
            var_ref[...] = jnp.maximum(sq_sc[...] * inv_n - m * m, 0.0)
    return kernel


def bn_stats(x, n_real, *, node_tile):
    n_pad, c = x.shape
    grid = (n_pad // node_tile,)
    return pl.pallas_call(
        _make_bn_stats_kernel(n_real),
        out_shape=(jax.ShapeDtypeStruct((1, c), jnp.float32),
                   jax.ShapeDtypeStruct((1, c), jnp.float32)),
        grid_spec=pltpu.PrefetchScalarGridSpec(
            num_scalar_prefetch=0,
            grid=grid,
            in_specs=[pl.BlockSpec((node_tile, c), lambda i: (i, 0))],
            out_specs=(pl.BlockSpec((1, c), lambda i: (0, 0)),
                       pl.BlockSpec((1, c), lambda i: (0, 0))),
            scratch_shapes=[pltpu.VMEM((1, c), jnp.float32),
                            pltpu.VMEM((1, c), jnp.float32)],
        ),
        compiler_params=pltpu.CompilerParams(
            dimension_semantics=("arbitrary",),     # sequential stats accumulation
            vmem_limit_bytes=BN_VMEM_LIMIT),
    )(x)


# ----------------------- BN apply (+SiLU / +residual) ------------------------
def _make_bn_apply_kernel(apply_silu, add_residual):
    def body(x_ref, mean_ref, var_ref, g_ref, b_ref):
        x = x_ref[...].astype(jnp.float32)
        scale = g_ref[...] * jax.lax.rsqrt(var_ref[...] + BN_EPS)
        shift = b_ref[...] - mean_ref[...] * scale
        y = x * scale + shift
        if apply_silu:
            y = y * (1.0 / (1.0 + jnp.exp(-y)))      # x * sigmoid(x)
        return y

    if add_residual:
        def kernel(x_ref, mean_ref, var_ref, g_ref, b_ref, res_ref, o_ref):
            y = body(x_ref, mean_ref, var_ref, g_ref, b_ref)
            o_ref[...] = (y + res_ref[...].astype(jnp.float32)).astype(o_ref.dtype)
    else:
        def kernel(x_ref, mean_ref, var_ref, g_ref, b_ref, o_ref):
            o_ref[...] = body(x_ref, mean_ref, var_ref, g_ref, b_ref).astype(o_ref.dtype)
    return kernel


def bn_apply(x, mean, var, gamma, beta, *, silu, residual=None,
             out_dtype=jnp.float32, node_tile=BN_NODE_TILE):
    n_pad, c = x.shape
    grid = (n_pad // node_tile,)
    row_spec = pl.BlockSpec((node_tile, c), lambda i: (i, 0))
    vec_spec = pl.BlockSpec((1, c), lambda i: (0, 0))          # VMEM-resident
    in_specs = [row_spec, vec_spec, vec_spec, vec_spec, vec_spec]
    args = [x, mean, var, gamma, beta]
    if residual is not None:
        in_specs.append(row_spec)
        args.append(residual)
    return pl.pallas_call(
        _make_bn_apply_kernel(silu, residual is not None),
        out_shape=jax.ShapeDtypeStruct((n_pad, c), out_dtype),
        grid_spec=pltpu.PrefetchScalarGridSpec(
            num_scalar_prefetch=0,
            grid=grid,
            in_specs=in_specs,
            out_specs=pl.BlockSpec((node_tile, c), lambda i: (i, 0)),
        ),
        compiler_params=pltpu.CompilerParams(
            dimension_semantics=("parallel",),       # memory-bound apply pass
            vmem_limit_bytes=BN_VMEM_LIMIT),
    )(*args)


# --------------- skip projection (x @ Wskip) + fused BN stats of x ------------
def _make_skip_stats_kernel(n_real):
    def kernel(x_ref, w_ref, xs_ref, mx_ref, vx_ref, ms_ref, vs_ref,
               sumx, sqx, sums, sqs):
        i = pl.program_id(0)

        @pl.when(i == 0)
        def _():
            sumx[...] = jnp.zeros_like(sumx)
            sqx[...] = jnp.zeros_like(sqx)
            sums[...] = jnp.zeros_like(sums)
            sqs[...] = jnp.zeros_like(sqs)

        x = x_ref[...].astype(jnp.float32)
        sumx[...] += jnp.sum(x, axis=0, keepdims=True)
        sqx[...] += jnp.sum(x * x, axis=0, keepdims=True)

        xs = jnp.dot(x.astype(MATMUL_DTYPE), w_ref[...],
                     preferred_element_type=jnp.float32)
        xs_ref[...] = xs.astype(xs_ref.dtype)
        sums[...] += jnp.sum(xs, axis=0, keepdims=True)
        sqs[...] += jnp.sum(xs * xs, axis=0, keepdims=True)

        @pl.when(i == pl.num_programs(0) - 1)
        def _():
            inv_n = 1.0 / float(n_real)
            mx = sumx[...] * inv_n
            mx_ref[...] = mx
            vx_ref[...] = jnp.maximum(sqx[...] * inv_n - mx * mx, 0.0)
            ms = sums[...] * inv_n
            ms_ref[...] = ms
            vs_ref[...] = jnp.maximum(sqs[...] * inv_n - ms * ms, 0.0)
    return kernel


def skip_proj_with_stats(x, w, n_real, *, node_tile):
    n_pad, c_in = x.shape
    c_out = w.shape[1]
    grid = (n_pad // node_tile,)
    stat_in = pl.BlockSpec((1, c_in), lambda i: (0, 0))
    stat_out = pl.BlockSpec((1, c_out), lambda i: (0, 0))
    return pl.pallas_call(
        _make_skip_stats_kernel(n_real),
        out_shape=(jax.ShapeDtypeStruct((n_pad, c_out), MATMUL_DTYPE),
                   jax.ShapeDtypeStruct((1, c_in), jnp.float32),
                   jax.ShapeDtypeStruct((1, c_in), jnp.float32),
                   jax.ShapeDtypeStruct((1, c_out), jnp.float32),
                   jax.ShapeDtypeStruct((1, c_out), jnp.float32)),
        grid_spec=pltpu.PrefetchScalarGridSpec(
            num_scalar_prefetch=0,
            grid=grid,
            in_specs=[pl.BlockSpec((node_tile, c_in), lambda i: (i, 0)),
                      pl.BlockSpec((c_in, c_out), lambda i: (0, 0))],   # resident
            out_specs=(pl.BlockSpec((node_tile, c_out), lambda i: (i, 0)),
                       stat_in, stat_in, stat_out, stat_out),
            scratch_shapes=[pltpu.VMEM((1, c_in), jnp.float32),
                            pltpu.VMEM((1, c_in), jnp.float32),
                            pltpu.VMEM((1, c_out), jnp.float32),
                            pltpu.VMEM((1, c_out), jnp.float32)],
        ),
        compiler_params=pltpu.CompilerParams(
            dimension_semantics=("arbitrary",),      # sequential stats accumulation
            vmem_limit_bytes=GC_VMEM_LIMIT),
    )(x, w)


# ------------------------- Graph convolution kernel --------------------------
def _make_graph_conv_kernel(n_edge_type, c_in_pad):
    def kernel(s_ref, invc_ref, h_ref, w_ref, y_ref, slab_ref):
        h = h_ref[...]
        # Per-type aggregation, scaled by exact f32 1/count, concatenated along
        # K into a bf16 slab -> one K = T*C_in_pad matmul against the weights.
        for t in range(n_edge_type):                       # static unroll (T small)
            agg = jnp.dot(s_ref[t], h, preferred_element_type=jnp.float32)
            agg = agg * invc_ref[t]                        # [tile,1] row scale
            slab_ref[:, t * c_in_pad:(t + 1) * c_in_pad] = agg.astype(slab_ref.dtype)
        y = jnp.dot(slab_ref[...], w_ref[...], preferred_element_type=jnp.float32)
        y_ref[...] = y.astype(y_ref.dtype)
    return kernel


def graph_conv(s, invc, h, w, *, out_dtype=jnp.float32, node_tile=GC_NODE_TILE):
    # s:    [T, N_pad, N_pad]  bf16 exact edge-count indicator
    # invc: [T, N_pad, 1]      f32  1/count per (row, type)
    # h:    [N_pad, C_in_pad]  bf16 (resident)
    # w:    [T*C_in_pad, C_out_pad] bf16 (resident, native (T*Ci, Co) layout)
    t, n_pad, _ = s.shape
    c_in = h.shape[1]
    c_out = w.shape[1]
    grid = (n_pad // node_tile,)
    flops = 2 * t * n_pad * (n_pad * c_in + c_in * c_out)
    bytes_accessed = (int(s.size) * s.dtype.itemsize
                      + int(invc.size) * 4
                      + int(h.size) * h.dtype.itemsize
                      + int(w.size) * w.dtype.itemsize
                      + n_pad * c_out * jnp.dtype(out_dtype).itemsize)

    return pl.pallas_call(
        _make_graph_conv_kernel(t, c_in),
        out_shape=jax.ShapeDtypeStruct((n_pad, c_out), out_dtype),
        grid_spec=pltpu.PrefetchScalarGridSpec(
            num_scalar_prefetch=0,
            grid=grid,
            in_specs=[
                pl.BlockSpec((t, node_tile, n_pad), lambda i: (0, i, 0)),
                pl.BlockSpec((t, node_tile, 1), lambda i: (0, i, 0)),
                pl.BlockSpec((n_pad, c_in), lambda i: (0, 0)),          # resident
                pl.BlockSpec((t * c_in, c_out), lambda i: (0, 0)),      # resident
            ],
            out_specs=pl.BlockSpec((node_tile, c_out), lambda i: (i, 0)),
            scratch_shapes=[pltpu.VMEM((node_tile, t * c_in), MATMUL_DTYPE)],
        ),
        compiler_params=pltpu.CompilerParams(
            dimension_semantics=("parallel",),       # independent node tiles (v7x 2-TC)
            vmem_limit_bytes=GC_VMEM_LIMIT),
        cost_estimate=pl.CostEstimate(flops=flops, transcendentals=0,
                                      bytes_accessed=bytes_accessed),
    )(s, invc, h, w)


# -------------------- aggregation operator (no scatter) ----------------------
def build_aggregation_matrix(edge_index, edge_type, n_pad, n_edge_type):
    # S[t, n, m] = #edges with row=n, type=t, col=m (small exact integers, bf16),
    # invc[t, n] = 1 / max(#edges with row=n, type=t, 1)  (f32, applied in-kernel).
    # scatter_mean(x[col]) == invc * (S @ x).  Built with one-hot matmuls (MXU),
    # no serialized XLA scatter.
    row = edge_index[0].astype(jnp.int32)
    col = edge_index[1].astype(jnp.int32)
    idx = row * n_edge_type + edge_type.astype(jnp.int32)                 # [E]
    onehot_rt = (idx[:, None] ==
                 jnp.arange(n_pad * n_edge_type, dtype=jnp.int32)[None, :]
                 ).astype(MATMUL_DTYPE)                                   # [E, N*T]
    onehot_col = (col[:, None] ==
                  jnp.arange(n_pad, dtype=jnp.int32)[None, :]
                  ).astype(MATMUL_DTYPE)                                  # [E, N]
    cnt = jnp.dot(onehot_rt.T, onehot_col,
                  preferred_element_type=jnp.float32)                     # [N*T, N]
    total = jnp.sum(cnt, axis=1)                                          # [N*T]
    inv = 1.0 / jnp.maximum(total, 1.0)                                   # f32, exact scale
    s = cnt.reshape(n_pad, n_edge_type, n_pad).transpose(1, 0, 2)         # [T,N,N]
    invc = inv.reshape(n_pad, n_edge_type).transpose(1, 0)[:, :, None]    # [T,N,1]
    # TODO(synk): at production scale build S per node-tile (scalar-prefetch /
    # segment-sum) instead of the O(E*N*T) dense one-hot operator.
    return s.astype(MATMUL_DTYPE), invc.astype(jnp.float32)


# --------------------------- GraphResBlock forward ---------------------------
def graph_res_block_forward(x, edge_index, edge_type,
                            gamma1, beta1, w1, gamma2, beta2, w2,
                            wskip, gamma_skip, beta_skip,
                            n_edge_type=5):
    n_real, c_in = x.shape
    c_out = w1.shape[1]
    n_pad = _round_up(n_real, NODE_ALIGN)
    c_in_pad = _round_up(c_in, LANE)
    c_out_pad = _round_up(c_out, LANE)
    gc_tile = min(GC_NODE_TILE, n_pad)
    bn_tile = _bn_tile(n_pad)

    # Zero-pad nodes and channels to lane-dense multiples of 128.
    x_p = jnp.pad(x.astype(jnp.float32),
                  ((0, n_pad - n_real), (0, c_in_pad - c_in)))

    def pad_vec(v, c_pad):
        v2 = v.reshape(1, -1).astype(jnp.float32)
        return jnp.pad(v2, ((0, 0), (0, c_pad - v2.shape[1])))

    def pad_gc_weight(w, ci, ci_pad, co, co_pad):
        w3 = w.astype(jnp.float32).reshape(n_edge_type, ci, co)
        w3 = jnp.pad(w3, ((0, 0), (0, ci_pad - ci), (0, co_pad - co)))
        return w3.reshape(n_edge_type * ci_pad, co_pad).astype(MATMUL_DTYPE)

    g1, b1 = pad_vec(gamma1, c_in_pad), pad_vec(beta1, c_in_pad)
    g2, b2 = pad_vec(gamma2, c_out_pad), pad_vec(beta2, c_out_pad)
    w1_p = pad_gc_weight(w1, c_in, c_in_pad, c_out, c_out_pad)
    w2_p = pad_gc_weight(w2, c_out, c_out_pad, c_out, c_out_pad)

    s, invc = build_aggregation_matrix(edge_index, edge_type, n_pad, n_edge_type)

    # --- skip projection fused with norm1 batch statistics (single pass over x)
    if c_in != c_out:
        ws_p = jnp.pad(wskip.astype(jnp.float32),
                       ((0, c_in_pad - c_in), (0, c_out_pad - c_out))
                       ).astype(MATMUL_DTYPE)
        gs, bs = pad_vec(gamma_skip, c_out_pad), pad_vec(beta_skip, c_out_pad)
        xs, mean1, var1, mean_s, var_s = skip_proj_with_stats(
            x_p, ws_p, n_real, node_tile=bn_tile)
    else:
        mean1, var1 = bn_stats(x_p, n_real, node_tile=bn_tile)

    # --- norm1 -> SiLU -> conv1 ---
    h1 = bn_apply(x_p, mean1, var1, g1, b1, silu=True,
                  out_dtype=MATMUL_DTYPE, node_tile=bn_tile)
    y1 = graph_conv(s, invc, h1, w1_p, out_dtype=MATMUL_DTYPE, node_tile=gc_tile)
    # TODO(synk): temb_proj path not implemented (temb is None here).

    # --- norm2 -> SiLU -> dropout -> conv2 ---
    mean2, var2 = bn_stats(y1, n_real, node_tile=bn_tile)
    h2 = bn_apply(y1, mean2, var2, g2, b2, silu=True,
                  out_dtype=MATMUL_DTYPE, node_tile=bn_tile)
    # TODO(synk): dropout treated as identity (p=0); nonzero p needs pltpu PRNG.
    y2 = graph_conv(s, invc, h2, w2_p, out_dtype=jnp.float32, node_tile=gc_tile)

    # --- Conv1x1Bn shortcut + residual add ---
    if c_in != c_out:
        out = bn_apply(xs, mean_s, var_s, gs, bs, silu=False, residual=y2,
                       out_dtype=jnp.float32, node_tile=bn_tile)
    else:
        out = y2 + x_p

    return out[:n_real, :c_out]


# ------------------------------ pure-JAX reference ----------------------------
def reference_forward(x, edge_index, edge_type,
                      gamma1, beta1, w1, gamma2, beta2, w2,
                      wskip, gamma_skip, beta_skip, n_edge_type=5):
    def bn(v, g, b):
        m = jnp.mean(v, axis=0, keepdims=True)
        var = jnp.mean(jnp.square(v - m), axis=0, keepdims=True)
        return (v - m) * jax.lax.rsqrt(var + BN_EPS) * g.reshape(1, -1) + b.reshape(1, -1)

    def silu(v):
        return v * jax.nn.sigmoid(v)

    def gconv(v, w):
        n = v.shape[0]
        row, col = edge_index[0], edge_index[1]
        idx = row * n_edge_type + edge_type
        sums = jnp.zeros((n * n_edge_type, v.shape[1]), v.dtype).at[idx].add(v[col])
        cnt = jnp.zeros((n * n_edge_type,), v.dtype).at[idx].add(1.0)
        col_data = sums / jnp.maximum(cnt, 1.0)[:, None]
        return col_data.reshape(n, -1) @ w

    h = gconv(silu(bn(x, gamma1, beta1)), w1)
    h = gconv(silu(bn(h, gamma2, beta2)), w2)
    xs = bn(x @ wskip, gamma_skip, beta_skip)
    return h + xs


# ----------------------------------- driver -----------------------------------
if __name__ == "__main__":
    N, C_in, C_out, T, avg_degree, E = 256, 32, 64, 5, 5, 1024

    key = jax.random.PRNGKey(0)
    kx, ke, kt, kw1, kw2, kws = jax.random.split(key, 6)

    x = jax.random.normal(kx, (N, C_in), dtype=jnp.float32)
    edge_index = jax.random.randint(ke, (2, E), 0, N, dtype=jnp.int32)
    edge_type = jax.random.randint(kt, (E,), 0, T, dtype=jnp.int32)

    def graphconv_init(k, ci, co):
        fan_in, fan_out = avg_degree * ci, avg_degree * co
        a = math.sqrt(3.0) * math.sqrt(2.0 / float(fan_in + fan_out))
        return jax.random.uniform(k, (T * ci, co), minval=-a, maxval=a,
                                  dtype=jnp.float32)

    w1 = graphconv_init(kw1, C_in, C_out)
    w2 = graphconv_init(kw2, C_out, C_out)
    lim = 1.0 / math.sqrt(C_in)
    wskip = jax.random.uniform(kws, (C_in, C_out), minval=-lim, maxval=lim,
                               dtype=jnp.float32)

    gamma1, beta1 = jnp.ones((C_in,), jnp.float32), jnp.zeros((C_in,), jnp.float32)
    gamma2, beta2 = jnp.ones((C_out,), jnp.float32), jnp.zeros((C_out,), jnp.float32)
    gamma_s, beta_s = jnp.ones((C_out,), jnp.float32), jnp.zeros((C_out,), jnp.float32)

    fwd = jax.jit(functools.partial(graph_res_block_forward, n_edge_type=T))
    out = fwd(x, edge_index, edge_type, gamma1, beta1, w1, gamma2, beta2, w2,
              wskip, gamma_s, beta_s)
    out = jax.block_until_ready(out)

    ref = reference_forward(x, edge_index, edge_type, gamma1, beta1, w1,
                            gamma2, beta2, w2, wskip, gamma_s, beta_s,
                            n_edge_type=T)

    assert out.shape == (N, C_out)
    diff = jnp.abs(out - ref)
    tol = 5e-2 + 5e-2 * jnp.abs(ref)     # bf16 MXU inputs, f32 accumulate
    assert bool(jnp.all(diff <= tol)), f"max abs err {float(jnp.max(diff))}"
    print("KERNEL_OK")
</pallas_src>

<mosaic_0001>
module attributes {stable_mosaic.version = 11 : i64} {
  func.func @kernel(%arg0: i32, %arg1: memref<256x128xf32, #tpu.memory_space<vmem>>, %arg2: memref<128x128xbf16, #tpu.memory_space<vmem>>, %arg3: memref<256x128xbf16, #tpu.memory_space<vmem>>, %arg4: memref<1x128xf32, #tpu.memory_space<vmem>>, %arg5: memref<1x128xf32, #tpu.memory_space<vmem>>, %arg6: memref<1x128xf32, #tpu.memory_space<vmem>>, %arg7: memref<1x128xf32, #tpu.memory_space<vmem>>, %arg8: memref<1x128xf32, #tpu.memory_space<vmem>>, %arg9: memref<1x128xf32, #tpu.memory_space<vmem>>, %arg10: memref<1x128xf32, #tpu.memory_space<vmem>>, %arg11: memref<1x128xf32, #tpu.memory_space<vmem>>) attributes {dimension_semantics = [#tpu.dimension_semantics<arbitrary>], iteration_bounds = array<i64: 1>, scalar_prefetch = 0 : i64, scratch_operands = 4 : i64, tpu.core_type = #tpu.core_type<tc>, window_params = [{transform_indices = @transform_0, window_bounds = array<i64: 256, 128>}, {pipeline_mode = #tpu.pipeline_mode<synchronous>, transform_indices = @transform_1, window_bounds = array<i64: 128, 128>}, {transform_indices = @transform_2, window_bounds = array<i64: 256, 128>}, {pipeline_mode = #tpu.pipeline_mode<synchronous>, transform_indices = @transform_3, window_bounds = array<i64: 1, 128>}, {pipeline_mode = #tpu.pipeline_mode<synchronous>, transform_indices = @transform_4, window_bounds = array<i64: 1, 128>}, {pipeline_mode = #tpu.pipeline_mode<synchronous>, transform_indices = @transform_5, window_bounds = array<i64: 1, 128>}, {pipeline_mode = #tpu.pipeline_mode<synchronous>, transform_indices = @transform_6, window_bounds = array<i64: 1, 128>}]} {
    %c0_i32 = arith.constant 0 : i32
    %0 = arith.cmpi eq, %arg0, %c0_i32 : i32
    %1 = arith.extui %0 : i1 to i32
    %c0_i32_0 = arith.constant 0 : i32
    %2 = arith.cmpi ne, %1, %c0_i32_0 : i32
    scf.if %2 {
      %cst_28 = arith.constant 0.000000e+00 : f32
      %34 = vector.broadcast %cst_28 : f32 to vector<1x128xf32>
      %c0_29 = arith.constant 0 : index
      %c0_30 = arith.constant 0 : index
      %35 = vector.load %arg8[%c0_29, %c0_30] : memref<1x128xf32, #tpu.memory_space<vmem>>, vector<1x128xf32>
      tpu.vector_store %arg8[%c0_29, %c0_30], %34 {strides = array<i32>} : memref<1x128xf32, #tpu.memory_space<vmem>>, vector<1x128xf32>,
      %cst_31 = arith.constant 0.000000e+00 : f32
      %36 = vector.broadcast %cst_31 : f32 to vector<1x128xf32>
      %c0_32 = arith.constant 0 : index
      %c0_33 = arith.constant 0 : index
      %37 = vector.load %arg9[%c0_32, %c0_33] : memref<1x128xf32, #tpu.memory_space<vmem>>, vector<1x128xf32>
      tpu.vector_store %arg9[%c0_32, %c0_33], %36 {strides = array<i32>} : memref<1x128xf32, #tpu.memory_space<vmem>>, vector<1x128xf32>,
      %cst_34 = arith.constant 0.000000e+00 : f32
      %38 = vector.broadcast %cst_34 : f32 to vector<1x128xf32>
      %c0_35 = arith.constant 0 : index
      %c0_36 = arith.constant 0 : index
      %39 = vector.load %arg10[%c0_35, %c0_36] : memref<1x128xf32, #tpu.memory_space<vmem>>, vector<1x128xf32>
      tpu.vector_store %arg10[%c0_35, %c0_36], %38 {strides = array<i32>} : memref<1x128xf32, #tpu.memory_space<vmem>>, vector<1x128xf32>,
      %cst_37 = arith.constant 0.000000e+00 : f32
      %40 = vector.broadcast %cst_37 : f32 to vector<1x128xf32>
      %c0_38 = arith.constant 0 : index
      %c0_39 = arith.constant 0 : index
      %41 = vector.load %arg11[%c0_38, %c0_39] : memref<1x128xf32, #tpu.memory_space<vmem>>, vector<1x128xf32>
      tpu.vector_store %arg11[%c0_38, %c0_39], %40 {strides = array<i32>} : memref<1x128xf32, #tpu.memory_space<vmem>>, vector<1x128xf32>,
    } else {
    }
    %c0 = arith.constant 0 : index
    %c0_1 = arith.constant 0 : index
    %3 = vector.load %arg1[%c0, %c0_1] : memref<256x128xf32, #tpu.memory_space<vmem>>, vector<256x128xf32>
    %c0_2 = arith.constant 0 : index
    %c0_3 = arith.constant 0 : index
    %4 = vector.load %arg8[%c0_2, %c0_3] : memref<1x128xf32, #tpu.memory_space<vmem>>, vector<1x128xf32>
    %cst = arith.constant dense<0.000000e+00> : vector<128xf32>
    %5 = vector.multi_reduction <add>, %3, %cst [0] : vector<256x128xf32> to vector<128xf32>
    %6 = vector.shape_cast %5 : vector<128xf32> to vector<1x128xf32>
    %7 = arith.addf %4, %6 : vector<1x128xf32>
    %c0_4 = arith.constant 0 : index
    %c0_5 = arith.constant 0 : index
    %8 = vector.load %arg8[%c0_4, %c0_5] : memref<1x128xf32, #tpu.memory_space<vmem>>, vector<1x128xf32>
    tpu.vector_store %arg8[%c0_4, %c0_5], %7 {strides = array<i32>} : memref<1x128xf32, #tpu.memory_space<vmem>>, vector<1x128xf32>,
    %c0_6 = arith.constant 0 : index
    %c0_7 = arith.constant 0 : index
    %9 = vector.load %arg9[%c0_6, %c0_7] : memref<1x128xf32, #tpu.memory_space<vmem>>, vector<1x128xf32>
    %10 = arith.mulf %3, %3 : vector<256x128xf32>
    %cst_8 = arith.constant dense<0.000000e+00> : vector<128xf32>
    %11 = vector.multi_reduction <add>, %10, %cst_8 [0] : vector<256x128xf32> to vector<128xf32>
    %12 = vector.shape_cast %11 : vector<128xf32> to vector<1x128xf32>
    %13 = arith.addf %9, %12 : vector<1x128xf32>
    %c0_9 = arith.constant 0 : index
    %c0_10 = arith.constant 0 : index
    %14 = vector.load %arg9[%c0_9, %c0_10] : memref<1x128xf32, #tpu.memory_space<vmem>>, vector<1x128xf32>
    tpu.vector_store %arg9[%c0_9, %c0_10], %13 {strides = array<i32>} : memref<1x128xf32, #tpu.memory_space<vmem>>, vector<1x128xf32>,
    %15 = arith.truncf %3 : vector<256x128xf32> to vector<256x128xbf16>
    %c0_11 = arith.constant 0 : index
    %c0_12 = arith.constant 0 : index
    %16 = vector.load %arg2[%c0_11, %c0_12] : memref<128x128xbf16, #tpu.memory_space<vmem>>, vector<128x128xbf16>
    %cst_13 = arith.constant dense<0.000000e+00> : vector<256x128xf32>
    %17 = tpu.matmul %15, %16, %cst_13 {dimension_numbers = #tpu.dot_dimension_numbers<[1], [0], [0], [1], [0, 0, 1, 1], [], []>} : vector<256x128xbf16>, vector<128x128xbf16>, vector<256x128xf32> -> vector<256x128xf32>
    %18 = arith.truncf %17 : vector<256x128xf32> to vector<256x128xbf16>
    %c0_14 = arith.constant 0 : index
    %c0_15 = arith.constant 0 : index
    %19 = vector.load %arg3[%c0_14, %c0_15] : memref<256x128xbf16, #tpu.memory_space<vmem>>, vector<256x128xbf16>
    tpu.vector_store %arg3[%c0_14, %c0_15], %18 {strides = array<i32>} : memref<256x128xbf16, #tpu.memory_space<vmem>>, vector<256x128xbf16>,
    %c0_16 = arith.constant 0 : index
    %c0_17 = arith.constant 0 : index
    %20 = vector.load %arg10[%c0_16, %c0_17] : memref<1x128xf32, #tpu.memory_space<vmem>>, vector<1x128xf32>
    %cst_18 = arith.constant dense<0.000000e+00> : vector<128xf32>
    %21 = vector.multi_reduction <add>, %17, %cst_18 [0] : vector<256x128xf32> to vector<128xf32>
    %22 = vector.shape_cast %21 : vector<128xf32> to vector<1x128xf32>
    %23 = arith.addf %20, %22 : vector<1x128xf32>
    %c0_19 = arith.constant 0 : index
    %c0_20 = arith.constant 0 : index
    %24 = vector.load %arg10[%c0_19, %c0_20] : memref<1x128xf32, #tpu.memory_space<vmem>>, vector<1x128xf32>
    tpu.vector_store %arg10[%c0_19, %c0_20], %23 {strides = array<i32>} : memref<1x128xf32, #tpu.memory_space<vmem>>, vector<1x128xf32>,
    %c0_21 = arith.constant 0 : index
    %c0_22 = arith.constant 0 : index
    %25 = vector.load %arg11[%c0_21, %c0_22] : memref<1x128xf32, #tpu.memory_space<vmem>>, vector<1x128xf32>
    %26 = arith.mulf %17, %17 : vector<256x128xf32>
    %cst_23 = arith.constant dense<0.000000e+00> : vector<128xf32>
    %27 = vector.multi_reduction <add>, %26, %cst_23 [0] : vector<256x128xf32> to vector<128xf32>
    %28 = vector.shape_cast %27 : vector<128xf32> to vector<1x128xf32>
    %29 = arith.addf %25, %28 : vector<1x128xf32>
    %c0_24 = arith.constant 0 : index
    %c0_25 = arith.constant 0 : index
    %30 = vector.load %arg11[%c0_24, %c0_25] : memref<1x128xf32, #tpu.memory_space<vmem>>, vector<1x128xf32>
    tpu.vector_store %arg11[%c0_24, %c0_25], %29 {strides = array<i32>} : memref<1x128xf32, #tpu.memory_space<vmem>>, vector<1x128xf32>,
    %c0_i32_26 = arith.constant 0 : i32
    %31 = arith.cmpi eq, %arg0, %c0_i32_26 : i32
    %32 = arith.extui %31 : i1 to i32
    %c0_i32_27 = arith.constant 0 : i32
    %33 = arith.cmpi ne, %32, %c0_i32_27 : i32
    scf.if %33 {
      %c0_28 = arith.constant 0 : index
      %c0_29 = arith.constant 0 : index
      %34 = vector.load %arg8[%c0_28, %c0_29] : memref<1x128xf32, #tpu.memory_space<vmem>>, vector<1x128xf32>
      %cst_30 = arith.constant 3.906250e-03 : f32
      %35 = vector.broadcast %cst_30 : f32 to vector<1x128xf32>
      %36 = arith.mulf %34, %35 : vector<1x128xf32>
      %c0_31 = arith.constant 0 : index
      %c0_32 = arith.constant 0 : index
      %37 = vector.load %arg4[%c0_31, %c0_32] : memref<1x128xf32, #tpu.memory_space<vmem>>, vector<1x128xf32>
      tpu.vector_store %arg4[%c0_31, %c0_32], %36 {strides = array<i32>} : memref<1x128xf32, #tpu.memory_space<vmem>>, vector<1x128xf32>,
      %c0_33 = arith.constant 0 : index
      %c0_34 = arith.constant 0 : index
      %38 = vector.load %arg9[%c0_33, %c0_34] : memref<1x128xf32, #tpu.memory_space<vmem>>, vector<1x128xf32>
      %cst_35 = arith.constant 3.906250e-03 : f32
      %39 = vector.broadcast %cst_35 : f32 to vector<1x128xf32>
      %40 = arith.mulf %38, %39 : vector<1x128xf32>
      %41 = arith.mulf %36, %36 : vector<1x128xf32>
      %42 = arith.subf %40, %41 : vector<1x128xf32>
      %cst_36 = arith.constant 0.000000e+00 : f32
      %43 = vector.broadcast %cst_36 : f32 to vector<1x128xf32>
      %44 = arith.maximumf %42, %43 : vector<1x128xf32>
      %c0_37 = arith.constant 0 : index
      %c0_38 = arith.constant 0 : index
      %45 = vector.load %arg5[%c0_37, %c0_38] : memref<1x128xf32, #tpu.memory_space<vmem>>, vector<1x128xf32>
      tpu.vector_store %arg5[%c0_37, %c0_38], %44 {strides = array<i32>} : memref<1x128xf32, #tpu.memory_space<vmem>>, vector<1x128xf32>,
      %c0_39 = arith.constant 0 : index
      %c0_40 = arith.constant 0 : index
      %46 = vector.load %arg10[%c0_39, %c0_40] : memref<1x128xf32, #tpu.memory_space<vmem>>, vector<1x128xf32>
      %cst_41 = arith.constant 3.906250e-03 : f32
      %47 = vector.broadcast %cst_41 : f32 to vector<1x128xf32>
      %48 = arith.mulf %46, %47 : vector<1x128xf32>
      %c0_42 = arith.constant 0 : index
      %c0_43 = arith.constant 0 : index
      %49 = vector.load %arg6[%c0_42, %c0_43] : memref<1x128xf32, #tpu.memory_space<vmem>>, vector<1x128xf32>
      tpu.vector_store %arg6[%c0_42, %c0_43], %48 {strides = array<i32>} : memref<1x128xf32, #tpu.memory_space<vmem>>, vector<1x128xf32>,
      %c0_44 = arith.constant 0 : index
      %c0_45 = arith.constant 0 : index
      %50 = vector.load %arg11[%c0_44, %c0_45] : memref<1x128xf32, #tpu.memory_space<vmem>>, vector<1x128xf32>
      %cst_46 = arith.constant 3.906250e-03 : f32
      %51 = vector.broadcast %cst_46 : f32 to vector<1x128xf32>
      %52 = arith.mulf %50, %51 : vector<1x128xf32>
      %53 = arith.mulf %48, %48 : vector<1x128xf32>
      %54 = arith.subf %52, %53 : vector<1x128xf32>
      %cst_47 = arith.constant 0.000000e+00 : f32
      %55 = vector.broadcast %cst_47 : f32 to vector<1x128xf32>
      %56 = arith.maximumf %54, %55 : vector<1x128xf32>
      %c0_48 = arith.constant 0 : index
      %c0_49 = arith.constant 0 : index
      %57 = vector.load %arg7[%c0_48, %c0_49] : memref<1x128xf32, #tpu.memory_space<vmem>>, vector<1x128xf32>
      tpu.vector_store %arg7[%c0_48, %c0_49], %56 {strides = array<i32>} : memref<1x128xf32, #tpu.memory_space<vmem>>, vector<1x128xf32>,
    } else {
    }
    return
  }
  func.func @transform_0(%arg0: i32) -> (i32, i32) {
    %c0_i32 = arith.constant 0 : i32
    %c0_i32_0 = arith.constant 0 : i32
    return %arg0, %c0_i32 : i32, i32
  }
  func.func @transform_1(%arg0: i32) -> (i32, i32) {
    %c0_i32 = arith.constant 0 : i32
    %c0_i32_0 = arith.constant 0 : i32
    %c0_i32_1 = arith.constant 0 : i32
    return %c0_i32, %c0_i32_0 : i32, i32
  }
  func.func @transform_2(%arg0: i32) -> (i32, i32) {
    %c0_i32 = arith.constant 0 : i32
    %c0_i32_0 = arith.constant 0 : i32
    return %arg0, %c0_i32 : i32, i32
  }
  func.func @transform_3(%arg0: i32) -> (i32, i32) {
    %c0_i32 = arith.constant 0 : i32
    %c0_i32_0 = arith.constant 0 : i32
    %c0_i32_1 = arith.constant 0 : i32
    return %c0_i32, %c0_i32_0 : i32, i32
  }
  func.func @transform_4(%arg0: i32) -> (i32, i32) {
    %c0_i32 = arith.constant 0 : i32
    %c0_i32_0 = arith.constant 0 : i32
    %c0_i32_1 = arith.constant 0 : i32
    return %c0_i32, %c0_i32_0 : i32, i32
  }
  func.func @transform_5(%arg0: i32) -> (i32, i32) {
    %c0_i32 = arith.constant 0 : i32
    %c0_i32_0 = arith.constant 0 : i32
    %c0_i32_1 = arith.constant 0 : i32
    return %c0_i32, %c0_i32_0 : i32, i32
  }
  func.func @transform_6(%arg0: i32) -> (i32, i32) {
    %c0_i32 = arith.constant 0 : i32
    %c0_i32_0 = arith.constant 0 : i32
    %c0_i32_1 = arith.constant 0 : i32
    return %c0_i32, %c0_i32_0 : i32, i32
  }
}

module attributes {stable_mosaic.version = 11 : i64} {
  func.func @kernel(%arg0: i32, %arg1: memref<256x128xf32, #tpu.memory_space<vmem>>, %arg2: memref<1x128xf32, #tpu.memory_space<vmem>>, %arg3: memref<1x128xf32, #tpu.memory_space<vmem>>, %arg4: memref<1x128xf32, #tpu.memory_space<vmem>>, %arg5: memref<1x128xf32, #tpu.memory_space<vmem>>, %arg6: memref<256x128xbf16, #tpu.memory_space<vmem>>) attributes {dimension_semantics = [#tpu.dimension_semantics<parallel>], iteration_bounds = array<i64: 1>, scalar_prefetch = 0 : i64, scratch_operands = 0 : i64, tpu.core_type = #tpu.core_type<tc>, window_params = [{transform_indices = @transform_0, window_bounds = array<i64: 256, 128>}, {pipeline_mode = #tpu.pipeline_mode<synchronous>, transform_indices = @transform_1, window_bounds = array<i64: 1, 128>}, {pipeline_mode = #tpu.pipeline_mode<synchronous>, transform_indices = @transform_2, window_bounds = array<i64: 1, 128>}, {pipeline_mode = #tpu.pipeline_mode<synchronous>, transform_indices = @transform_3, window_bounds = array<i64: 1, 128>}, {pipeline_mode = #tpu.pipeline_mode<synchronous>, transform_indices = @transform_4, window_bounds = array<i64: 1, 128>}, {transform_indices = @transform_5, window_bounds = array<i64: 256, 128>}]} {
    %c0 = arith.constant 0 : index
    %c0_0 = arith.constant 0 : index
    %0 = vector.load %arg1[%c0, %c0_0] : memref<256x128xf32, #tpu.memory_space<vmem>>, vector<256x128xf32>
    %c0_1 = arith.constant 0 : index
    %c0_2 = arith.constant 0 : index
    %1 = vector.load %arg4[%c0_1, %c0_2] : memref<1x128xf32, #tpu.memory_space<vmem>>, vector<1x128xf32>
    %c0_3 = arith.constant 0 : index
    %c0_4 = arith.constant 0 : index
    %2 = vector.load %arg3[%c0_3, %c0_4] : memref<1x128xf32, #tpu.memory_space<vmem>>, vector<1x128xf32>
    %cst = arith.constant 9.99999974E-6 : f32
    %3 = vector.broadcast %cst : f32 to vector<1x128xf32>
    %4 = arith.addf %2, %3 : vector<1x128xf32>
    %5 = math.rsqrt %4 : vector<1x128xf32>
    %6 = arith.mulf %1, %5 : vector<1x128xf32>
    %c0_5 = arith.constant 0 : index
    %c0_6 = arith.constant 0 : index
    %7 = vector.load %arg5[%c0_5, %c0_6] : memref<1x128xf32, #tpu.memory_space<vmem>>, vector<1x128xf32>
    %c0_7 = arith.constant 0 : index
    %c0_8 = arith.constant 0 : index
    %8 = vector.load %arg2[%c0_7, %c0_8] : memref<1x128xf32, #tpu.memory_space<vmem>>, vector<1x128xf32>
    %9 = arith.mulf %8, %6 : vector<1x128xf32>
    %10 = arith.subf %7, %9 : vector<1x128xf32>
    %11 = vector.broadcast %6 : vector<1x128xf32> to vector<256x128xf32>
    %12 = arith.mulf %0, %11 : vector<256x128xf32>
    %13 = vector.broadcast %10 : vector<1x128xf32> to vector<256x128xf32>
    %14 = arith.addf %12, %13 : vector<256x128xf32>
    %cst_9 = arith.constant 0.000000e+00 : f32
    %15 = vector.broadcast %cst_9 : f32 to vector<256x128xf32>
    %16 = arith.subf %15, %14 : vector<256x128xf32>
    %17 = math.exp %16 : vector<256x128xf32>
    %cst_10 = arith.constant 1.000000e+00 : f32
    %18 = vector.broadcast %cst_10 : f32 to vector<256x128xf32>
    %19 = arith.addf %18, %17 : vector<256x128xf32>
    %cst_11 = arith.constant 1.000000e+00 : f32
    %20 = vector.broadcast %cst_11 : f32 to vector<256x128xf32>
    %21 = arith.divf %20, %19 : vector<256x128xf32>
    %22 = arith.mulf %14, %21 : vector<256x128xf32>
    %23 = arith.truncf %22 : vector<256x128xf32> to vector<256x128xbf16>
    %c0_12 = arith.constant 0 : index
    %c0_13 = arith.constant 0 : index
    %24 = vector.load %arg6[%c0_12, %c0_13] : memref<256x128xbf16, #tpu.memory_space<vmem>>, vector<256x128xbf16>
    tpu.vector_store %arg6[%c0_12, %c0_13], %23 {strides = array<i32>} : memref<256x128xbf16, #tpu.memory_space<vmem>>, vector<256x128xbf16>,
    return
  }
  func.func @transform_0(%arg0: i32) -> (i32, i32) {
    %c0_i32 = arith.constant 0 : i32
    %c0_i32_0 = arith.constant 0 : i32
    return %arg0, %c0_i32 : i32, i32
  }
  func.func @transform_1(%arg0: i32) -> (i32, i32) {
    %c0_i32 = arith.constant 0 : i32
    %c0_i32_0 = arith.constant 0 : i32
    %c0_i32_1 = arith.constant 0 : i32
    return %c0_i32, %c0_i32_0 : i32, i32
  }
  func.func @transform_2(%arg0: i32) -> (i32, i32) {
    %c0_i32 = arith.constant 0 : i32
    %c0_i32_0 = arith.constant 0 : i32
    %c0_i32_1 = arith.constant 0 : i32
    return %c0_i32, %c0_i32_0 : i32, i32
  }
  func.func @transform_3(%arg0: i32) -> (i32, i32) {
    %c0_i32 = arith.constant 0 : i32
    %c0_i32_0 = arith.constant 0 : i32
    %c0_i32_1 = arith.constant 0 : i32
    return %c0_i32, %c0_i32_0 : i32, i32
  }
  func.func @transform_4(%arg0: i32) -> (i32, i32) {
    %c0_i32 = arith.constant 0 : i32
    %c0_i32_0 = arith.constant 0 : i32
    %c0_i32_1 = arith.constant 0 : i32
    return %c0_i32, %c0_i32_0 : i32, i32
  }
  func.func @transform_5(%arg0: i32) -> (i32, i32) {
    %c0_i32 = arith.constant 0 : i32
    %c0_i32_0 = arith.constant 0 : i32
    return %arg0, %c0_i32 : i32, i32
  }
}

module attributes {stable_mosaic.version = 11 : i64} {
  func.func @kernel(%arg0: i32, %arg1: memref<256x128xbf16, #tpu.memory_space<vmem>>, %arg2: memref<1x128xf32, #tpu.memory_space<vmem>>, %arg3: memref<1x128xf32, #tpu.memory_space<vmem>>, %arg4: memref<1x128xf32, #tpu.memory_space<vmem>>, %arg5: memref<1x128xf32, #tpu.memory_space<vmem>>, %arg6: memref<256x128xbf16, #tpu.memory_space<vmem>>) attributes {dimension_semantics = [#tpu.dimension_semantics<parallel>], iteration_bounds = array<i64: 1>, scalar_prefetch = 0 : i64, scratch_operands = 0 : i64, tpu.core_type = #tpu.core_type<tc>, window_params = [{transform_indices = @transform_0, window_bounds = array<i64: 256, 128>}, {pipeline_mode = #tpu.pipeline_mode<synchronous>, transform_indices = @transform_1, window_bounds = array<i64: 1, 128>}, {pipeline_mode = #tpu.pipeline_mode<synchronous>, transform_indices = @transform_2, window_bounds = array<i64: 1, 128>}, {pipeline_mode = #tpu.pipeline_mode<synchronous>, transform_indices = @transform_3, window_bounds = array<i64: 1, 128>}, {pipeline_mode = #tpu.pipeline_mode<synchronous>, transform_indices = @transform_4, window_bounds = array<i64: 1, 128>}, {transform_indices = @transform_5, window_bounds = array<i64: 256, 128>}]} {
    %c0 = arith.constant 0 : index
    %c0_0 = arith.constant 0 : index
    %0 = vector.load %arg1[%c0, %c0_0] : memref<256x128xbf16, #tpu.memory_space<vmem>>, vector<256x128xbf16>
    %1 = arith.extf %0 : vector<256x128xbf16> to vector<256x128xf32>
    %c0_1 = arith.constant 0 : index
    %c0_2 = arith.constant 0 : index
    %2 = vector.load %arg4[%c0_1, %c0_2] : memref<1x128xf32, #tpu.memory_space<vmem>>, vector<1x128xf32>
    %c0_3 = arith.constant 0 : index
    %c0_4 = arith.constant 0 : index
    %3 = vector.load %arg3[%c0_3, %c0_4] : memref<1x128xf32, #tpu.memory_space<vmem>>, vector<1x128xf32>
    %cst = arith.constant 9.99999974E-6 : f32
    %4 = vector.broadcast %cst : f32 to vector<1x128xf32>
    %5 = arith.addf %3, %4 : vector<1x128xf32>
    %6 = math.rsqrt %5 : vector<1x128xf32>
    %7 = arith.mulf %2, %6 : vector<1x128xf32>
    %c0_5 = arith.constant 0 : index
    %c0_6 = arith.constant 0 : index
    %8 = vector.load %arg5[%c0_5, %c0_6] : memref<1x128xf32, #tpu.memory_space<vmem>>, vector<1x128xf32>
    %c0_7 = arith.constant 0 : index
    %c0_8 = arith.constant 0 : index
    %9 = vector.load %arg2[%c0_7, %c0_8] : memref<1x128xf32, #tpu.memory_space<vmem>>, vector<1x128xf32>
    %10 = arith.mulf %9, %7 : vector<1x128xf32>
    %11 = arith.subf %8, %10 : vector<1x128xf32>
    %12 = vector.broadcast %7 : vector<1x128xf32> to vector<256x128xf32>
    %13 = arith.mulf %1, %12 : vector<256x128xf32>
    %14 = vector.broadcast %11 : vector<1x128xf32> to vector<256x128xf32>
    %15 = arith.addf %13, %14 : vector<256x128xf32>
    %cst_9 = arith.constant 0.000000e+00 : f32
    %16 = vector.broadcast %cst_9 : f32 to vector<256x128xf32>
    %17 = arith.subf %16, %15 : vector<256x128xf32>
    %18 = math.exp %17 : vector<256x128xf32>
    %cst_10 = arith.constant 1.000000e+00 : f32
    %19 = vector.broadcast %cst_10 : f32 to vector<256x128xf32>
    %20 = arith.addf %19, %18 : vector<256x128xf32>
    %cst_11 = arith.constant 1.000000e+00 : f32
    %21 = vector.broadcast %cst_11 : f32 to vector<256x128xf32>
    %22 = arith.divf %21, %20 : vector<256x128xf32>
    %23 = arith.mulf %15, %22 : vector<256x128xf32>
    %24 = arith.truncf %23 : vector<256x128xf32> to vector<256x128xbf16>
    %c0_12 = arith.constant 0 : index
    %c0_13 = arith.constant 0 : index
    %25 = vector.load %arg6[%c0_12, %c0_13] : memref<256x128xbf16, #tpu.memory_space<vmem>>, vector<256x128xbf16>
    tpu.vector_store %arg6[%c0_12, %c0_13], %24 {strides = array<i32>} : memref<256x128xbf16, #tpu.memory_space<vmem>>, vector<256x128xbf16>,
    return
  }
  func.func @transform_0(%arg0: i32) -> (i32, i32) {
    %c0_i32 = arith.constant 0 : i32
    %c0_i32_0 = arith.constant 0 : i32
    return %arg0, %c0_i32 : i32, i32
  }
  func.func @transform_1(%arg0: i32) -> (i32, i32) {
    %c0_i32 = arith.constant 0 : i32
    %c0_i32_0 = arith.constant 0 : i32
    %c0_i32_1 = arith.constant 0 : i32
    return %c0_i32, %c0_i32_0 : i32, i32
  }
  func.func @transform_2(%arg0: i32) -> (i32, i32) {
    %c0_i32 = arith.constant 0 : i32
    %c0_i32_0 = arith.constant 0 : i32
    %c0_i32_1 = arith.constant 0 : i32
    return %c0_i32, %c0_i32_0 : i32, i32
  }
  func.func @transform_3(%arg0: i32) -> (i32, i32) {
    %c0_i32 = arith.constant 0 : i32
    %c0_i32_0 = arith.constant 0 : i32
    %c0_i32_1 = arith.constant 0 : i32
    return %c0_i32, %c0_i32_0 : i32, i32
  }
  func.func @transform_4(%arg0: i32) -> (i32, i32) {
    %c0_i32 = arith.constant 0 : i32
    %c0_i32_0 = arith.constant 0 : i32
    %c0_i32_1 = arith.constant 0 : i32
    return %c0_i32, %c0_i32_0 : i32, i32
  }
  func.func @transform_5(%arg0: i32) -> (i32, i32) {
    %c0_i32 = arith.constant 0 : i32
    %c0_i32_0 = arith.constant 0 : i32
    return %arg0, %c0_i32 : i32, i32
  }
}

module attributes {stable_mosaic.version = 11 : i64} {
  func.func @kernel(%arg0: i32, %arg1: memref<5x256x256xbf16, #tpu.memory_space<vmem>>, %arg2: memref<5x256x1xf32, #tpu.memory_space<vmem>>, %arg3: memref<256x128xbf16, #tpu.memory_space<vmem>>, %arg4: memref<640x128xbf16, #tpu.memory_space<vmem>>, %arg5: memref<256x128xbf16, #tpu.memory_space<vmem>>, %arg6: memref<256x640xbf16, #tpu.memory_space<vmem>>) attributes {dimension_semantics = [#tpu.dimension_semantics<parallel>], iteration_bounds = array<i64: 1>, scalar_prefetch = 0 : i64, scratch_operands = 1 : i64, tpu.core_type = #tpu.core_type<tc>, window_params = [{transform_indices = @transform_0, window_bounds = array<i64: 5, 256, 256>}, {transform_indices = @transform_1, window_bounds = array<i64: 5, 256, 1>}, {pipeline_mode = #tpu.pipeline_mode<synchronous>, transform_indices = @transform_2, window_bounds = array<i64: 256, 128>}, {pipeline_mode = #tpu.pipeline_mode<synchronous>, transform_indices = @transform_3, window_bounds = array<i64: 640, 128>}, {transform_indices = @transform_4, window_bounds = array<i64: 256, 128>}]} {
    %c0 = arith.constant 0 : index
    %c0_0 = arith.constant 0 : index
    %0 = vector.load %arg3[%c0, %c0_0] : memref<256x128xbf16, #tpu.memory_space<vmem>>, vector<256x128xbf16>
    %c0_1 = arith.constant 0 : index
    %c0_2 = arith.constant 0 : index
    %c0_3 = arith.constant 0 : index
    %1 = vector.load %arg1[%c0_1, %c0_2, %c0_3] : memref<5x256x256xbf16, #tpu.memory_space<vmem>>, vector<1x256x256xbf16>
    %2 = vector.shape_cast %1 : vector<1x256x256xbf16> to vector<256x256xbf16>
    %cst = arith.constant dense<0.000000e+00> : vector<256x128xf32>
    %3 = tpu.matmul %2, %0, %cst {dimension_numbers = #tpu.dot_dimension_numbers<[1], [0], [0], [1], [0, 0, 1, 1], [], []>} : vector<256x256xbf16>, vector<256x128xbf16>, vector<256x128xf32> -> vector<256x128xf32>
    %c0_4 = arith.constant 0 : index
    %c0_5 = arith.constant 0 : index
    %c0_6 = arith.constant 0 : index
    %4 = vector.load %arg2[%c0_4, %c0_5, %c0_6] : memref<5x256x1xf32, #tpu.memory_space<vmem>>, vector<1x256x1xf32>
    %5 = vector.shape_cast %4 : vector<1x256x1xf32> to vector<256x1xf32>
    %6 = vector.broadcast %5 : vector<256x1xf32> to vector<256x128xf32>
    %7 = arith.mulf %3, %6 : vector<256x128xf32>
    %8 = arith.truncf %7 : vector<256x128xf32> to vector<256x128xbf16>
    %c0_7 = arith.constant 0 : index
    %c0_8 = arith.constant 0 : index
    %9 = vector.load %arg6[%c0_7, %c0_8] : memref<256x640xbf16, #tpu.memory_space<vmem>>, vector<256x128xbf16>
    tpu.vector_store %arg6[%c0_7, %c0_8], %8 {strides = array<i32>} : memref<256x640xbf16, #tpu.memory_space<vmem>>, vector<256x128xbf16>,
    %c1 = arith.constant 1 : index
    %c0_9 = arith.constant 0 : index
    %c0_10 = arith.constant 0 : index
    %10 = vector.load %arg1[%c1, %c0_9, %c0_10] : memref<5x256x256xbf16, #tpu.memory_space<vmem>>, vector<1x256x256xbf16>
    %11 = vector.shape_cast %10 : vector<1x256x256xbf16> to vector<256x256xbf16>
    %cst_11 = arith.constant dense<0.000000e+00> : vector<256x128xf32>
    %12 = tpu.matmul %11, %0, %cst_11 {dimension_numbers = #tpu.dot_dimension_numbers<[1], [0], [0], [1], [0, 0, 1, 1], [], []>} : vector<256x256xbf16>, vector<256x128xbf16>, vector<256x128xf32> -> vector<256x128xf32>
    %c1_12 = arith.constant 1 : index
    %c0_13 = arith.constant 0 : index
    %c0_14 = arith.constant 0 : index
    %13 = vector.load %arg2[%c1_12, %c0_13, %c0_14] : memref<5x256x1xf32, #tpu.memory_space<vmem>>, vector<1x256x1xf32>
    %14 = vector.shape_cast %13 : vector<1x256x1xf32> to vector<256x1xf32>
    %15 = vector.broadcast %14 : vector<256x1xf32> to vector<256x128xf32>
    %16 = arith.mulf %12, %15 : vector<256x128xf32>
    %17 = arith.truncf %16 : vector<256x128xf32> to vector<256x128xbf16>
    %c0_15 = arith.constant 0 : index
    %c128 = arith.constant 128 : index
    %18 = vector.load %arg6[%c0_15, %c128] : memref<256x640xbf16, #tpu.memory_space<vmem>>, vector<256x128xbf16>
    tpu.vector_store %arg6[%c0_15, %c128], %17 {strides = array<i32>} : memref<256x640xbf16, #tpu.memory_space<vmem>>, vector<256x128xbf16>,
    %c2 = arith.constant 2 : index
    %c0_16 = arith.constant 0 : index
    %c0_17 = arith.constant 0 : index
    %19 = vector.load %arg1[%c2, %c0_16, %c0_17] : memref<5x256x256xbf16, #tpu.memory_space<vmem>>, vector<1x256x256xbf16>
    %20 = vector.shape_cast %19 : vector<1x256x256xbf16> to vector<256x256xbf16>
    %cst_18 = arith.constant dense<0.000000e+00> : vector<256x128xf32>
    %21 = tpu.matmul %20, %0, %cst_18 {dimension_numbers = #tpu.dot_dimension_numbers<[1], [0], [0], [1], [0, 0, 1, 1], [], []>} : vector<256x256xbf16>, vector<256x128xbf16>, vector<256x128xf32> -> vector<256x128xf32>
    %c2_19 = arith.constant 2 : index
    %c0_20 = arith.constant 0 : index
    %c0_21 = arith.constant 0 : index
    %22 = vector.load %arg2[%c2_19, %c0_20, %c0_21] : memref<5x256x1xf32, #tpu.memory_space<vmem>>, vector<1x256x1xf32>
    %23 = vector.shape_cast %22 : vector<1x256x1xf32> to vector<256x1xf32>
    %24 = vector.broadcast %23 : vector<256x1xf32> to vector<256x128xf32>
    %25 = arith.mulf %21, %24 : vector<256x128xf32>
    %26 = arith.truncf %25 : vector<256x128xf32> to vector<256x128xbf16>
    %c0_22 = arith.constant 0 : index
    %c256 = arith.constant 256 : index
    %27 = vector.load %arg6[%c0_22, %c256] : memref<256x640xbf16, #tpu.memory_space<vmem>>, vector<256x128xbf16>
    tpu.vector_store %arg6[%c0_22, %c256], %26 {strides = array<i32>} : memref<256x640xbf16, #tpu.memory_space<vmem>>, vector<256x128xbf16>,
    %c3 = arith.constant 3 : index
    %c0_23 = arith.constant 0 : index
    %c0_24 = arith.constant 0 : index
    %28 = vector.load %arg1[%c3, %c0_23, %c0_24] : memref<5x256x256xbf16, #tpu.memory_space<vmem>>, vector<1x256x256xbf16>
    %29 = vector.shape_cast %28 : vector<1x256x256xbf16> to vector<256x256xbf16>
    %cst_25 = arith.constant dense<0.000000e+00> : vector<256x128xf32>
    %30 = tpu.matmul %29, %0, %cst_25 {dimension_numbers = #tpu.dot_dimension_numbers<[1], [0], [0], [1], [0, 0, 1, 1], [], []>} : vector<256x256xbf16>, vector<256x128xbf16>, vector<256x128xf32> -> vector<256x128xf32>
    %c3_26 = arith.constant 3 : index
    %c0_27 = arith.constant 0 : index
    %c0_28 = arith.constant 0 : index
    %31 = vector.load %arg2[%c3_26, %c0_27, %c0_28] : memref<5x256x1xf32, #tpu.memory_space<vmem>>, vector<1x256x1xf32>
    %32 = vector.shape_cast %31 : vector<1x256x1xf32> to vector<256x1xf32>
    %33 = vector.broadcast %32 : vector<256x1xf32> to vector<256x128xf32>
    %34 = arith.mulf %30, %33 : vector<256x128xf32>
    %35 = arith.truncf %34 : vector<256x128xf32> to vector<256x128xbf16>
    %c0_29 = arith.constant 0 : index
    %c384 = arith.constant 384 : index
    %36 = vector.load %arg6[%c0_29, %c384] : memref<256x640xbf16, #tpu.memory_space<vmem>>, vector<256x128xbf16>
    tpu.vector_store %arg6[%c0_29, %c384], %35 {strides = array<i32>} : memref<256x640xbf16, #tpu.memory_space<vmem>>, vector<256x128xbf16>,
    %c4 = arith.constant 4 : index
    %c0_30 = arith.constant 0 : index
    %c0_31 = arith.constant 0 : index
    %37 = vector.load %arg1[%c4, %c0_30, %c0_31] : memref<5x256x256xbf16, #tpu.memory_space<vmem>>, vector<1x256x256xbf16>
    %38 = vector.shape_cast %37 : vector<1x256x256xbf16> to vector<256x256xbf16>
    %cst_32 = arith.constant dense<0.000000e+00> : vector<256x128xf32>
    %39 = tpu.matmul %38, %0, %cst_32 {dimension_numbers = #tpu.dot_dimension_numbers<[1], [0], [0], [1], [0, 0, 1, 1], [], []>} : vector<256x256xbf16>, vector<256x128xbf16>, vector<256x128xf32> -> vector<256x128xf32>
    %c4_33 = arith.constant 4 : index
    %c0_34 = arith.constant 0 : index
    %c0_35 = arith.constant 0 : index
    %40 = vector.load %arg2[%c4_33, %c0_34, %c0_35] : memref<5x256x1xf32, #tpu.memory_space<vmem>>, vector<1x256x1xf32>
    %41 = vector.shape_cast %40 : vector<1x256x1xf32> to vector<256x1xf32>
    %42 = vector.broadcast %41 : vector<256x1xf32> to vector<256x128xf32>
    %43 = arith.mulf %39, %42 : vector<256x128xf32>
    %44 = arith.truncf %43 : vector<256x128xf32> to vector<256x128xbf16>
    %c0_36 = arith.constant 0 : index
    %c512 = arith.constant 512 : index
    %45 = vector.load %arg6[%c0_36, %c512] : memref<256x640xbf16, #tpu.memory_space<vmem>>, vector<256x128xbf16>
    tpu.vector_store %arg6[%c0_36, %c512], %44 {strides = array<i32>} : memref<256x640xbf16, #tpu.memory_space<vmem>>, vector<256x128xbf16>,
    %c0_37 = arith.constant 0 : index
    %c0_38 = arith.constant 0 : index
    %46 = vector.load %arg6[%c0_37, %c0_38] : memref<256x640xbf16, #tpu.memory_space<vmem>>, vector<256x640xbf16>
    %c0_39 = arith.constant 0 : index
    %c0_40 = arith.constant 0 : index
    %47 = vector.load %arg4[%c0_39, %c0_40] : memref<640x128xbf16, #tpu.memory_space<vmem>>, vector<640x128xbf16>
    %cst_41 = arith.constant dense<0.000000e+00> : vector<256x128xf32>
    %48 = tpu.matmul %46, %47, %cst_41 {dimension_numbers = #tpu.dot_dimension_numbers<[1], [0], [0], [1], [0, 0, 1, 1], [], []>} : vector<256x640xbf16>, vector<640x128xbf16>, vector<256x128xf32> -> vector<256x128xf32>
    %49 = arith.truncf %48 : vector<256x128xf32> to vector<256x128xbf16>
    %c0_42 = arith.constant 0 : index
    %c0_43 = arith.constant 0 : index
    %50 = vector.load %arg5[%c0_42, %c0_43] : memref<256x128xbf16, #tpu.memory_space<vmem>>, vector<256x128xbf16>
    tpu.vector_store %arg5[%c0_42, %c0_43], %49 {strides = array<i32>} : memref<256x128xbf16, #tpu.memory_space<vmem>>, vector<256x128xbf16>,
    return
  }
  func.func @transform_0(%arg0: i32) -> (i32, i32, i32) {
    %c0_i32 = arith.constant 0 : i32
    %c0_i32_0 = arith.constant 0 : i32
    %c0_i32_1 = arith.constant 0 : i32
    return %c0_i32, %arg0, %c0_i32_0 : i32, i32, i32
  }
  func.func @transform_1(%arg0: i32) -> (i32, i32, i32) {
    %c0_i32 = arith.constant 0 : i32
    %c0_i32_0 = arith.constant 0 : i32
    %c0_i32_1 = arith.constant 0 : i32
    return %c0_i32, %arg0, %c0_i32_0 : i32, i32, i32
  }
  func.func @transform_2(%arg0: i32) -> (i32, i32) {
    %c0_i32 = arith.constant 0 : i32
    %c0_i32_0 = arith.constant 0 : i32
    %c0_i32_1 = arith.constant 0 : i32
    return %c0_i32, %c0_i32_0 : i32, i32
  }
  func.func @transform_3(%arg0: i32) -> (i32, i32) {
    %c0_i32 = arith.constant 0 : i32
    %c0_i32_0 = arith.constant 0 : i32
    %c0_i32_1 = arith.constant 0 : i32
    return %c0_i32, %c0_i32_0 : i32, i32
  }
  func.func @transform_4(%arg0: i32) -> (i32, i32) {
    %c0_i32 = arith.constant 0 : i32
    %c0_i32_0 = arith.constant 0 : i32
    return %arg0, %c0_i32 : i32, i32
  }
}

module attributes {stable_mosaic.version = 11 : i64} {
  func.func @kernel(%arg0: i32, %arg1: memref<256x128xbf16, #tpu.memory_space<vmem>>, %arg2: memref<1x128xf32, #tpu.memory_space<vmem>>, %arg3: memref<1x128xf32, #tpu.memory_space<vmem>>, %arg4: memref<1x128xf32, #tpu.memory_space<vmem>>, %arg5: memref<1x128xf32, #tpu.memory_space<vmem>>) attributes {dimension_semantics = [#tpu.dimension_semantics<arbitrary>], iteration_bounds = array<i64: 1>, scalar_prefetch = 0 : i64, scratch_operands = 2 : i64, tpu.core_type = #tpu.core_type<tc>, window_params = [{transform_indices = @transform_0, window_bounds = array<i64: 256, 128>}, {pipeline_mode = #tpu.pipeline_mode<synchronous>, transform_indices = @transform_1, window_bounds = array<i64: 1, 128>}, {pipeline_mode = #tpu.pipeline_mode<synchronous>, transform_indices = @transform_2, window_bounds = array<i64: 1, 128>}]} {
    %c0_i32 = arith.constant 0 : i32
    %0 = arith.cmpi eq, %arg0, %c0_i32 : i32
    %1 = arith.extui %0 : i1 to i32
    %c0_i32_0 = arith.constant 0 : i32
    %2 = arith.cmpi ne, %1, %c0_i32_0 : i32
    scf.if %2 {
      %cst_13 = arith.constant 0.000000e+00 : f32
      %19 = vector.broadcast %cst_13 : f32 to vector<1x128xf32>
      %c0_14 = arith.constant 0 : index
      %c0_15 = arith.constant 0 : index
      %20 = vector.load %arg4[%c0_14, %c0_15] : memref<1x128xf32, #tpu.memory_space<vmem>>, vector<1x128xf32>
      tpu.vector_store %arg4[%c0_14, %c0_15], %19 {strides = array<i32>} : memref<1x128xf32, #tpu.memory_space<vmem>>, vector<1x128xf32>,
      %cst_16 = arith.constant 0.000000e+00 : f32
      %21 = vector.broadcast %cst_16 : f32 to vector<1x128xf32>
      %c0_17 = arith.constant 0 : index
      %c0_18 = arith.constant 0 : index
      %22 = vector.load %arg5[%c0_17, %c0_18] : memref<1x128xf32, #tpu.memory_space<vmem>>, vector<1x128xf32>
      tpu.vector_store %arg5[%c0_17, %c0_18], %21 {strides = array<i32>} : memref<1x128xf32, #tpu.memory_space<vmem>>, vector<1x128xf32>,
    } else {
    }
    %c0 = arith.constant 0 : index
    %c0_1 = arith.constant 0 : index
    %3 = vector.load %arg1[%c0, %c0_1] : memref<256x128xbf16, #tpu.memory_space<vmem>>, vector<256x128xbf16>
    %4 = arith.extf %3 : vector<256x128xbf16> to vector<256x128xf32>
    %c0_2 = arith.constant 0 : index
    %c0_3 = arith.constant 0 : index
    %5 = vector.load %arg4[%c0_2, %c0_3] : memref<1x128xf32, #tpu.memory_space<vmem>>, vector<1x128xf32>
    %cst = arith.constant dense<0.000000e+00> : vector<128xf32>
    %6 = vector.multi_reduction <add>, %4, %cst [0] : vector<256x128xf32> to vector<128xf32>
    %7 = vector.shape_cast %6 : vector<128xf32> to vector<1x128xf32>
    %8 = arith.addf %5, %7 : vector<1x128xf32>
    %c0_4 = arith.constant 0 : index
    %c0_5 = arith.constant 0 : index
    %9 = vector.load %arg4[%c0_4, %c0_5] : memref<1x128xf32, #tpu.memory_space<vmem>>, vector<1x128xf32>
    tpu.vector_store %arg4[%c0_4, %c0_5], %8 {strides = array<i32>} : memref<1x128xf32, #tpu.memory_space<vmem>>, vector<1x128xf32>,
    %c0_6 = arith.constant 0 : index
    %c0_7 = arith.constant 0 : index
    %10 = vector.load %arg5[%c0_6, %c0_7] : memref<1x128xf32, #tpu.memory_space<vmem>>, vector<1x128xf32>
    %11 = arith.mulf %4, %4 : vector<256x128xf32>
    %cst_8 = arith.constant dense<0.000000e+00> : vector<128xf32>
    %12 = vector.multi_reduction <add>, %11, %cst_8 [0] : vector<256x128xf32> to vector<128xf32>
    %13 = vector.shape_cast %12 : vector<128xf32> to vector<1x128xf32>
    %14 = arith.addf %10, %13 : vector<1x128xf32>
    %c0_9 = arith.constant 0 : index
    %c0_10 = arith.constant 0 : index
    %15 = vector.load %arg5[%c0_9, %c0_10] : memref<1x128xf32, #tpu.memory_space<vmem>>, vector<1x128xf32>
    tpu.vector_store %arg5[%c0_9, %c0_10], %14 {strides = array<i32>} : memref<1x128xf32, #tpu.memory_space<vmem>>, vector<1x128xf32>,
    %c0_i32_11 = arith.constant 0 : i32
    %16 = arith.cmpi eq, %arg0, %c0_i32_11 : i32
    %17 = arith.extui %16 : i1 to i32
    %c0_i32_12 = arith.constant 0 : i32
    %18 = arith.cmpi ne, %17, %c0_i32_12 : i32
    scf.if %18 {
      %c0_13 = arith.constant 0 : index
      %c0_14 = arith.constant 0 : index
      %19 = vector.load %arg4[%c0_13, %c0_14] : memref<1x128xf32, #tpu.memory_space<vmem>>, vector<1x128xf32>
      %cst_15 = arith.constant 3.906250e-03 : f32
      %20 = vector.broadcast %cst_15 : f32 to vector<1x128xf32>
      %21 = arith.mulf %19, %20 : vector<1x128xf32>
      %c0_16 = arith.constant 0 : index
      %c0_17 = arith.constant 0 : index
      %22 = vector.load %arg2[%c0_16, %c0_17] : memref<1x128xf32, #tpu.memory_space<vmem>>, vector<1x128xf32>
      tpu.vector_store %arg2[%c0_16, %c0_17], %21 {strides = array<i32>} : memref<1x128xf32, #tpu.memory_space<vmem>>, vector<1x128xf32>,
      %c0_18 = arith.constant 0 : index
      %c0_19 = arith.constant 0 : index
      %23 = vector.load %arg5[%c0_18, %c0_19] : memref<1x128xf32, #tpu.memory_space<vmem>>, vector<1x128xf32>
      %cst_20 = arith.constant 3.906250e-03 : f32
      %24 = vector.broadcast %cst_20 : f32 to vector<1x128xf32>
      %25 = arith.mulf %23, %24 : vector<1x128xf32>
      %26 = arith.mulf %21, %21 : vector<1x128xf32>
      %27 = arith.subf %25, %26 : vector<1x128xf32>
      %cst_21 = arith.constant 0.000000e+00 : f32
      %28 = vector.broadcast %cst_21 : f32 to vector<1x128xf32>
      %29 = arith.maximumf %27, %28 : vector<1x128xf32>
      %c0_22 = arith.constant 0 : index
      %c0_23 = arith.constant 0 : index
      %30 = vector.load %arg3[%c0_22, %c0_23] : memref<1x128xf32, #tpu.memory_space<vmem>>, vector<1x128xf32>
      tpu.vector_store %arg3[%c0_22, %c0_23], %29 {strides = array<i32>} : memref<1x128xf32, #tpu.memory_space<vmem>>, vector<1x128xf32>,
    } else {
    }
    return
  }
  func.func @transform_0(%arg0: i32) -> (i32, i32) {
    %c0_i32 = arith.constant 0 : i32
    %c0_i32_0 = arith.constant 0 : i32
    return %arg0, %c0_i32 : i32, i32
  }
  func.func @transform_1(%arg0: i32) -> (i32, i32) {
    %c0_i32 = arith.constant 0 : i32
    %c0_i32_0 = arith.constant 0 : i32
    %c0_i32_1 = arith.constant 0 : i32
    return %c0_i32, %c0_i32_0 : i32, i32
  }
  func.func @transform_2(%arg0: i32) -> (i32, i32) {
    %c0_i32 = arith.constant 0 : i32
    %c0_i32_0 = arith.constant 0 : i32
    %c0_i32_1 = arith.constant 0 : i32
    return %c0_i32, %c0_i32_0 : i32, i32
  }
}

module attributes {stable_mosaic.version = 11 : i64} {
  func.func @kernel(%arg0: i32, %arg1: memref<5x256x256xbf16, #tpu.memory_space<vmem>>, %arg2: memref<5x256x1xf32, #tpu.memory_space<vmem>>, %arg3: memref<256x128xbf16, #tpu.memory_space<vmem>>, %arg4: memref<640x128xbf16, #tpu.memory_space<vmem>>, %arg5: memref<256x128xf32, #tpu.memory_space<vmem>>, %arg6: memref<256x640xbf16, #tpu.memory_space<vmem>>) attributes {dimension_semantics = [#tpu.dimension_semantics<parallel>], iteration_bounds = array<i64: 1>, scalar_prefetch = 0 : i64, scratch_operands = 1 : i64, tpu.core_type = #tpu.core_type<tc>, window_params = [{transform_indices = @transform_0, window_bounds = array<i64: 5, 256, 256>}, {transform_indices = @transform_1, window_bounds = array<i64: 5, 256, 1>}, {pipeline_mode = #tpu.pipeline_mode<synchronous>, transform_indices = @transform_2, window_bounds = array<i64: 256, 128>}, {pipeline_mode = #tpu.pipeline_mode<synchronous>, transform_indices = @transform_3, window_bounds = array<i64: 640, 128>}, {transform_indices = @transform_4, window_bounds = array<i64: 256, 128>}]} {
    %c0 = arith.constant 0 : index
    %c0_0 = arith.constant 0 : index
    %0 = vector.load %arg3[%c0, %c0_0] : memref<256x128xbf16, #tpu.memory_space<vmem>>, vector<256x128xbf16>
    %c0_1 = arith.constant 0 : index
    %c0_2 = arith.constant 0 : index
    %c0_3 = arith.constant 0 : index
    %1 = vector.load %arg1[%c0_1, %c0_2, %c0_3] : memref<5x256x256xbf16, #tpu.memory_space<vmem>>, vector<1x256x256xbf16>
    %2 = vector.shape_cast %1 : vector<1x256x256xbf16> to vector<256x256xbf16>
    %cst = arith.constant dense<0.000000e+00> : vector<256x128xf32>
    %3 = tpu.matmul %2, %0, %cst {dimension_numbers = #tpu.dot_dimension_numbers<[1], [0], [0], [1], [0, 0, 1, 1], [], []>} : vector<256x256xbf16>, vector<256x128xbf16>, vector<256x128xf32> -> vector<256x128xf32>
    %c0_4 = arith.constant 0 : index
    %c0_5 = arith.constant 0 : index
    %c0_6 = arith.constant 0 : index
    %4 = vector.load %arg2[%c0_4, %c0_5, %c0_6] : memref<5x256x1xf32, #tpu.memory_space<vmem>>, vector<1x256x1xf32>
    %5 = vector.shape_cast %4 : vector<1x256x1xf32> to vector<256x1xf32>
    %6 = vector.broadcast %5 : vector<256x1xf32> to vector<256x128xf32>
    %7 = arith.mulf %3, %6 : vector<256x128xf32>
    %8 = arith.truncf %7 : vector<256x128xf32> to vector<256x128xbf16>
    %c0_7 = arith.constant 0 : index
    %c0_8 = arith.constant 0 : index
    %9 = vector.load %arg6[%c0_7, %c0_8] : memref<256x640xbf16, #tpu.memory_space<vmem>>, vector<256x128xbf16>
    tpu.vector_store %arg6[%c0_7, %c0_8], %8 {strides = array<i32>} : memref<256x640xbf16, #tpu.memory_space<vmem>>, vector<256x128xbf16>,
    %c1 = arith.constant 1 : index
    %c0_9 = arith.constant 0 : index
    %c0_10 = arith.constant 0 : index
    %10 = vector.load %arg1[%c1, %c0_9, %c0_10] : memref<5x256x256xbf16, #tpu.memory_space<vmem>>, vector<1x256x256xbf16>
    %11 = vector.shape_cast %10 : vector<1x256x256xbf16> to vector<256x256xbf16>
    %cst_11 = arith.constant dense<0.000000e+00> : vector<256x128xf32>
    %12 = tpu.matmul %11, %0, %cst_11 {dimension_numbers = #tpu.dot_dimension_numbers<[1], [0], [0], [1], [0, 0, 1, 1], [], []>} : vector<256x256xbf16>, vector<256x128xbf16>, vector<256x128xf32> -> vector<256x128xf32>
    %c1_12 = arith.constant 1 : index
    %c0_13 = arith.constant 0 : index
    %c0_14 = arith.constant 0 : index
    %13 = vector.load %arg2[%c1_12, %c0_13, %c0_14] : memref<5x256x1xf32, #tpu.memory_space<vmem>>, vector<1x256x1xf32>
    %14 = vector.shape_cast %13 : vector<1x256x1xf32> to vector<256x1xf32>
    %15 = vector.broadcast %14 : vector<256x1xf32> to vector<256x128xf32>
    %16 = arith.mulf %12, %15 : vector<256x128xf32>
    %17 = arith.truncf %16 : vector<256x128xf32> to vector<256x128xbf16>
    %c0_15 = arith.constant 0 : index
    %c128 = arith.constant 128 : index
    %18 = vector.load %arg6[%c0_15, %c128] : memref<256x640xbf16, #tpu.memory_space<vmem>>, vector<256x128xbf16>
    tpu.vector_store %arg6[%c0_15, %c128], %17 {strides = array<i32>} : memref<256x640xbf16, #tpu.memory_space<vmem>>, vector<256x128xbf16>,
    %c2 = arith.constant 2 : index
    %c0_16 = arith.constant 0 : index
    %c0_17 = arith.constant 0 : index
    %19 = vector.load %arg1[%c2, %c0_16, %c0_17] : memref<5x256x256xbf16, #tpu.memory_space<vmem>>, vector<1x256x256xbf16>
    %20 = vector.shape_cast %19 : vector<1x256x256xbf16> to vector<256x256xbf16>
    %cst_18 = arith.constant dense<0.000000e+00> : vector<256x128xf32>
    %21 = tpu.matmul %20, %0, %cst_18 {dimension_numbers = #tpu.dot_dimension_numbers<[1], [0], [0], [1], [0, 0, 1, 1], [], []>} : vector<256x256xbf16>, vector<256x128xbf16>, vector<256x128xf32> -> vector<256x128xf32>
    %c2_19 = arith.constant 2 : index
    %c0_20 = arith.constant 0 : index
    %c0_21 = arith.constant 0 : index
    %22 = vector.load %arg2[%c2_19, %c0_20, %c0_21] : memref<5x256x1xf32, #tpu.memory_space<vmem>>, vector<1x256x1xf32>
    %23 = vector.shape_cast %22 : vector<1x256x1xf32> to vector<256x1xf32>
    %24 = vector.broadcast %23 : vector<256x1xf32> to vector<256x128xf32>
    %25 = arith.mulf %21, %24 : vector<256x128xf32>
    %26 = arith.truncf %25 : vector<256x128xf32> to vector<256x128xbf16>
    %c0_22 = arith.constant 0 : index
    %c256 = arith.constant 256 : index
    %27 = vector.load %arg6[%c0_22, %c256] : memref<256x640xbf16, #tpu.memory_space<vmem>>, vector<256x128xbf16>
    tpu.vector_store %arg6[%c0_22, %c256], %26 {strides = array<i32>} : memref<256x640xbf16, #tpu.memory_space<vmem>>, vector<256x128xbf16>,
    %c3 = arith.constant 3 : index
    %c0_23 = arith.constant 0 : index
    %c0_24 = arith.constant 0 : index
    %28 = vector.load %arg1[%c3, %c0_23, %c0_24] : memref<5x256x256xbf16, #tpu.memory_space<vmem>>, vector<1x256x256xbf16>
    %29 = vector.shape_cast %28 : vector<1x256x256xbf16> to vector<256x256xbf16>
    %cst_25 = arith.constant dense<0.000000e+00> : vector<256x128xf32>
    %30 = tpu.matmul %29, %0, %cst_25 {dimension_numbers = #tpu.dot_dimension_numbers<[1], [0], [0], [1], [0, 0, 1, 1], [], []>} : vector<256x256xbf16>, vector<256x128xbf16>, vector<256x128xf32> -> vector<256x128xf32>
    %c3_26 = arith.constant 3 : index
    %c0_27 = arith.constant 0 : index
    %c0_28 = arith.constant 0 : index
    %31 = vector.load %arg2[%c3_26, %c0_27, %c0_28] : memref<5x256x1xf32, #tpu.memory_space<vmem>>, vector<1x256x1xf32>
    %32 = vector.shape_cast %31 : vector<1x256x1xf32> to vector<256x1xf32>
    %33 = vector.broadcast %32 : vector<256x1xf32> to vector<256x128xf32>
    %34 = arith.mulf %30, %33 : vector<256x128xf32>
    %35 = arith.truncf %34 : vector<256x128xf32> to vector<256x128xbf16>
    %c0_29 = arith.constant 0 : index
    %c384 = arith.constant 384 : index
    %36 = vector.load %arg6[%c0_29, %c384] : memref<256x640xbf16, #tpu.memory_space<vmem>>, vector<256x128xbf16>
    tpu.vector_store %arg6[%c0_29, %c384], %35 {strides = array<i32>} : memref<256x640xbf16, #tpu.memory_space<vmem>>, vector<256x128xbf16>,
    %c4 = arith.constant 4 : index
    %c0_30 = arith.constant 0 : index
    %c0_31 = arith.constant 0 : index
    %37 = vector.load %arg1[%c4, %c0_30, %c0_31] : memref<5x256x256xbf16, #tpu.memory_space<vmem>>, vector<1x256x256xbf16>
    %38 = vector.shape_cast %37 : vector<1x256x256xbf16> to vector<256x256xbf16>
    %cst_32 = arith.constant dense<0.000000e+00> : vector<256x128xf32>
    %39 = tpu.matmul %38, %0, %cst_32 {dimension_numbers = #tpu.dot_dimension_numbers<[1], [0], [0], [1], [0, 0, 1, 1], [], []>} : vector<256x256xbf16>, vector<256x128xbf16>, vector<256x128xf32> -> vector<256x128xf32>
    %c4_33 = arith.constant 4 : index
    %c0_34 = arith.constant 0 : index
    %c0_35 = arith.constant 0 : index
    %40 = vector.load %arg2[%c4_33, %c0_34, %c0_35] : memref<5x256x1xf32, #tpu.memory_space<vmem>>, vector<1x256x1xf32>
    %41 = vector.shape_cast %40 : vector<1x256x1xf32> to vector<256x1xf32>
    %42 = vector.broadcast %41 : vector<256x1xf32> to vector<256x128xf32>
    %43 = arith.mulf %39, %42 : vector<256x128xf32>
    %44 = arith.truncf %43 : vector<256x128xf32> to vector<256x128xbf16>
    %c0_36 = arith.constant 0 : index
    %c512 = arith.constant 512 : index
    %45 = vector.load %arg6[%c0_36, %c512] : memref<256x640xbf16, #tpu.memory_space<vmem>>, vector<256x128xbf16>
    tpu.vector_store %arg6[%c0_36, %c512], %44 {strides = array<i32>} : memref<256x640xbf16, #tpu.memory_space<vmem>>, vector<256x128xbf16>,
    %c0_37 = arith.constant 0 : index
    %c0_38 = arith.constant 0 : index
    %46 = vector.load %arg6[%c0_37, %c0_38] : memref<256x640xbf16, #tpu.memory_space<vmem>>, vector<256x640xbf16>
    %c0_39 = arith.constant 0 : index
    %c0_40 = arith.constant 0 : index
    %47 = vector.load %arg4[%c0_39, %c0_40] : memref<640x128xbf16, #tpu.memory_space<vmem>>, vector<640x128xbf16>
    %cst_41 = arith.constant dense<0.000000e+00> : vector<256x128xf32>
    %48 = tpu.matmul %46, %47, %cst_41 {dimension_numbers = #tpu.dot_dimension_numbers<[1], [0], [0], [1], [0, 0, 1, 1], [], []>} : vector<256x640xbf16>, vector<640x128xbf16>, vector<256x128xf32> -> vector<256x128xf32>
    %c0_42 = arith.constant 0 : index
    %c0_43 = arith.constant 0 : index
    %49 = vector.load %arg5[%c0_42, %c0_43] : memref<256x128xf32, #tpu.memory_space<vmem>>, vector<256x128xf32>
    tpu.vector_store %arg5[%c0_42, %c0_43], %48 {strides = array<i32>} : memref<256x128xf32, #tpu.memory_space<vmem>>, vector<256x128xf32>,
    return
  }
  func.func @transform_0(%arg0: i32) -> (i32, i32, i32) {
    %c0_i32 = arith.constant 0 : i32
    %c0_i32_0 = arith.constant 0 : i32
    %c0_i32_1 = arith.constant 0 : i32
    return %c0_i32, %arg0, %c0_i32_0 : i32, i32, i32
  }
  func.func @transform_1(%arg0: i32) -> (i32, i32, i32) {
    %c0_i32 = arith.constant 0 : i32
    %c0_i32_0 = arith.constant 0 : i32
    %c0_i32_1 = arith.constant 0 : i32
    return %c0_i32, %arg0, %c0_i32_0 : i32, i32, i32
  }
  func.func @transform_2(%arg0: i32) -> (i32, i32) {
    %c0_i32 = arith.constant 0 : i32
    %c0_i32_0 = arith.constant 0 : i32
    %c0_i32_1 = arith.constant 0 : i32
    return %c0_i32, %c0_i32_0 : i32, i32
  }
  func.func @transform_3(%arg0: i32) -> (i32, i32) {
    %c0_i32 = arith.constant 0 : i32
    %c0_i32_0 = arith.constant 0 : i32
    %c0_i32_1 = arith.constant 0 : i32
    return %c0_i32, %c0_i32_0 : i32, i32
  }
  func.func @transform_4(%arg0: i32) -> (i32, i32) {
    %c0_i32 = arith.constant 0 : i32
    %c0_i32_0 = arith.constant 0 : i32
    return %arg0, %c0_i32 : i32, i32
  }
}

module attributes {stable_mosaic.version = 11 : i64} {
  func.func @kernel(%arg0: i32, %arg1: memref<256x128xbf16, #tpu.memory_space<vmem>>, %arg2: memref<1x128xf32, #tpu.memory_space<vmem>>, %arg3: memref<1x128xf32, #tpu.memory_space<vmem>>, %arg4: memref<1x128xf32, #tpu.memory_space<vmem>>, %arg5: memref<1x128xf32, #tpu.memory_space<vmem>>, %arg6: memref<256x128xf32, #tpu.memory_space<vmem>>, %arg7: memref<256x128xf32, #tpu.memory_space<vmem>>) attributes {dimension_semantics = [#tpu.dimension_semantics<parallel>], iteration_bounds = array<i64: 1>, scalar_prefetch = 0 : i64, scratch_operands = 0 : i64, tpu.core_type = #tpu.core_type<tc>, window_params = [{transform_indices = @transform_0, window_bounds = array<i64: 256, 128>}, {pipeline_mode = #tpu.pipeline_mode<synchronous>, transform_indices = @transform_1, window_bounds = array<i64: 1, 128>}, {pipeline_mode = #tpu.pipeline_mode<synchronous>, transform_indices = @transform_2, window_bounds = array<i64: 1, 128>}, {pipeline_mode = #tpu.pipeline_mode<synchronous>, transform_indices = @transform_3, window_bounds = array<i64: 1, 128>}, {pipeline_mode = #tpu.pipeline_mode<synchronous>, transform_indices = @transform_4, window_bounds = array<i64: 1, 128>}, {transform_indices = @transform_5, window_bounds = array<i64: 256, 128>}, {transform_indices = @transform_6, window_bounds = array<i64: 256, 128>}]} {
    %c0 = arith.constant 0 : index
    %c0_0 = arith.constant 0 : index
    %0 = vector.load %arg1[%c0, %c0_0] : memref<256x128xbf16, #tpu.memory_space<vmem>>, vector<256x128xbf16>
    %1 = arith.extf %0 : vector<256x128xbf16> to vector<256x128xf32>
    %c0_1 = arith.constant 0 : index
    %c0_2 = arith.constant 0 : index
    %2 = vector.load %arg4[%c0_1, %c0_2] : memref<1x128xf32, #tpu.memory_space<vmem>>, vector<1x128xf32>
    %c0_3 = arith.constant 0 : index
    %c0_4 = arith.constant 0 : index
    %3 = vector.load %arg3[%c0_3, %c0_4] : memref<1x128xf32, #tpu.memory_space<vmem>>, vector<1x128xf32>
    %cst = arith.constant 9.99999974E-6 : f32
    %4 = vector.broadcast %cst : f32 to vector<1x128xf32>
    %5 = arith.addf %3, %4 : vector<1x128xf32>
    %6 = math.rsqrt %5 : vector<1x128xf32>
    %7 = arith.mulf %2, %6 : vector<1x128xf32>
    %c0_5 = arith.constant 0 : index
    %c0_6 = arith.constant 0 : index
    %8 = vector.load %arg5[%c0_5, %c0_6] : memref<1x128xf32, #tpu.memory_space<vmem>>, vector<1x128xf32>
    %c0_7 = arith.constant 0 : index
    %c0_8 = arith.constant 0 : index
    %9 = vector.load %arg2[%c0_7, %c0_8] : memref<1x128xf32, #tpu.memory_space<vmem>>, vector<1x128xf32>
    %10 = arith.mulf %9, %7 : vector<1x128xf32>
    %11 = arith.subf %8, %10 : vector<1x128xf32>
    %12 = vector.broadcast %7 : vector<1x128xf32> to vector<256x128xf32>
    %13 = arith.mulf %1, %12 : vector<256x128xf32>
    %14 = vector.broadcast %11 : vector<1x128xf32> to vector<256x128xf32>
    %15 = arith.addf %13, %14 : vector<256x128xf32>
    %c0_9 = arith.constant 0 : index
    %c0_10 = arith.constant 0 : index
    %16 = vector.load %arg6[%c0_9, %c0_10] : memref<256x128xf32, #tpu.memory_space<vmem>>, vector<256x128xf32>
    %17 = arith.addf %15, %16 : vector<256x128xf32>
    %c0_11 = arith.constant 0 : index
    %c0_12 = arith.constant 0 : index
    %18 = vector.load %arg7[%c0_11, %c0_12] : memref<256x128xf32, #tpu.memory_space<vmem>>, vector<256x128xf32>
    tpu.vector_store %arg7[%c0_11, %c0_12], %17 {strides = array<i32>} : memref<256x128xf32, #tpu.memory_space<vmem>>, vector<256x128xf32>,
    return
  }
  func.func @transform_0(%arg0: i32) -> (i32, i32) {
    %c0_i32 = arith.constant 0 : i32
    %c0_i32_0 = arith.constant 0 : i32
    return %arg0, %c0_i32 : i32, i32
  }
  func.func @transform_1(%arg0: i32) -> (i32, i32) {
    %c0_i32 = arith.constant 0 : i32
    %c0_i32_0 = arith.constant 0 : i32
    %c0_i32_1 = arith.constant 0 : i32
    return %c0_i32, %c0_i32_0 : i32, i32
  }
  func.func @transform_2(%arg0: i32) -> (i32, i32) {
    %c0_i32 = arith.constant 0 : i32
    %c0_i32_0 = arith.constant 0 : i32
    %c0_i32_1 = arith.constant 0 : i32
    return %c0_i32, %c0_i32_0 : i32, i32
  }
  func.func @transform_3(%arg0: i32) -> (i32, i32) {
    %c0_i32 = arith.constant 0 : i32
    %c0_i32_0 = arith.constant 0 : i32
    %c0_i32_1 = arith.constant 0 : i32
    return %c0_i32, %c0_i32_0 : i32, i32
  }
  func.func @transform_4(%arg0: i32) -> (i32, i32) {
    %c0_i32 = arith.constant 0 : i32
    %c0_i32_0 = arith.constant 0 : i32
    %c0_i32_1 = arith.constant 0 : i32
    return %c0_i32, %c0_i32_0 : i32, i32
  }
  func.func @transform_5(%arg0: i32) -> (i32, i32) {
    %c0_i32 = arith.constant 0 : i32
    %c0_i32_0 = arith.constant 0 : i32
    return %arg0, %c0_i32 : i32, i32
  }
  func.func @transform_6(%arg0: i32) -> (i32, i32) {
    %c0_i32 = arith.constant 0 : i32
    %c0_i32_0 = arith.constant 0 : i32
    return %arg0, %c0_i32 : i32, i32
  }
}

</mosaic_0001>

<llo_original>
// kernel: graph_res_block_forward.7
$region0: #{graph_res_block_forward.7}
  #allocation0 [shape = 'u32[]', space=smem, size = 0x4, offset = 0x4, fixed_abs, tag = 'smem constant byte address 0x4 - core index']
  #allocation1 [shape = 'u32[144,128]{1,0:T(1,128)}', space=vmem, size = 0x12000, scoped, tag = 'internal scratch']
  #allocation2 [shape = 'f32[1,128]{1,0:T(1,128)}', space=vmem, size = 0x200, scoped, tag = 'scratch operand']
  #allocation3 [shape = 'f32[1,128]{1,0:T(1,128)}', space=vmem, size = 0x200, scoped, tag = 'scratch operand']
  #allocation4 [shape = 'f32[1,128]{1,0:T(1,128)}', space=vmem, size = 0x200, scoped, tag = 'scratch operand']
  #allocation5 [shape = 'f32[1,128]{1,0:T(1,128)}', space=vmem, size = 0x200, scoped, tag = 'scratch operand']
  %s0 = inlined_call_operand.vmem [shape: f32[256,128], index: 0, kind: input, shape index: {}]
  %s1 = inlined_call_operand.vmem [shape: bf16[128,128], index: 1, kind: input, shape index: {}]
  %s2 = inlined_call_operand.vmem [shape: bf16[256,128], index: 2, kind: output, shape index: {0}]
  %s3 = inlined_call_operand.vmem [shape: f32[1,128], index: 3, kind: output, shape index: {1}]
  %s4 = inlined_call_operand.vmem [shape: f32[1,128], index: 4, kind: output, shape index: {2}]
  %s5 = inlined_call_operand.vmem [shape: f32[1,128], index: 5, kind: output, shape index: {3}]
  %s6 = inlined_call_operand.vmem [shape: f32[1,128], index: 6, kind: output, shape index: {4}]
  %7 = xla_tuple %s2, %s3, %s4, %s5, %s6
  %s8 = sld [smem:[#allocation0]]
  $region58: #{graph_res_block_forward.7} parent=0
    _
  %s10 = ssub.s32 1, %s8
  %s11 = scalar_select 0, %s10, %s8
  // Predicated region
  $region2: #{graph_res_block_forward.7} parent=0 // pred_check
    _
  $region3: #{graph_res_block_forward.7} parent=0 // pred_check_branch
    %13 = sbr.rel (0) target = $region5
  $region4: #{graph_res_block_forward.7} parent=0 // pred_region
    _
  $region5: #{graph_res_block_forward.7} parent=0 // pred_fallthru
    _
  // Predicated region
  $region6: #{graph_res_block_forward.7} parent=0 // pred_check
    _
  $region7: #{graph_res_block_forward.7} parent=0 // pred_check_branch
    %15 = sbr.rel (0) target = $region9
  $region8: #{graph_res_block_forward.7} parent=0 // pred_region
    _
  $region9: #{graph_res_block_forward.7} parent=0 // pred_fallthru
    _
  %p17 = scmp.eq.s32.totalorder 0, 0
  // Predicated region
  $region10: #{graph_res_block_forward.7} parent=0 // pred_check
    %p18 = pneg %p17
  $region11: #{graph_res_block_forward.7} parent=0 // pred_check_branch
    %20 = sbr.rel (%p18) target = $region13
  $region12: #{graph_res_block_forward.7} parent=0 // pred_region
    %21 = vst [vmem:[#allocation2] sm:$0x1] 0.0
    %22 = vst [vmem:[#allocation3] sm:$0x1] 0.0
    %23 = vst [vmem:[#allocation4] sm:$0x1] 0.0
    %24 = vst [vmem:[#allocation5] sm:$0x1] 0.0
  $region13: #{graph_res_block_forward.7} parent=0 // pred_fallthru
    _
  %v25 = vld [vmem:[%s0] sm:$0xff]
  %v26 = vld [vmem:[%s0 + $0x8] sm:$0xff]
  %v27 = vld [vmem:[%s0 + $0x10] sm:$0xff]
  %v28 = vld [vmem:[%s0 + $0x18] sm:$0xff]
  %v29 = vld [vmem:[%s0 + $0x20] sm:$0xff]
  %v30 = vld [vmem:[%s0 + $0x28] sm:$0xff]
  %v31 = vld [vmem:[%s0 + $0x30] sm:$0xff]
  %v32 = vld [vmem:[%s0 + $0x38] sm:$0xff]
  %v33 = vld [vmem:[%s0 + $0x40] sm:$0xff]
  %v34 = vld [vmem:[%s0 + $0x48] sm:$0xff]
  %v35 = vld [vmem:[%s0 + $0x50] sm:$0xff]
  %v36 = vld [vmem:[%s0 + $0x58] sm:$0xff]
  %v37 = vld [vmem:[%s0 + $0x60] sm:$0xff]
  %v38 = vld [vmem:[%s0 + $0x68] sm:$0xff]
  %v39 = vld [vmem:[%s0 + $0x70] sm:$0xff]
  %v40 = vld [vmem:[%s0 + $0x78] sm:$0xff]
  %v41 = vld [vmem:[%s0 + $0x80] sm:$0xff]
  %v42 = vld [vmem:[%s0 + $0x88] sm:$0xff]
  %v43 = vld [vmem:[%s0 + $0x90] sm:$0xff]
  %v44 = vld [vmem:[%s0 + $0x98] sm:$0xff]
  %v45 = vld [vmem:[%s0 + $0xa0] sm:$0xff]
  %v46 = vld [vmem:[%s0 + $0xa8] sm:$0xff]
  %v47 = vld [vmem:[%s0 + $0xb0] sm:$0xff]
  %v48 = vld [vmem:[%s0 + $0xb8] sm:$0xff]
  %v49 = vld [vmem:[%s0 + $0xc0] sm:$0xff]
  %v50 = vld [vmem:[%s0 + $0xc8] sm:$0xff]
  %v51 = vld [vmem:[%s0 + $0xd0] sm:$0xff]
  %v52 = vld [vmem:[%s0 + $0xd8] sm:$0xff]
  %v53 = vld [vmem:[%s0 + $0xe0] sm:$0xff]
  %v54 = vld [vmem:[%s0 + $0xe8] sm:$0xff]
  %v55 = vld [vmem:[%s0 + $0xf0] sm:$0xff]
  %v56 = vld [vmem:[%s0 + $0xf8] sm:$0xff]
  %v57 = vld [vmem:[#allocation2] sm:$0x1]
  %v58 = vadd.f32 %v25, %v26
  %v59 = vadd.f32 %v58, %v27
  %v60 = vadd.f32 %v59, %v28
  %v61 = vadd.f32 %v60, %v29
  %v62 = vadd.f32 %v61, %v30
  %v63 = vadd.f32 %v62, %v31
  %v64 = vadd.f32 %v63, %v32
  %v65 = vadd.f32 %v64, %v33
  %v66 = vadd.f32 %v65, %v34
  %v67 = vadd.f32 %v66, %v35
  %v68 = vadd.f32 %v67, %v36
  %v69 = vadd.f32 %v68, %v37
  %v70 = vadd.f32 %v69, %v38
  %v71 = vadd.f32 %v70, %v39
  %v72 = vadd.f32 %v71, %v40
  %v73 = vadd.f32 %v72, %v41
  %v74 = vadd.f32 %v73, %v42
  %v75 = vadd.f32 %v74, %v43
  %v76 = vadd.f32 %v75, %v44
  %v77 = vadd.f32 %v76, %v45
  %v78 = vadd.f32 %v77, %v46
  %v79 = vadd.f32 %v78, %v47
  %v80 = vadd.f32 %v79, %v48
  %v81 = vadd.f32 %v80, %v49
  %v82 = vadd.f32 %v81, %v50
  %v83 = vadd.f32 %v82, %v51
  %v84 = vadd.f32 %v83, %v52
  %v85 = vadd.f32 %v84, %v53
  %v86 = vadd.f32 %v85, %v54
  %v87 = vadd.f32 %v86, %v55
  %v88 = vadd.f32 %v87, %v56
  %v89 = vrot.slane %v88, 4
  %v90 = vadd.f32 %v88, %v89
  %v91 = vrot.slane %v90, 2
  %v92 = vadd.f32 %v90, %v91
  %v93 = vrot.slane %v92, 1
  %v94 = vadd.f32 %v92, %v93
  %v95 = vadd.f32 %v57, %v94
  %96 = vst [vmem:[#allocation2] sm:$0x1] %v95
  %v97 = vld [vmem:[#allocation3] sm:$0x1]
  %v98 = vmul.f32 %v25, %v25
  %v99 = vmul.f32 %v26, %v26
  %v100 = vmul.f32 %v27, %v27
  %v101 = vmul.f32 %v28, %v28
  %v102 = vmul.f32 %v29, %v29
  %v103 = vmul.f32 %v30, %v30
  %v104 = vmul.f32 %v31, %v31
  %v105 = vmul.f32 %v32, %v32
  %v106 = vmul.f32 %v33, %v33
  %v107 = vmul.f32 %v34, %v34
  %v108 = vmul.f32 %v35, %v35
  %v109 = vmul.f32 %v36, %v36
  %v110 = vmul.f32 %v37, %v37
  %v111 = vmul.f32 %v38, %v38
  %v112 = vmul.f32 %v39, %v39
  %v113 = vmul.f32 %v40, %v40
  %v114 = vmul.f32 %v41, %v41
  %v115 = vmul.f32 %v42, %v42
  %v116 = vmul.f32 %v43, %v43
  %v117 = vmul.f32 %v44, %v44
  %v118 = vmul.f32 %v45, %v45
  %v119 = vmul.f32 %v46, %v46
  %v120 = vmul.f32 %v47, %v47
  %v121 = vmul.f32 %v48, %v48
  %v122 = vmul.f32 %v49, %v49
  %v123 = vmul.f32 %v50, %v50
  %v124 = vmul.f32 %v51, %v51
  %v125 = vmul.f32 %v52, %v52
  %v126 = vmul.f32 %v53, %v53
  %v127 = vmul.f32 %v54, %v54
  %v128 = vmul.f32 %v55, %v55
  %v129 = vmul.f32 %v56, %v56
  %v130 = vadd.f32 %v98, %v99
  %v131 = vadd.f32 %v130, %v100
  %v132 = vadd.f32 %v131, %v101
  %v133 = vadd.f32 %v132, %v102
  %v134 = vadd.f32 %v133, %v103
  %v135 = vadd.f32 %v134, %v104
  %v136 = vadd.f32 %v135, %v105
  %v137 = vadd.f32 %v136, %v106
  %v138 = vadd.f32 %v137, %v107
  %v139 = vadd.f32 %v138, %v108
  %v140 = vadd.f32 %v139, %v109
  %v141 = vadd.f32 %v140, %v110
  %v142 = vadd.f32 %v141, %v111
  %v143 = vadd.f32 %v142, %v112
  %v144 = vadd.f32 %v143, %v113
  %v145 = vadd.f32 %v144, %v114
  %v146 = vadd.f32 %v145, %v115
  %v147 = vadd.f32 %v146, %v116
  %v148 = vadd.f32 %v147, %v117
  %v149 = vadd.f32 %v148, %v118
  %v150 = vadd.f32 %v149, %v119
  %v151 = vadd.f32 %v150, %v120
  %v152 = vadd.f32 %v151, %v121
  %v153 = vadd.f32 %v152, %v122
  %v154 = vadd.f32 %v153, %v123
  %v155 = vadd.f32 %v154, %v124
  %v156 = vadd.f32 %v155, %v125
  %v157 = vadd.f32 %v156, %v126
  %v158 = vadd.f32 %v157, %v127
  %v159 = vadd.f32 %v158, %v128
  %v160 = vadd.f32 %v159, %v129
  %v161 = vrot.slane %v160, 4
  %v162 = vadd.f32 %v160, %v161
  %v163 = vrot.slane %v162, 2
  %v164 = vadd.f32 %v162, %v163
  %v165 = vrot.slane %v164, 1
  %v166 = vadd.f32 %v164, %v165
  %v167 = vadd.f32 %v97, %v166
  %168 = vst [vmem:[#allocation3] sm:$0x1] %v167
  %v169 = vpack.c.bf16 %v26, %v25
  %v170 = vpack.c.bf16 %v28, %v27
  %v171 = vpack.c.bf16 %v30, %v29
  %v172 = vpack.c.bf16 %v32, %v31
  %v173 = vpack.c.bf16 %v34, %v33
  %v174 = vpack.c.bf16 %v36, %v35
  %v175 = vpack.c.bf16 %v38, %v37
  %v176 = vpack.c.bf16 %v40, %v39
  %v177 = vpack.c.bf16 %v42, %v41
  %v178 = vpack.c.bf16 %v44, %v43
  %v179 = vpack.c.bf16 %v46, %v45
  %v180 = vpack.c.bf16 %v48, %v47
  %v181 = vpack.c.bf16 %v50, %v49
  %v182 = vpack.c.bf16 %v52, %v51
  %v183 = vpack.c.bf16 %v54, %v53
  %v184 = vpack.c.bf16 %v56, %v55
  %v185 = vld [vmem:[%s1] sm:$0xf]
  %v186 = vld [vmem:[%s1 + $0x4] sm:$0xf]
  %v187 = vld [vmem:[%s1 + $0x8] sm:$0xf]
  %v188 = vld [vmem:[%s1 + $0xc] sm:$0xf]
  %v189 = vld [vmem:[%s1 + $0x10] sm:$0xf]
  %v190 = vld [vmem:[%s1 + $0x14] sm:$0xf]
  %v191 = vld [vmem:[%s1 + $0x18] sm:$0xf]
  %v192 = vld [vmem:[%s1 + $0x1c] sm:$0xf]
  %v193 = vld [vmem:[%s1 + $0x20] sm:$0xf]
  %v194 = vld [vmem:[%s1 + $0x24] sm:$0xf]
  %v195 = vld [vmem:[%s1 + $0x28] sm:$0xf]
  %v196 = vld [vmem:[%s1 + $0x2c] sm:$0xf]
  %v197 = vld [vmem:[%s1 + $0x30] sm:$0xf]
  %v198 = vld [vmem:[%s1 + $0x34] sm:$0xf]
  %v199 = vld [vmem:[%s1 + $0x38] sm:$0xf]
  %v200 = vld [vmem:[%s1 + $0x3c] sm:$0xf]
  %v217 = vunpack.c.l.b16 %v185
  %v218 = vunpack.c.l.b16 %v186
  %v219 = vunpack.c.l.b16 %v187
  %v220 = vunpack.c.l.b16 %v188
  %v221 = vunpack.c.l.b16 %v189
  %v222 = vunpack.c.l.b16 %v190
  %v223 = vunpack.c.l.b16 %v191
  %v224 = vunpack.c.l.b16 %v192
  %v225 = vunpack.c.l.b16 %v193
  %v226 = vunpack.c.l.b16 %v194
  %v227 = vunpack.c.l.b16 %v195
  %v228 = vunpack.c.l.b16 %v196
  %v229 = vunpack.c.l.b16 %v197
  %v230 = vunpack.c.l.b16 %v198
  %v231 = vunpack.c.l.b16 %v199
  %v232 = vunpack.c.l.b16 %v200
  %v233 = vpack.c.b16 %v218, %v217
  %v234 = vpack.c.b16 %v220, %v219
  %v235 = vpack.c.b16 %v222, %v221
  %v236 = vpack.c.b16 %v224, %v223
  %v237 = vpack.c.b16 %v226, %v225
  %v238 = vpack.c.b16 %v228, %v227
  %v239 = vpack.c.b16 %v230, %v229
  %v240 = vpack.c.b16 %v232, %v231
  %249 = vmatprep.subr.bf16.mxu0 0
  %250 = vmatpush1.bf16.msra.mxu0 %v233
  %251 = vmatprep.subr.bf16.mxu0 0
  %252 = vmatpush1.bf16.msra.mxu0 %v234
  %253 = vmatprep.subr.bf16.mxu0 0
  %254 = vmatpush1.bf16.msra.mxu0 %v235
  %255 = vmatprep.subr.bf16.mxu0 0
  %256 = vmatpush1.bf16.msra.mxu0 %v236
  %257 = vmatprep.subr.bf16.mxu0 0
  %258 = vmatpush1.bf16.msra.mxu0 %v237
  %259 = vmatprep.subr.bf16.mxu0 0
  %260 = vmatpush1.bf16.msra.mxu0 %v238
  %261 = vmatprep.subr.bf16.mxu0 0
  %262 = vmatpush1.bf16.msra.mxu0 %v239
  %263 = vmatprep.subr.bf16.mxu0 0
  %264 = vmatpush1.bf16.msra.mxu0 %v240
  %265 = vmatprep.subr.bf16.mxu0 0
  %266 = vmatpush1.bf16.msra.mxu0 0
  %267 = vmatprep.subr.bf16.mxu0 0
  %268 = vmatpush1.bf16.msra.mxu0 0
  %269 = vmatprep.subr.bf16.mxu0 0
  %270 = vmatpush1.bf16.msra.mxu0 0
  %271 = vmatprep.subr.bf16.mxu0 0
  %272 = vmatpush1.bf16.msra.mxu0 0
  %273 = vmatprep.subr.bf16.mxu0 0
  %274 = vmatpush1.bf16.msra.mxu0 0
  %275 = vmatprep.subr.bf16.mxu0 0
  %276 = vmatpush1.bf16.msra.mxu0 0
  %277 = vmatprep.subr.bf16.mxu0 0
  %278 = vmatpush1.bf16.msra.mxu0 0
  %279 = vmatprep.subr.bf16.mxu0 0
  %280 = vmatpush1.bf16.msra.mxu0 0
  %281 = vmatprep.mubr.bf16.mxu0 0
  %282 = vmatmul.mubr.bf16.gmra.mrb[0].mxu0 %v169
  %v283 = vpop.f32.mrb[0].mxu0
  %v284 = vadd.f32 0.0, %v283
  %v285 = vpop.f32.mrb[0].mxu0
  %v286 = vpop.f32.mrb[0].mxu0
  %v287 = vadd.f32 0.0, %v286
  %v288 = vpop.f32.mrb[0].mxu0
  %289 = vmatprep.mubr.bf16.mxu0 0
  %290 = vmatmul.mubr.bf16.gmra.mrb[0].mxu0 %v170
  %v291 = vpop.f32.mrb[0].mxu0
  %v292 = vadd.f32 0.0, %v291
  %v293 = vpop.f32.mrb[0].mxu0
  %v294 = vpop.f32.mrb[0].mxu0
  %v295 = vadd.f32 0.0, %v294
  %v296 = vpop.f32.mrb[0].mxu0
  %297 = vmatprep.mubr.bf16.mxu0 0
  %298 = vmatmul.mubr.bf16.gmra.mrb[0].mxu0 %v171
  %v299 = vpop.f32.mrb[0].mxu0
  %v300 = vadd.f32 0.0, %v299
  %v301 = vpop.f32.mrb[0].mxu0
  %v302 = vpop.f32.mrb[0].mxu0
  %v303 = vadd.f32 0.0, %v302
  %v304 = vpop.f32.mrb[0].mxu0
  %305 = vmatprep.mubr.bf16.mxu0 0
  %306 = vmatmul.mubr.bf16.gmra.mrb[0].mxu0 %v172
  %v307 = vpop.f32.mrb[0].mxu0
  %v308 = vadd.f32 0.0, %v307
  %v309 = vpop.f32.mrb[0].mxu0
  %v310 = vpop.f32.mrb[0].mxu0
  %v311 = vadd.f32 0.0, %v310
  %v312 = vpop.f32.mrb[0].mxu0
  %313 = vmatprep.mubr.bf16.mxu0 0
  %314 = vmatmul.mubr.bf16.gmra.mrb[0].mxu0 %v173
  %v315 = vpop.f32.mrb[0].mxu0
  %v316 = vadd.f32 0.0, %v315
  %v317 = vpop.f32.mrb[0].mxu0
  %v318 = vpop.f32.mrb[0].mxu0
  %v319 = vadd.f32 0.0, %v318
  %v320 = vpop.f32.mrb[0].mxu0
  %321 = vmatprep.mubr.bf16.mxu0 0
  %322 = vmatmul.mubr.bf16.gmra.mrb[0].mxu0 %v174
  %v323 = vpop.f32.mrb[0].mxu0
  %v324 = vadd.f32 0.0, %v323
  %v325 = vpop.f32.mrb[0].mxu0
  %v326 = vpop.f32.mrb[0].mxu0
  %v327 = vadd.f32 0.0, %v326
  %v328 = vpop.f32.mrb[0].mxu0
  %329 = vmatprep.mubr.bf16.mxu0 0
  %330 = vmatmul.mubr.bf16.gmra.mrb[0].mxu0 %v175
  %v331 = vpop.f32.mrb[0].mxu0
  %v332 = vadd.f32 0.0, %v331
  %v333 = vpop.f32.mrb[0].mxu0
  %v334 = vpop.f32.mrb[0].mxu0
  %v335 = vadd.f32 0.0, %v334
  %v336 = vpop.f32.mrb[0].mxu0
  %337 = vmatprep.mubr.bf16.mxu0 0
  %338 = vmatmul.mubr.bf16.gmra.mrb[0].mxu0 %v176
  %v339 = vpop.f32.mrb[0].mxu0
  %v340 = vadd.f32 0.0, %v339
  %v341 = vpop.f32.mrb[0].mxu0
  %v342 = vpop.f32.mrb[0].mxu0
  %v343 = vadd.f32 0.0, %v342
  %v344 = vpop.f32.mrb[0].mxu0
  %345 = vmatprep.mubr.bf16.mxu0 0
  %346 = vmatmul.mubr.bf16.gmra.mrb[0].mxu0 %v177
  %v347 = vpop.f32.mrb[0].mxu0
  %v348 = vadd.f32 0.0, %v347
  %v349 = vpop.f32.mrb[0].mxu0
  %v350 = vpop.f32.mrb[0].mxu0
  %v351 = vadd.f32 0.0, %v350
  %v352 = vpop.f32.mrb[0].mxu0
  %353 = vmatprep.mubr.bf16.mxu0 0
  %354 = vmatmul.mubr.bf16.gmra.mrb[0].mxu0 %v178
  %v355 = vpop.f32.mrb[0].mxu0
  %v356 = vadd.f32 0.0, %v355
  %v357 = vpop.f32.mrb[0].mxu0
  %v358 = vpop.f32.mrb[0].mxu0
  %v359 = vadd.f32 0.0, %v358
  %v360 = vpop.f32.mrb[0].mxu0
  %361 = vmatprep.mubr.bf16.mxu0 0
  %362 = vmatmul.mubr.bf16.gmra.mrb[0].mxu0 %v179
  %v363 = vpop.f32.mrb[0].mxu0
  %v364 = vadd.f32 0.0, %v363
  %v365 = vpop.f32.mrb[0].mxu0
  %v366 = vpop.f32.mrb[0].mxu0
  %v367 = vadd.f32 0.0, %v366
  %v368 = vpop.f32.mrb[0].mxu0
  %369 = vmatprep.mubr.bf16.mxu0 0
  %370 = vmatmul.mubr.bf16.gmra.mrb[0].mxu0 %v180
  %v371 = vpop.f32.mrb[0].mxu0
  %v372 = vadd.f32 0.0, %v371
  %v373 = vpop.f32.mrb[0].mxu0
  %v374 = vpop.f32.mrb[0].mxu0
  %v375 = vadd.f32 0.0, %v374
  %v376 = vpop.f32.mrb[0].mxu0
  %377 = vmatprep.mubr.bf16.mxu0 0
  %378 = vmatmul.mubr.bf16.gmra.mrb[0].mxu0 %v181
  %v379 = vpop.f32.mrb[0].mxu0
  %v380 = vadd.f32 0.0, %v379
  %v381 = vpop.f32.mrb[0].mxu0
  %v382 = vpop.f32.mrb[0].mxu0
  %v383 = vadd.f32 0.0, %v382
  %v384 = vpop.f32.mrb[0].mxu0
  %385 = vmatprep.mubr.bf16.mxu0 0
  %386 = vmatmul.mubr.bf16.gmra.mrb[0].mxu0 %v182
  %v387 = vpop.f32.mrb[0].mxu0
  %v388 = vadd.f32 0.0, %v387
  %v389 = vpop.f32.mrb[0].mxu0
  %v390 = vpop.f32.mrb[0].mxu0
  %v391 = vadd.f32 0.0, %v390
  %v392 = vpop.f32.mrb[0].mxu0
  %393 = vmatprep.mubr.bf16.mxu0 0
  %394 = vmatmul.mubr.bf16.gmra.mrb[0].mxu0 %v183
  %v395 = vpop.f32.mrb[0].mxu0
  %v396 = vadd.f32 0.0, %v395
  %v397 = vpop.f32.mrb[0].mxu0
  %v398 = vpop.f32.mrb[0].mxu0
  %v399 = vadd.f32 0.0, %v398
  %v400 = vpop.f32.mrb[0].mxu0
  %401 = vmatprep.mubr.bf16.mxu0 0
  %402 = vmatmul.mubr.bf16.gmra.mrb[0].mxu0 %v184
  %v403 = vpop.f32.mrb[0].mxu0
  %v404 = vadd.f32 0.0, %v403
  %v405 = vpop.f32.mrb[0].mxu0
  %v406 = vpop.f32.mrb[0].mxu0
  %v407 = vadd.f32 0.0, %v406
  %v408 = vpop.f32.mrb[0].mxu0
  %409 = vdwg.mxu0
  %v410 = vpack.c.bf16 %v287, %v284
  %v411 = vpack.c.bf16 %v295, %v292
  %v412 = vpack.c.bf16 %v303, %v300
  %v413 = vpack.c.bf16 %v311, %v308
  %v414 = vpack.c.bf16 %v319, %v316
  %v415 = vpack.c.bf16 %v327, %v324
  %v416 = vpack.c.bf16 %v335, %v332
  %v417 = vpack.c.bf16 %v343, %v340
  %v418 = vpack.c.bf16 %v351, %v348
  %v419 = vpack.c.bf16 %v359, %v356
  %v420 = vpack.c.bf16 %v367, %v364
  %v421 = vpack.c.bf16 %v375, %v372
  %v422 = vpack.c.bf16 %v383, %v380
  %v423 = vpack.c.bf16 %v391, %v388
  %v424 = vpack.c.bf16 %v399, %v396
  %v425 = vpack.c.bf16 %v407, %v404
  %v442 = vunpack.c.l.b16 %v410
  %v443 = vunpack.c.h.b16 %v410
  %v444 = vunpack.c.l.b16 %v411
  %v445 = vunpack.c.h.b16 %v411
  %v446 = vunpack.c.l.b16 %v412
  %v447 = vunpack.c.h.b16 %v412
  %v448 = vunpack.c.l.b16 %v413
  %v449 = vunpack.c.h.b16 %v413
  %v450 = vunpack.c.l.b16 %v414
  %v451 = vunpack.c.h.b16 %v414
  %v452 = vunpack.c.l.b16 %v415
  %v453 = vunpack.c.h.b16 %v415
  %v454 = vunpack.c.l.b16 %v416
  %v455 = vunpack.c.h.b16 %v416
  %v456 = vunpack.c.l.b16 %v417
  %v457 = vunpack.c.h.b16 %v417
  %v458 = vunpack.c.l.b16 %v418
  %v459 = vunpack.c.h.b16 %v418
  %v460 = vunpack.c.l.b16 %v419
  %v461 = vunpack.c.h.b16 %v419
  %v462 = vunpack.c.l.b16 %v420
  %v463 = vunpack.c.h.b16 %v420
  %v464 = vunpack.c.l.b16 %v421
  %v465 = vunpack.c.h.b16 %v421
  %v466 = vunpack.c.l.b16 %v422
  %v467 = vunpack.c.h.b16 %v422
  %v468 = vunpack.c.l.b16 %v423
  %v469 = vunpack.c.h.b16 %v423
  %v470 = vunpack.c.l.b16 %v424
  %v471 = vunpack.c.h.b16 %v424
  %v472 = vunpack.c.l.b16 %v425
  %v473 = vunpack.c.h.b16 %v425
  %v474 = vpack.c.b16 %v442, %v442
  %v475 = vpack.c.b16 %v443, %v443
  %v476 = vpack.c.b16 %v444, %v444
  %v477 = vpack.c.b16 %v445, %v445
  %v478 = vpack.c.b16 %v446, %v446
  %v479 = vpack.c.b16 %v447, %v447
  %v480 = vpack.c.b16 %v448, %v448
  %v481 = vpack.c.b16 %v449, %v449
  %v482 = vpack.c.b16 %v450, %v450
  %v483 = vpack.c.b16 %v451, %v451
  %v484 = vpack.c.b16 %v452, %v452
  %v485 = vpack.c.b16 %v453, %v453
  %v486 = vpack.c.b16 %v454, %v454
  %v487 = vpack.c.b16 %v455, %v455
  %v488 = vpack.c.b16 %v456, %v456
  %v489 = vpack.c.b16 %v457, %v457
  %v490 = vpack.c.b16 %v458, %v458
  %v491 = vpack.c.b16 %v459, %v459
  %v492 = vpack.c.b16 %v460, %v460
  %v493 = vpack.c.b16 %v461, %v461
  %v494 = vpack.c.b16 %v462, %v462
  %v495 = vpack.c.b16 %v463, %v463
  %v496 = vpack.c.b16 %v464, %v464
  %v497 = vpack.c.b16 %v465, %v465
  %v498 = vpack.c.b16 %v466, %v466
  %v499 = vpack.c.b16 %v467, %v467
  %v500 = vpack.c.b16 %v468, %v468
  %v501 = vpack.c.b16 %v469, %v469
  %v502 = vpack.c.b16 %v470, %v470
  %v503 = vpack.c.b16 %v471, %v471
  %v504 = vpack.c.b16 %v472, %v472
  %v505 = vpack.c.b16 %v473, %v473
  %538 = vst [vmem:[%s2] sm:$0xf] %v474
  %539 = vst [vmem:[%s2 + $0x4] sm:$0xf] %v475
  %540 = vst [vmem:[%s2 + $0x8] sm:$0xf] %v476
  %541 = vst [vmem:[%s2 + $0xc] sm:$0xf] %v477
  %542 = vst [vmem:[%s2 + $0x10] sm:$0xf] %v478
  %543 = vst [vmem:[%s2 + $0x14] sm:$0xf] %v479
  %544 = vst [vmem:[%s2 + $0x18] sm:$0xf] %v480
  %545 = vst [vmem:[%s2 + $0x1c] sm:$0xf] %v481
  %546 = vst [vmem:[%s2 + $0x20] sm:$0xf] %v482
  %547 = vst [vmem:[%s2 + $0x24] sm:$0xf] %v483
  %548 = vst [vmem:[%s2 + $0x28] sm:$0xf] %v484
  %549 = vst [vmem:[%s2 + $0x2c] sm:$0xf] %v485
  %550 = vst [vmem:[%s2 + $0x30] sm:$0xf] %v486
  %551 = vst [vmem:[%s2 + $0x34] sm:$0xf] %v487
  %552 = vst [vmem:[%s2 + $0x38] sm:$0xf] %v488
  %553 = vst [vmem:[%s2 + $0x3c] sm:$0xf] %v489
  %554 = vst [vmem:[%s2 + $0x40] sm:$0xf] %v490
  %555 = vst [vmem:[%s2 + $0x44] sm:$0xf] %v491
  %556 = vst [vmem:[%s2 + $0x48] sm:$0xf] %v492
  %557 = vst [vmem:[%s2 + $0x4c] sm:$0xf] %v493
  %558 = vst [vmem:[%s2 + $0x50] sm:$0xf] %v494
  %559 = vst [vmem:[%s2 + $0x54] sm:$0xf] %v495
  %560 = vst [vmem:[%s2 + $0x58] sm:$0xf] %v496
  %561 = vst [vmem:[%s2 + $0x5c] sm:$0xf] %v497
  %562 = vst [vmem:[%s2 + $0x60] sm:$0xf] %v498
  %563 = vst [vmem:[%s2 + $0x64] sm:$0xf] %v499
  %564 = vst [vmem:[%s2 + $0x68] sm:$0xf] %v500
  %565 = vst [vmem:[%s2 + $0x6c] sm:$0xf] %v501
  %566 = vst [vmem:[%s2 + $0x70] sm:$0xf] %v502
  %567 = vst [vmem:[%s2 + $0x74] sm:$0xf] %v503
  %568 = vst [vmem:[%s2 + $0x78] sm:$0xf] %v504
  %569 = vst [vmem:[%s2 + $0x7c] sm:$0xf] %v505
  %v570 = vld [vmem:[#allocation4] sm:$0x1]
  %v571 = vadd.f32 %v284, %v287
  %v572 = vadd.f32 %v571, %v292
  %v573 = vadd.f32 %v572, %v295
  %v574 = vadd.f32 %v573, %v300
  %v575 = vadd.f32 %v574, %v303
  %v576 = vadd.f32 %v575, %v308
  %v577 = vadd.f32 %v576, %v311
  %v578 = vadd.f32 %v577, %v316
  %v579 = vadd.f32 %v578, %v319
  %v580 = vadd.f32 %v579, %v324
  %v581 = vadd.f32 %v580, %v327
  %v582 = vadd.f32 %v581, %v332
  %v583 = vadd.f32 %v582, %v335
  %v584 = vadd.f32 %v583, %v340
  %v585 = vadd.f32 %v584, %v343
  %v586 = vadd.f32 %v585, %v348
  %v587 = vadd.f32 %v586, %v351
  %v588 = vadd.f32 %v587, %v356
  %v589 = vadd.f32 %v588, %v359
  %v590 = vadd.f32 %v589, %v364
  %v591 = vadd.f32 %v590, %v367
  %v592 = vadd.f32 %v591, %v372
  %v593 = vadd.f32 %v592, %v375
  %v594 = vadd.f32 %v593, %v380
  %v595 = vadd.f32 %v594, %v383
  %v596 = vadd.f32 %v595, %v388
  %v597 = vadd.f32 %v596, %v391
  %v598 = vadd.f32 %v597, %v396
  %v599 = vadd.f32 %v598, %v399
  %v600 = vadd.f32 %v599, %v404
  %v601 = vadd.f32 %v600, %v407
  %v602 = vrot.slane %v601, 4
  %v603 = vadd.f32 %v601, %v602
  %v604 = vrot.slane %v603, 2
  %v605 = vadd.f32 %v603, %v604
  %v606 = vrot.slane %v605, 1
  %v607 = vadd.f32 %v605, %v606
  %v608 = vadd.f32 %v570, %v607
  %609 = vst [vmem:[#allocation4] sm:$0x1] %v608
  %v610 = vld [vmem:[#allocation5] sm:$0x1]
  %v611 = vmul.f32 %v284, %v284
  %v612 = vmul.f32 %v287, %v287
  %v613 = vmul.f32 %v292, %v292
  %v614 = vmul.f32 %v295, %v295
  %v615 = vmul.f32 %v300, %v300
  %v616 = vmul.f32 %v303, %v303
  %v617 = vmul.f32 %v308, %v308
  %v618 = vmul.f32 %v311, %v311
  %v619 = vmul.f32 %v316, %v316
  %v620 = vmul.f32 %v319, %v319
  %v621 = vmul.f32 %v324, %v324
  %v622 = vmul.f32 %v327, %v327
  %v623 = vmul.f32 %v332, %v332
  %v624 = vmul.f32 %v335, %v335
  %v625 = vmul.f32 %v340, %v340
  %v626 = vmul.f32 %v343, %v343
  %v627 = vmul.f32 %v348, %v348
  %v628 = vmul.f32 %v351, %v351
  %v629 = vmul.f32 %v356, %v356
  %v630 = vmul.f32 %v359, %v359
  %v631 = vmul.f32 %v364, %v364
  %v632 = vmul.f32 %v367, %v367
  %v633 = vmul.f32 %v372, %v372
  %v634 = vmul.f32 %v375, %v375
  %v635 = vmul.f32 %v380, %v380
  %v636 = vmul.f32 %v383, %v383
  %v637 = vmul.f32 %v388, %v388
  %v638 = vmul.f32 %v391, %v391
  %v639 = vmul.f32 %v396, %v396
  %v640 = vmul.f32 %v399, %v399
  %v641 = vmul.f32 %v404, %v404
  %v642 = vmul.f32 %v407, %v407
  %v643 = vadd.f32 %v611, %v612
  %v644 = vadd.f32 %v643, %v613
  %v645 = vadd.f32 %v644, %v614
  %v646 = vadd.f32 %v645, %v615
  %v647 = vadd.f32 %v646, %v616
  %v648 = vadd.f32 %v647, %v617
  %v649 = vadd.f32 %v648, %v618
  %v650 = vadd.f32 %v649, %v619
  %v651 = vadd.f32 %v650, %v620
  %v652 = vadd.f32 %v651, %v621
  %v653 = vadd.f32 %v652, %v622
  %v654 = vadd.f32 %v653, %v623
  %v655 = vadd.f32 %v654, %v624
  %v656 = vadd.f32 %v655, %v625
  %v657 = vadd.f32 %v656, %v626
  %v658 = vadd.f32 %v657, %v627
  %v659 = vadd.f32 %v658, %v628
  %v660 = vadd.f32 %v659, %v629
  %v661 = vadd.f32 %v660, %v630
  %v662 = vadd.f32 %v661, %v631
  %v663 = vadd.f32 %v662, %v632
  %v664 = vadd.f32 %v663, %v633
  %v665 = vadd.f32 %v664, %v634
  %v666 = vadd.f32 %v665, %v635
  %v667 = vadd.f32 %v666, %v636
  %v668 = vadd.f32 %v667, %v637
  %v669 = vadd.f32 %v668, %v638
  %v670 = vadd.f32 %v669, %v639
  %v671 = vadd.f32 %v670, %v640
  %v672 = vadd.f32 %v671, %v641
  %v673 = vadd.f32 %v672, %v642
  %v674 = vrot.slane %v673, 4
  %v675 = vadd.f32 %v673, %v674
  %v676 = vrot.slane %v675, 2
  %v677 = vadd.f32 %v675, %v676
  %v678 = vrot.slane %v677, 1
  %v679 = vadd.f32 %v677, %v678
  %v680 = vadd.f32 %v610, %v679
  %681 = vst [vmem:[#allocation5] sm:$0x1] %v680
  // Predicated region
  $region14: #{graph_res_block_forward.7} parent=0 // pred_check
    %p682 = pneg %p17
  $region15: #{graph_res_block_forward.7} parent=0 // pred_check_branch
    %684 = sbr.rel (%p682) target = $region17
  $region16: #{graph_res_block_forward.7} parent=0 // pred_region
    %v685 = vld [vmem:[#allocation2] sm:$0x1]
    %v686 = vmul.f32 %v685, 0.00390625
    %687 = vst [vmem:[%s3] sm:$0x1] %v686
    %v688 = vld [vmem:[#allocation3] sm:$0x1]
    %v689 = vmul.f32 %v688, 0.00390625
    %v690 = vmul.f32 %v686, %v686
    %v691 = vsub.f32 %v689, %v690
    %v692 = vmax.f32 %v691, 0.0
    %693 = vst [vmem:[%s4] sm:$0x1] %v692
    %v694 = vld [vmem:[#allocation4] sm:$0x1]
    %v695 = vmul.f32 %v694, 0.00390625
    %696 = vst [vmem:[%s5] sm:$0x1] %v695
    %v697 = vld [vmem:[#allocation5] sm:$0x1]
    %v698 = vmul.f32 %v697, 0.00390625
    %v699 = vmul.f32 %v695, %v695
    %v700 = vsub.f32 %v698, %v699
    %v701 = vmax.f32 %v700, 0.0
    %702 = vst [vmem:[%s6] sm:$0x1] %v701
  $region17: #{graph_res_block_forward.7} parent=0 // pred_fallthru
    _
  // Predicated region
  $region18: #{graph_res_block_forward.7} parent=0 // pred_check
    _
  $region19: #{graph_res_block_forward.7} parent=0 // pred_check_branch
    %704 = sbr.rel (0) target = $region21
  $region20: #{graph_res_block_forward.7} parent=0 // pred_region
    _
  $region21: #{graph_res_block_forward.7} parent=0 // pred_fallthru
    _
  // Predicated region
  $region22: #{graph_res_block_forward.7} parent=0 // pred_check
    _
  $region23: #{graph_res_block_forward.7} parent=0 // pred_check_branch
    %706 = sbr.rel (0) target = $region25
  $region24: #{graph_res_block_forward.7} parent=0 // pred_region
    _
  $region25: #{graph_res_block_forward.7} parent=0 // pred_fallthru
    _
  // Predicated region
  $region26: #{graph_res_block_forward.7} parent=0 // pred_check
    _
  $region27: #{graph_res_block_forward.7} parent=0 // pred_check_branch
    %708 = sbr.rel (0) target = $region29
  $region28: #{graph_res_block_forward.7} parent=0 // pred_region
    _
  $region29: #{graph_res_block_forward.7} parent=0 // pred_fallthru
    _
  // Predicated region
  $region30: #{graph_res_block_forward.7} parent=0 // pred_check
    _
  $region31: #{graph_res_block_forward.7} parent=0 // pred_check_branch
    %710 = sbr.rel (0) target = $region33
  $region32: #{graph_res_block_forward.7} parent=0 // pred_region
    _
  $region33: #{graph_res_block_forward.7} parent=0 // pred_fallthru
    _
  // Predicated region
  $region34: #{graph_res_block_forward.7} parent=0 // pred_check
    _
  $region35: #{graph_res_block_forward.7} parent=0 // pred_check_branch
    %712 = sbr.rel (0) target = $region37
  $region36: #{graph_res_block_forward.7} parent=0 // pred_region
    _
  $region37: #{graph_res_block_forward.7} parent=0 // pred_fallthru
    _
  // Predicated region
  $region38: #{graph_res_block_forward.7} parent=0 // pred_check
    _
  $region39: #{graph_res_block_forward.7} parent=0 // pred_check_branch
    %714 = sbr.rel (0) target = $region41
  $region40: #{graph_res_block_forward.7} parent=0 // pred_region
    _
  $region41: #{graph_res_block_forward.7} parent=0 // pred_fallthru
    _
  // Predicated region
  $region42: #{graph_res_block_forward.7} parent=0 // pred_check
    _
  $region43: #{graph_res_block_forward.7} parent=0 // pred_check_branch
    %716 = sbr.rel (0) target = $region45
  $region44: #{graph_res_block_forward.7} parent=0 // pred_region
    _
  $region45: #{graph_res_block_forward.7} parent=0 // pred_fallthru
    _
  // Predicated region
  $region46: #{graph_res_block_forward.7} parent=0 // pred_check
    _
  $region47: #{graph_res_block_forward.7} parent=0 // pred_check_branch
    %718 = sbr.rel (0) target = $region49
  $region48: #{graph_res_block_forward.7} parent=0 // pred_region
    _
  $region49: #{graph_res_block_forward.7} parent=0 // pred_fallthru
    _
  // Predicated region
  $region50: #{graph_res_block_forward.7} parent=0 // pred_check
    _
  $region51: #{graph_res_block_forward.7} parent=0 // pred_check_branch
    %720 = sbr.rel (0) target = $region53
  $region52: #{graph_res_block_forward.7} parent=0 // pred_region
    _
  $region53: #{graph_res_block_forward.7} parent=0 // pred_fallthru
    _
  // Predicated region
  $region54: #{graph_res_block_forward.7} parent=0 // pred_check
    _
  $region55: #{graph_res_block_forward.7} parent=0 // pred_check_branch
    %722 = sbr.rel (0) target = $region57
  $region56: #{graph_res_block_forward.7} parent=0 // pred_region
    _
  $region57: #{graph_res_block_forward.7} parent=0 // pred_fallthru
    _

// kernel: graph_res_block_forward.8
$region0: #{graph_res_block_forward.8}
  #allocation0 [shape = 'u32[]', space=smem, size = 0x4, offset = 0x4, fixed_abs, tag = 'smem constant byte address 0x4 - core index']
  #allocation1 [shape = 'u32[144,128]{1,0:T(1,128)}', space=vmem, size = 0x12000, scoped, tag = 'internal scratch']
  %s0 = inlined_call_operand.vmem [shape: f32[256,128], index: 0, kind: input, shape index: {}]
  %s1 = inlined_call_operand.vmem [shape: f32[1,128], index: 1, kind: input, shape index: {}]
  %s2 = inlined_call_operand.vmem [shape: f32[1,128], index: 2, kind: input, shape index: {}]
  %s3 = inlined_call_operand.vmem [shape: f32[1,128], index: 3, kind: input, shape index: {}]
  %s4 = inlined_call_operand.vmem [shape: f32[1,128], index: 4, kind: input, shape index: {}]
  %s5 = inlined_call_operand.vmem [shape: bf16[256,128], index: 5, kind: output, shape index: {}]
  %s6 = sld [smem:[#allocation0]]
  $region30: #{graph_res_block_forward.8} parent=0
    _
  %s8 = ssub.s32 1, %s6
  %s9 = scalar_select 0, %s8, %s6
  // Predicated region
  $region2: #{graph_res_block_forward.8} parent=0 // pred_check
    _
  $region3: #{graph_res_block_forward.8} parent=0 // pred_check_branch
    %11 = sbr.rel (0) target = $region5
  $region4: #{graph_res_block_forward.8} parent=0 // pred_region
    _
  $region5: #{graph_res_block_forward.8} parent=0 // pred_fallthru
    _
  // Predicated region
  $region6: #{graph_res_block_forward.8} parent=0 // pred_check
    _
  $region7: #{graph_res_block_forward.8} parent=0 // pred_check_branch
    %13 = sbr.rel (0) target = $region9
  $region8: #{graph_res_block_forward.8} parent=0 // pred_region
    _
  $region9: #{graph_res_block_forward.8} parent=0 // pred_fallthru
    _
  // Predicated region
  $region10: #{graph_res_block_forward.8} parent=0 // pred_check
    _
  $region11: #{graph_res_block_forward.8} parent=0 // pred_check_branch
    %15 = sbr.rel (0) target = $region13
  $region12: #{graph_res_block_forward.8} parent=0 // pred_region
    _
  $region13: #{graph_res_block_forward.8} parent=0 // pred_fallthru
    _
  // Predicated region
  $region14: #{graph_res_block_forward.8} parent=0 // pred_check
    _
  $region15: #{graph_res_block_forward.8} parent=0 // pred_check_branch
    %17 = sbr.rel (0) target = $region17
  $region16: #{graph_res_block_forward.8} parent=0 // pred_region
    _
  $region17: #{graph_res_block_forward.8} parent=0 // pred_fallthru
    _
  // Predicated region
  $region18: #{graph_res_block_forward.8} parent=0 // pred_check
    _
  $region19: #{graph_res_block_forward.8} parent=0 // pred_check_branch
    %19 = sbr.rel (0) target = $region21
  $region20: #{graph_res_block_forward.8} parent=0 // pred_region
    _
  $region21: #{graph_res_block_forward.8} parent=0 // pred_fallthru
    _
  %v20 = vld [vmem:[%s0] sm:$0xff]
  %v21 = vld [vmem:[%s0 + $0x8] sm:$0xff]
  %v22 = vld [vmem:[%s0 + $0x10] sm:$0xff]
  %v23 = vld [vmem:[%s0 + $0x18] sm:$0xff]
  %v24 = vld [vmem:[%s0 + $0x20] sm:$0xff]
  %v25 = vld [vmem:[%s0 + $0x28] sm:$0xff]
  %v26 = vld [vmem:[%s0 + $0x30] sm:$0xff]
  %v27 = vld [vmem:[%s0 + $0x38] sm:$0xff]
  %v28 = vld [vmem:[%s0 + $0x40] sm:$0xff]
  %v29 = vld [vmem:[%s0 + $0x48] sm:$0xff]
  %v30 = vld [vmem:[%s0 + $0x50] sm:$0xff]
  %v31 = vld [vmem:[%s0 + $0x58] sm:$0xff]
  %v32 = vld [vmem:[%s0 + $0x60] sm:$0xff]
  %v33 = vld [vmem:[%s0 + $0x68] sm:$0xff]
  %v34 = vld [vmem:[%s0 + $0x70] sm:$0xff]
  %v35 = vld [vmem:[%s0 + $0x78] sm:$0xff]
  %v36 = vld [vmem:[%s0 + $0x80] sm:$0xff]
  %v37 = vld [vmem:[%s0 + $0x88] sm:$0xff]
  %v38 = vld [vmem:[%s0 + $0x90] sm:$0xff]
  %v39 = vld [vmem:[%s0 + $0x98] sm:$0xff]
  %v40 = vld [vmem:[%s0 + $0xa0] sm:$0xff]
  %v41 = vld [vmem:[%s0 + $0xa8] sm:$0xff]
  %v42 = vld [vmem:[%s0 + $0xb0] sm:$0xff]
  %v43 = vld [vmem:[%s0 + $0xb8] sm:$0xff]
  %v44 = vld [vmem:[%s0 + $0xc0] sm:$0xff]
  %v45 = vld [vmem:[%s0 + $0xc8] sm:$0xff]
  %v46 = vld [vmem:[%s0 + $0xd0] sm:$0xff]
  %v47 = vld [vmem:[%s0 + $0xd8] sm:$0xff]
  %v48 = vld [vmem:[%s0 + $0xe0] sm:$0xff]
  %v49 = vld [vmem:[%s0 + $0xe8] sm:$0xff]
  %v50 = vld [vmem:[%s0 + $0xf0] sm:$0xff]
  %v51 = vld [vmem:[%s0 + $0xf8] sm:$0xff]
  %v52 = vld [vmem:[%s3] sm:$0x1]
  %v53 = vld [vmem:[%s2] sm:$0x1]
  %v54 = vadd.f32 %v53, 1e-05
  %v55 = vrsqrt.pop %v54
  %v56 = vmul.f32 %v52, %v55
  %v57 = vld [vmem:[%s4] sm:$0x1]
  %v58 = vld [vmem:[%s1] sm:$0x1]
  %v59 = vmul.f32 %v58, %v56
  %v60 = vsub.f32 %v57, %v59
  %v62 = vlaneseq
  %v63 = vshrl.u32 %v62, 7
  %v64 = vsub.s32 0, %v63
  %v65 = vrot.slane %v56, %v64
  %v67 = vmul.f32 %v20, %v65
  %v68 = vmul.f32 %v21, %v65
  %v69 = vmul.f32 %v22, %v65
  %v70 = vmul.f32 %v23, %v65
  %v71 = vmul.f32 %v24, %v65
  %v72 = vmul.f32 %v25, %v65
  %v73 = vmul.f32 %v26, %v65
  %v74 = vmul.f32 %v27, %v65
  %v75 = vmul.f32 %v28, %v65
  %v76 = vmul.f32 %v29, %v65
  %v77 = vmul.f32 %v30, %v65
  %v78 = vmul.f32 %v31, %v65
  %v79 = vmul.f32 %v32, %v65
  %v80 = vmul.f32 %v33, %v65
  %v81 = vmul.f32 %v34, %v65
  %v82 = vmul.f32 %v35, %v65
  %v83 = vmul.f32 %v36, %v65
  %v84 = vmul.f32 %v37, %v65
  %v85 = vmul.f32 %v38, %v65
  %v86 = vmul.f32 %v39, %v65
  %v87 = vmul.f32 %v40, %v65
  %v88 = vmul.f32 %v41, %v65
  %v89 = vmul.f32 %v42, %v65
  %v90 = vmul.f32 %v43, %v65
  %v91 = vmul.f32 %v44, %v65
  %v92 = vmul.f32 %v45, %v65
  %v93 = vmul.f32 %v46, %v65
  %v94 = vmul.f32 %v47, %v65
  %v95 = vmul.f32 %v48, %v65
  %v96 = vmul.f32 %v49, %v65
  %v97 = vmul.f32 %v50, %v65
  %v98 = vmul.f32 %v51, %v65
  %v100 = vlaneseq
  %v101 = vshrl.u32 %v100, 7
  %v102 = vsub.s32 0, %v101
  %v103 = vrot.slane %v60, %v102
  %v105 = vadd.f32 %v67, %v103
  %v106 = vadd.f32 %v68, %v103
  %v107 = vadd.f32 %v69, %v103
  %v108 = vadd.f32 %v70, %v103
  %v109 = vadd.f32 %v71, %v103
  %v110 = vadd.f32 %v72, %v103
  %v111 = vadd.f32 %v73, %v103
  %v112 = vadd.f32 %v74, %v103
  %v113 = vadd.f32 %v75, %v103
  %v114 = vadd.f32 %v76, %v103
  %v115 = vadd.f32 %v77, %v103
  %v116 = vadd.f32 %v78, %v103
  %v117 = vadd.f32 %v79, %v103
  %v118 = vadd.f32 %v80, %v103
  %v119 = vadd.f32 %v81, %v103
  %v120 = vadd.f32 %v82, %v103
  %v121 = vadd.f32 %v83, %v103
  %v122 = vadd.f32 %v84, %v103
  %v123 = vadd.f32 %v85, %v103
  %v124 = vadd.f32 %v86, %v103
  %v125 = vadd.f32 %v87, %v103
  %v126 = vadd.f32 %v88, %v103
  %v127 = vadd.f32 %v89, %v103
  %v128 = vadd.f32 %v90, %v103
  %v129 = vadd.f32 %v91, %v103
  %v130 = vadd.f32 %v92, %v103
  %v131 = vadd.f32 %v93, %v103
  %v132 = vadd.f32 %v94, %v103
  %v133 = vadd.f32 %v95, %v103
  %v134 = vadd.f32 %v96, %v103
  %v135 = vadd.f32 %v97, %v103
  %v136 = vadd.f32 %v98, %v103
  %v137 = vsub.f32 0.0, %v105
  %v138 = vsub.f32 0.0, %v106
  %v139 = vsub.f32 0.0, %v107
  %v140 = vsub.f32 0.0, %v108
  %v141 = vsub.f32 0.0, %v109
  %v142 = vsub.f32 0.0, %v110
  %v143 = vsub.f32 0.0, %v111
  %v144 = vsub.f32 0.0, %v112
  %v145 = vsub.f32 0.0, %v113
  %v146 = vsub.f32 0.0, %v114
  %v147 = vsub.f32 0.0, %v115
  %v148 = vsub.f32 0.0, %v116
  %v149 = vsub.f32 0.0, %v117
  %v150 = vsub.f32 0.0, %v118
  %v151 = vsub.f32 0.0, %v119
  %v152 = vsub.f32 0.0, %v120
  %v153 = vsub.f32 0.0, %v121
  %v154 = vsub.f32 0.0, %v122
  %v155 = vsub.f32 0.0, %v123
  %v156 = vsub.f32 0.0, %v124
  %v157 = vsub.f32 0.0, %v125
  %v158 = vsub.f32 0.0, %v126
  %v159 = vsub.f32 0.0, %v127
  %v160 = vsub.f32 0.0, %v128
  %v161 = vsub.f32 0.0, %v129
  %v162 = vsub.f32 0.0, %v130
  %v163 = vsub.f32 0.0, %v131
  %v164 = vsub.f32 0.0, %v132
  %v165 = vsub.f32 0.0, %v133
  %v166 = vsub.f32 0.0, %v134
  %v167 = vsub.f32 0.0, %v135
  %v168 = vsub.f32 0.0, %v136
  %v169 = vmul.f32 %v137, 1.442695
  %v170 = vpow.pop %v169
  %v171 = vmul.f32 %v138, 1.442695
  %v172 = vpow.pop %v171
  %v173 = vmul.f32 %v139, 1.442695
  %v174 = vpow.pop %v173
  %v175 = vmul.f32 %v140, 1.442695
  %v176 = vpow.pop %v175
  %v177 = vmul.f32 %v141, 1.442695
  %v178 = vpow.pop %v177
  %v179 = vmul.f32 %v142, 1.442695
  %v180 = vpow.pop %v179
  %v181 = vmul.f32 %v143, 1.442695
  %v182 = vpow.pop %v181
  %v183 = vmul.f32 %v144, 1.442695
  %v184 = vpow.pop %v183
  %v185 = vmul.f32 %v145, 1.442695
  %v186 = vpow.pop %v185
  %v187 = vmul.f32 %v146, 1.442695
  %v188 = vpow.pop %v187
  %v189 = vmul.f32 %v147, 1.442695
  %v190 = vpow.pop %v189
  %v191 = vmul.f32 %v148, 1.442695
  %v192 = vpow.pop %v191
  %v193 = vmul.f32 %v149, 1.442695
  %v194 = vpow.pop %v193
  %v195 = vmul.f32 %v150, 1.442695
  %v196 = vpow.pop %v195
  %v197 = vmul.f32 %v151, 1.442695
  %v198 = vpow.pop %v197
  %v199 = vmul.f32 %v152, 1.442695
  %v200 = vpow.pop %v199
  %v201 = vmul.f32 %v153, 1.442695
  %v202 = vpow.pop %v201
  %v203 = vmul.f32 %v154, 1.442695
  %v204 = vpow.pop %v203
  %v205 = vmul.f32 %v155, 1.442695
  %v206 = vpow.pop %v205
  %v207 = vmul.f32 %v156, 1.442695
  %v208 = vpow.pop %v207
  %v209 = vmul.f32 %v157, 1.442695
  %v210 = vpow.pop %v209
  %v211 = vmul.f32 %v158, 1.442695
  %v212 = vpow.pop %v211
  %v213 = vmul.f32 %v159, 1.442695
  %v214 = vpow.pop %v213
  %v215 = vmul.f32 %v160, 1.442695
  %v216 = vpow.pop %v215
  %v217 = vmul.f32 %v161, 1.442695
  %v218 = vpow.pop %v217
  %v219 = vmul.f32 %v162, 1.442695
  %v220 = vpow.pop %v219
  %v221 = vmul.f32 %v163, 1.442695
  %v222 = vpow.pop %v221
  %v223 = vmul.f32 %v164, 1.442695
  %v224 = vpow.pop %v223
  %v225 = vmul.f32 %v165, 1.442695
  %v226 = vpow.pop %v225
  %v227 = vmul.f32 %v166, 1.442695
  %v228 = vpow.pop %v227
  %v229 = vmul.f32 %v167, 1.442695
  %v230 = vpow.pop %v229
  %v231 = vmul.f32 %v168, 1.442695
  %v232 = vpow.pop %v231
  %v233 = vadd.f32 %v170, 1.0
  %v234 = vadd.f32 %v172, 1.0
  %v235 = vadd.f32 %v174, 1.0
  %v236 = vadd.f32 %v176, 1.0
  %v237 = vadd.f32 %v178, 1.0
  %v238 = vadd.f32 %v180, 1.0
  %v239 = vadd.f32 %v182, 1.0
  %v240 = vadd.f32 %v184, 1.0
  %v241 = vadd.f32 %v186, 1.0
  %v242 = vadd.f32 %v188, 1.0
  %v243 = vadd.f32 %v190, 1.0
  %v244 = vadd.f32 %v192, 1.0
  %v245 = vadd.f32 %v194, 1.0
  %v246 = vadd.f32 %v196, 1.0
  %v247 = vadd.f32 %v198, 1.0
  %v248 = vadd.f32 %v200, 1.0
  %v249 = vadd.f32 %v202, 1.0
  %v250 = vadd.f32 %v204, 1.0
  %v251 = vadd.f32 %v206, 1.0
  %v252 = vadd.f32 %v208, 1.0
  %v253 = vadd.f32 %v210, 1.0
  %v254 = vadd.f32 %v212, 1.0
  %v255 = vadd.f32 %v214, 1.0
  %v256 = vadd.f32 %v216, 1.0
  %v257 = vadd.f32 %v218, 1.0
  %v258 = vadd.f32 %v220, 1.0
  %v259 = vadd.f32 %v222, 1.0
  %v260 = vadd.f32 %v224, 1.0
  %v261 = vadd.f32 %v226, 1.0
  %v262 = vadd.f32 %v228, 1.0
  %v263 = vadd.f32 %v230, 1.0
  %v264 = vadd.f32 %v232, 1.0
  %v265 = vrcp.pop %v233
  %v266 = vmul.f32 1.0, %v265
  %v267 = vrcp.pop %v234
  %v268 = vmul.f32 1.0, %v267
  %v269 = vrcp.pop %v235
  %v270 = vmul.f32 1.0, %v269
  %v271 = vrcp.pop %v236
  %v272 = vmul.f32 1.0, %v271
  %v273 = vrcp.pop %v237
  %v274 = vmul.f32 1.0, %v273
  %v275 = vrcp.pop %v238
  %v276 = vmul.f32 1.0, %v275
  %v277 = vrcp.pop %v239
  %v278 = vmul.f32 1.0, %v277
  %v279 = vrcp.pop %v240
  %v280 = vmul.f32 1.0, %v279
  %v281 = vrcp.pop %v241
  %v282 = vmul.f32 1.0, %v281
  %v283 = vrcp.pop %v242
  %v284 = vmul.f32 1.0, %v283
  %v285 = vrcp.pop %v243
  %v286 = vmul.f32 1.0, %v285
  %v287 = vrcp.pop %v244
  %v288 = vmul.f32 1.0, %v287
  %v289 = vrcp.pop %v245
  %v290 = vmul.f32 1.0, %v289
  %v291 = vrcp.pop %v246
  %v292 = vmul.f32 1.0, %v291
  %v293 = vrcp.pop %v247
  %v294 = vmul.f32 1.0, %v293
  %v295 = vrcp.pop %v248
  %v296 = vmul.f32 1.0, %v295
  %v297 = vrcp.pop %v249
  %v298 = vmul.f32 1.0, %v297
  %v299 = vrcp.pop %v250
  %v300 = vmul.f32 1.0, %v299
  %v301 = vrcp.pop %v251
  %v302 = vmul.f32 1.0, %v301
  %v303 = vrcp.pop %v252
  %v304 = vmul.f32 1.0, %v303
  %v305 = vrcp.pop %v253
  %v306 = vmul.f32 1.0, %v305
  %v307 = vrcp.pop %v254
  %v308 = vmul.f32 1.0, %v307
  %v309 = vrcp.pop %v255
  %v310 = vmul.f32 1.0, %v309
  %v311 = vrcp.pop %v256
  %v312 = vmul.f32 1.0, %v311
  %v313 = vrcp.pop %v257
  %v314 = vmul.f32 1.0, %v313
  %v315 = vrcp.pop %v258
  %v316 = vmul.f32 1.0, %v315
  %v317 = vrcp.pop %v259
  %v318 = vmul.f32 1.0, %v317
  %v319 = vrcp.pop %v260
  %v320 = vmul.f32 1.0, %v319
  %v321 = vrcp.pop %v261
  %v322 = vmul.f32 1.0, %v321
  %v323 = vrcp.pop %v262
  %v324 = vmul.f32 1.0, %v323
  %v325 = vrcp.pop %v263
  %v326 = vmul.f32 1.0, %v325
  %v327 = vrcp.pop %v264
  %v328 = vmul.f32 1.0, %v327
  %v329 = vmul.f32 %v105, %v266
  %v330 = vmul.f32 %v106, %v268
  %v331 = vmul.f32 %v107, %v270
  %v332 = vmul.f32 %v108, %v272
  %v333 = vmul.f32 %v109, %v274
  %v334 = vmul.f32 %v110, %v276
  %v335 = vmul.f32 %v111, %v278
  %v336 = vmul.f32 %v112, %v280
  %v337 = vmul.f32 %v113, %v282
  %v338 = vmul.f32 %v114, %v284
  %v339 = vmul.f32 %v115, %v286
  %v340 = vmul.f32 %v116, %v288
  %v341 = vmul.f32 %v117, %v290
  %v342 = vmul.f32 %v118, %v292
  %v343 = vmul.f32 %v119, %v294
  %v344 = vmul.f32 %v120, %v296
  %v345 = vmul.f32 %v121, %v298
  %v346 = vmul.f32 %v122, %v300
  %v347 = vmul.f32 %v123, %v302
  %v348 = vmul.f32 %v124, %v304
  %v349 = vmul.f32 %v125, %v306
  %v350 = vmul.f32 %v126, %v308
  %v351 = vmul.f32 %v127, %v310
  %v352 = vmul.f32 %v128, %v312
  %v353 = vmul.f32 %v129, %v314
  %v354 = vmul.f32 %v130, %v316
  %v355 = vmul.f32 %v131, %v318
  %v356 = vmul.f32 %v132, %v320
  %v357 = vmul.f32 %v133, %v322
  %v358 = vmul.f32 %v134, %v324
  %v359 = vmul.f32 %v135, %v326
  %v360 = vmul.f32 %v136, %v328
  %v361 = vpack.c.bf16 %v330, %v329
  %v362 = vpack.c.bf16 %v332, %v331
  %v363 = vpack.c.bf16 %v334, %v333
  %v364 = vpack.c.bf16 %v336, %v335
  %v365 = vpack.c.bf16 %v338, %v337
  %v366 = vpack.c.bf16 %v340, %v339
  %v367 = vpack.c.bf16 %v342, %v341
  %v368 = vpack.c.bf16 %v344, %v343
  %v369 = vpack.c.bf16 %v346, %v345
  %v370 = vpack.c.bf16 %v348, %v347
  %v371 = vpack.c.bf16 %v350, %v349
  %v372 = vpack.c.bf16 %v352, %v351
  %v373 = vpack.c.bf16 %v354, %v353
  %v374 = vpack.c.bf16 %v356, %v355
  %v375 = vpack.c.bf16 %v358, %v357
  %v376 = vpack.c.bf16 %v360, %v359
  %v393 = vunpack.c.l.b16 %v361
  %v394 = vunpack.c.h.b16 %v361
  %v395 = vunpack.c.l.b16 %v362
  %v396 = vunpack.c.h.b16 %v362
  %v397 = vunpack.c.l.b16 %v363
  %v398 = vunpack.c.h.b16 %v363
  %v399 = vunpack.c.l.b16 %v364
  %v400 = vunpack.c.h.b16 %v364
  %v401 = vunpack.c.l.b16 %v365
  %v402 = vunpack.c.h.b16 %v365
  %v403 = vunpack.c.l.b16 %v366
  %v404 = vunpack.c.h.b16 %v366
  %v405 = vunpack.c.l.b16 %v367
  %v406 = vunpack.c.h.b16 %v367
  %v407 = vunpack.c.l.b16 %v368
  %v408 = vunpack.c.h.b16 %v368
  %v409 = vunpack.c.l.b16 %v369
  %v410 = vunpack.c.h.b16 %v369
  %v411 = vunpack.c.l.b16 %v370
  %v412 = vunpack.c.h.b16 %v370
  %v413 = vunpack.c.l.b16 %v371
  %v414 = vunpack.c.h.b16 %v371
  %v415 = vunpack.c.l.b16 %v372
  %v416 = vunpack.c.h.b16 %v372
  %v417 = vunpack.c.l.b16 %v373
  %v418 = vunpack.c.h.b16 %v373
  %v419 = vunpack.c.l.b16 %v374
  %v420 = vunpack.c.h.b16 %v374
  %v421 = vunpack.c.l.b16 %v375
  %v422 = vunpack.c.h.b16 %v375
  %v423 = vunpack.c.l.b16 %v376
  %v424 = vunpack.c.h.b16 %v376
  %v425 = vpack.c.b16 %v393, %v393
  %v426 = vpack.c.b16 %v394, %v394
  %v427 = vpack.c.b16 %v395, %v395
  %v428 = vpack.c.b16 %v396, %v396
  %v429 = vpack.c.b16 %v397, %v397
  %v430 = vpack.c.b16 %v398, %v398
  %v431 = vpack.c.b16 %v399, %v399
  %v432 = vpack.c.b16 %v400, %v400
  %v433 = vpack.c.b16 %v401, %v401
  %v434 = vpack.c.b16 %v402, %v402
  %v435 = vpack.c.b16 %v403, %v403
  %v436 = vpack.c.b16 %v404, %v404
  %v437 = vpack.c.b16 %v405, %v405
  %v438 = vpack.c.b16 %v406, %v406
  %v439 = vpack.c.b16 %v407, %v407
  %v440 = vpack.c.b16 %v408, %v408
  %v441 = vpack.c.b16 %v409, %v409
  %v442 = vpack.c.b16 %v410, %v410
  %v443 = vpack.c.b16 %v411, %v411
  %v444 = vpack.c.b16 %v412, %v412
  %v445 = vpack.c.b16 %v413, %v413
  %v446 = vpack.c.b16 %v414, %v414
  %v447 = vpack.c.b16 %v415, %v415
  %v448 = vpack.c.b16 %v416, %v416
  %v449 = vpack.c.b16 %v417, %v417
  %v450 = vpack.c.b16 %v418, %v418
  %v451 = vpack.c.b16 %v419, %v419
  %v452 = vpack.c.b16 %v420, %v420
  %v453 = vpack.c.b16 %v421, %v421
  %v454 = vpack.c.b16 %v422, %v422
  %v455 = vpack.c.b16 %v423, %v423
  %v456 = vpack.c.b16 %v424, %v424
  %489 = vst [vmem:[%s5] sm:$0xf] %v425
  %490 = vst [vmem:[%s5 + $0x4] sm:$0xf] %v426
  %491 = vst [vmem:[%s5 + $0x8] sm:$0xf] %v427
  %492 = vst [vmem:[%s5 + $0xc] sm:$0xf] %v428
  %493 = vst [vmem:[%s5 + $0x10] sm:$0xf] %v429
  %494 = vst [vmem:[%s5 + $0x14] sm:$0xf] %v430
  %495 = vst [vmem:[%s5 + $0x18] sm:$0xf] %v431
  %496 = vst [vmem:[%s5 + $0x1c] sm:$0xf] %v432
  %497 = vst [vmem:[%s5 + $0x20] sm:$0xf] %v433
  %498 = vst [vmem:[%s5 + $0x24] sm:$0xf] %v434
  %499 = vst [vmem:[%s5 + $0x28] sm:$0xf] %v435
  %500 = vst [vmem:[%s5 + $0x2c] sm:$0xf] %v436
  %501 = vst [vmem:[%s5 + $0x30] sm:$0xf] %v437
  %502 = vst [vmem:[%s5 + $0x34] sm:$0xf] %v438
  %503 = vst [vmem:[%s5 + $0x38] sm:$0xf] %v439
  %504 = vst [vmem:[%s5 + $0x3c] sm:$0xf] %v440
  %505 = vst [vmem:[%s5 + $0x40] sm:$0xf] %v441
  %506 = vst [vmem:[%s5 + $0x44] sm:$0xf] %v442
  %507 = vst [vmem:[%s5 + $0x48] sm:$0xf] %v443
  %508 = vst [vmem:[%s5 + $0x4c] sm:$0xf] %v444
  %509 = vst [vmem:[%s5 + $0x50] sm:$0xf] %v445
  %510 = vst [vmem:[%s5 + $0x54] sm:$0xf] %v446
  %511 = vst [vmem:[%s5 + $0x58] sm:$0xf] %v447
  %512 = vst [vmem:[%s5 + $0x5c] sm:$0xf] %v448
  %513 = vst [vmem:[%s5 + $0x60] sm:$0xf] %v449
  %514 = vst [vmem:[%s5 + $0x64] sm:$0xf] %v450
  %515 = vst [vmem:[%s5 + $0x68] sm:$0xf] %v451
  %516 = vst [vmem:[%s5 + $0x6c] sm:$0xf] %v452
  %517 = vst [vmem:[%s5 + $0x70] sm:$0xf] %v453
  %518 = vst [vmem:[%s5 + $0x74] sm:$0xf] %v454
  %519 = vst [vmem:[%s5 + $0x78] sm:$0xf] %v455
  %520 = vst [vmem:[%s5 + $0x7c] sm:$0xf] %v456
  // Predicated region
  $region22: #{graph_res_block_forward.8} parent=0 // pred_check
    _
  $region23: #{graph_res_block_forward.8} parent=0 // pred_check_branch
    %522 = sbr.rel (0) target = $region25
  $region24: #{graph_res_block_forward.8} parent=0 // pred_region
    _
  $region25: #{graph_res_block_forward.8} parent=0 // pred_fallthru
    _
  // Predicated region
  $region26: #{graph_res_block_forward.8} parent=0 // pred_check
    _
  $region27: #{graph_res_block_forward.8} parent=0 // pred_check_branch
    %524 = sbr.rel (0) target = $region29
  $region28: #{graph_res_block_forward.8} parent=0 // pred_region
    _
  $region29: #{graph_res_block_forward.8} parent=0 // pred_fallthru
    _

// kernel: graph_res_block_forward.10
$region0: #{graph_res_block_forward.10}
  #allocation0 [shape = 'u32[]', space=smem, size = 0x4, offset = 0x4, fixed_abs, tag = 'smem constant byte address 0x4 - core index']
  #allocation1 [shape = 'u32[144,128]{1,0:T(1,128)}', space=vmem, size = 0x12000, scoped, tag = 'internal scratch']
  #allocation2 [shape = 'f32[1,128]{1,0:T(1,128)}', space=vmem, size = 0x200, scoped, tag = 'scratch operand']
  #allocation3 [shape = 'f32[1,128]{1,0:T(1,128)}', space=vmem, size = 0x200, scoped, tag = 'scratch operand']
  %s0 = inlined_call_operand.vmem [shape: bf16[256,128], index: 0, kind: input, shape index: {}]
  %s1 = inlined_call_operand.vmem [shape: f32[1,128], index: 1, kind: output, shape index: {0}]
  %s2 = inlined_call_operand.vmem [shape: f32[1,128], index: 2, kind: output, shape index: {1}]
  %3 = xla_tuple %s1, %s2
  %s4 = sld [smem:[#allocation0]]
  $region30: #{graph_res_block_forward.10} parent=0
    _
  %s6 = ssub.s32 1, %s4
  %s7 = scalar_select 0, %s6, %s4
  // Predicated region
  $region2: #{graph_res_block_forward.10} parent=0 // pred_check
    _
  $region3: #{graph_res_block_forward.10} parent=0 // pred_check_branch
    %9 = sbr.rel (0) target = $region5
  $region4: #{graph_res_block_forward.10} parent=0 // pred_region
    _
  $region5: #{graph_res_block_forward.10} parent=0 // pred_fallthru
    _
  %p10 = scmp.eq.s32.totalorder 0, 0
  // Predicated region
  $region6: #{graph_res_block_forward.10} parent=0 // pred_check
    %p11 = pneg %p10
  $region7: #{graph_res_block_forward.10} parent=0 // pred_check_branch
    %13 = sbr.rel (%p11) target = $region9
  $region8: #{graph_res_block_forward.10} parent=0 // pred_region
    %14 = vst [vmem:[#allocation2] sm:$0x1] 0.0
    %15 = vst [vmem:[#allocation3] sm:$0x1] 0.0
  $region9: #{graph_res_block_forward.10} parent=0 // pred_fallthru
    _
  %v16 = vld [vmem:[%s0] sm:$0xf]
  %v17 = vld [vmem:[%s0 + $0x4] sm:$0xf]
  %v18 = vld [vmem:[%s0 + $0x8] sm:$0xf]
  %v19 = vld [vmem:[%s0 + $0xc] sm:$0xf]
  %v20 = vld [vmem:[%s0 + $0x10] sm:$0xf]
  %v21 = vld [vmem:[%s0 + $0x14] sm:$0xf]
  %v22 = vld [vmem:[%s0 + $0x18] sm:$0xf]
  %v23 = vld [vmem:[%s0 + $0x1c] sm:$0xf]
  %v24 = vld [vmem:[%s0 + $0x20] sm:$0xf]
  %v25 = vld [vmem:[%s0 + $0x24] sm:$0xf]
  %v26 = vld [vmem:[%s0 + $0x28] sm:$0xf]
  %v27 = vld [vmem:[%s0 + $0x2c] sm:$0xf]
  %v28 = vld [vmem:[%s0 + $0x30] sm:$0xf]
  %v29 = vld [vmem:[%s0 + $0x34] sm:$0xf]
  %v30 = vld [vmem:[%s0 + $0x38] sm:$0xf]
  %v31 = vld [vmem:[%s0 + $0x3c] sm:$0xf]
  %v32 = vld [vmem:[%s0 + $0x40] sm:$0xf]
  %v33 = vld [vmem:[%s0 + $0x44] sm:$0xf]
  %v34 = vld [vmem:[%s0 + $0x48] sm:$0xf]
  %v35 = vld [vmem:[%s0 + $0x4c] sm:$0xf]
  %v36 = vld [vmem:[%s0 + $0x50] sm:$0xf]
  %v37 = vld [vmem:[%s0 + $0x54] sm:$0xf]
  %v38 = vld [vmem:[%s0 + $0x58] sm:$0xf]
  %v39 = vld [vmem:[%s0 + $0x5c] sm:$0xf]
  %v40 = vld [vmem:[%s0 + $0x60] sm:$0xf]
  %v41 = vld [vmem:[%s0 + $0x64] sm:$0xf]
  %v42 = vld [vmem:[%s0 + $0x68] sm:$0xf]
  %v43 = vld [vmem:[%s0 + $0x6c] sm:$0xf]
  %v44 = vld [vmem:[%s0 + $0x70] sm:$0xf]
  %v45 = vld [vmem:[%s0 + $0x74] sm:$0xf]
  %v46 = vld [vmem:[%s0 + $0x78] sm:$0xf]
  %v47 = vld [vmem:[%s0 + $0x7c] sm:$0xf]
  %v48 = vunpack.c.l.bf16 %v16
  %v49 = vunpack.c.l.bf16 %v17
  %v50 = vunpack.c.l.bf16 %v18
  %v51 = vunpack.c.l.bf16 %v19
  %v52 = vunpack.c.l.bf16 %v20
  %v53 = vunpack.c.l.bf16 %v21
  %v54 = vunpack.c.l.bf16 %v22
  %v55 = vunpack.c.l.bf16 %v23
  %v56 = vunpack.c.l.bf16 %v24
  %v57 = vunpack.c.l.bf16 %v25
  %v58 = vunpack.c.l.bf16 %v26
  %v59 = vunpack.c.l.bf16 %v27
  %v60 = vunpack.c.l.bf16 %v28
  %v61 = vunpack.c.l.bf16 %v29
  %v62 = vunpack.c.l.bf16 %v30
  %v63 = vunpack.c.l.bf16 %v31
  %v64 = vunpack.c.l.bf16 %v32
  %v65 = vunpack.c.l.bf16 %v33
  %v66 = vunpack.c.l.bf16 %v34
  %v67 = vunpack.c.l.bf16 %v35
  %v68 = vunpack.c.l.bf16 %v36
  %v69 = vunpack.c.l.bf16 %v37
  %v70 = vunpack.c.l.bf16 %v38
  %v71 = vunpack.c.l.bf16 %v39
  %v72 = vunpack.c.l.bf16 %v40
  %v73 = vunpack.c.l.bf16 %v41
  %v74 = vunpack.c.l.bf16 %v42
  %v75 = vunpack.c.l.bf16 %v43
  %v76 = vunpack.c.l.bf16 %v44
  %v77 = vunpack.c.l.bf16 %v45
  %v78 = vunpack.c.l.bf16 %v46
  %v79 = vunpack.c.l.bf16 %v47
  %v80 = vld [vmem:[#allocation2] sm:$0x1]
  %v81 = vadd.f32 %v48, %v49
  %v82 = vadd.f32 %v81, %v50
  %v83 = vadd.f32 %v82, %v51
  %v84 = vadd.f32 %v83, %v52
  %v85 = vadd.f32 %v84, %v53
  %v86 = vadd.f32 %v85, %v54
  %v87 = vadd.f32 %v86, %v55
  %v88 = vadd.f32 %v87, %v56
  %v89 = vadd.f32 %v88, %v57
  %v90 = vadd.f32 %v89, %v58
  %v91 = vadd.f32 %v90, %v59
  %v92 = vadd.f32 %v91, %v60
  %v93 = vadd.f32 %v92, %v61
  %v94 = vadd.f32 %v93, %v62
  %v95 = vadd.f32 %v94, %v63
  %v96 = vadd.f32 %v95, %v64
  %v97 = vadd.f32 %v96, %v65
  %v98 = vadd.f32 %v97, %v66
  %v99 = vadd.f32 %v98, %v67
  %v100 = vadd.f32 %v99, %v68
  %v101 = vadd.f32 %v100, %v69
  %v102 = vadd.f32 %v101, %v70
  %v103 = vadd.f32 %v102, %v71
  %v104 = vadd.f32 %v103, %v72
  %v105 = vadd.f32 %v104, %v73
  %v106 = vadd.f32 %v105, %v74
  %v107 = vadd.f32 %v106, %v75
  %v108 = vadd.f32 %v107, %v76
  %v109 = vadd.f32 %v108, %v77
  %v110 = vadd.f32 %v109, %v78
  %v111 = vadd.f32 %v110, %v79
  %v112 = vrot.slane %v111, 4
  %v113 = vadd.f32 %v111, %v112
  %v114 = vrot.slane %v113, 2
  %v115 = vadd.f32 %v113, %v114
  %v116 = vrot.slane %v115, 1
  %v117 = vadd.f32 %v115, %v116
  %v118 = vadd.f32 %v80, %v117
  %119 = vst [vmem:[#allocation2] sm:$0x1] %v118
  %v120 = vld [vmem:[#allocation3] sm:$0x1]
  %v121 = vmul.f32 %v48, %v48
  %v122 = vmul.f32 %v49, %v49
  %v123 = vmul.f32 %v50, %v50
  %v124 = vmul.f32 %v51, %v51
  %v125 = vmul.f32 %v52, %v52
  %v126 = vmul.f32 %v53, %v53
  %v127 = vmul.f32 %v54, %v54
  %v128 = vmul.f32 %v55, %v55
  %v129 = vmul.f32 %v56, %v56
  %v130 = vmul.f32 %v57, %v57
  %v131 = vmul.f32 %v58, %v58
  %v132 = vmul.f32 %v59, %v59
  %v133 = vmul.f32 %v60, %v60
  %v134 = vmul.f32 %v61, %v61
  %v135 = vmul.f32 %v62, %v62
  %v136 = vmul.f32 %v63, %v63
  %v137 = vmul.f32 %v64, %v64
  %v138 = vmul.f32 %v65, %v65
  %v139 = vmul.f32 %v66, %v66
  %v140 = vmul.f32 %v67, %v67
  %v141 = vmul.f32 %v68, %v68
  %v142 = vmul.f32 %v69, %v69
  %v143 = vmul.f32 %v70, %v70
  %v144 = vmul.f32 %v71, %v71
  %v145 = vmul.f32 %v72, %v72
  %v146 = vmul.f32 %v73, %v73
  %v147 = vmul.f32 %v74, %v74
  %v148 = vmul.f32 %v75, %v75
  %v149 = vmul.f32 %v76, %v76
  %v150 = vmul.f32 %v77, %v77
  %v151 = vmul.f32 %v78, %v78
  %v152 = vmul.f32 %v79, %v79
  %v153 = vadd.f32 %v121, %v122
  %v154 = vadd.f32 %v153, %v123
  %v155 = vadd.f32 %v154, %v124
  %v156 = vadd.f32 %v155, %v125
  %v157 = vadd.f32 %v156, %v126
  %v158 = vadd.f32 %v157, %v127
  %v159 = vadd.f32 %v158, %v128
  %v160 = vadd.f32 %v159, %v129
  %v161 = vadd.f32 %v160, %v130
  %v162 = vadd.f32 %v161, %v131
  %v163 = vadd.f32 %v162, %v132
  %v164 = vadd.f32 %v163, %v133
  %v165 = vadd.f32 %v164, %v134
  %v166 = vadd.f32 %v165, %v135
  %v167 = vadd.f32 %v166, %v136
  %v168 = vadd.f32 %v167, %v137
  %v169 = vadd.f32 %v168, %v138
  %v170 = vadd.f32 %v169, %v139
  %v171 = vadd.f32 %v170, %v140
  %v172 = vadd.f32 %v171, %v141
  %v173 = vadd.f32 %v172, %v142
  %v174 = vadd.f32 %v173, %v143
  %v175 = vadd.f32 %v174, %v144
  %v176 = vadd.f32 %v175, %v145
  %v177 = vadd.f32 %v176, %v146
  %v178 = vadd.f32 %v177, %v147
  %v179 = vadd.f32 %v178, %v148
  %v180 = vadd.f32 %v179, %v149
  %v181 = vadd.f32 %v180, %v150
  %v182 = vadd.f32 %v181, %v151
  %v183 = vadd.f32 %v182, %v152
  %v184 = vrot.slane %v183, 4
  %v185 = vadd.f32 %v183, %v184
  %v186 = vrot.slane %v185, 2
  %v187 = vadd.f32 %v185, %v186
  %v188 = vrot.slane %v187, 1
  %v189 = vadd.f32 %v187, %v188
  %v190 = vadd.f32 %v120, %v189
  %191 = vst [vmem:[#allocation3] sm:$0x1] %v190
  // Predicated region
  $region10: #{graph_res_block_forward.10} parent=0 // pred_check
    %p192 = pneg %p10
  $region11: #{graph_res_block_forward.10} parent=0 // pred_check_branch
    %194 = sbr.rel (%p192) target = $region13
  $region12: #{graph_res_block_forward.10} parent=0 // pred_region
    %v195 = vld [vmem:[#allocation2] sm:$0x1]
    %v196 = vmul.f32 %v195, 0.00390625
    %197 = vst [vmem:[%s1] sm:$0x1] %v196
    %v198 = vld [vmem:[#allocation3] sm:$0x1]
    %v199 = vmul.f32 %v198, 0.00390625
    %v200 = vmul.f32 %v196, %v196
    %v201 = vsub.f32 %v199, %v200
    %v202 = vmax.f32 %v201, 0.0
    %203 = vst [vmem:[%s2] sm:$0x1] %v202
  $region13: #{graph_res_block_forward.10} parent=0 // pred_fallthru
    _
  // Predicated region
  $region14: #{graph_res_block_forward.10} parent=0 // pred_check
    _
  $region15: #{graph_res_block_forward.10} parent=0 // pred_check_branch
    %205 = sbr.rel (0) target = $region17
  $region16: #{graph_res_block_forward.10} parent=0 // pred_region
    _
  $region17: #{graph_res_block_forward.10} parent=0 // pred_fallthru
    _
  // Predicated region
  $region18: #{graph_res_block_forward.10} parent=0 // pred_check
    _
  $region19: #{graph_res_block_forward.10} parent=0 // pred_check_branch
    %207 = sbr.rel (0) target = $region21
  $region20: #{graph_res_block_forward.10} parent=0 // pred_region
    _
  $region21: #{graph_res_block_forward.10} parent=0 // pred_fallthru
    _
  // Predicated region
  $region22: #{graph_res_block_forward.10} parent=0 // pred_check
    _
  $region23: #{graph_res_block_forward.10} parent=0 // pred_check_branch
    %209 = sbr.rel (0) target = $region25
  $region24: #{graph_res_block_forward.10} parent=0 // pred_region
    _
  $region25: #{graph_res_block_forward.10} parent=0 // pred_fallthru
    _
  // Predicated region
  $region26: #{graph_res_block_forward.10} parent=0 // pred_check
    _
  $region27: #{graph_res_block_forward.10} parent=0 // pred_check_branch
    %211 = sbr.rel (0) target = $region29
  $region28: #{graph_res_block_forward.10} parent=0 // pred_region
    _
  $region29: #{graph_res_block_forward.10} parent=0 // pred_fallthru
    _

// kernel: graph_res_block_forward.11
$region0: #{graph_res_block_forward.11}
  #allocation0 [shape = 'u32[]', space=smem, size = 0x4, offset = 0x4, fixed_abs, tag = 'smem constant byte address 0x4 - core index']
  #allocation1 [shape = 'u32[144,128]{1,0:T(1,128)}', space=vmem, size = 0x12000, scoped, tag = 'internal scratch']
  %s0 = inlined_call_operand.vmem [shape: bf16[256,128], index: 0, kind: input, shape index: {}]
  %s1 = inlined_call_operand.vmem [shape: f32[1,128], index: 1, kind: input, shape index: {}]
  %s2 = inlined_call_operand.vmem [shape: f32[1,128], index: 2, kind: input, shape index: {}]
  %s3 = inlined_call_operand.vmem [shape: f32[1,128], index: 3, kind: input, shape index: {}]
  %s4 = inlined_call_operand.vmem [shape: f32[1,128], index: 4, kind: input, shape index: {}]
  %s5 = inlined_call_operand.vmem [shape: bf16[256,128], index: 5, kind: output, shape index: {}]
  %s6 = sld [smem:[#allocation0]]
  $region30: #{graph_res_block_forward.11} parent=0
    _
  %s8 = ssub.s32 1, %s6
  %s9 = scalar_select 0, %s8, %s6
  // Predicated region
  $region2: #{graph_res_block_forward.11} parent=0 // pred_check
    _
  $region3: #{graph_res_block_forward.11} parent=0 // pred_check_branch
    %11 = sbr.rel (0) target = $region5
  $region4: #{graph_res_block_forward.11} parent=0 // pred_region
    _
  $region5: #{graph_res_block_forward.11} parent=0 // pred_fallthru
    _
  // Predicated region
  $region6: #{graph_res_block_forward.11} parent=0 // pred_check
    _
  $region7: #{graph_res_block_forward.11} parent=0 // pred_check_branch
    %13 = sbr.rel (0) target = $region9
  $region8: #{graph_res_block_forward.11} parent=0 // pred_region
    _
  $region9: #{graph_res_block_forward.11} parent=0 // pred_fallthru
    _
  // Predicated region
  $region10: #{graph_res_block_forward.11} parent=0 // pred_check
    _
  $region11: #{graph_res_block_forward.11} parent=0 // pred_check_branch
    %15 = sbr.rel (0) target = $region13
  $region12: #{graph_res_block_forward.11} parent=0 // pred_region
    _
  $region13: #{graph_res_block_forward.11} parent=0 // pred_fallthru
    _
  // Predicated region
  $region14: #{graph_res_block_forward.11} parent=0 // pred_check
    _
  $region15: #{graph_res_block_forward.11} parent=0 // pred_check_branch
    %17 = sbr.rel (0) target = $region17
  $region16: #{graph_res_block_forward.11} parent=0 // pred_region
    _
  $region17: #{graph_res_block_forward.11} parent=0 // pred_fallthru
    _
  // Predicated region
  $region18: #{graph_res_block_forward.11} parent=0 // pred_check
    _
  $region19: #{graph_res_block_forward.11} parent=0 // pred_check_branch
    %19 = sbr.rel (0) target = $region21
  $region20: #{graph_res_block_forward.11} parent=0 // pred_region
    _
  $region21: #{graph_res_block_forward.11} parent=0 // pred_fallthru
    _
  %v20 = vld [vmem:[%s0] sm:$0xf]
  %v21 = vld [vmem:[%s0 + $0x4] sm:$0xf]
  %v22 = vld [vmem:[%s0 + $0x8] sm:$0xf]
  %v23 = vld [vmem:[%s0 + $0xc] sm:$0xf]
  %v24 = vld [vmem:[%s0 + $0x10] sm:$0xf]
  %v25 = vld [vmem:[%s0 + $0x14] sm:$0xf]
  %v26 = vld [vmem:[%s0 + $0x18] sm:$0xf]
  %v27 = vld [vmem:[%s0 + $0x1c] sm:$0xf]
  %v28 = vld [vmem:[%s0 + $0x20] sm:$0xf]
  %v29 = vld [vmem:[%s0 + $0x24] sm:$0xf]
  %v30 = vld [vmem:[%s0 + $0x28] sm:$0xf]
  %v31 = vld [vmem:[%s0 + $0x2c] sm:$0xf]
  %v32 = vld [vmem:[%s0 + $0x30] sm:$0xf]
  %v33 = vld [vmem:[%s0 + $0x34] sm:$0xf]
  %v34 = vld [vmem:[%s0 + $0x38] sm:$0xf]
  %v35 = vld [vmem:[%s0 + $0x3c] sm:$0xf]
  %v36 = vld [vmem:[%s0 + $0x40] sm:$0xf]
  %v37 = vld [vmem:[%s0 + $0x44] sm:$0xf]
  %v38 = vld [vmem:[%s0 + $0x48] sm:$0xf]
  %v39 = vld [vmem:[%s0 + $0x4c] sm:$0xf]
  %v40 = vld [vmem:[%s0 + $0x50] sm:$0xf]
  %v41 = vld [vmem:[%s0 + $0x54] sm:$0xf]
  %v42 = vld [vmem:[%s0 + $0x58] sm:$0xf]
  %v43 = vld [vmem:[%s0 + $0x5c] sm:$0xf]
  %v44 = vld [vmem:[%s0 + $0x60] sm:$0xf]
  %v45 = vld [vmem:[%s0 + $0x64] sm:$0xf]
  %v46 = vld [vmem:[%s0 + $0x68] sm:$0xf]
  %v47 = vld [vmem:[%s0 + $0x6c] sm:$0xf]
  %v48 = vld [vmem:[%s0 + $0x70] sm:$0xf]
  %v49 = vld [vmem:[%s0 + $0x74] sm:$0xf]
  %v50 = vld [vmem:[%s0 + $0x78] sm:$0xf]
  %v51 = vld [vmem:[%s0 + $0x7c] sm:$0xf]
  %v52 = vunpack.c.l.bf16 %v20
  %v53 = vunpack.c.l.bf16 %v21
  %v54 = vunpack.c.l.bf16 %v22
  %v55 = vunpack.c.l.bf16 %v23
  %v56 = vunpack.c.l.bf16 %v24
  %v57 = vunpack.c.l.bf16 %v25
  %v58 = vunpack.c.l.bf16 %v26
  %v59 = vunpack.c.l.bf16 %v27
  %v60 = vunpack.c.l.bf16 %v28
  %v61 = vunpack.c.l.bf16 %v29
  %v62 = vunpack.c.l.bf16 %v30
  %v63 = vunpack.c.l.bf16 %v31
  %v64 = vunpack.c.l.bf16 %v32
  %v65 = vunpack.c.l.bf16 %v33
  %v66 = vunpack.c.l.bf16 %v34
  %v67 = vunpack.c.l.bf16 %v35
  %v68 = vunpack.c.l.bf16 %v36
  %v69 = vunpack.c.l.bf16 %v37
  %v70 = vunpack.c.l.bf16 %v38
  %v71 = vunpack.c.l.bf16 %v39
  %v72 = vunpack.c.l.bf16 %v40
  %v73 = vunpack.c.l.bf16 %v41
  %v74 = vunpack.c.l.bf16 %v42
  %v75 = vunpack.c.l.bf16 %v43
  %v76 = vunpack.c.l.bf16 %v44
  %v77 = vunpack.c.l.bf16 %v45
  %v78 = vunpack.c.l.bf16 %v46
  %v79 = vunpack.c.l.bf16 %v47
  %v80 = vunpack.c.l.bf16 %v48
  %v81 = vunpack.c.l.bf16 %v49
  %v82 = vunpack.c.l.bf16 %v50
  %v83 = vunpack.c.l.bf16 %v51
  %v84 = vld [vmem:[%s3] sm:$0x1]
  %v85 = vld [vmem:[%s2] sm:$0x1]
  %v86 = vadd.f32 %v85, 1e-05
  %v87 = vrsqrt.pop %v86
  %v88 = vmul.f32 %v84, %v87
  %v89 = vld [vmem:[%s4] sm:$0x1]
  %v90 = vld [vmem:[%s1] sm:$0x1]
  %v91 = vmul.f32 %v90, %v88
  %v92 = vsub.f32 %v89, %v91
  %v94 = vlaneseq
  %v95 = vshrl.u32 %v94, 7
  %v96 = vsub.s32 0, %v95
  %v97 = vrot.slane %v88, %v96
  %v99 = vmul.f32 %v52, %v97
  %v100 = vmul.f32 %v53, %v97
  %v101 = vmul.f32 %v54, %v97
  %v102 = vmul.f32 %v55, %v97
  %v103 = vmul.f32 %v56, %v97
  %v104 = vmul.f32 %v57, %v97
  %v105 = vmul.f32 %v58, %v97
  %v106 = vmul.f32 %v59, %v97
  %v107 = vmul.f32 %v60, %v97
  %v108 = vmul.f32 %v61, %v97
  %v109 = vmul.f32 %v62, %v97
  %v110 = vmul.f32 %v63, %v97
  %v111 = vmul.f32 %v64, %v97
  %v112 = vmul.f32 %v65, %v97
  %v113 = vmul.f32 %v66, %v97
  %v114 = vmul.f32 %v67, %v97
  %v115 = vmul.f32 %v68, %v97
  %v116 = vmul.f32 %v69, %v97
  %v117 = vmul.f32 %v70, %v97
  %v118 = vmul.f32 %v71, %v97
  %v119 = vmul.f32 %v72, %v97
  %v120 = vmul.f32 %v73, %v97
  %v121 = vmul.f32 %v74, %v97
  %v122 = vmul.f32 %v75, %v97
  %v123 = vmul.f32 %v76, %v97
  %v124 = vmul.f32 %v77, %v97
  %v125 = vmul.f32 %v78, %v97
  %v126 = vmul.f32 %v79, %v97
  %v127 = vmul.f32 %v80, %v97
  %v128 = vmul.f32 %v81, %v97
  %v129 = vmul.f32 %v82, %v97
  %v130 = vmul.f32 %v83, %v97
  %v132 = vlaneseq
  %v133 = vshrl.u32 %v132, 7
  %v134 = vsub.s32 0, %v133
  %v135 = vrot.slane %v92, %v134
  %v137 = vadd.f32 %v99, %v135
  %v138 = vadd.f32 %v100, %v135
  %v139 = vadd.f32 %v101, %v135
  %v140 = vadd.f32 %v102, %v135
  %v141 = vadd.f32 %v103, %v135
  %v142 = vadd.f32 %v104, %v135
  %v143 = vadd.f32 %v105, %v135
  %v144 = vadd.f32 %v106, %v135
  %v145 = vadd.f32 %v107, %v135
  %v146 = vadd.f32 %v108, %v135
  %v147 = vadd.f32 %v109, %v135
  %v148 = vadd.f32 %v110, %v135
  %v149 = vadd.f32 %v111, %v135
  %v150 = vadd.f32 %v112, %v135
  %v151 = vadd.f32 %v113, %v135
  %v152 = vadd.f32 %v114, %v135
  %v153 = vadd.f32 %v115, %v135
  %v154 = vadd.f32 %v116, %v135
  %v155 = vadd.f32 %v117, %v135
  %v156 = vadd.f32 %v118, %v135
  %v157 = vadd.f32 %v119, %v135
  %v158 = vadd.f32 %v120, %v135
  %v159 = vadd.f32 %v121, %v135
  %v160 = vadd.f32 %v122, %v135
  %v161 = vadd.f32 %v123, %v135
  %v162 = vadd.f32 %v124, %v135
  %v163 = vadd.f32 %v125, %v135
  %v164 = vadd.f32 %v126, %v135
  %v165 = vadd.f32 %v127, %v135
  %v166 = vadd.f32 %v128, %v135
  %v167 = vadd.f32 %v129, %v135
  %v168 = vadd.f32 %v130, %v135
  %v169 = vsub.f32 0.0, %v137
  %v170 = vsub.f32 0.0, %v138
  %v171 = vsub.f32 0.0, %v139
  %v172 = vsub.f32 0.0, %v140
  %v173 = vsub.f32 0.0, %v141
  %v174 = vsub.f32 0.0, %v142
  %v175 = vsub.f32 0.0, %v143
  %v176 = vsub.f32 0.0, %v144
  %v177 = vsub.f32 0.0, %v145
  %v178 = vsub.f32 0.0, %v146
  %v179 = vsub.f32 0.0, %v147
  %v180 = vsub.f32 0.0, %v148
  %v181 = vsub.f32 0.0, %v149
  %v182 = vsub.f32 0.0, %v150
  %v183 = vsub.f32 0.0, %v151
  %v184 = vsub.f32 0.0, %v152
  %v185 = vsub.f32 0.0, %v153
  %v186 = vsub.f32 0.0, %v154
  %v187 = vsub.f32 0.0, %v155
  %v188 = vsub.f32 0.0, %v156
  %v189 = vsub.f32 0.0, %v157
  %v190 = vsub.f32 0.0, %v158
  %v191 = vsub.f32 0.0, %v159
  %v192 = vsub.f32 0.0, %v160
  %v193 = vsub.f32 0.0, %v161
  %v194 = vsub.f32 0.0, %v162
  %v195 = vsub.f32 0.0, %v163
  %v196 = vsub.f32 0.0, %v164
  %v197 = vsub.f32 0.0, %v165
  %v198 = vsub.f32 0.0, %v166
  %v199 = vsub.f32 0.0, %v167
  %v200 = vsub.f32 0.0, %v168
  %v201 = vmul.f32 %v169, 1.442695
  %v202 = vpow.pop %v201
  %v203 = vmul.f32 %v170, 1.442695
  %v204 = vpow.pop %v203
  %v205 = vmul.f32 %v171, 1.442695
  %v206 = vpow.pop %v205
  %v207 = vmul.f32 %v172, 1.442695
  %v208 = vpow.pop %v207
  %v209 = vmul.f32 %v173, 1.442695
  %v210 = vpow.pop %v209
  %v211 = vmul.f32 %v174, 1.442695
  %v212 = vpow.pop %v211
  %v213 = vmul.f32 %v175, 1.442695
  %v214 = vpow.pop %v213
  %v215 = vmul.f32 %v176, 1.442695
  %v216 = vpow.pop %v215
  %v217 = vmul.f32 %v177, 1.442695
  %v218 = vpow.pop %v217
  %v219 = vmul.f32 %v178, 1.442695
  %v220 = vpow.pop %v219
  %v221 = vmul.f32 %v179, 1.442695
  %v222 = vpow.pop %v221
  %v223 = vmul.f32 %v180, 1.442695
  %v224 = vpow.pop %v223
  %v225 = vmul.f32 %v181, 1.442695
  %v226 = vpow.pop %v225
  %v227 = vmul.f32 %v182, 1.442695
  %v228 = vpow.pop %v227
  %v229 = vmul.f32 %v183, 1.442695
  %v230 = vpow.pop %v229
  %v231 = vmul.f32 %v184, 1.442695
  %v232 = vpow.pop %v231
  %v233 = vmul.f32 %v185, 1.442695
  %v234 = vpow.pop %v233
  %v235 = vmul.f32 %v186, 1.442695
  %v236 = vpow.pop %v235
  %v237 = vmul.f32 %v187, 1.442695
  %v238 = vpow.pop %v237
  %v239 = vmul.f32 %v188, 1.442695
  %v240 = vpow.pop %v239
  %v241 = vmul.f32 %v189, 1.442695
  %v242 = vpow.pop %v241
  %v243 = vmul.f32 %v190, 1.442695
  %v244 = vpow.pop %v243
  %v245 = vmul.f32 %v191, 1.442695
  %v246 = vpow.pop %v245
  %v247 = vmul.f32 %v192, 1.442695
  %v248 = vpow.pop %v247
  %v249 = vmul.f32 %v193, 1.442695
  %v250 = vpow.pop %v249
  %v251 = vmul.f32 %v194, 1.442695
  %v252 = vpow.pop %v251
  %v253 = vmul.f32 %v195, 1.442695
  %v254 = vpow.pop %v253
  %v255 = vmul.f32 %v196, 1.442695
  %v256 = vpow.pop %v255
  %v257 = vmul.f32 %v197, 1.442695
  %v258 = vpow.pop %v257
  %v259 = vmul.f32 %v198, 1.442695
  %v260 = vpow.pop %v259
  %v261 = vmul.f32 %v199, 1.442695
  %v262 = vpow.pop %v261
  %v263 = vmul.f32 %v200, 1.442695
  %v264 = vpow.pop %v263
  %v265 = vadd.f32 %v202, 1.0
  %v266 = vadd.f32 %v204, 1.0
  %v267 = vadd.f32 %v206, 1.0
  %v268 = vadd.f32 %v208, 1.0
  %v269 = vadd.f32 %v210, 1.0
  %v270 = vadd.f32 %v212, 1.0
  %v271 = vadd.f32 %v214, 1.0
  %v272 = vadd.f32 %v216, 1.0
  %v273 = vadd.f32 %v218, 1.0
  %v274 = vadd.f32 %v220, 1.0
  %v275 = vadd.f32 %v222, 1.0
  %v276 = vadd.f32 %v224, 1.0
  %v277 = vadd.f32 %v226, 1.0
  %v278 = vadd.f32 %v228, 1.0
  %v279 = vadd.f32 %v230, 1.0
  %v280 = vadd.f32 %v232, 1.0
  %v281 = vadd.f32 %v234, 1.0
  %v282 = vadd.f32 %v236, 1.0
  %v283 = vadd.f32 %v238, 1.0
  %v284 = vadd.f32 %v240, 1.0
  %v285 = vadd.f32 %v242, 1.0
  %v286 = vadd.f32 %v244, 1.0
  %v287 = vadd.f32 %v246, 1.0
  %v288 = vadd.f32 %v248, 1.0
  %v289 = vadd.f32 %v250, 1.0
  %v290 = vadd.f32 %v252, 1.0
  %v291 = vadd.f32 %v254, 1.0
  %v292 = vadd.f32 %v256, 1.0
  %v293 = vadd.f32 %v258, 1.0
  %v294 = vadd.f32 %v260, 1.0
  %v295 = vadd.f32 %v262, 1.0
  %v296 = vadd.f32 %v264, 1.0
  %v297 = vrcp.pop %v265
  %v298 = vmul.f32 1.0, %v297
  %v299 = vrcp.pop %v266
  %v300 = vmul.f32 1.0, %v299
  %v301 = vrcp.pop %v267
  %v302 = vmul.f32 1.0, %v301
  %v303 = vrcp.pop %v268
  %v304 = vmul.f32 1.0, %v303
  %v305 = vrcp.pop %v269
  %v306 = vmul.f32 1.0, %v305
  %v307 = vrcp.pop %v270
  %v308 = vmul.f32 1.0, %v307
  %v309 = vrcp.pop %v271
  %v310 = vmul.f32 1.0, %v309
  %v311 = vrcp.pop %v272
  %v312 = vmul.f32 1.0, %v311
  %v313 = vrcp.pop %v273
  %v314 = vmul.f32 1.0, %v313
  %v315 = vrcp.pop %v274
  %v316 = vmul.f32 1.0, %v315
  %v317 = vrcp.pop %v275
  %v318 = vmul.f32 1.0, %v317
  %v319 = vrcp.pop %v276
  %v320 = vmul.f32 1.0, %v319
  %v321 = vrcp.pop %v277
  %v322 = vmul.f32 1.0, %v321
  %v323 = vrcp.pop %v278
  %v324 = vmul.f32 1.0, %v323
  %v325 = vrcp.pop %v279
  %v326 = vmul.f32 1.0, %v325
  %v327 = vrcp.pop %v280
  %v328 = vmul.f32 1.0, %v327
  %v329 = vrcp.pop %v281
  %v330 = vmul.f32 1.0, %v329
  %v331 = vrcp.pop %v282
  %v332 = vmul.f32 1.0, %v331
  %v333 = vrcp.pop %v283
  %v334 = vmul.f32 1.0, %v333
  %v335 = vrcp.pop %v284
  %v336 = vmul.f32 1.0, %v335
  %v337 = vrcp.pop %v285
  %v338 = vmul.f32 1.0, %v337
  %v339 = vrcp.pop %v286
  %v340 = vmul.f32 1.0, %v339
  %v341 = vrcp.pop %v287
  %v342 = vmul.f32 1.0, %v341
  %v343 = vrcp.pop %v288
  %v344 = vmul.f32 1.0, %v343
  %v345 = vrcp.pop %v289
  %v346 = vmul.f32 1.0, %v345
  %v347 = vrcp.pop %v290
  %v348 = vmul.f32 1.0, %v347
  %v349 = vrcp.pop %v291
  %v350 = vmul.f32 1.0, %v349
  %v351 = vrcp.pop %v292
  %v352 = vmul.f32 1.0, %v351
  %v353 = vrcp.pop %v293
  %v354 = vmul.f32 1.0, %v353
  %v355 = vrcp.pop %v294
  %v356 = vmul.f32 1.0, %v355
  %v357 = vrcp.pop %v295
  %v358 = vmul.f32 1.0, %v357
  %v359 = vrcp.pop %v296
  %v360 = vmul.f32 1.0, %v359
  %v361 = vmul.f32 %v137, %v298
  %v362 = vmul.f32 %v138, %v300
  %v363 = vmul.f32 %v139, %v302
  %v364 = vmul.f32 %v140, %v304
  %v365 = vmul.f32 %v141, %v306
  %v366 = vmul.f32 %v142, %v308
  %v367 = vmul.f32 %v143, %v310
  %v368 = vmul.f32 %v144, %v312
  %v369 = vmul.f32 %v145, %v314
  %v370 = vmul.f32 %v146, %v316
  %v371 = vmul.f32 %v147, %v318
  %v372 = vmul.f32 %v148, %v320
  %v373 = vmul.f32 %v149, %v322
  %v374 = vmul.f32 %v150, %v324
  %v375 = vmul.f32 %v151, %v326
  %v376 = vmul.f32 %v152, %v328
  %v377 = vmul.f32 %v153, %v330
  %v378 = vmul.f32 %v154, %v332
  %v379 = vmul.f32 %v155, %v334
  %v380 = vmul.f32 %v156, %v336
  %v381 = vmul.f32 %v157, %v338
  %v382 = vmul.f32 %v158, %v340
  %v383 = vmul.f32 %v159, %v342
  %v384 = vmul.f32 %v160, %v344
  %v385 = vmul.f32 %v161, %v346
  %v386 = vmul.f32 %v162, %v348
  %v387 = vmul.f32 %v163, %v350
  %v388 = vmul.f32 %v164, %v352
  %v389 = vmul.f32 %v165, %v354
  %v390 = vmul.f32 %v166, %v356
  %v391 = vmul.f32 %v167, %v358
  %v392 = vmul.f32 %v168, %v360
  %v393 = vpack.c.bf16 %v362, %v361
  %v394 = vpack.c.bf16 %v364, %v363
  %v395 = vpack.c.bf16 %v366, %v365
  %v396 = vpack.c.bf16 %v368, %v367
  %v397 = vpack.c.bf16 %v370, %v369
  %v398 = vpack.c.bf16 %v372, %v371
  %v399 = vpack.c.bf16 %v374, %v373
  %v400 = vpack.c.bf16 %v376, %v375
  %v401 = vpack.c.bf16 %v378, %v377
  %v402 = vpack.c.bf16 %v380, %v379
  %v403 = vpack.c.bf16 %v382, %v381
  %v404 = vpack.c.bf16 %v384, %v383
  %v405 = vpack.c.bf16 %v386, %v385
  %v406 = vpack.c.bf16 %v388, %v387
  %v407 = vpack.c.bf16 %v390, %v389
  %v408 = vpack.c.bf16 %v392, %v391
  %v425 = vunpack.c.l.b16 %v393
  %v426 = vunpack.c.h.b16 %v393
  %v427 = vunpack.c.l.b16 %v394
  %v428 = vunpack.c.h.b16 %v394
  %v429 = vunpack.c.l.b16 %v395
  %v430 = vunpack.c.h.b16 %v395
  %v431 = vunpack.c.l.b16 %v396
  %v432 = vunpack.c.h.b16 %v396
  %v433 = vunpack.c.l.b16 %v397
  %v434 = vunpack.c.h.b16 %v397
  %v435 = vunpack.c.l.b16 %v398
  %v436 = vunpack.c.h.b16 %v398
  %v437 = vunpack.c.l.b16 %v399
  %v438 = vunpack.c.h.b16 %v399
  %v439 = vunpack.c.l.b16 %v400
  %v440 = vunpack.c.h.b16 %v400
  %v441 = vunpack.c.l.b16 %v401
  %v442 = vunpack.c.h.b16 %v401
  %v443 = vunpack.c.l.b16 %v402
  %v444 = vunpack.c.h.b16 %v402
  %v445 = vunpack.c.l.b16 %v403
  %v446 = vunpack.c.h.b16 %v403
  %v447 = vunpack.c.l.b16 %v404
  %v448 = vunpack.c.h.b16 %v404
  %v449 = vunpack.c.l.b16 %v405
  %v450 = vunpack.c.h.b16 %v405
  %v451 = vunpack.c.l.b16 %v406
  %v452 = vunpack.c.h.b16 %v406
  %v453 = vunpack.c.l.b16 %v407
  %v454 = vunpack.c.h.b16 %v407
  %v455 = vunpack.c.l.b16 %v408
  %v456 = vunpack.c.h.b16 %v408
  %v457 = vpack.c.b16 %v425, %v425
  %v458 = vpack.c.b16 %v426, %v426
  %v459 = vpack.c.b16 %v427, %v427
  %v460 = vpack.c.b16 %v428, %v428
  %v461 = vpack.c.b16 %v429, %v429
  %v462 = vpack.c.b16 %v430, %v430
  %v463 = vpack.c.b16 %v431, %v431
  %v464 = vpack.c.b16 %v432, %v432
  %v465 = vpack.c.b16 %v433, %v433
  %v466 = vpack.c.b16 %v434, %v434
  %v467 = vpack.c.b16 %v435, %v435
  %v468 = vpack.c.b16 %v436, %v436
  %v469 = vpack.c.b16 %v437, %v437
  %v470 = vpack.c.b16 %v438, %v438
  %v471 = vpack.c.b16 %v439, %v439
  %v472 = vpack.c.b16 %v440, %v440
  %v473 = vpack.c.b16 %v441, %v441
  %v474 = vpack.c.b16 %v442, %v442
  %v475 = vpack.c.b16 %v443, %v443
  %v476 = vpack.c.b16 %v444, %v444
  %v477 = vpack.c.b16 %v445, %v445
  %v478 = vpack.c.b16 %v446, %v446
  %v479 = vpack.c.b16 %v447, %v447
  %v480 = vpack.c.b16 %v448, %v448
  %v481 = vpack.c.b16 %v449, %v449
  %v482 = vpack.c.b16 %v450, %v450
  %v483 = vpack.c.b16 %v451, %v451
  %v484 = vpack.c.b16 %v452, %v452
  %v485 = vpack.c.b16 %v453, %v453
  %v486 = vpack.c.b16 %v454, %v454
  %v487 = vpack.c.b16 %v455, %v455
  %v488 = vpack.c.b16 %v456, %v456
  %521 = vst [vmem:[%s5] sm:$0xf] %v457
  %522 = vst [vmem:[%s5 + $0x4] sm:$0xf] %v458
  %523 = vst [vmem:[%s5 + $0x8] sm:$0xf] %v459
  %524 = vst [vmem:[%s5 + $0xc] sm:$0xf] %v460
  %525 = vst [vmem:[%s5 + $0x10] sm:$0xf] %v461
  %526 = vst [vmem:[%s5 + $0x14] sm:$0xf] %v462
  %527 = vst [vmem:[%s5 + $0x18] sm:$0xf] %v463
  %528 = vst [vmem:[%s5 + $0x1c] sm:$0xf] %v464
  %529 = vst [vmem:[%s5 + $0x20] sm:$0xf] %v465
  %530 = vst [vmem:[%s5 + $0x24] sm:$0xf] %v466
  %531 = vst [vmem:[%s5 + $0x28] sm:$0xf] %v467
  %532 = vst [vmem:[%s5 + $0x2c] sm:$0xf] %v468
  %533 = vst [vmem:[%s5 + $0x30] sm:$0xf] %v469
  %534 = vst [vmem:[%s5 + $0x34] sm:$0xf] %v470
  %535 = vst [vmem:[%s5 + $0x38] sm:$0xf] %v471
  %536 = vst [vmem:[%s5 + $0x3c] sm:$0xf] %v472
  %537 = vst [vmem:[%s5 + $0x40] sm:$0xf] %v473
  %538 = vst [vmem:[%s5 + $0x44] sm:$0xf] %v474
  %539 = vst [vmem:[%s5 + $0x48] sm:$0xf] %v475
  %540 = vst [vmem:[%s5 + $0x4c] sm:$0xf] %v476
  %541 = vst [vmem:[%s5 + $0x50] sm:$0xf] %v477
  %542 = vst [vmem:[%s5 + $0x54] sm:$0xf] %v478
  %543 = vst [vmem:[%s5 + $0x58] sm:$0xf] %v479
  %544 = vst [vmem:[%s5 + $0x5c] sm:$0xf] %v480
  %545 = vst [vmem:[%s5 + $0x60] sm:$0xf] %v481
  %546 = vst [vmem:[%s5 + $0x64] sm:$0xf] %v482
  %547 = vst [vmem:[%s5 + $0x68] sm:$0xf] %v483
  %548 = vst [vmem:[%s5 + $0x6c] sm:$0xf] %v484
  %549 = vst [vmem:[%s5 + $0x70] sm:$0xf] %v485
  %550 = vst [vmem:[%s5 + $0x74] sm:$0xf] %v486
  %551 = vst [vmem:[%s5 + $0x78] sm:$0xf] %v487
  %552 = vst [vmem:[%s5 + $0x7c] sm:$0xf] %v488
  // Predicated region
  $region22: #{graph_res_block_forward.11} parent=0 // pred_check
    _
  $region23: #{graph_res_block_forward.11} parent=0 // pred_check_branch
    %554 = sbr.rel (0) target = $region25
  $region24: #{graph_res_block_forward.11} parent=0 // pred_region
    _
  $region25: #{graph_res_block_forward.11} parent=0 // pred_fallthru
    _
  // Predicated region
  $region26: #{graph_res_block_forward.11} parent=0 // pred_check
    _
  $region27: #{graph_res_block_forward.11} parent=0 // pred_check_branch
    %556 = sbr.rel (0) target = $region29
  $region28: #{graph_res_block_forward.11} parent=0 // pred_region
    _
  $region29: #{graph_res_block_forward.11} parent=0 // pred_fallthru
    _

// kernel: graph_res_block_forward.13
$region0: #{graph_res_block_forward.13}
  #allocation0 [shape = 'u32[]', space=smem, size = 0x4, offset = 0x4, fixed_abs, tag = 'smem constant byte address 0x4 - core index']
  #allocation1 [shape = 'u32[144,128]{1,0:T(1,128)}', space=vmem, size = 0x12000, scoped, tag = 'internal scratch']
  %s0 = inlined_call_operand.vmem [shape: bf16[256,128], index: 0, kind: input, shape index: {}]
  %s1 = inlined_call_operand.vmem [shape: f32[1,128], index: 1, kind: input, shape index: {}]
  %s2 = inlined_call_operand.vmem [shape: f32[1,128], index: 2, kind: input, shape index: {}]
  %s3 = inlined_call_operand.vmem [shape: f32[1,128], index: 3, kind: input, shape index: {}]
  %s4 = inlined_call_operand.vmem [shape: f32[1,128], index: 4, kind: input, shape index: {}]
  %s5 = inlined_call_operand.vmem [shape: f32[256,128], index: 5, kind: input, shape index: {}]
  %s6 = inlined_call_operand.vmem [shape: f32[256,128], index: 6, kind: output, shape index: {}]
  %s7 = sld [smem:[#allocation0]]
  $region34: #{graph_res_block_forward.13} parent=0
    _
  %s9 = ssub.s32 1, %s7
  %s10 = scalar_select 0, %s9, %s7
  // Predicated region
  $region2: #{graph_res_block_forward.13} parent=0 // pred_check
    _
  $region3: #{graph_res_block_forward.13} parent=0 // pred_check_branch
    %12 = sbr.rel (0) target = $region5
  $region4: #{graph_res_block_forward.13} parent=0 // pred_region
    _
  $region5: #{graph_res_block_forward.13} parent=0 // pred_fallthru
    _
  // Predicated region
  $region6: #{graph_res_block_forward.13} parent=0 // pred_check
    _
  $region7: #{graph_res_block_forward.13} parent=0 // pred_check_branch
    %14 = sbr.rel (0) target = $region9
  $region8: #{graph_res_block_forward.13} parent=0 // pred_region
    _
  $region9: #{graph_res_block_forward.13} parent=0 // pred_fallthru
    _
  // Predicated region
  $region10: #{graph_res_block_forward.13} parent=0 // pred_check
    _
  $region11: #{graph_res_block_forward.13} parent=0 // pred_check_branch
    %16 = sbr.rel (0) target = $region13
  $region12: #{graph_res_block_forward.13} parent=0 // pred_region
    _
  $region13: #{graph_res_block_forward.13} parent=0 // pred_fallthru
    _
  // Predicated region
  $region14: #{graph_res_block_forward.13} parent=0 // pred_check
    _
  $region15: #{graph_res_block_forward.13} parent=0 // pred_check_branch
    %18 = sbr.rel (0) target = $region17
  $region16: #{graph_res_block_forward.13} parent=0 // pred_region
    _
  $region17: #{graph_res_block_forward.13} parent=0 // pred_fallthru
    _
  // Predicated region
  $region18: #{graph_res_block_forward.13} parent=0 // pred_check
    _
  $region19: #{graph_res_block_forward.13} parent=0 // pred_check_branch
    %20 = sbr.rel (0) target = $region21
  $region20: #{graph_res_block_forward.13} parent=0 // pred_region
    _
  $region21: #{graph_res_block_forward.13} parent=0 // pred_fallthru
    _
  // Predicated region
  $region22: #{graph_res_block_forward.13} parent=0 // pred_check
    _
  $region23: #{graph_res_block_forward.13} parent=0 // pred_check_branch
    %22 = sbr.rel (0) target = $region25
  $region24: #{graph_res_block_forward.13} parent=0 // pred_region
    _
  $region25: #{graph_res_block_forward.13} parent=0 // pred_fallthru
    _
  %v23 = vld [vmem:[%s0] sm:$0xf]
  %v24 = vld [vmem:[%s0 + $0x4] sm:$0xf]
  %v25 = vld [vmem:[%s0 + $0x8] sm:$0xf]
  %v26 = vld [vmem:[%s0 + $0xc] sm:$0xf]
  %v27 = vld [vmem:[%s0 + $0x10] sm:$0xf]
  %v28 = vld [vmem:[%s0 + $0x14] sm:$0xf]
  %v29 = vld [vmem:[%s0 + $0x18] sm:$0xf]
  %v30 = vld [vmem:[%s0 + $0x1c] sm:$0xf]
  %v31 = vld [vmem:[%s0 + $0x20] sm:$0xf]
  %v32 = vld [vmem:[%s0 + $0x24] sm:$0xf]
  %v33 = vld [vmem:[%s0 + $0x28] sm:$0xf]
  %v34 = vld [vmem:[%s0 + $0x2c] sm:$0xf]
  %v35 = vld [vmem:[%s0 + $0x30] sm:$0xf]
  %v36 = vld [vmem:[%s0 + $0x34] sm:$0xf]
  %v37 = vld [vmem:[%s0 + $0x38] sm:$0xf]
  %v38 = vld [vmem:[%s0 + $0x3c] sm:$0xf]
  %v39 = vld [vmem:[%s0 + $0x40] sm:$0xf]
  %v40 = vld [vmem:[%s0 + $0x44] sm:$0xf]
  %v41 = vld [vmem:[%s0 + $0x48] sm:$0xf]
  %v42 = vld [vmem:[%s0 + $0x4c] sm:$0xf]
  %v43 = vld [vmem:[%s0 + $0x50] sm:$0xf]
  %v44 = vld [vmem:[%s0 + $0x54] sm:$0xf]
  %v45 = vld [vmem:[%s0 + $0x58] sm:$0xf]
  %v46 = vld [vmem:[%s0 + $0x5c] sm:$0xf]
  %v47 = vld [vmem:[%s0 + $0x60] sm:$0xf]
  %v48 = vld [vmem:[%s0 + $0x64] sm:$0xf]
  %v49 = vld [vmem:[%s0 + $0x68] sm:$0xf]
  %v50 = vld [vmem:[%s0 + $0x6c] sm:$0xf]
  %v51 = vld [vmem:[%s0 + $0x70] sm:$0xf]
  %v52 = vld [vmem:[%s0 + $0x74] sm:$0xf]
  %v53 = vld [vmem:[%s0 + $0x78] sm:$0xf]
  %v54 = vld [vmem:[%s0 + $0x7c] sm:$0xf]
  %v55 = vunpack.c.l.bf16 %v23
  %v56 = vunpack.c.l.bf16 %v24
  %v57 = vunpack.c.l.bf16 %v25
  %v58 = vunpack.c.l.bf16 %v26
  %v59 = vunpack.c.l.bf16 %v27
  %v60 = vunpack.c.l.bf16 %v28
  %v61 = vunpack.c.l.bf16 %v29
  %v62 = vunpack.c.l.bf16 %v30
  %v63 = vunpack.c.l.bf16 %v31
  %v64 = vunpack.c.l.bf16 %v32
  %v65 = vunpack.c.l.bf16 %v33
  %v66 = vunpack.c.l.bf16 %v34
  %v67 = vunpack.c.l.bf16 %v35
  %v68 = vunpack.c.l.bf16 %v36
  %v69 = vunpack.c.l.bf16 %v37
  %v70 = vunpack.c.l.bf16 %v38
  %v71 = vunpack.c.l.bf16 %v39
  %v72 = vunpack.c.l.bf16 %v40
  %v73 = vunpack.c.l.bf16 %v41
  %v74 = vunpack.c.l.bf16 %v42
  %v75 = vunpack.c.l.bf16 %v43
  %v76 = vunpack.c.l.bf16 %v44
  %v77 = vunpack.c.l.bf16 %v45
  %v78 = vunpack.c.l.bf16 %v46
  %v79 = vunpack.c.l.bf16 %v47
  %v80 = vunpack.c.l.bf16 %v48
  %v81 = vunpack.c.l.bf16 %v49
  %v82 = vunpack.c.l.bf16 %v50
  %v83 = vunpack.c.l.bf16 %v51
  %v84 = vunpack.c.l.bf16 %v52
  %v85 = vunpack.c.l.bf16 %v53
  %v86 = vunpack.c.l.bf16 %v54
  %v87 = vld [vmem:[%s3] sm:$0x1]
  %v88 = vld [vmem:[%s2] sm:$0x1]
  %v89 = vadd.f32 %v88, 1e-05
  %v90 = vrsqrt.pop %v89
  %v91 = vmul.f32 %v87, %v90
  %v92 = vld [vmem:[%s4] sm:$0x1]
  %v93 = vld [vmem:[%s1] sm:$0x1]
  %v94 = vmul.f32 %v93, %v91
  %v95 = vsub.f32 %v92, %v94
  %v97 = vlaneseq
  %v98 = vshrl.u32 %v97, 7
  %v99 = vsub.s32 0, %v98
  %v100 = vrot.slane %v91, %v99
  %v102 = vmul.f32 %v55, %v100
  %v103 = vmul.f32 %v56, %v100
  %v104 = vmul.f32 %v57, %v100
  %v105 = vmul.f32 %v58, %v100
  %v106 = vmul.f32 %v59, %v100
  %v107 = vmul.f32 %v60, %v100
  %v108 = vmul.f32 %v61, %v100
  %v109 = vmul.f32 %v62, %v100
  %v110 = vmul.f32 %v63, %v100
  %v111 = vmul.f32 %v64, %v100
  %v112 = vmul.f32 %v65, %v100
  %v113 = vmul.f32 %v66, %v100
  %v114 = vmul.f32 %v67, %v100
  %v115 = vmul.f32 %v68, %v100
  %v116 = vmul.f32 %v69, %v100
  %v117 = vmul.f32 %v70, %v100
  %v118 = vmul.f32 %v71, %v100
  %v119 = vmul.f32 %v72, %v100
  %v120 = vmul.f32 %v73, %v100
  %v121 = vmul.f32 %v74, %v100
  %v122 = vmul.f32 %v75, %v100
  %v123 = vmul.f32 %v76, %v100
  %v124 = vmul.f32 %v77, %v100
  %v125 = vmul.f32 %v78, %v100
  %v126 = vmul.f32 %v79, %v100
  %v127 = vmul.f32 %v80, %v100
  %v128 = vmul.f32 %v81, %v100
  %v129 = vmul.f32 %v82, %v100
  %v130 = vmul.f32 %v83, %v100
  %v131 = vmul.f32 %v84, %v100
  %v132 = vmul.f32 %v85, %v100
  %v133 = vmul.f32 %v86, %v100
  %v135 = vlaneseq
  %v136 = vshrl.u32 %v135, 7
  %v137 = vsub.s32 0, %v136
  %v138 = vrot.slane %v95, %v137
  %v140 = vadd.f32 %v102, %v138
  %v141 = vadd.f32 %v103, %v138
  %v142 = vadd.f32 %v104, %v138
  %v143 = vadd.f32 %v105, %v138
  %v144 = vadd.f32 %v106, %v138
  %v145 = vadd.f32 %v107, %v138
  %v146 = vadd.f32 %v108, %v138
  %v147 = vadd.f32 %v109, %v138
  %v148 = vadd.f32 %v110, %v138
  %v149 = vadd.f32 %v111, %v138
  %v150 = vadd.f32 %v112, %v138
  %v151 = vadd.f32 %v113, %v138
  %v152 = vadd.f32 %v114, %v138
  %v153 = vadd.f32 %v115, %v138
  %v154 = vadd.f32 %v116, %v138
  %v155 = vadd.f32 %v117, %v138
  %v156 = vadd.f32 %v118, %v138
  %v157 = vadd.f32 %v119, %v138
  %v158 = vadd.f32 %v120, %v138
  %v159 = vadd.f32 %v121, %v138
  %v160 = vadd.f32 %v122, %v138
  %v161 = vadd.f32 %v123, %v138
  %v162 = vadd.f32 %v124, %v138
  %v163 = vadd.f32 %v125, %v138
  %v164 = vadd.f32 %v126, %v138
  %v165 = vadd.f32 %v127, %v138
  %v166 = vadd.f32 %v128, %v138
  %v167 = vadd.f32 %v129, %v138
  %v168 = vadd.f32 %v130, %v138
  %v169 = vadd.f32 %v131, %v138
  %v170 = vadd.f32 %v132, %v138
  %v171 = vadd.f32 %v133, %v138
  %v172 = vld [vmem:[%s5] sm:$0xff]
  %v173 = vld [vmem:[%s5 + $0x8] sm:$0xff]
  %v174 = vld [vmem:[%s5 + $0x10] sm:$0xff]
  %v175 = vld [vmem:[%s5 + $0x18] sm:$0xff]
  %v176 = vld [vmem:[%s5 + $0x20] sm:$0xff]
  %v177 = vld [vmem:[%s5 + $0x28] sm:$0xff]
  %v178 = vld [vmem:[%s5 + $0x30] sm:$0xff]
  %v179 = vld [vmem:[%s5 + $0x38] sm:$0xff]
  %v180 = vld [vmem:[%s5 + $0x40] sm:$0xff]
  %v181 = vld [vmem:[%s5 + $0x48] sm:$0xff]
  %v182 = vld [vmem:[%s5 + $0x50] sm:$0xff]
  %v183 = vld [vmem:[%s5 + $0x58] sm:$0xff]
  %v184 = vld [vmem:[%s5 + $0x60] sm:$0xff]
  %v185 = vld [vmem:[%s5 + $0x68] sm:$0xff]
  %v186 = vld [vmem:[%s5 + $0x70] sm:$0xff]
  %v187 = vld [vmem:[%s5 + $0x78] sm:$0xff]
  %v188 = vld [vmem:[%s5 + $0x80] sm:$0xff]
  %v189 = vld [vmem:[%s5 + $0x88] sm:$0xff]
  %v190 = vld [vmem:[%s5 + $0x90] sm:$0xff]
  %v191 = vld [vmem:[%s5 + $0x98] sm:$0xff]
  %v192 = vld [vmem:[%s5 + $0xa0] sm:$0xff]
  %v193 = vld [vmem:[%s5 + $0xa8] sm:$0xff]
  %v194 = vld [vmem:[%s5 + $0xb0] sm:$0xff]
  %v195 = vld [vmem:[%s5 + $0xb8] sm:$0xff]
  %v196 = vld [vmem:[%s5 + $0xc0] sm:$0xff]
  %v197 = vld [vmem:[%s5 + $0xc8] sm:$0xff]
  %v198 = vld [vmem:[%s5 + $0xd0] sm:$0xff]
  %v199 = vld [vmem:[%s5 + $0xd8] sm:$0xff]
  %v200 = vld [vmem:[%s5 + $0xe0] sm:$0xff]
  %v201 = vld [vmem:[%s5 + $0xe8] sm:$0xff]
  %v202 = vld [vmem:[%s5 + $0xf0] sm:$0xff]
  %v203 = vld [vmem:[%s5 + $0xf8] sm:$0xff]
  %v204 = vadd.f32 %v140, %v172
  %v205 = vadd.f32 %v141, %v173
  %v206 = vadd.f32 %v142, %v174
  %v207 = vadd.f32 %v143, %v175
  %v208 = vadd.f32 %v144, %v176
  %v209 = vadd.f32 %v145, %v177
  %v210 = vadd.f32 %v146, %v178
  %v211 = vadd.f32 %v147, %v179
  %v212 = vadd.f32 %v148, %v180
  %v213 = vadd.f32 %v149, %v181
  %v214 = vadd.f32 %v150, %v182
  %v215 = vadd.f32 %v151, %v183
  %v216 = vadd.f32 %v152, %v184
  %v217 = vadd.f32 %v153, %v185
  %v218 = vadd.f32 %v154, %v186
  %v219 = vadd.f32 %v155, %v187
  %v220 = vadd.f32 %v156, %v188
  %v221 = vadd.f32 %v157, %v189
  %v222 = vadd.f32 %v158, %v190
  %v223 = vadd.f32 %v159, %v191
  %v224 = vadd.f32 %v160, %v192
  %v225 = vadd.f32 %v161, %v193
  %v226 = vadd.f32 %v162, %v194
  %v227 = vadd.f32 %v163, %v195
  %v228 = vadd.f32 %v164, %v196
  %v229 = vadd.f32 %v165, %v197
  %v230 = vadd.f32 %v166, %v198
  %v231 = vadd.f32 %v167, %v199
  %v232 = vadd.f32 %v168, %v200
  %v233 = vadd.f32 %v169, %v201
  %v234 = vadd.f32 %v170, %v202
  %v235 = vadd.f32 %v171, %v203
  %236 = vst [vmem:[%s6] sm:$0xff] %v204
  %237 = vst [vmem:[%s6 + $0x8] sm:$0xff] %v205
  %238 = vst [vmem:[%s6 + $0x10] sm:$0xff] %v206
  %239 = vst [vmem:[%s6 + $0x18] sm:$0xff] %v207
  %240 = vst [vmem:[%s6 + $0x20] sm:$0xff] %v208
  %241 = vst [vmem:[%s6 + $0x28] sm:$0xff] %v209
  %242 = vst [vmem:[%s6 + $0x30] sm:$0xff] %v210
  %243 = vst [vmem:[%s6 + $0x38] sm:$0xff] %v211
  %244 = vst [vmem:[%s6 + $0x40] sm:$0xff] %v212
  %245 = vst [vmem:[%s6 + $0x48] sm:$0xff] %v213
  %246 = vst [vmem:[%s6 + $0x50] sm:$0xff] %v214
  %247 = vst [vmem:[%s6 + $0x58] sm:$0xff] %v215
  %248 = vst [vmem:[%s6 + $0x60] sm:$0xff] %v216
  %249 = vst [vmem:[%s6 + $0x68] sm:$0xff] %v217
  %250 = vst [vmem:[%s6 + $0x70] sm:$0xff] %v218
  %251 = vst [vmem:[%s6 + $0x78] sm:$0xff] %v219
  %252 = vst [vmem:[%s6 + $0x80] sm:$0xff] %v220
  %253 = vst [vmem:[%s6 + $0x88] sm:$0xff] %v221
  %254 = vst [vmem:[%s6 + $0x90] sm:$0xff] %v222
  %255 = vst [vmem:[%s6 + $0x98] sm:$0xff] %v223
  %256 = vst [vmem:[%s6 + $0xa0] sm:$0xff] %v224
  %257 = vst [vmem:[%s6 + $0xa8] sm:$0xff] %v225
  %258 = vst [vmem:[%s6 + $0xb0] sm:$0xff] %v226
  %259 = vst [vmem:[%s6 + $0xb8] sm:$0xff] %v227
  %260 = vst [vmem:[%s6 + $0xc0] sm:$0xff] %v228
  %261 = vst [vmem:[%s6 + $0xc8] sm:$0xff] %v229
  %262 = vst [vmem:[%s6 + $0xd0] sm:$0xff] %v230
  %263 = vst [vmem:[%s6 + $0xd8] sm:$0xff] %v231
  %264 = vst [vmem:[%s6 + $0xe0] sm:$0xff] %v232
  %265 = vst [vmem:[%s6 + $0xe8] sm:$0xff] %v233
  %266 = vst [vmem:[%s6 + $0xf0] sm:$0xff] %v234
  %267 = vst [vmem:[%s6 + $0xf8] sm:$0xff] %v235
  // Predicated region
  $region26: #{graph_res_block_forward.13} parent=0 // pred_check
    _
  $region27: #{graph_res_block_forward.13} parent=0 // pred_check_branch
    %269 = sbr.rel (0) target = $region29
  $region28: #{graph_res_block_forward.13} parent=0 // pred_region
    _
  $region29: #{graph_res_block_forward.13} parent=0 // pred_fallthru
    _
  // Predicated region
  $region30: #{graph_res_block_forward.13} parent=0 // pred_check
    _
  $region31: #{graph_res_block_forward.13} parent=0 // pred_check_branch
    %271 = sbr.rel (0) target = $region33
  $region32: #{graph_res_block_forward.13} parent=0 // pred_region
    _
  $region33: #{graph_res_block_forward.13} parent=0 // pred_fallthru
    _

// kernel: graph_res_block_forward.9
$region0: #{graph_res_block_forward.9}
  #allocation0 [shape = 'u32[]', space=smem, size = 0x4, offset = 0x4, fixed_abs, tag = 'smem constant byte address 0x4 - core index']
  #allocation1 [shape = 'u32[144,128]{1,0:T(1,128)}', space=vmem, size = 0x12000, scoped, tag = 'internal scratch']
  #allocation2 [shape = 'bf16[256,640]{1,0:T(16,128)(2,1)}', space=vmem, size = 0x50000, scoped, tag = 'scratch operand']
  %s0 = inlined_call_operand.vmem [shape: bf16[5,256,256], index: 0, kind: input, shape index: {}]
  %s1 = inlined_call_operand.vmem [shape: f32[5,256,1], index: 1, kind: input, shape index: {}]
  %s2 = inlined_call_operand.vmem [shape: bf16[256,128], index: 2, kind: input, shape index: {}]
  %s3 = inlined_call_operand.vmem [shape: bf16[640,128], index: 3, kind: input, shape index: {}]
  %s4 = inlined_call_operand.vmem [shape: bf16[256,128], index: 4, kind: output, shape index: {}]
  %s5 = sld [smem:[#allocation0]]
  $region26: #{graph_res_block_forward.9} parent=0
    _
  %s7 = ssub.s32 1, %s5
  %s8 = scalar_select 0, %s7, %s5
  // Predicated region
  $region2: #{graph_res_block_forward.9} parent=0 // pred_check
    _
  $region3: #{graph_res_block_forward.9} parent=0 // pred_check_branch
    %10 = sbr.rel (0) target = $region5
  $region4: #{graph_res_block_forward.9} parent=0 // pred_region
    _
  $region5: #{graph_res_block_forward.9} parent=0 // pred_fallthru
    _
  // Predicated region
  $region6: #{graph_res_block_forward.9} parent=0 // pred_check
    _
  $region7: #{graph_res_block_forward.9} parent=0 // pred_check_branch
    %12 = sbr.rel (0) target = $region9
  $region8: #{graph_res_block_forward.9} parent=0 // pred_region
    _
  $region9: #{graph_res_block_forward.9} parent=0 // pred_fallthru
    _
  // Predicated region
  $region10: #{graph_res_block_forward.9} parent=0 // pred_check
    _
  $region11: #{graph_res_block_forward.9} parent=0 // pred_check_branch
    %14 = sbr.rel (0) target = $region13
  $region12: #{graph_res_block_forward.9} parent=0 // pred_region
    _
  $region13: #{graph_res_block_forward.9} parent=0 // pred_fallthru
    _
  // Predicated region
  $region14: #{graph_res_block_forward.9} parent=0 // pred_check
    _
  $region15: #{graph_res_block_forward.9} parent=0 // pred_check_branch
    %16 = sbr.rel (0) target = $region17
  $region16: #{graph_res_block_forward.9} parent=0 // pred_region
    _
  $region17: #{graph_res_block_forward.9} parent=0 // pred_fallthru
    _
  %v18 = vld [vmem:[%s2] sm:$0xf]
  %v19 = vld [vmem:[%s2 + $0x4] sm:$0xf]
  %v20 = vld [vmem:[%s2 + $0x8] sm:$0xf]
  %v21 = vld [vmem:[%s2 + $0xc] sm:$0xf]
  %v22 = vld [vmem:[%s2 + $0x10] sm:$0xf]
  %v23 = vld [vmem:[%s2 + $0x14] sm:$0xf]
  %v24 = vld [vmem:[%s2 + $0x18] sm:$0xf]
  %v25 = vld [vmem:[%s2 + $0x1c] sm:$0xf]
  %v26 = vld [vmem:[%s2 + $0x20] sm:$0xf]
  %v27 = vld [vmem:[%s2 + $0x24] sm:$0xf]
  %v28 = vld [vmem:[%s2 + $0x28] sm:$0xf]
  %v29 = vld [vmem:[%s2 + $0x2c] sm:$0xf]
  %v30 = vld [vmem:[%s2 + $0x30] sm:$0xf]
  %v31 = vld [vmem:[%s2 + $0x34] sm:$0xf]
  %v32 = vld [vmem:[%s2 + $0x38] sm:$0xf]
  %v33 = vld [vmem:[%s2 + $0x3c] sm:$0xf]
  %v34 = vld [vmem:[%s2 + $0x40] sm:$0xf]
  %v35 = vld [vmem:[%s2 + $0x44] sm:$0xf]
  %v36 = vld [vmem:[%s2 + $0x48] sm:$0xf]
  %v37 = vld [vmem:[%s2 + $0x4c] sm:$0xf]
  %v38 = vld [vmem:[%s2 + $0x50] sm:$0xf]
  %v39 = vld [vmem:[%s2 + $0x54] sm:$0xf]
  %v40 = vld [vmem:[%s2 + $0x58] sm:$0xf]
  %v41 = vld [vmem:[%s2 + $0x5c] sm:$0xf]
  %v42 = vld [vmem:[%s2 + $0x60] sm:$0xf]
  %v43 = vld [vmem:[%s2 + $0x64] sm:$0xf]
  %v44 = vld [vmem:[%s2 + $0x68] sm:$0xf]
  %v45 = vld [vmem:[%s2 + $0x6c] sm:$0xf]
  %v46 = vld [vmem:[%s2 + $0x70] sm:$0xf]
  %v47 = vld [vmem:[%s2 + $0x74] sm:$0xf]
  %v48 = vld [vmem:[%s2 + $0x78] sm:$0xf]
  %v49 = vld [vmem:[%s2 + $0x7c] sm:$0xf]
  %v50 = vld [vmem:[%s0] sm:$0xff]
  %v51 = vld [vmem:[%s0 + $0x8] sm:$0xff]
  %v52 = vld [vmem:[%s0 + $0x10] sm:$0xff]
  %v53 = vld [vmem:[%s0 + $0x18] sm:$0xff]
  %v54 = vld [vmem:[%s0 + $0x20] sm:$0xff]
  %v55 = vld [vmem:[%s0 + $0x28] sm:$0xff]
  %v56 = vld [vmem:[%s0 + $0x30] sm:$0xff]
  %v57 = vld [vmem:[%s0 + $0x38] sm:$0xff]
  %v58 = vld [vmem:[%s0 + $0x40] sm:$0xff]
  %v59 = vld [vmem:[%s0 + $0x48] sm:$0xff]
  %v60 = vld [vmem:[%s0 + $0x50] sm:$0xff]
  %v61 = vld [vmem:[%s0 + $0x58] sm:$0xff]
  %v62 = vld [vmem:[%s0 + $0x60] sm:$0xff]
  %v63 = vld [vmem:[%s0 + $0x68] sm:$0xff]
  %v64 = vld [vmem:[%s0 + $0x70] sm:$0xff]
  %v65 = vld [vmem:[%s0 + $0x78] sm:$0xff]
  %v66 = vld [vmem:[%s0 + $0x80] sm:$0xff]
  %v67 = vld [vmem:[%s0 + $0x88] sm:$0xff]
  %v68 = vld [vmem:[%s0 + $0x90] sm:$0xff]
  %v69 = vld [vmem:[%s0 + $0x98] sm:$0xff]
  %v70 = vld [vmem:[%s0 + $0xa0] sm:$0xff]
  %v71 = vld [vmem:[%s0 + $0xa8] sm:$0xff]
  %v72 = vld [vmem:[%s0 + $0xb0] sm:$0xff]
  %v73 = vld [vmem:[%s0 + $0xb8] sm:$0xff]
  %v74 = vld [vmem:[%s0 + $0xc0] sm:$0xff]
  %v75 = vld [vmem:[%s0 + $0xc8] sm:$0xff]
  %v76 = vld [vmem:[%s0 + $0xd0] sm:$0xff]
  %v77 = vld [vmem:[%s0 + $0xd8] sm:$0xff]
  %v78 = vld [vmem:[%s0 + $0xe0] sm:$0xff]
  %v79 = vld [vmem:[%s0 + $0xe8] sm:$0xff]
  %v80 = vld [vmem:[%s0 + $0xf0] sm:$0xff]
  %v81 = vld [vmem:[%s0 + $0xf8] sm:$0xff]
  %v114 = vunpack.c.l.b16 %v50
  %v115 = vunpack.c.h.b16 %v50
  %v116 = vunpack.c.l.b16 %v51
  %v117 = vunpack.c.h.b16 %v51
  %v118 = vunpack.c.l.b16 %v52
  %v119 = vunpack.c.h.b16 %v52
  %v120 = vunpack.c.l.b16 %v53
  %v121 = vunpack.c.h.b16 %v53
  %v122 = vunpack.c.l.b16 %v54
  %v123 = vunpack.c.h.b16 %v54
  %v124 = vunpack.c.l.b16 %v55
  %v125 = vunpack.c.h.b16 %v55
  %v126 = vunpack.c.l.b16 %v56
  %v127 = vunpack.c.h.b16 %v56
  %v128 = vunpack.c.l.b16 %v57
  %v129 = vunpack.c.h.b16 %v57
  %v130 = vunpack.c.l.b16 %v58
  %v131 = vunpack.c.h.b16 %v58
  %v132 = vunpack.c.l.b16 %v59
  %v133 = vunpack.c.h.b16 %v59
  %v134 = vunpack.c.l.b16 %v60
  %v135 = vunpack.c.h.b16 %v60
  %v136 = vunpack.c.l.b16 %v61
  %v137 = vunpack.c.h.b16 %v61
  %v138 = vunpack.c.l.b16 %v62
  %v139 = vunpack.c.h.b16 %v62
  %v140 = vunpack.c.l.b16 %v63
  %v141 = vunpack.c.h.b16 %v63
  %v142 = vunpack.c.l.b16 %v64
  %v143 = vunpack.c.h.b16 %v64
  %v144 = vunpack.c.l.b16 %v65
  %v145 = vunpack.c.h.b16 %v65
  %v146 = vunpack.c.l.b16 %v66
  %v147 = vunpack.c.h.b16 %v66
  %v148 = vunpack.c.l.b16 %v67
  %v149 = vunpack.c.h.b16 %v67
  %v150 = vunpack.c.l.b16 %v68
  %v151 = vunpack.c.h.b16 %v68
  %v152 = vunpack.c.l.b16 %v69
  %v153 = vunpack.c.h.b16 %v69
  %v154 = vunpack.c.l.b16 %v70
  %v155 = vunpack.c.h.b16 %v70
  %v156 = vunpack.c.l.b16 %v71
  %v157 = vunpack.c.h.b16 %v71
  %v158 = vunpack.c.l.b16 %v72
  %v159 = vunpack.c.h.b16 %v72
  %v160 = vunpack.c.l.b16 %v73
  %v161 = vunpack.c.h.b16 %v73
  %v162 = vunpack.c.l.b16 %v74
  %v163 = vunpack.c.h.b16 %v74
  %v164 = vunpack.c.l.b16 %v75
  %v165 = vunpack.c.h.b16 %v75
  %v166 = vunpack.c.l.b16 %v76
  %v167 = vunpack.c.h.b16 %v76
  %v168 = vunpack.c.l.b16 %v77
  %v169 = vunpack.c.h.b16 %v77
  %v170 = vunpack.c.l.b16 %v78
  %v171 = vunpack.c.h.b16 %v78
  %v172 = vunpack.c.l.b16 %v79
  %v173 = vunpack.c.h.b16 %v79
  %v174 = vunpack.c.l.b16 %v80
  %v175 = vunpack.c.h.b16 %v80
  %v176 = vunpack.c.l.b16 %v81
  %v177 = vunpack.c.h.b16 %v81
  %v178 = vpack.c.b16 %v116, %v114
  %v179 = vpack.c.b16 %v117, %v115
  %v180 = vpack.c.b16 %v120, %v118
  %v181 = vpack.c.b16 %v121, %v119
  %v182 = vpack.c.b16 %v124, %v122
  %v183 = vpack.c.b16 %v125, %v123
  %v184 = vpack.c.b16 %v128, %v126
  %v185 = vpack.c.b16 %v129, %v127
  %v186 = vpack.c.b16 %v132, %v130
  %v187 = vpack.c.b16 %v133, %v131
  %v188 = vpack.c.b16 %v136, %v134
  %v189 = vpack.c.b16 %v137, %v135
  %v190 = vpack.c.b16 %v140, %v138
  %v191 = vpack.c.b16 %v141, %v139
  %v192 = vpack.c.b16 %v144, %v142
  %v193 = vpack.c.b16 %v145, %v143
  %v194 = vpack.c.b16 %v148, %v146
  %v195 = vpack.c.b16 %v149, %v147
  %v196 = vpack.c.b16 %v152, %v150
  %v197 = vpack.c.b16 %v153, %v151
  %v198 = vpack.c.b16 %v156, %v154
  %v199 = vpack.c.b16 %v157, %v155
  %v200 = vpack.c.b16 %v160, %v158
  %v201 = vpack.c.b16 %v161, %v159
  %v202 = vpack.c.b16 %v164, %v162
  %v203 = vpack.c.b16 %v165, %v163
  %v204 = vpack.c.b16 %v168, %v166
  %v205 = vpack.c.b16 %v169, %v167
  %v206 = vpack.c.b16 %v172, %v170
  %v207 = vpack.c.b16 %v173, %v171
  %v208 = vpack.c.b16 %v176, %v174
  %v209 = vpack.c.b16 %v177, %v175
  %v274 = vunpack.c.l.b16 %v18
  %v275 = vunpack.c.l.b16 %v19
  %v276 = vunpack.c.l.b16 %v20
  %v277 = vunpack.c.l.b16 %v21
  %v278 = vunpack.c.l.b16 %v22
  %v279 = vunpack.c.l.b16 %v23
  %v280 = vunpack.c.l.b16 %v24
  %v281 = vunpack.c.l.b16 %v25
  %v282 = vunpack.c.l.b16 %v26
  %v283 = vunpack.c.l.b16 %v27
  %v284 = vunpack.c.l.b16 %v28
  %v285 = vunpack.c.l.b16 %v29
  %v286 = vunpack.c.l.b16 %v30
  %v287 = vunpack.c.l.b16 %v31
  %v288 = vunpack.c.l.b16 %v32
  %v289 = vunpack.c.l.b16 %v33
  %v290 = vunpack.c.l.b16 %v34
  %v291 = vunpack.c.l.b16 %v35
  %v292 = vunpack.c.l.b16 %v36
  %v293 = vunpack.c.l.b16 %v37
  %v294 = vunpack.c.l.b16 %v38
  %v295 = vunpack.c.l.b16 %v39
  %v296 = vunpack.c.l.b16 %v40
  %v297 = vunpack.c.l.b16 %v41
  %v298 = vunpack.c.l.b16 %v42
  %v299 = vunpack.c.l.b16 %v43
  %v300 = vunpack.c.l.b16 %v44
  %v301 = vunpack.c.l.b16 %v45
  %v302 = vunpack.c.l.b16 %v46
  %v303 = vunpack.c.l.b16 %v47
  %v304 = vunpack.c.l.b16 %v48
  %v305 = vunpack.c.l.b16 %v49
  %v306 = vpack.c.b16 %v275, %v274
  %v307 = vpack.c.b16 %v277, %v276
  %v308 = vpack.c.b16 %v279, %v278
  %v309 = vpack.c.b16 %v281, %v280
  %v310 = vpack.c.b16 %v283, %v282
  %v311 = vpack.c.b16 %v285, %v284
  %v312 = vpack.c.b16 %v287, %v286
  %v313 = vpack.c.b16 %v289, %v288
  %v314 = vpack.c.b16 %v291, %v290
  %v315 = vpack.c.b16 %v293, %v292
  %v316 = vpack.c.b16 %v295, %v294
  %v317 = vpack.c.b16 %v297, %v296
  %v318 = vpack.c.b16 %v299, %v298
  %v319 = vpack.c.b16 %v301, %v300
  %v320 = vpack.c.b16 %v303, %v302
  %v321 = vpack.c.b16 %v305, %v304
  %338 = vmatprep.subr.bf16.mxu0 0
  %339 = vmatpush1.bf16.msra.mxu0 %v306
  %340 = vmatprep.subr.bf16.mxu0 0
  %341 = vmatpush1.bf16.msra.mxu0 %v307
  %342 = vmatprep.subr.bf16.mxu0 0
  %343 = vmatpush1.bf16.msra.mxu0 %v308
  %344 = vmatprep.subr.bf16.mxu0 0
  %345 = vmatpush1.bf16.msra.mxu0 %v309
  %346 = vmatprep.subr.bf16.mxu0 0
  %347 = vmatpush1.bf16.msra.mxu0 %v310
  %348 = vmatprep.subr.bf16.mxu0 0
  %349 = vmatpush1.bf16.msra.mxu0 %v311
  %350 = vmatprep.subr.bf16.mxu0 0
  %351 = vmatpush1.bf16.msra.mxu0 %v312
  %352 = vmatprep.subr.bf16.mxu0 0
  %353 = vmatpush1.bf16.msra.mxu0 %v313
  %354 = vmatprep.subr.bf16.mxu0 0
  %355 = vmatpush1.bf16.msra.mxu0 %v314
  %356 = vmatprep.subr.bf16.mxu0 0
  %357 = vmatpush1.bf16.msra.mxu0 %v315
  %358 = vmatprep.subr.bf16.mxu0 0
  %359 = vmatpush1.bf16.msra.mxu0 %v316
  %360 = vmatprep.subr.bf16.mxu0 0
  %361 = vmatpush1.bf16.msra.mxu0 %v317
  %362 = vmatprep.subr.bf16.mxu0 0
  %363 = vmatpush1.bf16.msra.mxu0 %v318
  %364 = vmatprep.subr.bf16.mxu0 0
  %365 = vmatpush1.bf16.msra.mxu0 %v319
  %366 = vmatprep.subr.bf16.mxu0 0
  %367 = vmatpush1.bf16.msra.mxu0 %v320
  %368 = vmatprep.subr.bf16.mxu0 0
  %369 = vmatpush1.bf16.msra.mxu0 %v321
  %370 = vmatprep.mubr.bf16.mxu0 %v179
  %371 = vmatmul.mubr.bf16.gmra.mrb[0].mxu0 %v178
  %v372 = vpop.f32.mrb[0].mxu0
  %v373 = vadd.f32 0.0, %v372
  %v374 = vpop.f32.mrb[0].mxu0
  %v375 = vpop.f32.mrb[0].mxu0
  %v376 = vadd.f32 0.0, %v375
  %v377 = vpop.f32.mrb[0].mxu0
  %378 = vmatprep.mubr.bf16.mxu0 %v181
  %379 = vmatmul.mubr.bf16.gmra.mrb[0].mxu0 %v180
  %v380 = vpop.f32.mrb[0].mxu0
  %v381 = vadd.f32 0.0, %v380
  %v382 = vpop.f32.mrb[0].mxu0
  %v383 = vpop.f32.mrb[0].mxu0
  %v384 = vadd.f32 0.0, %v383
  %v385 = vpop.f32.mrb[0].mxu0
  %386 = vmatprep.mubr.bf16.mxu0 %v183
  %387 = vmatmul.mubr.bf16.gmra.mrb[0].mxu0 %v182
  %v388 = vpop.f32.mrb[0].mxu0
  %v389 = vadd.f32 0.0, %v388
  %v390 = vpop.f32.mrb[0].mxu0
  %v391 = vpop.f32.mrb[0].mxu0
  %v392 = vadd.f32 0.0, %v391
  %v393 = vpop.f32.mrb[0].mxu0
  %394 = vmatprep.mubr.bf16.mxu0 %v185
  %395 = vmatmul.mubr.bf16.gmra.mrb[0].mxu0 %v184
  %v396 = vpop.f32.mrb[0].mxu0
  %v397 = vadd.f32 0.0, %v396
  %v398 = vpop.f32.mrb[0].mxu0
  %v399 = vpop.f32.mrb[0].mxu0
  %v400 = vadd.f32 0.0, %v399
  %v401 = vpop.f32.mrb[0].mxu0
  %402 = vmatprep.mubr.bf16.mxu0 %v187
  %403 = vmatmul.mubr.bf16.gmra.mrb[0].mxu0 %v186
  %v404 = vpop.f32.mrb[0].mxu0
  %v405 = vadd.f32 0.0, %v404
  %v406 = vpop.f32.mrb[0].mxu0
  %v407 = vpop.f32.mrb[0].mxu0
  %v408 = vadd.f32 0.0, %v407
  %v409 = vpop.f32.mrb[0].mxu0
  %410 = vmatprep.mubr.bf16.mxu0 %v189
  %411 = vmatmul.mubr.bf16.gmra.mrb[0].mxu0 %v188
  %v412 = vpop.f32.mrb[0].mxu0
  %v413 = vadd.f32 0.0, %v412
  %v414 = vpop.f32.mrb[0].mxu0
  %v415 = vpop.f32.mrb[0].mxu0
  %v416 = vadd.f32 0.0, %v415
  %v417 = vpop.f32.mrb[0].mxu0
  %418 = vmatprep.mubr.bf16.mxu0 %v191
  %419 = vmatmul.mubr.bf16.gmra.mrb[0].mxu0 %v190
  %v420 = vpop.f32.mrb[0].mxu0
  %v421 = vadd.f32 0.0, %v420
  %v422 = vpop.f32.mrb[0].mxu0
  %v423 = vpop.f32.mrb[0].mxu0
  %v424 = vadd.f32 0.0, %v423
  %v425 = vpop.f32.mrb[0].mxu0
  %426 = vmatprep.mubr.bf16.mxu0 %v193
  %427 = vmatmul.mubr.bf16.gmra.mrb[0].mxu0 %v192
  %v428 = vpop.f32.mrb[0].mxu0
  %v429 = vadd.f32 0.0, %v428
  %v430 = vpop.f32.mrb[0].mxu0
  %v431 = vpop.f32.mrb[0].mxu0
  %v432 = vadd.f32 0.0, %v431
  %v433 = vpop.f32.mrb[0].mxu0
  %434 = vmatprep.mubr.bf16.mxu0 %v195
  %435 = vmatmul.mubr.bf16.gmra.mrb[0].mxu0 %v194
  %v436 = vpop.f32.mrb[0].mxu0
  %v437 = vadd.f32 0.0, %v436
  %v438 = vpop.f32.mrb[0].mxu0
  %v439 = vpop.f32.mrb[0].mxu0
  %v440 = vadd.f32 0.0, %v439
  %v441 = vpop.f32.mrb[0].mxu0
  %442 = vmatprep.mubr.bf16.mxu0 %v197
  %443 = vmatmul.mubr.bf16.gmra.mrb[0].mxu0 %v196
  %v444 = vpop.f32.mrb[0].mxu0
  %v445 = vadd.f32 0.0, %v444
  %v446 = vpop.f32.mrb[0].mxu0
  %v447 = vpop.f32.mrb[0].mxu0
  %v448 = vadd.f32 0.0, %v447
  %v449 = vpop.f32.mrb[0].mxu0
  %450 = vmatprep.mubr.bf16.mxu0 %v199
  %451 = vmatmul.mubr.bf16.gmra.mrb[0].mxu0 %v198
  %v452 = vpop.f32.mrb[0].mxu0
  %v453 = vadd.f32 0.0, %v452
  %v454 = vpop.f32.mrb[0].mxu0
  %v455 = vpop.f32.mrb[0].mxu0
  %v456 = vadd.f32 0.0, %v455
  %v457 = vpop.f32.mrb[0].mxu0
  %458 = vmatprep.mubr.bf16.mxu0 %v201
  %459 = vmatmul.mubr.bf16.gmra.mrb[0].mxu0 %v200
  %v460 = vpop.f32.mrb[0].mxu0
  %v461 = vadd.f32 0.0, %v460
  %v462 = vpop.f32.mrb[0].mxu0
  %v463 = vpop.f32.mrb[0].mxu0
  %v464 = vadd.f32 0.0, %v463
  %v465 = vpop.f32.mrb[0].mxu0
  %466 = vmatprep.mubr.bf16.mxu0 %v203
  %467 = vmatmul.mubr.bf16.gmra.mrb[0].mxu0 %v202
  %v468 = vpop.f32.mrb[0].mxu0
  %v469 = vadd.f32 0.0, %v468
  %v470 = vpop.f32.mrb[0].mxu0
  %v471 = vpop.f32.mrb[0].mxu0
  %v472 = vadd.f32 0.0, %v471
  %v473 = vpop.f32.mrb[0].mxu0
  %474 = vmatprep.mubr.bf16.mxu0 %v205
  %475 = vmatmul.mubr.bf16.gmra.mrb[0].mxu0 %v204
  %v476 = vpop.f32.mrb[0].mxu0
  %v477 = vadd.f32 0.0, %v476
  %v478 = vpop.f32.mrb[0].mxu0
  %v479 = vpop.f32.mrb[0].mxu0
  %v480 = vadd.f32 0.0, %v479
  %v481 = vpop.f32.mrb[0].mxu0
  %482 = vmatprep.mubr.bf16.mxu0 %v207
  %483 = vmatmul.mubr.bf16.gmra.mrb[0].mxu0 %v206
  %v484 = vpop.f32.mrb[0].mxu0
  %v485 = vadd.f32 0.0, %v484
  %v486 = vpop.f32.mrb[0].mxu0
  %v487 = vpop.f32.mrb[0].mxu0
  %v488 = vadd.f32 0.0, %v487
  %v489 = vpop.f32.mrb[0].mxu0
  %490 = vmatprep.mubr.bf16.mxu0 %v209
  %491 = vmatmul.mubr.bf16.gmra.mrb[0].mxu0 %v208
  %v492 = vpop.f32.mrb[0].mxu0
  %v493 = vadd.f32 0.0, %v492
  %v494 = vpop.f32.mrb[0].mxu0
  %v495 = vpop.f32.mrb[0].mxu0
  %v496 = vadd.f32 0.0, %v495
  %v497 = vpop.f32.mrb[0].mxu0
  %498 = vdwg.mxu0
  %v499 = vld [vmem:[%s1] sm:$0xff]
  %v500 = vld [vmem:[%s1 + $0x8] sm:$0xff]
  %v501 = vld [vmem:[%s1 + $0x10] sm:$0xff]
  %v502 = vld [vmem:[%s1 + $0x18] sm:$0xff]
  %v503 = vld [vmem:[%s1 + $0x20] sm:$0xff]
  %v504 = vld [vmem:[%s1 + $0x28] sm:$0xff]
  %v505 = vld [vmem:[%s1 + $0x30] sm:$0xff]
  %v506 = vld [vmem:[%s1 + $0x38] sm:$0xff]
  %v507 = vld [vmem:[%s1 + $0x40] sm:$0xff]
  %v508 = vld [vmem:[%s1 + $0x48] sm:$0xff]
  %v509 = vld [vmem:[%s1 + $0x50] sm:$0xff]
  %v510 = vld [vmem:[%s1 + $0x58] sm:$0xff]
  %v511 = vld [vmem:[%s1 + $0x60] sm:$0xff]
  %v512 = vld [vmem:[%s1 + $0x68] sm:$0xff]
  %v513 = vld [vmem:[%s1 + $0x70] sm:$0xff]
  %v514 = vld [vmem:[%s1 + $0x78] sm:$0xff]
  %v515 = vld [vmem:[%s1 + $0x80] sm:$0xff]
  %v516 = vld [vmem:[%s1 + $0x88] sm:$0xff]
  %v517 = vld [vmem:[%s1 + $0x90] sm:$0xff]
  %v518 = vld [vmem:[%s1 + $0x98] sm:$0xff]
  %v519 = vld [vmem:[%s1 + $0xa0] sm:$0xff]
  %v520 = vld [vmem:[%s1 + $0xa8] sm:$0xff]
  %v521 = vld [vmem:[%s1 + $0xb0] sm:$0xff]
  %v522 = vld [vmem:[%s1 + $0xb8] sm:$0xff]
  %v523 = vld [vmem:[%s1 + $0xc0] sm:$0xff]
  %v524 = vld [vmem:[%s1 + $0xc8] sm:$0xff]
  %v525 = vld [vmem:[%s1 + $0xd0] sm:$0xff]
  %v526 = vld [vmem:[%s1 + $0xd8] sm:$0xff]
  %v527 = vld [vmem:[%s1 + $0xe0] sm:$0xff]
  %v528 = vld [vmem:[%s1 + $0xe8] sm:$0xff]
  %v529 = vld [vmem:[%s1 + $0xf0] sm:$0xff]
  %v530 = vld [vmem:[%s1 + $0xf8] sm:$0xff]
  %532 = vset.pattern.permute.xlu0 0
  %533 = vperm.xlu0 %532, %v499
  %v534 = vpop.permute.xlu0 %533
  %537 = vset.pattern.permute.xlu0 0
  %538 = vperm.xlu0 %537, %v500
  %v539 = vpop.permute.xlu0 %538
  %542 = vset.pattern.permute.xlu0 0
  %543 = vperm.xlu0 %542, %v501
  %v544 = vpop.permute.xlu0 %543
  %547 = vset.pattern.permute.xlu0 0
  %548 = vperm.xlu0 %547, %v502
  %v549 = vpop.permute.xlu0 %548
  %552 = vset.pattern.permute.xlu0 0
  %553 = vperm.xlu0 %552, %v503
  %v554 = vpop.permute.xlu0 %553
  %557 = vset.pattern.permute.xlu0 0
  %558 = vperm.xlu0 %557, %v504
  %v559 = vpop.permute.xlu0 %558
  %562 = vset.pattern.permute.xlu0 0
  %563 = vperm.xlu0 %562, %v505
  %v564 = vpop.permute.xlu0 %563
  %567 = vset.pattern.permute.xlu0 0
  %568 = vperm.xlu0 %567, %v506
  %v569 = vpop.permute.xlu0 %568
  %572 = vset.pattern.permute.xlu0 0
  %573 = vperm.xlu0 %572, %v507
  %v574 = vpop.permute.xlu0 %573
  %577 = vset.pattern.permute.xlu0 0
  %578 = vperm.xlu0 %577, %v508
  %v579 = vpop.permute.xlu0 %578
  %582 = vset.pattern.permute.xlu0 0
  %583 = vperm.xlu0 %582, %v509
  %v584 = vpop.permute.xlu0 %583
  %587 = vset.pattern.permute.xlu0 0
  %588 = vperm.xlu0 %587, %v510
  %v589 = vpop.permute.xlu0 %588
  %592 = vset.pattern.permute.xlu0 0
  %593 = vperm.xlu0 %592, %v511
  %v594 = vpop.permute.xlu0 %593
  %597 = vset.pattern.permute.xlu0 0
  %598 = vperm.xlu0 %597, %v512
  %v599 = vpop.permute.xlu0 %598
  %602 = vset.pattern.permute.xlu0 0
  %603 = vperm.xlu0 %602, %v513
  %v604 = vpop.permute.xlu0 %603
  %607 = vset.pattern.permute.xlu0 0
  %608 = vperm.xlu0 %607, %v514
  %v609 = vpop.permute.xlu0 %608
  %612 = vset.pattern.permute.xlu0 0
  %613 = vperm.xlu0 %612, %v515
  %v614 = vpop.permute.xlu0 %613
  %617 = vset.pattern.permute.xlu0 0
  %618 = vperm.xlu0 %617, %v516
  %v619 = vpop.permute.xlu0 %618
  %622 = vset.pattern.permute.xlu0 0
  %623 = vperm.xlu0 %622, %v517
  %v624 = vpop.permute.xlu0 %623
  %627 = vset.pattern.permute.xlu0 0
  %628 = vperm.xlu0 %627, %v518
  %v629 = vpop.permute.xlu0 %628
  %632 = vset.pattern.permute.xlu0 0
  %633 = vperm.xlu0 %632, %v519
  %v634 = vpop.permute.xlu0 %633
  %637 = vset.pattern.permute.xlu0 0
  %638 = vperm.xlu0 %637, %v520
  %v639 = vpop.permute.xlu0 %638
  %642 = vset.pattern.permute.xlu0 0
  %643 = vperm.xlu0 %642, %v521
  %v644 = vpop.permute.xlu0 %643
  %647 = vset.pattern.permute.xlu0 0
  %648 = vperm.xlu0 %647, %v522
  %v649 = vpop.permute.xlu0 %648
  %652 = vset.pattern.permute.xlu0 0
  %653 = vperm.xlu0 %652, %v523
  %v654 = vpop.permute.xlu0 %653
  %657 = vset.pattern.permute.xlu0 0
  %658 = vperm.xlu0 %657, %v524
  %v659 = vpop.permute.xlu0 %658
  %662 = vset.pattern.permute.xlu0 0
  %663 = vperm.xlu0 %662, %v525
  %v664 = vpop.permute.xlu0 %663
  %667 = vset.pattern.permute.xlu0 0
  %668 = vperm.xlu0 %667, %v526
  %v669 = vpop.permute.xlu0 %668
  %672 = vset.pattern.permute.xlu0 0
  %673 = vperm.xlu0 %672, %v527
  %v674 = vpop.permute.xlu0 %673
  %677 = vset.pattern.permute.xlu0 0
  %678 = vperm.xlu0 %677, %v528
  %v679 = vpop.permute.xlu0 %678
  %682 = vset.pattern.permute.xlu0 0
  %683 = vperm.xlu0 %682, %v529
  %v684 = vpop.permute.xlu0 %683
  %687 = vset.pattern.permute.xlu0 0
  %688 = vperm.xlu0 %687, %v530
  %v689 = vpop.permute.xlu0 %688
  %v691 = vmul.f32 %v373, %v534
  %v692 = vmul.f32 %v376, %v539
  %v693 = vmul.f32 %v381, %v544
  %v694 = vmul.f32 %v384, %v549
  %v695 = vmul.f32 %v389, %v554
  %v696 = vmul.f32 %v392, %v559
  %v697 = vmul.f32 %v397, %v564
  %v698 = vmul.f32 %v400, %v569
  %v699 = vmul.f32 %v405, %v574
  %v700 = vmul.f32 %v408, %v579
  %v701 = vmul.f32 %v413, %v584
  %v702 = vmul.f32 %v416, %v589
  %v703 = vmul.f32 %v421, %v594
  %v704 = vmul.f32 %v424, %v599
  %v705 = vmul.f32 %v429, %v604
  %v706 = vmul.f32 %v432, %v609
  %v707 = vmul.f32 %v437, %v614
  %v708 = vmul.f32 %v440, %v619
  %v709 = vmul.f32 %v445, %v624
  %v710 = vmul.f32 %v448, %v629
  %v711 = vmul.f32 %v453, %v634
  %v712 = vmul.f32 %v456, %v639
  %v713 = vmul.f32 %v461, %v644
  %v714 = vmul.f32 %v464, %v649
  %v715 = vmul.f32 %v469, %v654
  %v716 = vmul.f32 %v472, %v659
  %v717 = vmul.f32 %v477, %v664
  %v718 = vmul.f32 %v480, %v669
  %v719 = vmul.f32 %v485, %v674
  %v720 = vmul.f32 %v488, %v679
  %v721 = vmul.f32 %v493, %v684
  %v722 = vmul.f32 %v496, %v689
  %v723 = vpack.c.bf16 %v692, %v691
  %v724 = vpack.c.bf16 %v694, %v693
  %v725 = vpack.c.bf16 %v696, %v695
  %v726 = vpack.c.bf16 %v698, %v697
  %v727 = vpack.c.bf16 %v700, %v699
  %v728 = vpack.c.bf16 %v702, %v701
  %v729 = vpack.c.bf16 %v704, %v703
  %v730 = vpack.c.bf16 %v706, %v705
  %v731 = vpack.c.bf16 %v708, %v707
  %v732 = vpack.c.bf16 %v710, %v709
  %v733 = vpack.c.bf16 %v712, %v711
  %v734 = vpack.c.bf16 %v714, %v713
  %v735 = vpack.c.bf16 %v716, %v715
  %v736 = vpack.c.bf16 %v718, %v717
  %v737 = vpack.c.bf16 %v720, %v719
  %v738 = vpack.c.bf16 %v722, %v721
  %739 = vst [vmem:[#allocation2] sm:$0xff] %v723
  %740 = vst [vmem:[#allocation2 + $0x28] sm:$0xff] %v724
  %741 = vst [vmem:[#allocation2 + $0x50] sm:$0xff] %v725
  %742 = vst [vmem:[#allocation2 + $0x78] sm:$0xff] %v726
  %743 = vst [vmem:[#allocation2 + $0xa0] sm:$0xff] %v727
  %744 = vst [vmem:[#allocation2 + $0xc8] sm:$0xff] %v728
  %745 = vst [vmem:[#allocation2 + $0xf0] sm:$0xff] %v729
  %746 = vst [vmem:[#allocation2 + $0x118] sm:$0xff] %v730
  %747 = vst [vmem:[#allocation2 + $0x140] sm:$0xff] %v731
  %748 = vst [vmem:[#allocation2 + $0x168] sm:$0xff] %v732
  %749 = vst [vmem:[#allocation2 + $0x190] sm:$0xff] %v733
  %750 = vst [vmem:[#allocation2 + $0x1b8] sm:$0xff] %v734
  %751 = vst [vmem:[#allocation2 + $0x1e0] sm:$0xff] %v735
  %752 = vst [vmem:[#allocation2 + $0x208] sm:$0xff] %v736
  %753 = vst [vmem:[#allocation2 + $0x230] sm:$0xff] %v737
  %754 = vst [vmem:[#allocation2 + $0x258] sm:$0xff] %v738
  %s755 = scalar_lea.vmem %s0, 256
  %v756 = vld [vmem:[%s755] sm:$0xff]
  %v757 = vld [vmem:[%s755 + $0x8] sm:$0xff]
  %v758 = vld [vmem:[%s755 + $0x10] sm:$0xff]
  %v759 = vld [vmem:[%s755 + $0x18] sm:$0xff]
  %v760 = vld [vmem:[%s755 + $0x20] sm:$0xff]
  %v761 = vld [vmem:[%s755 + $0x28] sm:$0xff]
  %v762 = vld [vmem:[%s755 + $0x30] sm:$0xff]
  %v763 = vld [vmem:[%s755 + $0x38] sm:$0xff]
  %v764 = vld [vmem:[%s755 + $0x40] sm:$0xff]
  %v765 = vld [vmem:[%s755 + $0x48] sm:$0xff]
  %v766 = vld [vmem:[%s755 + $0x50] sm:$0xff]
  %v767 = vld [vmem:[%s755 + $0x58] sm:$0xff]
  %v768 = vld [vmem:[%s755 + $0x60] sm:$0xff]
  %v769 = vld [vmem:[%s755 + $0x68] sm:$0xff]
  %v770 = vld [vmem:[%s755 + $0x70] sm:$0xff]
  %v771 = vld [vmem:[%s755 + $0x78] sm:$0xff]
  %v772 = vld [vmem:[%s755 + $0x80] sm:$0xff]
  %v773 = vld [vmem:[%s755 + $0x88] sm:$0xff]
  %v774 = vld [vmem:[%s755 + $0x90] sm:$0xff]
  %v775 = vld [vmem:[%s755 + $0x98] sm:$0xff]
  %v776 = vld [vmem:[%s755 + $0xa0] sm:$0xff]
  %v777 = vld [vmem:[%s755 + $0xa8] sm:$0xff]
  %v778 = vld [vmem:[%s755 + $0xb0] sm:$0xff]
  %v779 = vld [vmem:[%s755 + $0xb8] sm:$0xff]
  %v780 = vld [vmem:[%s755 + $0xc0] sm:$0xff]
  %v781 = vld [vmem:[%s755 + $0xc8] sm:$0xff]
  %v782 = vld [vmem:[%s755 + $0xd0] sm:$0xff]
  %v783 = vld [vmem:[%s755 + $0xd8] sm:$0xff]
  %v784 = vld [vmem:[%s755 + $0xe0] sm:$0xff]
  %v785 = vld [vmem:[%s755 + $0xe8] sm:$0xff]
  %v786 = vld [vmem:[%s755 + $0xf0] sm:$0xff]
  %v787 = vld [vmem:[%s755 + $0xf8] sm:$0xff]
  %v820 = vunpack.c.l.b16 %v756
  %v821 = vunpack.c.h.b16 %v756
  %v822 = vunpack.c.l.b16 %v757
  %v823 = vunpack.c.h.b16 %v757
  %v824 = vunpack.c.l.b16 %v758
  %v825 = vunpack.c.h.b16 %v758
  %v826 = vunpack.c.l.b16 %v759
  %v827 = vunpack.c.h.b16 %v759
  %v828 = vunpack.c.l.b16 %v760
  %v829 = vunpack.c.h.b16 %v760
  %v830 = vunpack.c.l.b16 %v761
  %v831 = vunpack.c.h.b16 %v761
  %v832 = vunpack.c.l.b16 %v762
  %v833 = vunpack.c.h.b16 %v762
  %v834 = vunpack.c.l.b16 %v763
  %v835 = vunpack.c.h.b16 %v763
  %v836 = vunpack.c.l.b16 %v764
  %v837 = vunpack.c.h.b16 %v764
  %v838 = vunpack.c.l.b16 %v765
  %v839 = vunpack.c.h.b16 %v765
  %v840 = vunpack.c.l.b16 %v766
  %v841 = vunpack.c.h.b16 %v766
  %v842 = vunpack.c.l.b16 %v767
  %v843 = vunpack.c.h.b16 %v767
  %v844 = vunpack.c.l.b16 %v768
  %v845 = vunpack.c.h.b16 %v768
  %v846 = vunpack.c.l.b16 %v769
  %v847 = vunpack.c.h.b16 %v769
  %v848 = vunpack.c.l.b16 %v770
  %v849 = vunpack.c.h.b16 %v770
  %v850 = vunpack.c.l.b16 %v771
  %v851 = vunpack.c.h.b16 %v771
  %v852 = vunpack.c.l.b16 %v772
  %v853 = vunpack.c.h.b16 %v772
  %v854 = vunpack.c.l.b16 %v773
  %v855 = vunpack.c.h.b16 %v773
  %v856 = vunpack.c.l.b16 %v774
  %v857 = vunpack.c.h.b16 %v774
  %v858 = vunpack.c.l.b16 %v775
  %v859 = vunpack.c.h.b16 %v775
  %v860 = vunpack.c.l.b16 %v776
  %v861 = vunpack.c.h.b16 %v776
  %v862 = vunpack.c.l.b16 %v777
  %v863 = vunpack.c.h.b16 %v777
  %v864 = vunpack.c.l.b16 %v778
  %v865 = vunpack.c.h.b16 %v778
  %v866 = vunpack.c.l.b16 %v779
  %v867 = vunpack.c.h.b16 %v779
  %v868 = vunpack.c.l.b16 %v780
  %v869 = vunpack.c.h.b16 %v780
  %v870 = vunpack.c.l.b16 %v781
  %v871 = vunpack.c.h.b16 %v781
  %v872 = vunpack.c.l.b16 %v782
  %v873 = vunpack.c.h.b16 %v782
  %v874 = vunpack.c.l.b16 %v783
  %v875 = vunpack.c.h.b16 %v783
  %v876 = vunpack.c.l.b16 %v784
  %v877 = vunpack.c.h.b16 %v784
  %v878 = vunpack.c.l.b16 %v785
  %v879 = vunpack.c.h.b16 %v785
  %v880 = vunpack.c.l.b16 %v786
  %v881 = vunpack.c.h.b16 %v786
  %v882 = vunpack.c.l.b16 %v787
  %v883 = vunpack.c.h.b16 %v787
  %v884 = vpack.c.b16 %v822, %v820
  %v885 = vpack.c.b16 %v823, %v821
  %v886 = vpack.c.b16 %v826, %v824
  %v887 = vpack.c.b16 %v827, %v825
  %v888 = vpack.c.b16 %v830, %v828
  %v889 = vpack.c.b16 %v831, %v829
  %v890 = vpack.c.b16 %v834, %v832
  %v891 = vpack.c.b16 %v835, %v833
  %v892 = vpack.c.b16 %v838, %v836
  %v893 = vpack.c.b16 %v839, %v837
  %v894 = vpack.c.b16 %v842, %v840
  %v895 = vpack.c.b16 %v843, %v841
  %v896 = vpack.c.b16 %v846, %v844
  %v897 = vpack.c.b16 %v847, %v845
  %v898 = vpack.c.b16 %v850, %v848
  %v899 = vpack.c.b16 %v851, %v849
  %v900 = vpack.c.b16 %v854, %v852
  %v901 = vpack.c.b16 %v855, %v853
  %v902 = vpack.c.b16 %v858, %v856
  %v903 = vpack.c.b16 %v859, %v857
  %v904 = vpack.c.b16 %v862, %v860
  %v905 = vpack.c.b16 %v863, %v861
  %v906 = vpack.c.b16 %v866, %v864
  %v907 = vpack.c.b16 %v867, %v865
  %v908 = vpack.c.b16 %v870, %v868
  %v909 = vpack.c.b16 %v871, %v869
  %v910 = vpack.c.b16 %v874, %v872
  %v911 = vpack.c.b16 %v875, %v873
  %v912 = vpack.c.b16 %v878, %v876
  %v913 = vpack.c.b16 %v879, %v877
  %v914 = vpack.c.b16 %v882, %v880
  %v915 = vpack.c.b16 %v883, %v881
  %948 = vmatprep.subr.bf16.mxu0 0
  %949 = vmatpush1.bf16.msra.mxu0 %v306
  %950 = vmatprep.subr.bf16.mxu0 0
  %951 = vmatpush1.bf16.msra.mxu0 %v307
  %952 = vmatprep.subr.bf16.mxu0 0
  %953 = vmatpush1.bf16.msra.mxu0 %v308
  %954 = vmatprep.subr.bf16.mxu0 0
  %955 = vmatpush1.bf16.msra.mxu0 %v309
  %956 = vmatprep.subr.bf16.mxu0 0
  %957 = vmatpush1.bf16.msra.mxu0 %v310
  %958 = vmatprep.subr.bf16.mxu0 0
  %959 = vmatpush1.bf16.msra.mxu0 %v311
  %960 = vmatprep.subr.bf16.mxu0 0
  %961 = vmatpush1.bf16.msra.mxu0 %v312
  %962 = vmatprep.subr.bf16.mxu0 0
  %963 = vmatpush1.bf16.msra.mxu0 %v313
  %964 = vmatprep.subr.bf16.mxu0 0
  %965 = vmatpush1.bf16.msra.mxu0 %v314
  %966 = vmatprep.subr.bf16.mxu0 0
  %967 = vmatpush1.bf16.msra.mxu0 %v315
  %968 = vmatprep.subr.bf16.mxu0 0
  %969 = vmatpush1.bf16.msra.mxu0 %v316
  %970 = vmatprep.subr.bf16.mxu0 0
  %971 = vmatpush1.bf16.msra.mxu0 %v317
  %972 = vmatprep.subr.bf16.mxu0 0
  %973 = vmatpush1.bf16.msra.mxu0 %v318
  %974 = vmatprep.subr.bf16.mxu0 0
  %975 = vmatpush1.bf16.msra.mxu0 %v319
  %976 = vmatprep.subr.bf16.mxu0 0
  %977 = vmatpush1.bf16.msra.mxu0 %v320
  %978 = vmatprep.subr.bf16.mxu0 0
  %979 = vmatpush1.bf16.msra.mxu0 %v321
  %980 = vmatprep.mubr.bf16.mxu0 %v885
  %981 = vmatmul.mubr.bf16.gmra.mrb[0].mxu0 %v884
  %v982 = vpop.f32.mrb[0].mxu0
  %v983 = vadd.f32 0.0, %v982
  %v984 = vpop.f32.mrb[0].mxu0
  %v985 = vpop.f32.mrb[0].mxu0
  %v986 = vadd.f32 0.0, %v985
  %v987 = vpop.f32.mrb[0].mxu0
  %988 = vmatprep.mubr.bf16.mxu0 %v887
  %989 = vmatmul.mubr.bf16.gmra.mrb[0].mxu0 %v886
  %v990 = vpop.f32.mrb[0].mxu0
  %v991 = vadd.f32 0.0, %v990
  %v992 = vpop.f32.mrb[0].mxu0
  %v993 = vpop.f32.mrb[0].mxu0
  %v994 = vadd.f32 0.0, %v993
  %v995 = vpop.f32.mrb[0].mxu0
  %996 = vmatprep.mubr.bf16.mxu0 %v889
  %997 = vmatmul.mubr.bf16.gmra.mrb[0].mxu0 %v888
  %v998 = vpop.f32.mrb[0].mxu0
  %v999 = vadd.f32 0.0, %v998
  %v1000 = vpop.f32.mrb[0].mxu0
  %v1001 = vpop.f32.mrb[0].mxu0
  %v1002 = vadd.f32 0.0, %v1001
  %v1003 = vpop.f32.mrb[0].mxu0
  %1004 = vmatprep.mubr.bf16.mxu0 %v891
  %1005 = vmatmul.mubr.bf16.gmra.mrb[0].mxu0 %v890
  %v1006 = vpop.f32.mrb[0].mxu0
  %v1007 = vadd.f32 0.0, %v1006
  %v1008 = vpop.f32.mrb[0].mxu0
  %v1009 = vpop.f32.mrb[0].mxu0
  %v1010 = vadd.f32 0.0, %v1009
  %v1011 = vpop.f32.mrb[0].mxu0
  %1012 = vmatprep.mubr.bf16.mxu0 %v893
  %1013 = vmatmul.mubr.bf16.gmra.mrb[0].mxu0 %v892
  %v1014 = vpop.f32.mrb[0].mxu0
  %v1015 = vadd.f32 0.0, %v1014
  %v1016 = vpop.f32.mrb[0].mxu0
  %v1017 = vpop.f32.mrb[0].mxu0
  %v1018 = vadd.f32 0.0, %v1017
  %v1019 = vpop.f32.mrb[0].mxu0
  %1020 = vmatprep.mubr.bf16.mxu0 %v895
  %1021 = vmatmul.mubr.bf16.gmra.mrb[0].mxu0 %v894
  %v1022 = vpop.f32.mrb[0].mxu0
  %v1023 = vadd.f32 0.0, %v1022
  %v1024 = vpop.f32.mrb[0].mxu0
  %v1025 = vpop.f32.mrb[0].mxu0
  %v1026 = vadd.f32 0.0, %v1025
  %v1027 = vpop.f32.mrb[0].mxu0
  %1028 = vmatprep.mubr.bf16.mxu0 %v897
  %1029 = vmatmul.mubr.bf16.gmra.mrb[0].mxu0 %v896
  %v1030 = vpop.f32.mrb[0].mxu0
  %v1031 = vadd.f32 0.0, %v1030
  %v1032 = vpop.f32.mrb[0].mxu0
  %v1033 = vpop.f32.mrb[0].mxu0
  %v1034 = vadd.f32 0.0, %v1033
  %v1035 = vpop.f32.mrb[0].mxu0
  %1036 = vmatprep.mubr.bf16.mxu0 %v899
  %1037 = vmatmul.mubr.bf16.gmra.mrb[0].mxu0 %v898
  %v1038 = vpop.f32.mrb[0].mxu0
  %v1039 = vadd.f32 0.0, %v1038
  %v1040 = vpop.f32.mrb[0].mxu0
  %v1041 = vpop.f32.mrb[0].mxu0
  %v1042 = vadd.f32 0.0, %v1041
  %v1043 = vpop.f32.mrb[0].mxu0
  %1044 = vmatprep.mubr.bf16.mxu0 %v901
  %1045 = vmatmul.mubr.bf16.gmra.mrb[0].mxu0 %v900
  %v1046 = vpop.f32.mrb[0].mxu0
  %v1047 = vadd.f32 0.0, %v1046
  %v1048 = vpop.f32.mrb[0].mxu0
  %v1049 = vpop.f32.mrb[0].mxu0
  %v1050 = vadd.f32 0.0, %v1049
  %v1051 = vpop.f32.mrb[0].mxu0
  %1052 = vmatprep.mubr.bf16.mxu0 %v903
  %1053 = vmatmul.mubr.bf16.gmra.mrb[0].mxu0 %v902
  %v1054 = vpop.f32.mrb[0].mxu0
  %v1055 = vadd.f32 0.0, %v1054
  %v1056 = vpop.f32.mrb[0].mxu0
  %v1057 = vpop.f32.mrb[0].mxu0
  %v1058 = vadd.f32 0.0, %v1057
  %v1059 = vpop.f32.mrb[0].mxu0
  %1060 = vmatprep.mubr.bf16.mxu0 %v905
  %1061 = vmatmul.mubr.bf16.gmra.mrb[0].mxu0 %v904
  %v1062 = vpop.f32.mrb[0].mxu0
  %v1063 = vadd.f32 0.0, %v1062
  %v1064 = vpop.f32.mrb[0].mxu0
  %v1065 = vpop.f32.mrb[0].mxu0
  %v1066 = vadd.f32 0.0, %v1065
  %v1067 = vpop.f32.mrb[0].mxu0
  %1068 = vmatprep.mubr.bf16.mxu0 %v907
  %1069 = vmatmul.mubr.bf16.gmra.mrb[0].mxu0 %v906
  %v1070 = vpop.f32.mrb[0].mxu0
  %v1071 = vadd.f32 0.0, %v1070
  %v1072 = vpop.f32.mrb[0].mxu0
  %v1073 = vpop.f32.mrb[0].mxu0
  %v1074 = vadd.f32 0.0, %v1073
  %v1075 = vpop.f32.mrb[0].mxu0
  %1076 = vmatprep.mubr.bf16.mxu0 %v909
  %1077 = vmatmul.mubr.bf16.gmra.mrb[0].mxu0 %v908
  %v1078 = vpop.f32.mrb[0].mxu0
  %v1079 = vadd.f32 0.0, %v1078
  %v1080 = vpop.f32.mrb[0].mxu0
  %v1081 = vpop.f32.mrb[0].mxu0
  %v1082 = vadd.f32 0.0, %v1081
  %v1083 = vpop.f32.mrb[0].mxu0
  %1084 = vmatprep.mubr.bf16.mxu0 %v911
  %1085 = vmatmul.mubr.bf16.gmra.mrb[0].mxu0 %v910
  %v1086 = vpop.f32.mrb[0].mxu0
  %v1087 = vadd.f32 0.0, %v1086
  %v1088 = vpop.f32.mrb[0].mxu0
  %v1089 = vpop.f32.mrb[0].mxu0
  %v1090 = vadd.f32 0.0, %v1089
  %v1091 = vpop.f32.mrb[0].mxu0
  %1092 = vmatprep.mubr.bf16.mxu0 %v913
  %1093 = vmatmul.mubr.bf16.gmra.mrb[0].mxu0 %v912
  %v1094 = vpop.f32.mrb[0].mxu0
  %v1095 = vadd.f32 0.0, %v1094
  %v1096 = vpop.f32.mrb[0].mxu0
  %v1097 = vpop.f32.mrb[0].mxu0
  %v1098 = vadd.f32 0.0, %v1097
  %v1099 = vpop.f32.mrb[0].mxu0
  %1100 = vmatprep.mubr.bf16.mxu0 %v915
  %1101 = vmatmul.mubr.bf16.gmra.mrb[0].mxu0 %v914
  %v1102 = vpop.f32.mrb[0].mxu0
  %v1103 = vadd.f32 0.0, %v1102
  %v1104 = vpop.f32.mrb[0].mxu0
  %v1105 = vpop.f32.mrb[0].mxu0
  %v1106 = vadd.f32 0.0, %v1105
  %v1107 = vpop.f32.mrb[0].mxu0
  %1108 = vdwg.mxu0
  %s1109 = scalar_lea.vmem %s1, 256
  %v1110 = vld [vmem:[%s1109] sm:$0xff]
  %v1111 = vld [vmem:[%s1109 + $0x8] sm:$0xff]
  %v1112 = vld [vmem:[%s1109 + $0x10] sm:$0xff]
  %v1113 = vld [vmem:[%s1109 + $0x18] sm:$0xff]
  %v1114 = vld [vmem:[%s1109 + $0x20] sm:$0xff]
  %v1115 = vld [vmem:[%s1109 + $0x28] sm:$0xff]
  %v1116 = vld [vmem:[%s1109 + $0x30] sm:$0xff]
  %v1117 = vld [vmem:[%s1109 + $0x38] sm:$0xff]
  %v1118 = vld [vmem:[%s1109 + $0x40] sm:$0xff]
  %v1119 = vld [vmem:[%s1109 + $0x48] sm:$0xff]
  %v1120 = vld [vmem:[%s1109 + $0x50] sm:$0xff]
  %v1121 = vld [vmem:[%s1109 + $0x58] sm:$0xff]
  %v1122 = vld [vmem:[%s1109 + $0x60] sm:$0xff]
  %v1123 = vld [vmem:[%s1109 + $0x68] sm:$0xff]
  %v1124 = vld [vmem:[%s1109 + $0x70] sm:$0xff]
  %v1125 = vld [vmem:[%s1109 + $0x78] sm:$0xff]
  %v1126 = vld [vmem:[%s1109 + $0x80] sm:$0xff]
  %v1127 = vld [vmem:[%s1109 + $0x88] sm:$0xff]
  %v1128 = vld [vmem:[%s1109 + $0x90] sm:$0xff]
  %v1129 = vld [vmem:[%s1109 + $0x98] sm:$0xff]
  %v1130 = vld [vmem:[%s1109 + $0xa0] sm:$0xff]
  %v1131 = vld [vmem:[%s1109 + $0xa8] sm:$0xff]
  %v1132 = vld [vmem:[%s1109 + $0xb0] sm:$0xff]
  %v1133 = vld [vmem:[%s1109 + $0xb8] sm:$0xff]
  %v1134 = vld [vmem:[%s1109 + $0xc0] sm:$0xff]
  %v1135 = vld [vmem:[%s1109 + $0xc8] sm:$0xff]
  %v1136 = vld [vmem:[%s1109 + $0xd0] sm:$0xff]
  %v1137 = vld [vmem:[%s1109 + $0xd8] sm:$0xff]
  %v1138 = vld [vmem:[%s1109 + $0xe0] sm:$0xff]
  %v1139 = vld [vmem:[%s1109 + $0xe8] sm:$0xff]
  %v1140 = vld [vmem:[%s1109 + $0xf0] sm:$0xff]
  %v1141 = vld [vmem:[%s1109 + $0xf8] sm:$0xff]
  %1143 = vset.pattern.permute.xlu0 0
  %1144 = vperm.xlu0 %1143, %v1110
  %v1145 = vpop.permute.xlu0 %1144
  %1148 = vset.pattern.permute.xlu0 0
  %1149 = vperm.xlu0 %1148, %v1111
  %v1150 = vpop.permute.xlu0 %1149
  %1153 = vset.pattern.permute.xlu0 0
  %1154 = vperm.xlu0 %1153, %v1112
  %v1155 = vpop.permute.xlu0 %1154
  %1158 = vset.pattern.permute.xlu0 0
  %1159 = vperm.xlu0 %1158, %v1113
  %v1160 = vpop.permute.xlu0 %1159
  %1163 = vset.pattern.permute.xlu0 0
  %1164 = vperm.xlu0 %1163, %v1114
  %v1165 = vpop.permute.xlu0 %1164
  %1168 = vset.pattern.permute.xlu0 0
  %1169 = vperm.xlu0 %1168, %v1115
  %v1170 = vpop.permute.xlu0 %1169
  %1173 = vset.pattern.permute.xlu0 0
  %1174 = vperm.xlu0 %1173, %v1116
  %v1175 = vpop.permute.xlu0 %1174
  %1178 = vset.pattern.permute.xlu0 0
  %1179 = vperm.xlu0 %1178, %v1117
  %v1180 = vpop.permute.xlu0 %1179
  %1183 = vset.pattern.permute.xlu0 0
  %1184 = vperm.xlu0 %1183, %v1118
  %v1185 = vpop.permute.xlu0 %1184
  %1188 = vset.pattern.permute.xlu0 0
  %1189 = vperm.xlu0 %1188, %v1119
  %v1190 = vpop.permute.xlu0 %1189
  %1193 = vset.pattern.permute.xlu0 0
  %1194 = vperm.xlu0 %1193, %v1120
  %v1195 = vpop.permute.xlu0 %1194
  %1198 = vset.pattern.permute.xlu0 0
  %1199 = vperm.xlu0 %1198, %v1121
  %v1200 = vpop.permute.xlu0 %1199
  %1203 = vset.pattern.permute.xlu0 0
  %1204 = vperm.xlu0 %1203, %v1122
  %v1205 = vpop.permute.xlu0 %1204
  %1208 = vset.pattern.permute.xlu0 0
  %1209 = vperm.xlu0 %1208, %v1123
  %v1210 = vpop.permute.xlu0 %1209
  %1213 = vset.pattern.permute.xlu0 0
  %1214 = vperm.xlu0 %1213, %v1124
  %v1215 = vpop.permute.xlu0 %1214
  %1218 = vset.pattern.permute.xlu0 0
  %1219 = vperm.xlu0 %1218, %v1125
  %v1220 = vpop.permute.xlu0 %1219
  %1223 = vset.pattern.permute.xlu0 0
  %1224 = vperm.xlu0 %1223, %v1126
  %v1225 = vpop.permute.xlu0 %1224
  %1228 = vset.pattern.permute.xlu0 0
  %1229 = vperm.xlu0 %1228, %v1127
  %v1230 = vpop.permute.xlu0 %1229
  %1233 = vset.pattern.permute.xlu0 0
  %1234 = vperm.xlu0 %1233, %v1128
  %v1235 = vpop.permute.xlu0 %1234
  %1238 = vset.pattern.permute.xlu0 0
  %1239 = vperm.xlu0 %1238, %v1129
  %v1240 = vpop.permute.xlu0 %1239
  %1243 = vset.pattern.permute.xlu0 0
  %1244 = vperm.xlu0 %1243, %v1130
  %v1245 = vpop.permute.xlu0 %1244
  %1248 = vset.pattern.permute.xlu0 0
  %1249 = vperm.xlu0 %1248, %v1131
  %v1250 = vpop.permute.xlu0 %1249
  %1253 = vset.pattern.permute.xlu0 0
  %1254 = vperm.xlu0 %1253, %v1132
  %v1255 = vpop.permute.xlu0 %1254
  %1258 = vset.pattern.permute.xlu0 0
  %1259 = vperm.xlu0 %1258, %v1133
  %v1260 = vpop.permute.xlu0 %1259
  %1263 = vset.pattern.permute.xlu0 0
  %1264 = vperm.xlu0 %1263, %v1134
  %v1265 = vpop.permute.xlu0 %1264
  %1268 = vset.pattern.permute.xlu0 0
  %1269 = vperm.xlu0 %1268, %v1135
  %v1270 = vpop.permute.xlu0 %1269
  %1273 = vset.pattern.permute.xlu0 0
  %1274 = vperm.xlu0 %1273, %v1136
  %v1275 = vpop.permute.xlu0 %1274
  %1278 = vset.pattern.permute.xlu0 0
  %1279 = vperm.xlu0 %1278, %v1137
  %v1280 = vpop.permute.xlu0 %1279
  %1283 = vset.pattern.permute.xlu0 0
  %1284 = vperm.xlu0 %1283, %v1138
  %v1285 = vpop.permute.xlu0 %1284
  %1288 = vset.pattern.permute.xlu0 0
  %1289 = vperm.xlu0 %1288, %v1139
  %v1290 = vpop.permute.xlu0 %1289
  %1293 = vset.pattern.permute.xlu0 0
  %1294 = vperm.xlu0 %1293, %v1140
  %v1295 = vpop.permute.xlu0 %1294
  %1298 = vset.pattern.permute.xlu0 0
  %1299 = vperm.xlu0 %1298, %v1141
  %v1300 = vpop.permute.xlu0 %1299
  %v1302 = vmul.f32 %v983, %v1145
  %v1303 = vmul.f32 %v986, %v1150
  %v1304 = vmul.f32 %v991, %v1155
  %v1305 = vmul.f32 %v994, %v1160
  %v1306 = vmul.f32 %v999, %v1165
  %v1307 = vmul.f32 %v1002, %v1170
  %v1308 = vmul.f32 %v1007, %v1175
  %v1309 = vmul.f32 %v1010, %v1180
  %v1310 = vmul.f32 %v1015, %v1185
  %v1311 = vmul.f32 %v1018, %v1190
  %v1312 = vmul.f32 %v1023, %v1195
  %v1313 = vmul.f32 %v1026, %v1200
  %v1314 = vmul.f32 %v1031, %v1205
  %v1315 = vmul.f32 %v1034, %v1210
  %v1316 = vmul.f32 %v1039, %v1215
  %v1317 = vmul.f32 %v1042, %v1220
  %v1318 = vmul.f32 %v1047, %v1225
  %v1319 = vmul.f32 %v1050, %v1230
  %v1320 = vmul.f32 %v1055, %v1235
  %v1321 = vmul.f32 %v1058, %v1240
  %v1322 = vmul.f32 %v1063, %v1245
  %v1323 = vmul.f32 %v1066, %v1250
  %v1324 = vmul.f32 %v1071, %v1255
  %v1325 = vmul.f32 %v1074, %v1260
  %v1326 = vmul.f32 %v1079, %v1265
  %v1327 = vmul.f32 %v1082, %v1270
  %v1328 = vmul.f32 %v1087, %v1275
  %v1329 = vmul.f32 %v1090, %v1280
  %v1330 = vmul.f32 %v1095, %v1285
  %v1331 = vmul.f32 %v1098, %v1290
  %v1332 = vmul.f32 %v1103, %v1295
  %v1333 = vmul.f32 %v1106, %v1300
  %v1334 = vpack.c.bf16 %v1303, %v1302
  %v1335 = vpack.c.bf16 %v1305, %v1304
  %v1336 = vpack.c.bf16 %v1307, %v1306
  %v1337 = vpack.c.bf16 %v1309, %v1308
  %v1338 = vpack.c.bf16 %v1311, %v1310
  %v1339 = vpack.c.bf16 %v1313, %v1312
  %v1340 = vpack.c.bf16 %v1315, %v1314
  %v1341 = vpack.c.bf16 %v1317, %v1316
  %v1342 = vpack.c.bf16 %v1319, %v1318
  %v1343 = vpack.c.bf16 %v1321, %v1320
  %v1344 = vpack.c.bf16 %v1323, %v1322
  %v1345 = vpack.c.bf16 %v1325, %v1324
  %v1346 = vpack.c.bf16 %v1327, %v1326
  %v1347 = vpack.c.bf16 %v1329, %v1328
  %v1348 = vpack.c.bf16 %v1331, %v1330
  %v1349 = vpack.c.bf16 %v1333, %v1332
  %1350 = vst [vmem:[#allocation2 + $0x8] sm:$0xff] %v1334
  %1351 = vst [vmem:[#allocation2 + $0x30] sm:$0xff] %v1335
  %1352 = vst [vmem:[#allocation2 + $0x58] sm:$0xff] %v1336
  %1353 = vst [vmem:[#allocation2 + $0x80] sm:$0xff] %v1337
  %1354 = vst [vmem:[#allocation2 + $0xa8] sm:$0xff] %v1338
  %1355 = vst [vmem:[#allocation2 + $0xd0] sm:$0xff] %v1339
  %1356 = vst [vmem:[#allocation2 + $0xf8] sm:$0xff] %v1340
  %1357 = vst [vmem:[#allocation2 + $0x120] sm:$0xff] %v1341
  %1358 = vst [vmem:[#allocation2 + $0x148] sm:$0xff] %v1342
  %1359 = vst [vmem:[#allocation2 + $0x170] sm:$0xff] %v1343
  %1360 = vst [vmem:[#allocation2 + $0x198] sm:$0xff] %v1344
  %1361 = vst [vmem:[#allocation2 + $0x1c0] sm:$0xff] %v1345
  %1362 = vst [vmem:[#allocation2 + $0x1e8] sm:$0xff] %v1346
  %1363 = vst [vmem:[#allocation2 + $0x210] sm:$0xff] %v1347
  %1364 = vst [vmem:[#allocation2 + $0x238] sm:$0xff] %v1348
  %1365 = vst [vmem:[#allocation2 + $0x260] sm:$0xff] %v1349
  %s1366 = scalar_lea.vmem %s0, 512
  %v1367 = vld [vmem:[%s1366] sm:$0xff]
  %v1368 = vld [vmem:[%s1366 + $0x8] sm:$0xff]
  %v1369 = vld [vmem:[%s1366 + $0x10] sm:$0xff]
  %v1370 = vld [vmem:[%s1366 + $0x18] sm:$0xff]
  %v1371 = vld [vmem:[%s1366 + $0x20] sm:$0xff]
  %v1372 = vld [vmem:[%s1366 + $0x28] sm:$0xff]
  %v1373 = vld [vmem:[%s1366 + $0x30] sm:$0xff]
  %v1374 = vld [vmem:[%s1366 + $0x38] sm:$0xff]
  %v1375 = vld [vmem:[%s1366 + $0x40] sm:$0xff]
  %v1376 = vld [vmem:[%s1366 + $0x48] sm:$0xff]
  %v1377 = vld [vmem:[%s1366 + $0x50] sm:$0xff]
  %v1378 = vld [vmem:[%s1366 + $0x58] sm:$0xff]
  %v1379 = vld [vmem:[%s1366 + $0x60] sm:$0xff]
  %v1380 = vld [vmem:[%s1366 + $0x68] sm:$0xff]
  %v1381 = vld [vmem:[%s1366 + $0x70] sm:$0xff]
  %v1382 = vld [vmem:[%s1366 + $0x78] sm:$0xff]
  %v1383 = vld [vmem:[%s1366 + $0x80] sm:$0xff]
  %v1384 = vld [vmem:[%s1366 + $0x88] sm:$0xff]
  %v1385 = vld [vmem:[%s1366 + $0x90] sm:$0xff]
  %v1386 = vld [vmem:[%s1366 + $0x98] sm:$0xff]
  %v1387 = vld [vmem:[%s1366 + $0xa0] sm:$0xff]
  %v1388 = vld [vmem:[%s1366 + $0xa8] sm:$0xff]
  %v1389 = vld [vmem:[%s1366 + $0xb0] sm:$0xff]
  %v1390 = vld [vmem:[%s1366 + $0xb8] sm:$0xff]
  %v1391 = vld [vmem:[%s1366 + $0xc0] sm:$0xff]
  %v1392 = vld [vmem:[%s1366 + $0xc8] sm:$0xff]
  %v1393 = vld [vmem:[%s1366 + $0xd0] sm:$0xff]
  %v1394 = vld [vmem:[%s1366 + $0xd8] sm:$0xff]
  %v1395 = vld [vmem:[%s1366 + $0xe0] sm:$0xff]
  %v1396 = vld [vmem:[%s1366 + $0xe8] sm:$0xff]
  %v1397 = vld [vmem:[%s1366 + $0xf0] sm:$0xff]
  %v1398 = vld [vmem:[%s1366 + $0xf8] sm:$0xff]
  %v1431 = vunpack.c.l.b16 %v1367
  %v1432 = vunpack.c.h.b16 %v1367
  %v1433 = vunpack.c.l.b16 %v1368
  %v1434 = vunpack.c.h.b16 %v1368
  %v1435 = vunpack.c.l.b16 %v1369
  %v1436 = vunpack.c.h.b16 %v1369
  %v1437 = vunpack.c.l.b16 %v1370
  %v1438 = vunpack.c.h.b16 %v1370
  %v1439 = vunpack.c.l.b16 %v1371
  %v1440 = vunpack.c.h.b16 %v1371
  %v1441 = vunpack.c.l.b16 %v1372
  %v1442 = vunpack.c.h.b16 %v1372
  %v1443 = vunpack.c.l.b16 %v1373
  %v1444 = vunpack.c.h.b16 %v1373
  %v1445 = vunpack.c.l.b16 %v1374
  %v1446 = vunpack.c.h.b16 %v1374
  %v1447 = vunpack.c.l.b16 %v1375
  %v1448 = vunpack.c.h.b16 %v1375
  %v1449 = vunpack.c.l.b16 %v1376
  %v1450 = vunpack.c.h.b16 %v1376
  %v1451 = vunpack.c.l.b16 %v1377
  %v1452 = vunpack.c.h.b16 %v1377
  %v1453 = vunpack.c.l.b16 %v1378
  %v1454 = vunpack.c.h.b16 %v1378
  %v1455 = vunpack.c.l.b16 %v1379
  %v1456 = vunpack.c.h.b16 %v1379
  %v1457 = vunpack.c.l.b16 %v1380
  %v1458 = vunpack.c.h.b16 %v1380
  %v1459 = vunpack.c.l.b16 %v1381
  %v1460 = vunpack.c.h.b16 %v1381
  %v1461 = vunpack.c.l.b16 %v1382
  %v1462 = vunpack.c.h.b16 %v1382
  %v1463 = vunpack.c.l.b16 %v1383
  %v1464 = vunpack.c.h.b16 %v1383
  %v1465 = vunpack.c.l.b16 %v1384
  %v1466 = vunpack.c.h.b16 %v1384
  %v1467 = vunpack.c.l.b16 %v1385
  %v1468 = vunpack.c.h.b16 %v1385
  %v1469 = vunpack.c.l.b16 %v1386
  %v1470 = vunpack.c.h.b16 %v1386
  %v1471 = vunpack.c.l.b16 %v1387
  %v1472 = vunpack.c.h.b16 %v1387
  %v1473 = vunpack.c.l.b16 %v1388
  %v1474 = vunpack.c.h.b16 %v1388
  %v1475 = vunpack.c.l.b16 %v1389
  %v1476 = vunpack.c.h.b16 %v1389
  %v1477 = vunpack.c.l.b16 %v1390
  %v1478 = vunpack.c.h.b16 %v1390
  %v1479 = vunpack.c.l.b16 %v1391
  %v1480 = vunpack.c.h.b16 %v1391
  %v1481 = vunpack.c.l.b16 %v1392
  %v1482 = vunpack.c.h.b16 %v1392
  %v1483 = vunpack.c.l.b16 %v1393
  %v1484 = vunpack.c.h.b16 %v1393
  %v1485 = vunpack.c.l.b16 %v1394
  %v1486 = vunpack.c.h.b16 %v1394
  %v1487 = vunpack.c.l.b16 %v1395
  %v1488 = vunpack.c.h.b16 %v1395
  %v1489 = vunpack.c.l.b16 %v1396
  %v1490 = vunpack.c.h.b16 %v1396
  %v1491 = vunpack.c.l.b16 %v1397
  %v1492 = vunpack.c.h.b16 %v1397
  %v1493 = vunpack.c.l.b16 %v1398
  %v1494 = vunpack.c.h.b16 %v1398
  %v1495 = vpack.c.b16 %v1433, %v1431
  %v1496 = vpack.c.b16 %v1434, %v1432
  %v1497 = vpack.c.b16 %v1437, %v1435
  %v1498 = vpack.c.b16 %v1438, %v1436
  %v1499 = vpack.c.b16 %v1441, %v1439
  %v1500 = vpack.c.b16 %v1442, %v1440
  %v1501 = vpack.c.b16 %v1445, %v1443
  %v1502 = vpack.c.b16 %v1446, %v1444
  %v1503 = vpack.c.b16 %v1449, %v1447
  %v1504 = vpack.c.b16 %v1450, %v1448
  %v1505 = vpack.c.b16 %v1453, %v1451
  %v1506 = vpack.c.b16 %v1454, %v1452
  %v1507 = vpack.c.b16 %v1457, %v1455
  %v1508 = vpack.c.b16 %v1458, %v1456
  %v1509 = vpack.c.b16 %v1461, %v1459
  %v1510 = vpack.c.b16 %v1462, %v1460
  %v1511 = vpack.c.b16 %v1465, %v1463
  %v1512 = vpack.c.b16 %v1466, %v1464
  %v1513 = vpack.c.b16 %v1469, %v1467
  %v1514 = vpack.c.b16 %v1470, %v1468
  %v1515 = vpack.c.b16 %v1473, %v1471
  %v1516 = vpack.c.b16 %v1474, %v1472
  %v1517 = vpack.c.b16 %v1477, %v1475
  %v1518 = vpack.c.b16 %v1478, %v1476
  %v1519 = vpack.c.b16 %v1481, %v1479
  %v1520 = vpack.c.b16 %v1482, %v1480
  %v1521 = vpack.c.b16 %v1485, %v1483
  %v1522 = vpack.c.b16 %v1486, %v1484
  %v1523 = vpack.c.b16 %v1489, %v1487
  %v1524 = vpack.c.b16 %v1490, %v1488
  %v1525 = vpack.c.b16 %v1493, %v1491
  %v1526 = vpack.c.b16 %v1494, %v1492
  %1559 = vmatprep.subr.bf16.mxu0 0
  %1560 = vmatpush1.bf16.msra.mxu0 %v306
  %1561 = vmatprep.subr.bf16.mxu0 0
  %1562 = vmatpush1.bf16.msra.mxu0 %v307
  %1563 = vmatprep.subr.bf16.mxu0 0
  %1564 = vmatpush1.bf16.msra.mxu0 %v308
  %1565 = vmatprep.subr.bf16.mxu0 0
  %1566 = vmatpush1.bf16.msra.mxu0 %v309
  %1567 = vmatprep.subr.bf16.mxu0 0
  %1568 = vmatpush1.bf16.msra.mxu0 %v310
  %1569 = vmatprep.subr.bf16.mxu0 0
  %1570 = vmatpush1.bf16.msra.mxu0 %v311
  %1571 = vmatprep.subr.bf16.mxu0 0
  %1572 = vmatpush1.bf16.msra.mxu0 %v312
  %1573 = vmatprep.subr.bf16.mxu0 0
  %1574 = vmatpush1.bf16.msra.mxu0 %v313
  %1575 = vmatprep.subr.bf16.mxu0 0
  %1576 = vmatpush1.bf16.msra.mxu0 %v314
  %1577 = vmatprep.subr.bf16.mxu0 0
  %1578 = vmatpush1.bf16.msra.mxu0 %v315
  %1579 = vmatprep.subr.bf16.mxu0 0
  %1580 = vmatpush1.bf16.msra.mxu0 %v316
  %1581 = vmatprep.subr.bf16.mxu0 0
  %1582 = vmatpush1.bf16.msra.mxu0 %v317
  %1583 = vmatprep.subr.bf16.mxu0 0
  %1584 = vmatpush1.bf16.msra.mxu0 %v318
  %1585 = vmatprep.subr.bf16.mxu0 0
  %1586 = vmatpush1.bf16.msra.mxu0 %v319
  %1587 = vmatprep.subr.bf16.mxu0 0
  %1588 = vmatpush1.bf16.msra.mxu0 %v320
  %1589 = vmatprep.subr.bf16.mxu0 0
  %1590 = vmatpush1.bf16.msra.mxu0 %v321
  %1591 = vmatprep.mubr.bf16.mxu0 %v1496
  %1592 = vmatmul.mubr.bf16.gmra.mrb[0].mxu0 %v1495
  %v1593 = vpop.f32.mrb[0].mxu0
  %v1594 = vadd.f32 0.0, %v1593
  %v1595 = vpop.f32.mrb[0].mxu0
  %v1596 = vpop.f32.mrb[0].mxu0
  %v1597 = vadd.f32 0.0, %v1596
  %v1598 = vpop.f32.mrb[0].mxu0
  %1599 = vmatprep.mubr.bf16.mxu0 %v1498
  %1600 = vmatmul.mubr.bf16.gmra.mrb[0].mxu0 %v1497
  %v1601 = vpop.f32.mrb[0].mxu0
  %v1602 = vadd.f32 0.0, %v1601
  %v1603 = vpop.f32.mrb[0].mxu0
  %v1604 = vpop.f32.mrb[0].mxu0
  %v1605 = vadd.f32 0.0, %v1604
  %v1606 = vpop.f32.mrb[0].mxu0
  %1607 = vmatprep.mubr.bf16.mxu0 %v1500
  %1608 = vmatmul.mubr.bf16.gmra.mrb[0].mxu0 %v1499
  %v1609 = vpop.f32.mrb[0].mxu0
  %v1610 = vadd.f32 0.0, %v1609
  %v1611 = vpop.f32.mrb[0].mxu0
  %v1612 = vpop.f32.mrb[0].mxu0
  %v1613 = vadd.f32 0.0, %v1612
  %v1614 = vpop.f32.mrb[0].mxu0
  %1615 = vmatprep.mubr.bf16.mxu0 %v1502
  %1616 = vmatmul.mubr.bf16.gmra.mrb[0].mxu0 %v1501
  %v1617 = vpop.f32.mrb[0].mxu0
  %v1618 = vadd.f32 0.0, %v1617
  %v1619 = vpop.f32.mrb[0].mxu0
  %v1620 = vpop.f32.mrb[0].mxu0
  %v1621 = vadd.f32 0.0, %v1620
  %v1622 = vpop.f32.mrb[0].mxu0
  %1623 = vmatprep.mubr.bf16.mxu0 %v1504
  %1624 = vmatmul.mubr.bf16.gmra.mrb[0].mxu0 %v1503
  %v1625 = vpop.f32.mrb[0].mxu0
  %v1626 = vadd.f32 0.0, %v1625
  %v1627 = vpop.f32.mrb[0].mxu0
  %v1628 = vpop.f32.mrb[0].mxu0
  %v1629 = vadd.f32 0.0, %v1628
  %v1630 = vpop.f32.mrb[0].mxu0
  %1631 = vmatprep.mubr.bf16.mxu0 %v1506
  %1632 = vmatmul.mubr.bf16.gmra.mrb[0].mxu0 %v1505
  %v1633 = vpop.f32.mrb[0].mxu0
  %v1634 = vadd.f32 0.0, %v1633
  %v1635 = vpop.f32.mrb[0].mxu0
  %v1636 = vpop.f32.mrb[0].mxu0
  %v1637 = vadd.f32 0.0, %v1636
  %v1638 = vpop.f32.mrb[0].mxu0
  %1639 = vmatprep.mubr.bf16.mxu0 %v1508
  %1640 = vmatmul.mubr.bf16.gmra.mrb[0].mxu0 %v1507
  %v1641 = vpop.f32.mrb[0].mxu0
  %v1642 = vadd.f32 0.0, %v1641
  %v1643 = vpop.f32.mrb[0].mxu0
  %v1644 = vpop.f32.mrb[0].mxu0
  %v1645 = vadd.f32 0.0, %v1644
  %v1646 = vpop.f32.mrb[0].mxu0
  %1647 = vmatprep.mubr.bf16.mxu0 %v1510
  %1648 = vmatmul.mubr.bf16.gmra.mrb[0].mxu0 %v1509
  %v1649 = vpop.f32.mrb[0].mxu0
  %v1650 = vadd.f32 0.0, %v1649
  %v1651 = vpop.f32.mrb[0].mxu0
  %v1652 = vpop.f32.mrb[0].mxu0
  %v1653 = vadd.f32 0.0, %v1652
  %v1654 = vpop.f32.mrb[0].mxu0
  %1655 = vmatprep.mubr.bf16.mxu0 %v1512
  %1656 = vmatmul.mubr.bf16.gmra.mrb[0].mxu0 %v1511
  %v1657 = vpop.f32.mrb[0].mxu0
  %v1658 = vadd.f32 0.0, %v1657
  %v1659 = vpop.f32.mrb[0].mxu0
  %v1660 = vpop.f32.mrb[0].mxu0
  %v1661 = vadd.f32 0.0, %v1660
  %v1662 = vpop.f32.mrb[0].mxu0
  %1663 = vmatprep.mubr.bf16.mxu0 %v1514
  %1664 = vmatmul.mubr.bf16.gmra.mrb[0].mxu0 %v1513
  %v1665 = vpop.f32.mrb[0].mxu0
  %v1666 = vadd.f32 0.0, %v1665
  %v1667 = vpop.f32.mrb[0].mxu0
  %v1668 = vpop.f32.mrb[0].mxu0
  %v1669 = vadd.f32 0.0, %v1668
  %v1670 = vpop.f32.mrb[0].mxu0
  %1671 = vmatprep.mubr.bf16.mxu0 %v1516
  %1672 = vmatmul.mubr.bf16.gmra.mrb[0].mxu0 %v1515
  %v1673 = vpop.f32.mrb[0].mxu0
  %v1674 = vadd.f32 0.0, %v1673
  %v1675 = vpop.f32.mrb[0].mxu0
  %v1676 = vpop.f32.mrb[0].mxu0
  %v1677 = vadd.f32 0.0, %v1676
  %v1678 = vpop.f32.mrb[0].mxu0
  %1679 = vmatprep.mubr.bf16.mxu0 %v1518
  %1680 = vmatmul.mubr.bf16.gmra.mrb[0].mxu0 %v1517
  %v1681 = vpop.f32.mrb[0].mxu0
  %v1682 = vadd.f32 0.0, %v1681
  %v1683 = vpop.f32.mrb[0].mxu0
  %v1684 = vpop.f32.mrb[0].mxu0
  %v1685 = vadd.f32 0.0, %v1684
  %v1686 = vpop.f32.mrb[0].mxu0
  %1687 = vmatprep.mubr.bf16.mxu0 %v1520
  %1688 = vmatmul.mubr.bf16.gmra.mrb[0].mxu0 %v1519
  %v1689 = vpop.f32.mrb[0].mxu0
  %v1690 = vadd.f32 0.0, %v1689
  %v1691 = vpop.f32.mrb[0].mxu0
  %v1692 = vpop.f32.mrb[0].mxu0
  %v1693 = vadd.f32 0.0, %v1692
  %v1694 = vpop.f32.mrb[0].mxu0
  %1695 = vmatprep.mubr.bf16.mxu0 %v1522
  %1696 = vmatmul.mubr.bf16.gmra.mrb[0].mxu0 %v1521
  %v1697 = vpop.f32.mrb[0].mxu0
  %v1698 = vadd.f32 0.0, %v1697
  %v1699 = vpop.f32.mrb[0].mxu0
  %v1700 = vpop.f32.mrb[0].mxu0
  %v1701 = vadd.f32 0.0, %v1700
  %v1702 = vpop.f32.mrb[0].mxu0
  %1703 = vmatprep.mubr.bf16.mxu0 %v1524
  %1704 = vmatmul.mubr.bf16.gmra.mrb[0].mxu0 %v1523
  %v1705 = vpop.f32.mrb[0].mxu0
  %v1706 = vadd.f32 0.0, %v1705
  %v1707 = vpop.f32.mrb[0].mxu0
  %v1708 = vpop.f32.mrb[0].mxu0
  %v1709 = vadd.f32 0.0, %v1708
  %v1710 = vpop.f32.mrb[0].mxu0
  %1711 = vmatprep.mubr.bf16.mxu0 %v1526
  %1712 = vmatmul.mubr.bf16.gmra.mrb[0].mxu0 %v1525
  %v1713 = vpop.f32.mrb[0].mxu0
  %v1714 = vadd.f32 0.0, %v1713
  %v1715 = vpop.f32.mrb[0].mxu0
  %v1716 = vpop.f32.mrb[0].mxu0
  %v1717 = vadd.f32 0.0, %v1716
  %v1718 = vpop.f32.mrb[0].mxu0
  %1719 = vdwg.mxu0
  %s1720 = scalar_lea.vmem %s1, 512
  %v1721 = vld [vmem:[%s1720] sm:$0xff]
  %v1722 = vld [vmem:[%s1720 + $0x8] sm:$0xff]
  %v1723 = vld [vmem:[%s1720 + $0x10] sm:$0xff]
  %v1724 = vld [vmem:[%s1720 + $0x18] sm:$0xff]
  %v1725 = vld [vmem:[%s1720 + $0x20] sm:$0xff]
  %v1726 = vld [vmem:[%s1720 + $0x28] sm:$0xff]
  %v1727 = vld [vmem:[%s1720 + $0x30] sm:$0xff]
  %v1728 = vld [vmem:[%s1720 + $0x38] sm:$0xff]
  %v1729 = vld [vmem:[%s1720 + $0x40] sm:$0xff]
  %v1730 = vld [vmem:[%s1720 + $0x48] sm:$0xff]
  %v1731 = vld [vmem:[%s1720 + $0x50] sm:$0xff]
  %v1732 = vld [vmem:[%s1720 + $0x58] sm:$0xff]
  %v1733 = vld [vmem:[%s1720 + $0x60] sm:$0xff]
  %v1734 = vld [vmem:[%s1720 + $0x68] sm:$0xff]
  %v1735 = vld [vmem:[%s1720 + $0x70] sm:$0xff]
  %v1736 = vld [vmem:[%s1720 + $0x78] sm:$0xff]
  %v1737 = vld [vmem:[%s1720 + $0x80] sm:$0xff]
  %v1738 = vld [vmem:[%s1720 + $0x88] sm:$0xff]
  %v1739 = vld [vmem:[%s1720 + $0x90] sm:$0xff]
  %v1740 = vld [vmem:[%s1720 + $0x98] sm:$0xff]
  %v1741 = vld [vmem:[%s1720 + $0xa0] sm:$0xff]
  %v1742 = vld [vmem:[%s1720 + $0xa8] sm:$0xff]
  %v1743 = vld [vmem:[%s1720 + $0xb0] sm:$0xff]
  %v1744 = vld [vmem:[%s1720 + $0xb8] sm:$0xff]
  %v1745 = vld [vmem:[%s1720 + $0xc0] sm:$0xff]
  %v1746 = vld [vmem:[%s1720 + $0xc8] sm:$0xff]
  %v1747 = vld [vmem:[%s1720 + $0xd0] sm:$0xff]
  %v1748 = vld [vmem:[%s1720 + $0xd8] sm:$0xff]
  %v1749 = vld [vmem:[%s1720 + $0xe0] sm:$0xff]
  %v1750 = vld [vmem:[%s1720 + $0xe8] sm:$0xff]
  %v1751 = vld [vmem:[%s1720 + $0xf0] sm:$0xff]
  %v1752 = vld [vmem:[%s1720 + $0xf8] sm:$0xff]
  %1754 = vset.pattern.permute.xlu0 0
  %1755 = vperm.xlu0 %1754, %v1721
  %v1756 = vpop.permute.xlu0 %1755
  %1759 = vset.pattern.permute.xlu0 0
  %1760 = vperm.xlu0 %1759, %v1722
  %v1761 = vpop.permute.xlu0 %1760
  %1764 = vset.pattern.permute.xlu0 0
  %1765 = vperm.xlu0 %1764, %v1723
  %v1766 = vpop.permute.xlu0 %1765
  %1769 = vset.pattern.permute.xlu0 0
  %1770 = vperm.xlu0 %1769, %v1724
  %v1771 = vpop.permute.xlu0 %1770
  %1774 = vset.pattern.permute.xlu0 0
  %1775 = vperm.xlu0 %1774, %v1725
  %v1776 = vpop.permute.xlu0 %1775
  %1779 = vset.pattern.permute.xlu0 0
  %1780 = vperm.xlu0 %1779, %v1726
  %v1781 = vpop.permute.xlu0 %1780
  %1784 = vset.pattern.permute.xlu0 0
  %1785 = vperm.xlu0 %1784, %v1727
  %v1786 = vpop.permute.xlu0 %1785
  %1789 = vset.pattern.permute.xlu0 0
  %1790 = vperm.xlu0 %1789, %v1728
  %v1791 = vpop.permute.xlu0 %1790
  %1794 = vset.pattern.permute.xlu0 0
  %1795 = vperm.xlu0 %1794, %v1729
  %v1796 = vpop.permute.xlu0 %1795
  %1799 = vset.pattern.permute.xlu0 0
  %1800 = vperm.xlu0 %1799, %v1730
  %v1801 = vpop.permute.xlu0 %1800
  %1804 = vset.pattern.permute.xlu0 0
  %1805 = vperm.xlu0 %1804, %v1731
  %v1806 = vpop.permute.xlu0 %1805
  %1809 = vset.pattern.permute.xlu0 0
  %1810 = vperm.xlu0 %1809, %v1732
  %v1811 = vpop.permute.xlu0 %1810
  %1814 = vset.pattern.permute.xlu0 0
  %1815 = vperm.xlu0 %1814, %v1733
  %v1816 = vpop.permute.xlu0 %1815
  %1819 = vset.pattern.permute.xlu0 0
  %1820 = vperm.xlu0 %1819, %v1734
  %v1821 = vpop.permute.xlu0 %1820
  %1824 = vset.pattern.permute.xlu0 0
  %1825 = vperm.xlu0 %1824, %v1735
  %v1826 = vpop.permute.xlu0 %1825
  %1829 = vset.pattern.permute.xlu0 0
  %1830 = vperm.xlu0 %1829, %v1736
  %v1831 = vpop.permute.xlu0 %1830
  %1834 = vset.pattern.permute.xlu0 0
  %1835 = vperm.xlu0 %1834, %v1737
  %v1836 = vpop.permute.xlu0 %1835
  %1839 = vset.pattern.permute.xlu0 0
  %1840 = vperm.xlu0 %1839, %v1738
  %v1841 = vpop.permute.xlu0 %1840
  %1844 = vset.pattern.permute.xlu0 0
  %1845 = vperm.xlu0 %1844, %v1739
  %v1846 = vpop.permute.xlu0 %1845
  %1849 = vset.pattern.permute.xlu0 0
  %1850 = vperm.xlu0 %1849, %v1740
  %v1851 = vpop.permute.xlu0 %1850
  %1854 = vset.pattern.permute.xlu0 0
  %1855 = vperm.xlu0 %1854, %v1741
  %v1856 = vpop.permute.xlu0 %1855
  %1859 = vset.pattern.permute.xlu0 0
  %1860 = vperm.xlu0 %1859, %v1742
  %v1861 = vpop.permute.xlu0 %1860
  %1864 = vset.pattern.permute.xlu0 0
  %1865 = vperm.xlu0 %1864, %v1743
  %v1866 = vpop.permute.xlu0 %1865
  %1869 = vset.pattern.permute.xlu0 0
  %1870 = vperm.xlu0 %1869, %v1744
  %v1871 = vpop.permute.xlu0 %1870
  %1874 = vset.pattern.permute.xlu0 0
  %1875 = vperm.xlu0 %1874, %v1745
  %v1876 = vpop.permute.xlu0 %1875
  %1879 = vset.pattern.permute.xlu0 0
  %1880 = vperm.xlu0 %1879, %v1746
  %v1881 = vpop.permute.xlu0 %1880
  %1884 = vset.pattern.permute.xlu0 0
  %1885 = vperm.xlu0 %1884, %v1747
  %v1886 = vpop.permute.xlu0 %1885
  %1889 = vset.pattern.permute.xlu0 0
  %1890 = vperm.xlu0 %1889, %v1748
  %v1891 = vpop.permute.xlu0 %1890
  %1894 = vset.pattern.permute.xlu0 0
  %1895 = vperm.xlu0 %1894, %v1749
  %v1896 = vpop.permute.xlu0 %1895
  %1899 = vset.pattern.permute.xlu0 0
  %1900 = vperm.xlu0 %1899, %v1750
  %v1901 = vpop.permute.xlu0 %1900
  %1904 = vset.pattern.permute.xlu0 0
  %1905 = vperm.xlu0 %1904, %v1751
  %v1906 = vpop.permute.xlu0 %1905
  %1909 = vset.pattern.permute.xlu0 0
  %1910 = vperm.xlu0 %1909, %v1752
  %v1911 = vpop.permute.xlu0 %1910
  %v1913 = vmul.f32 %v1594, %v1756
  %v1914 = vmul.f32 %v1597, %v1761
  %v1915 = vmul.f32 %v1602, %v1766
  %v1916 = vmul.f32 %v1605, %v1771
  %v1917 = vmul.f32 %v1610, %v1776
  %v1918 = vmul.f32 %v1613, %v1781
  %v1919 = vmul.f32 %v1618, %v1786
  %v1920 = vmul.f32 %v1621, %v1791
  %v1921 = vmul.f32 %v1626, %v1796
  %v1922 = vmul.f32 %v1629, %v1801
  %v1923 = vmul.f32 %v1634, %v1806
  %v1924 = vmul.f32 %v1637, %v1811
  %v1925 = vmul.f32 %v1642, %v1816
  %v1926 = vmul.f32 %v1645, %v1821
  %v1927 = vmul.f32 %v1650, %v1826
  %v1928 = vmul.f32 %v1653, %v1831
  %v1929 = vmul.f32 %v1658, %v1836
  %v1930 = vmul.f32 %v1661, %v1841
  %v1931 = vmul.f32 %v1666, %v1846
  %v1932 = vmul.f32 %v1669, %v1851
  %v1933 = vmul.f32 %v1674, %v1856
  %v1934 = vmul.f32 %v1677, %v1861
  %v1935 = vmul.f32 %v1682, %v1866
  %v1936 = vmul.f32 %v1685, %v1871
  %v1937 = vmul.f32 %v1690, %v1876
  %v1938 = vmul.f32 %v1693, %v1881
  %v1939 = vmul.f32 %v1698, %v1886
  %v1940 = vmul.f32 %v1701, %v1891
  %v1941 = vmul.f32 %v1706, %v1896
  %v1942 = vmul.f32 %v1709, %v1901
  %v1943 = vmul.f32 %v1714, %v1906
  %v1944 = vmul.f32 %v1717, %v1911
  %v1945 = vpack.c.bf16 %v1914, %v1913
  %v1946 = vpack.c.bf16 %v1916, %v1915
  %v1947 = vpack.c.bf16 %v1918, %v1917
  %v1948 = vpack.c.bf16 %v1920, %v1919
  %v1949 = vpack.c.bf16 %v1922, %v1921
  %v1950 = vpack.c.bf16 %v1924, %v1923
  %v1951 = vpack.c.bf16 %v1926, %v1925
  %v1952 = vpack.c.bf16 %v1928, %v1927
  %v1953 = vpack.c.bf16 %v1930, %v1929
  %v1954 = vpack.c.bf16 %v1932, %v1931
  %v1955 = vpack.c.bf16 %v1934, %v1933
  %v1956 = vpack.c.bf16 %v1936, %v1935
  %v1957 = vpack.c.bf16 %v1938, %v1937
  %v1958 = vpack.c.bf16 %v1940, %v1939
  %v1959 = vpack.c.bf16 %v1942, %v1941
  %v1960 = vpack.c.bf16 %v1944, %v1943
  %1961 = vst [vmem:[#allocation2 + $0x10] sm:$0xff] %v1945
  %1962 = vst [vmem:[#allocation2 + $0x38] sm:$0xff] %v1946
  %1963 = vst [vmem:[#allocation2 + $0x60] sm:$0xff] %v1947
  %1964 = vst [vmem:[#allocation2 + $0x88] sm:$0xff] %v1948
  %1965 = vst [vmem:[#allocation2 + $0xb0] sm:$0xff] %v1949
  %1966 = vst [vmem:[#allocation2 + $0xd8] sm:$0xff] %v1950
  %1967 = vst [vmem:[#allocation2 + $0x100] sm:$0xff] %v1951
  %1968 = vst [vmem:[#allocation2 + $0x128] sm:$0xff] %v1952
  %1969 = vst [vmem:[#allocation2 + $0x150] sm:$0xff] %v1953
  %1970 = vst [vmem:[#allocation2 + $0x178] sm:$0xff] %v1954
  %1971 = vst [vmem:[#allocation2 + $0x1a0] sm:$0xff] %v1955
  %1972 = vst [vmem:[#allocation2 + $0x1c8] sm:$0xff] %v1956
  %1973 = vst [vmem:[#allocation2 + $0x1f0] sm:$0xff] %v1957
  %1974 = vst [vmem:[#allocation2 + $0x218] sm:$0xff] %v1958
  %1975 = vst [vmem:[#allocation2 + $0x240] sm:$0xff] %v1959
  %1976 = vst [vmem:[#allocation2 + $0x268] sm:$0xff] %v1960
  %s1977 = scalar_lea.vmem %s0, 768
  %v1978 = vld [vmem:[%s1977] sm:$0xff]
  %v1979 = vld [vmem:[%s1977 + $0x8] sm:$0xff]
  %v1980 = vld [vmem:[%s1977 + $0x10] sm:$0xff]
  %v1981 = vld [vmem:[%s1977 + $0x18] sm:$0xff]
  %v1982 = vld [vmem:[%s1977 + $0x20] sm:$0xff]
  %v1983 = vld [vmem:[%s1977 + $0x28] sm:$0xff]
  %v1984 = vld [vmem:[%s1977 + $0x30] sm:$0xff]
  %v1985 = vld [vmem:[%s1977 + $0x38] sm:$0xff]
  %v1986 = vld [vmem:[%s1977 + $0x40] sm:$0xff]
  %v1987 = vld [vmem:[%s1977 + $0x48] sm:$0xff]
  %v1988 = vld [vmem:[%s1977 + $0x50] sm:$0xff]
  %v1989 = vld [vmem:[%s1977 + $0x58] sm:$0xff]
  %v1990 = vld [vmem:[%s1977 + $0x60] sm:$0xff]
  %v1991 = vld [vmem:[%s1977 + $0x68] sm:$0xff]
  %v1992 = vld [vmem:[%s1977 + $0x70] sm:$0xff]
  %v1993 = vld [vmem:[%s1977 + $0x78] sm:$0xff]
  %v1994 = vld [vmem:[%s1977 + $0x80] sm:$0xff]
  %v1995 = vld [vmem:[%s1977 + $0x88] sm:$0xff]
  %v1996 = vld [vmem:[%s1977 + $0x90] sm:$0xff]
  %v1997 = vld [vmem:[%s1977 + $0x98] sm:$0xff]
  %v1998 = vld [vmem:[%s1977 + $0xa0] sm:$0xff]
  %v1999 = vld [vmem:[%s1977 + $0xa8] sm:$0xff]
  %v2000 = vld [vmem:[%s1977 + $0xb0] sm:$0xff]
  %v2001 = vld [vmem:[%s1977 + $0xb8] sm:$0xff]
  %v2002 = vld [vmem:[%s1977 + $0xc0] sm:$0xff]
  %v2003 = vld [vmem:[%s1977 + $0xc8] sm:$0xff]
  %v2004 = vld [vmem:[%s1977 + $0xd0] sm:$0xff]
  %v2005 = vld [vmem:[%s1977 + $0xd8] sm:$0xff]
  %v2006 = vld [vmem:[%s1977 + $0xe0] sm:$0xff]
  %v2007 = vld [vmem:[%s1977 + $0xe8] sm:$0xff]
  %v2008 = vld [vmem:[%s1977 + $0xf0] sm:$0xff]
  %v2009 = vld [vmem:[%s1977 + $0xf8] sm:$0xff]
  %v2042 = vunpack.c.l.b16 %v1978
  %v2043 = vunpack.c.h.b16 %v1978
  %v2044 = vunpack.c.l.b16 %v1979
  %v2045 = vunpack.c.h.b16 %v1979
  %v2046 = vunpack.c.l.b16 %v1980
  %v2047 = vunpack.c.h.b16 %v1980
  %v2048 = vunpack.c.l.b16 %v1981
  %v2049 = vunpack.c.h.b16 %v1981
  %v2050 = vunpack.c.l.b16 %v1982
  %v2051 = vunpack.c.h.b16 %v1982
  %v2052 = vunpack.c.l.b16 %v1983
  %v2053 = vunpack.c.h.b16 %v1983
  %v2054 = vunpack.c.l.b16 %v1984
  %v2055 = vunpack.c.h.b16 %v1984
  %v2056 = vunpack.c.l.b16 %v1985
  %v2057 = vunpack.c.h.b16 %v1985
  %v2058 = vunpack.c.l.b16 %v1986
  %v2059 = vunpack.c.h.b16 %v1986
  %v2060 = vunpack.c.l.b16 %v1987
  %v2061 = vunpack.c.h.b16 %v1987
  %v2062 = vunpack.c.l.b16 %v1988
  %v2063 = vunpack.c.h.b16 %v1988
  %v2064 = vunpack.c.l.b16 %v1989
  %v2065 = vunpack.c.h.b16 %v1989
  %v2066 = vunpack.c.l.b16 %v1990
  %v2067 = vunpack.c.h.b16 %v1990
  %v2068 = vunpack.c.l.b16 %v1991
  %v2069 = vunpack.c.h.b16 %v1991
  %v2070 = vunpack.c.l.b16 %v1992
  %v2071 = vunpack.c.h.b16 %v1992
  %v2072 = vunpack.c.l.b16 %v1993
  %v2073 = vunpack.c.h.b16 %v1993
  %v2074 = vunpack.c.l.b16 %v1994
  %v2075 = vunpack.c.h.b16 %v1994
  %v2076 = vunpack.c.l.b16 %v1995
  %v2077 = vunpack.c.h.b16 %v1995
  %v2078 = vunpack.c.l.b16 %v1996
  %v2079 = vunpack.c.h.b16 %v1996
  %v2080 = vunpack.c.l.b16 %v1997
  %v2081 = vunpack.c.h.b16 %v1997
  %v2082 = vunpack.c.l.b16 %v1998
  %v2083 = vunpack.c.h.b16 %v1998
  %v2084 = vunpack.c.l.b16 %v1999
  %v2085 = vunpack.c.h.b16 %v1999
  %v2086 = vunpack.c.l.b16 %v2000
  %v2087 = vunpack.c.h.b16 %v2000
  %v2088 = vunpack.c.l.b16 %v2001
  %v2089 = vunpack.c.h.b16 %v2001
  %v2090 = vunpack.c.l.b16 %v2002
  %v2091 = vunpack.c.h.b16 %v2002
  %v2092 = vunpack.c.l.b16 %v2003
  %v2093 = vunpack.c.h.b16 %v2003
  %v2094 = vunpack.c.l.b16 %v2004
  %v2095 = vunpack.c.h.b16 %v2004
  %v2096 = vunpack.c.l.b16 %v2005
  %v2097 = vunpack.c.h.b16 %v2005
  %v2098 = vunpack.c.l.b16 %v2006
  %v2099 = vunpack.c.h.b16 %v2006
  %v2100 = vunpack.c.l.b16 %v2007
  %v2101 = vunpack.c.h.b16 %v2007
  %v2102 = vunpack.c.l.b16 %v2008
  %v2103 = vunpack.c.h.b16 %v2008
  %v2104 = vunpack.c.l.b16 %v2009
  %v2105 = vunpack.c.h.b16 %v2009
  %v2106 = vpack.c.b16 %v2044, %v2042
  %v2107 = vpack.c.b16 %v2045, %v2043
  %v2108 = vpack.c.b16 %v2048, %v2046
  %v2109 = vpack.c.b16 %v2049, %v2047
  %v2110 = vpack.c.b16 %v2052, %v2050
  %v2111 = vpack.c.b16 %v2053, %v2051
  %v2112 = vpack.c.b16 %v2056, %v2054
  %v2113 = vpack.c.b16 %v2057, %v2055
  %v2114 = vpack.c.b16 %v2060, %v2058
  %v2115 = vpack.c.b16 %v2061, %v2059
  %v2116 = vpack.c.b16 %v2064, %v2062
  %v2117 = vpack.c.b16 %v2065, %v2063
  %v2118 = vpack.c.b16 %v2068, %v2066
  %v2119 = vpack.c.b16 %v2069, %v2067
  %v2120 = vpack.c.b16 %v2072, %v2070
  %v2121 = vpack.c.b16 %v2073, %v2071
  %v2122 = vpack.c.b16 %v2076, %v2074
  %v2123 = vpack.c.b16 %v2077, %v2075
  %v2124 = vpack.c.b16 %v2080, %v2078
  %v2125 = vpack.c.b16 %v2081, %v2079
  %v2126 = vpack.c.b16 %v2084, %v2082
  %v2127 = vpack.c.b16 %v2085, %v2083
  %v2128 = vpack.c.b16 %v2088, %v2086
  %v2129 = vpack.c.b16 %v2089, %v2087
  %v2130 = vpack.c.b16 %v2092, %v2090
  %v2131 = vpack.c.b16 %v2093, %v2091
  %v2132 = vpack.c.b16 %v2096, %v2094
  %v2133 = vpack.c.b16 %v2097, %v2095
  %v2134 = vpack.c.b16 %v2100, %v2098
  %v2135 = vpack.c.b16 %v2101, %v2099
  %v2136 = vpack.c.b16 %v2104, %v2102
  %v2137 = vpack.c.b16 %v2105, %v2103
  %2170 = vmatprep.subr.bf16.mxu0 0
  %2171 = vmatpush1.bf16.msra.mxu0 %v306
  %2172 = vmatprep.subr.bf16.mxu0 0
  %2173 = vmatpush1.bf16.msra.mxu0 %v307
  %2174 = vmatprep.subr.bf16.mxu0 0
  %2175 = vmatpush1.bf16.msra.mxu0 %v308
  %2176 = vmatprep.subr.bf16.mxu0 0
  %2177 = vmatpush1.bf16.msra.mxu0 %v309
  %2178 = vmatprep.subr.bf16.mxu0 0
  %2179 = vmatpush1.bf16.msra.mxu0 %v310
  %2180 = vmatprep.subr.bf16.mxu0 0
  %2181 = vmatpush1.bf16.msra.mxu0 %v311
  %2182 = vmatprep.subr.bf16.mxu0 0
  %2183 = vmatpush1.bf16.msra.mxu0 %v312
  %2184 = vmatprep.subr.bf16.mxu0 0
  %2185 = vmatpush1.bf16.msra.mxu0 %v313
  %2186 = vmatprep.subr.bf16.mxu0 0
  %2187 = vmatpush1.bf16.msra.mxu0 %v314
  %2188 = vmatprep.subr.bf16.mxu0 0
  %2189 = vmatpush1.bf16.msra.mxu0 %v315
  %2190 = vmatprep.subr.bf16.mxu0 0
  %2191 = vmatpush1.bf16.msra.mxu0 %v316
  %2192 = vmatprep.subr.bf16.mxu0 0
  %2193 = vmatpush1.bf16.msra.mxu0 %v317
  %2194 = vmatprep.subr.bf16.mxu0 0
  %2195 = vmatpush1.bf16.msra.mxu0 %v318
  %2196 = vmatprep.subr.bf16.mxu0 0
  %2197 = vmatpush1.bf16.msra.mxu0 %v319
  %2198 = vmatprep.subr.bf16.mxu0 0
  %2199 = vmatpush1.bf16.msra.mxu0 %v320
  %2200 = vmatprep.subr.bf16.mxu0 0
  %2201 = vmatpush1.bf16.msra.mxu0 %v321
  %2202 = vmatprep.mubr.bf16.mxu0 %v2107
  %2203 = vmatmul.mubr.bf16.gmra.mrb[0].mxu0 %v2106
  %v2204 = vpop.f32.mrb[0].mxu0
  %v2205 = vadd.f32 0.0, %v2204
  %v2206 = vpop.f32.mrb[0].mxu0
  %v2207 = vpop.f32.mrb[0].mxu0
  %v2208 = vadd.f32 0.0, %v2207
  %v2209 = vpop.f32.mrb[0].mxu0
  %2210 = vmatprep.mubr.bf16.mxu0 %v2109
  %2211 = vmatmul.mubr.bf16.gmra.mrb[0].mxu0 %v2108
  %v2212 = vpop.f32.mrb[0].mxu0
  %v2213 = vadd.f32 0.0, %v2212
  %v2214 = vpop.f32.mrb[0].mxu0
  %v2215 = vpop.f32.mrb[0].mxu0
  %v2216 = vadd.f32 0.0, %v2215
  %v2217 = vpop.f32.mrb[0].mxu0
  %2218 = vmatprep.mubr.bf16.mxu0 %v2111
  %2219 = vmatmul.mubr.bf16.gmra.mrb[0].mxu0 %v2110
  %v2220 = vpop.f32.mrb[0].mxu0
  %v2221 = vadd.f32 0.0, %v2220
  %v2222 = vpop.f32.mrb[0].mxu0
  %v2223 = vpop.f32.mrb[0].mxu0
  %v2224 = vadd.f32 0.0, %v2223
  %v2225 = vpop.f32.mrb[0].mxu0
  %2226 = vmatprep.mubr.bf16.mxu0 %v2113
  %2227 = vmatmul.mubr.bf16.gmra.mrb[0].mxu0 %v2112
  %v2228 = vpop.f32.mrb[0].mxu0
  %v2229 = vadd.f32 0.0, %v2228
  %v2230 = vpop.f32.mrb[0].mxu0
  %v2231 = vpop.f32.mrb[0].mxu0
  %v2232 = vadd.f32 0.0, %v2231
  %v2233 = vpop.f32.mrb[0].mxu0
  %2234 = vmatprep.mubr.bf16.mxu0 %v2115
  %2235 = vmatmul.mubr.bf16.gmra.mrb[0].mxu0 %v2114
  %v2236 = vpop.f32.mrb[0].mxu0
  %v2237 = vadd.f32 0.0, %v2236
  %v2238 = vpop.f32.mrb[0].mxu0
  %v2239 = vpop.f32.mrb[0].mxu0
  %v2240 = vadd.f32 0.0, %v2239
  %v2241 = vpop.f32.mrb[0].mxu0
  %2242 = vmatprep.mubr.bf16.mxu0 %v2117
  %2243 = vmatmul.mubr.bf16.gmra.mrb[0].mxu0 %v2116
  %v2244 = vpop.f32.mrb[0].mxu0
  %v2245 = vadd.f32 0.0, %v2244
  %v2246 = vpop.f32.mrb[0].mxu0
  %v2247 = vpop.f32.mrb[0].mxu0
  %v2248 = vadd.f32 0.0, %v2247
  %v2249 = vpop.f32.mrb[0].mxu0
  %2250 = vmatprep.mubr.bf16.mxu0 %v2119
  %2251 = vmatmul.mubr.bf16.gmra.mrb[0].mxu0 %v2118
  %v2252 = vpop.f32.mrb[0].mxu0
  %v2253 = vadd.f32 0.0, %v2252
  %v2254 = vpop.f32.mrb[0].mxu0
  %v2255 = vpop.f32.mrb[0].mxu0
  %v2256 = vadd.f32 0.0, %v2255
  %v2257 = vpop.f32.mrb[0].mxu0
  %2258 = vmatprep.mubr.bf16.mxu0 %v2121
  %2259 = vmatmul.mubr.bf16.gmra.mrb[0].mxu0 %v2120
  %v2260 = vpop.f32.mrb[0].mxu0
  %v2261 = vadd.f32 0.0, %v2260
  %v2262 = vpop.f32.mrb[0].mxu0
  %v2263 = vpop.f32.mrb[0].mxu0
  %v2264 = vadd.f32 0.0, %v2263
  %v2265 = vpop.f32.mrb[0].mxu0
  %2266 = vmatprep.mubr.bf16.mxu0 %v2123
  %2267 = vmatmul.mubr.bf16.gmra.mrb[0].mxu0 %v2122
  %v2268 = vpop.f32.mrb[0].mxu0
  %v2269 = vadd.f32 0.0, %v2268
  %v2270 = vpop.f32.mrb[0].mxu0
  %v2271 = vpop.f32.mrb[0].mxu0
  %v2272 = vadd.f32 0.0, %v2271
  %v2273 = vpop.f32.mrb[0].mxu0
  %2274 = vmatprep.mubr.bf16.mxu0 %v2125
  %2275 = vmatmul.mubr.bf16.gmra.mrb[0].mxu0 %v2124
  %v2276 = vpop.f32.mrb[0].mxu0
  %v2277 = vadd.f32 0.0, %v2276
  %v2278 = vpop.f32.mrb[0].mxu0
  %v2279 = vpop.f32.mrb[0].mxu0
  %v2280 = vadd.f32 0.0, %v2279
  %v2281 = vpop.f32.mrb[0].mxu0
  %2282 = vmatprep.mubr.bf16.mxu0 %v2127
  %2283 = vmatmul.mubr.bf16.gmra.mrb[0].mxu0 %v2126
  %v2284 = vpop.f32.mrb[0].mxu0
  %v2285 = vadd.f32 0.0, %v2284
  %v2286 = vpop.f32.mrb[0].mxu0
  %v2287 = vpop.f32.mrb[0].mxu0
  %v2288 = vadd.f32 0.0, %v2287
  %v2289 = vpop.f32.mrb[0].mxu0
  %2290 = vmatprep.mubr.bf16.mxu0 %v2129
  %2291 = vmatmul.mubr.bf16.gmra.mrb[0].mxu0 %v2128
  %v2292 = vpop.f32.mrb[0].mxu0
  %v2293 = vadd.f32 0.0, %v2292
  %v2294 = vpop.f32.mrb[0].mxu0
  %v2295 = vpop.f32.mrb[0].mxu0
  %v2296 = vadd.f32 0.0, %v2295
  %v2297 = vpop.f32.mrb[0].mxu0
  %2298 = vmatprep.mubr.bf16.mxu0 %v2131
  %2299 = vmatmul.mubr.bf16.gmra.mrb[0].mxu0 %v2130
  %v2300 = vpop.f32.mrb[0].mxu0
  %v2301 = vadd.f32 0.0, %v2300
  %v2302 = vpop.f32.mrb[0].mxu0
  %v2303 = vpop.f32.mrb[0].mxu0
  %v2304 = vadd.f32 0.0, %v2303
  %v2305 = vpop.f32.mrb[0].mxu0
  %2306 = vmatprep.mubr.bf16.mxu0 %v2133
  %2307 = vmatmul.mubr.bf16.gmra.mrb[0].mxu0 %v2132
  %v2308 = vpop.f32.mrb[0].mxu0
  %v2309 = vadd.f32 0.0, %v2308
  %v2310 = vpop.f32.mrb[0].mxu0
  %v2311 = vpop.f32.mrb[0].mxu0
  %v2312 = vadd.f32 0.0, %v2311
  %v2313 = vpop.f32.mrb[0].mxu0
  %2314 = vmatprep.mubr.bf16.mxu0 %v2135
  %2315 = vmatmul.mubr.bf16.gmra.mrb[0].mxu0 %v2134
  %v2316 = vpop.f32.mrb[0].mxu0
  %v2317 = vadd.f32 0.0, %v2316
  %v2318 = vpop.f32.mrb[0].mxu0
  %v2319 = vpop.f32.mrb[0].mxu0
  %v2320 = vadd.f32 0.0, %v2319
  %v2321 = vpop.f32.mrb[0].mxu0
  %2322 = vmatprep.mubr.bf16.mxu0 %v2137
  %2323 = vmatmul.mubr.bf16.gmra.mrb[0].mxu0 %v2136
  %v2324 = vpop.f32.mrb[0].mxu0
  %v2325 = vadd.f32 0.0, %v2324
  %v2326 = vpop.f32.mrb[0].mxu0
  %v2327 = vpop.f32.mrb[0].mxu0
  %v2328 = vadd.f32 0.0, %v2327
  %v2329 = vpop.f32.mrb[0].mxu0
  %2330 = vdwg.mxu0
  %s2331 = scalar_lea.vmem %s1, 768
  %v2332 = vld [vmem:[%s2331] sm:$0xff]
  %v2333 = vld [vmem:[%s2331 + $0x8] sm:$0xff]
  %v2334 = vld [vmem:[%s2331 + $0x10] sm:$0xff]
  %v2335 = vld [vmem:[%s2331 + $0x18] sm:$0xff]
  %v2336 = vld [vmem:[%s2331 + $0x20] sm:$0xff]
  %v2337 = vld [vmem:[%s2331 + $0x28] sm:$0xff]
  %v2338 = vld [vmem:[%s2331 + $0x30] sm:$0xff]
  %v2339 = vld [vmem:[%s2331 + $0x38] sm:$0xff]
  %v2340 = vld [vmem:[%s2331 + $0x40] sm:$0xff]
  %v2341 = vld [vmem:[%s2331 + $0x48] sm:$0xff]
  %v2342 = vld [vmem:[%s2331 + $0x50] sm:$0xff]
  %v2343 = vld [vmem:[%s2331 + $0x58] sm:$0xff]
  %v2344 = vld [vmem:[%s2331 + $0x60] sm:$0xff]
  %v2345 = vld [vmem:[%s2331 + $0x68] sm:$0xff]
  %v2346 = vld [vmem:[%s2331 + $0x70] sm:$0xff]
  %v2347 = vld [vmem:[%s2331 + $0x78] sm:$0xff]
  %v2348 = vld [vmem:[%s2331 + $0x80] sm:$0xff]
  %v2349 = vld [vmem:[%s2331 + $0x88] sm:$0xff]
  %v2350 = vld [vmem:[%s2331 + $0x90] sm:$0xff]
  %v2351 = vld [vmem:[%s2331 + $0x98] sm:$0xff]
  %v2352 = vld [vmem:[%s2331 + $0xa0] sm:$0xff]
  %v2353 = vld [vmem:[%s2331 + $0xa8] sm:$0xff]
  %v2354 = vld [vmem:[%s2331 + $0xb0] sm:$0xff]
  %v2355 = vld [vmem:[%s2331 + $0xb8] sm:$0xff]
  %v2356 = vld [vmem:[%s2331 + $0xc0] sm:$0xff]
  %v2357 = vld [vmem:[%s2331 + $0xc8] sm:$0xff]
  %v2358 = vld [vmem:[%s2331 + $0xd0] sm:$0xff]
  %v2359 = vld [vmem:[%s2331 + $0xd8] sm:$0xff]
  %v2360 = vld [vmem:[%s2331 + $0xe0] sm:$0xff]
  %v2361 = vld [vmem:[%s2331 + $0xe8] sm:$0xff]
  %v2362 = vld [vmem:[%s2331 + $0xf0] sm:$0xff]
  %v2363 = vld [vmem:[%s2331 + $0xf8] sm:$0xff]
  %2365 = vset.pattern.permute.xlu0 0
  %2366 = vperm.xlu0 %2365, %v2332
  %v2367 = vpop.permute.xlu0 %2366
  %2370 = vset.pattern.permute.xlu0 0
  %2371 = vperm.xlu0 %2370, %v2333
  %v2372 = vpop.permute.xlu0 %2371
  %2375 = vset.pattern.permute.xlu0 0
  %2376 = vperm.xlu0 %2375, %v2334
  %v2377 = vpop.permute.xlu0 %2376
  %2380 = vset.pattern.permute.xlu0 0
  %2381 = vperm.xlu0 %2380, %v2335
  %v2382 = vpop.permute.xlu0 %2381
  %2385 = vset.pattern.permute.xlu0 0
  %2386 = vperm.xlu0 %2385, %v2336
  %v2387 = vpop.permute.xlu0 %2386
  %2390 = vset.pattern.permute.xlu0 0
  %2391 = vperm.xlu0 %2390, %v2337
  %v2392 = vpop.permute.xlu0 %2391
  %2395 = vset.pattern.permute.xlu0 0
  %2396 = vperm.xlu0 %2395, %v2338
  %v2397 = vpop.permute.xlu0 %2396
  %2400 = vset.pattern.permute.xlu0 0
  %2401 = vperm.xlu0 %2400, %v2339
  %v2402 = vpop.permute.xlu0 %2401
  %2405 = vset.pattern.permute.xlu0 0
  %2406 = vperm.xlu0 %2405, %v2340
  %v2407 = vpop.permute.xlu0 %2406
  %2410 = vset.pattern.permute.xlu0 0
  %2411 = vperm.xlu0 %2410, %v2341
  %v2412 = vpop.permute.xlu0 %2411
  %2415 = vset.pattern.permute.xlu0 0
  %2416 = vperm.xlu0 %2415, %v2342
  %v2417 = vpop.permute.xlu0 %2416
  %2420 = vset.pattern.permute.xlu0 0
  %2421 = vperm.xlu0 %2420, %v2343
  %v2422 = vpop.permute.xlu0 %2421
  %2425 = vset.pattern.permute.xlu0 0
  %2426 = vperm.xlu0 %2425, %v2344
  %v2427 = vpop.permute.xlu0 %2426
  %2430 = vset.pattern.permute.xlu0 0
  %2431 = vperm.xlu0 %2430, %v2345
  %v2432 = vpop.permute.xlu0 %2431
  %2435 = vset.pattern.permute.xlu0 0
  %2436 = vperm.xlu0 %2435, %v2346
  %v2437 = vpop.permute.xlu0 %2436
  %2440 = vset.pattern.permute.xlu0 0
  %2441 = vperm.xlu0 %2440, %v2347
  %v2442 = vpop.permute.xlu0 %2441
  %2445 = vset.pattern.permute.xlu0 0
  %2446 = vperm.xlu0 %2445, %v2348
  %v2447 = vpop.permute.xlu0 %2446
  %2450 = vset.pattern.permute.xlu0 0
  %2451 = vperm.xlu0 %2450, %v2349
  %v2452 = vpop.permute.xlu0 %2451
  %2455 = vset.pattern.permute.xlu0 0
  %2456 = vperm.xlu0 %2455, %v2350
  %v2457 = vpop.permute.xlu0 %2456
  %2460 = vset.pattern.permute.xlu0 0
  %2461 = vperm.xlu0 %2460, %v2351
  %v2462 = vpop.permute.xlu0 %2461
  %2465 = vset.pattern.permute.xlu0 0
  %2466 = vperm.xlu0 %2465, %v2352
  %v2467 = vpop.permute.xlu0 %2466
  %2470 = vset.pattern.permute.xlu0 0
  %2471 = vperm.xlu0 %2470, %v2353
  %v2472 = vpop.permute.xlu0 %2471
  %2475 = vset.pattern.permute.xlu0 0
  %2476 = vperm.xlu0 %2475, %v2354
  %v2477 = vpop.permute.xlu0 %2476
  %2480 = vset.pattern.permute.xlu0 0
  %2481 = vperm.xlu0 %2480, %v2355
  %v2482 = vpop.permute.xlu0 %2481
  %2485 = vset.pattern.permute.xlu0 0
  %2486 = vperm.xlu0 %2485, %v2356
  %v2487 = vpop.permute.xlu0 %2486
  %2490 = vset.pattern.permute.xlu0 0
  %2491 = vperm.xlu0 %2490, %v2357
  %v2492 = vpop.permute.xlu0 %2491
  %2495 = vset.pattern.permute.xlu0 0
  %2496 = vperm.xlu0 %2495, %v2358
  %v2497 = vpop.permute.xlu0 %2496
  %2500 = vset.pattern.permute.xlu0 0
  %2501 = vperm.xlu0 %2500, %v2359
  %v2502 = vpop.permute.xlu0 %2501
  %2505 = vset.pattern.permute.xlu0 0
  %2506 = vperm.xlu0 %2505, %v2360
  %v2507 = vpop.permute.xlu0 %2506
  %2510 = vset.pattern.permute.xlu0 0
  %2511 = vperm.xlu0 %2510, %v2361
  %v2512 = vpop.permute.xlu0 %2511
  %2515 = vset.pattern.permute.xlu0 0
  %2516 = vperm.xlu0 %2515, %v2362
  %v2517 = vpop.permute.xlu0 %2516
  %2520 = vset.pattern.permute.xlu0 0
  %2521 = vperm.xlu0 %2520, %v2363
  %v2522 = vpop.permute.xlu0 %2521
  %v2524 = vmul.f32 %v2205, %v2367
  %v2525 = vmul.f32 %v2208, %v2372
  %v2526 = vmul.f32 %v2213, %v2377
  %v2527 = vmul.f32 %v2216, %v2382
  %v2528 = vmul.f32 %v2221, %v2387
  %v2529 = vmul.f32 %v2224, %v2392
  %v2530 = vmul.f32 %v2229, %v2397
  %v2531 = vmul.f32 %v2232, %v2402
  %v2532 = vmul.f32 %v2237, %v2407
  %v2533 = vmul.f32 %v2240, %v2412
  %v2534 = vmul.f32 %v2245, %v2417
  %v2535 = vmul.f32 %v2248, %v2422
  %v2536 = vmul.f32 %v2253, %v2427
  %v2537 = vmul.f32 %v2256, %v2432
  %v2538 = vmul.f32 %v2261, %v2437
  %v2539 = vmul.f32 %v2264, %v2442
  %v2540 = vmul.f32 %v2269, %v2447
  %v2541 = vmul.f32 %v2272, %v2452
  %v2542 = vmul.f32 %v2277, %v2457
  %v2543 = vmul.f32 %v2280, %v2462
  %v2544 = vmul.f32 %v2285, %v2467
  %v2545 = vmul.f32 %v2288, %v2472
  %v2546 = vmul.f32 %v2293, %v2477
  %v2547 = vmul.f32 %v2296, %v2482
  %v2548 = vmul.f32 %v2301, %v2487
  %v2549 = vmul.f32 %v2304, %v2492
  %v2550 = vmul.f32 %v2309, %v2497
  %v2551 = vmul.f32 %v2312, %v2502
  %v2552 = vmul.f32 %v2317, %v2507
  %v2553 = vmul.f32 %v2320, %v2512
  %v2554 = vmul.f32 %v2325, %v2517
  %v2555 = vmul.f32 %v2328, %v2522
  %v2556 = vpack.c.bf16 %v2525, %v2524
  %v2557 = vpack.c.bf16 %v2527, %v2526
  %v2558 = vpack.c.bf16 %v2529, %v2528
  %v2559 = vpack.c.bf16 %v2531, %v2530
  %v2560 = vpack.c.bf16 %v2533, %v2532
  %v2561 = vpack.c.bf16 %v2535, %v2534
  %v2562 = vpack.c.bf16 %v2537, %v2536
  %v2563 = vpack.c.bf16 %v2539, %v2538
  %v2564 = vpack.c.bf16 %v2541, %v2540
  %v2565 = vpack.c.bf16 %v2543, %v2542
  %v2566 = vpack.c.bf16 %v2545, %v2544
  %v2567 = vpack.c.bf16 %v2547, %v2546
  %v2568 = vpack.c.bf16 %v2549, %v2548
  %v2569 = vpack.c.bf16 %v2551, %v2550
  %v2570 = vpack.c.bf16 %v2553, %v2552
  %v2571 = vpack.c.bf16 %v2555, %v2554
  %2572 = vst [vmem:[#allocation2 + $0x18] sm:$0xff] %v2556
  %2573 = vst [vmem:[#allocation2 + $0x40] sm:$0xff] %v2557
  %2574 = vst [vmem:[#allocation2 + $0x68] sm:$0xff] %v2558
  %2575 = vst [vmem:[#allocation2 + $0x90] sm:$0xff] %v2559
  %2576 = vst [vmem:[#allocation2 + $0xb8] sm:$0xff] %v2560
  %2577 = vst [vmem:[#allocation2 + $0xe0] sm:$0xff] %v2561
  %2578 = vst [vmem:[#allocation2 + $0x108] sm:$0xff] %v2562
  %2579 = vst [vmem:[#allocation2 + $0x130] sm:$0xff] %v2563
  %2580 = vst [vmem:[#allocation2 + $0x158] sm:$0xff] %v2564
  %2581 = vst [vmem:[#allocation2 + $0x180] sm:$0xff] %v2565
  %2582 = vst [vmem:[#allocation2 + $0x1a8] sm:$0xff] %v2566
  %2583 = vst [vmem:[#allocation2 + $0x1d0] sm:$0xff] %v2567
  %2584 = vst [vmem:[#allocation2 + $0x1f8] sm:$0xff] %v2568
  %2585 = vst [vmem:[#allocation2 + $0x220] sm:$0xff] %v2569
  %2586 = vst [vmem:[#allocation2 + $0x248] sm:$0xff] %v2570
  %2587 = vst [vmem:[#allocation2 + $0x270] sm:$0xff] %v2571
  %s2588 = scalar_lea.vmem %s0, 1024
  %v2589 = vld [vmem:[%s2588] sm:$0xff]
  %v2590 = vld [vmem:[%s2588 + $0x8] sm:$0xff]
  %v2591 = vld [vmem:[%s2588 + $0x10] sm:$0xff]
  %v2592 = vld [vmem:[%s2588 + $0x18] sm:$0xff]
  %v2593 = vld [vmem:[%s2588 + $0x20] sm:$0xff]
  %v2594 = vld [vmem:[%s2588 + $0x28] sm:$0xff]
  %v2595 = vld [vmem:[%s2588 + $0x30] sm:$0xff]
  %v2596 = vld [vmem:[%s2588 + $0x38] sm:$0xff]
  %v2597 = vld [vmem:[%s2588 + $0x40] sm:$0xff]
  %v2598 = vld [vmem:[%s2588 + $0x48] sm:$0xff]
  %v2599 = vld [vmem:[%s2588 + $0x50] sm:$0xff]
  %v2600 = vld [vmem:[%s2588 + $0x58] sm:$0xff]
  %v2601 = vld [vmem:[%s2588 + $0x60] sm:$0xff]
  %v2602 = vld [vmem:[%s2588 + $0x68] sm:$0xff]
  %v2603 = vld [vmem:[%s2588 + $0x70] sm:$0xff]
  %v2604 = vld [vmem:[%s2588 + $0x78] sm:$0xff]
  %v2605 = vld [vmem:[%s2588 + $0x80] sm:$0xff]
  %v2606 = vld [vmem:[%s2588 + $0x88] sm:$0xff]
  %v2607 = vld [vmem:[%s2588 + $0x90] sm:$0xff]
  %v2608 = vld [vmem:[%s2588 + $0x98] sm:$0xff]
  %v2609 = vld [vmem:[%s2588 + $0xa0] sm:$0xff]
  %v2610 = vld [vmem:[%s2588 + $0xa8] sm:$0xff]
  %v2611 = vld [vmem:[%s2588 + $0xb0] sm:$0xff]
  %v2612 = vld [vmem:[%s2588 + $0xb8] sm:$0xff]
  %v2613 = vld [vmem:[%s2588 + $0xc0] sm:$0xff]
  %v2614 = vld [vmem:[%s2588 + $0xc8] sm:$0xff]
  %v2615 = vld [vmem:[%s2588 + $0xd0] sm:$0xff]
  %v2616 = vld [vmem:[%s2588 + $0xd8] sm:$0xff]
  %v2617 = vld [vmem:[%s2588 + $0xe0] sm:$0xff]
  %v2618 = vld [vmem:[%s2588 + $0xe8] sm:$0xff]
  %v2619 = vld [vmem:[%s2588 + $0xf0] sm:$0xff]
  %v2620 = vld [vmem:[%s2588 + $0xf8] sm:$0xff]
  %v2653 = vunpack.c.l.b16 %v2589
  %v2654 = vunpack.c.h.b16 %v2589
  %v2655 = vunpack.c.l.b16 %v2590
  %v2656 = vunpack.c.h.b16 %v2590
  %v2657 = vunpack.c.l.b16 %v2591
  %v2658 = vunpack.c.h.b16 %v2591
  %v2659 = vunpack.c.l.b16 %v2592
  %v2660 = vunpack.c.h.b16 %v2592
  %v2661 = vunpack.c.l.b16 %v2593
  %v2662 = vunpack.c.h.b16 %v2593
  %v2663 = vunpack.c.l.b16 %v2594
  %v2664 = vunpack.c.h.b16 %v2594
  %v2665 = vunpack.c.l.b16 %v2595
  %v2666 = vunpack.c.h.b16 %v2595
  %v2667 = vunpack.c.l.b16 %v2596
  %v2668 = vunpack.c.h.b16 %v2596
  %v2669 = vunpack.c.l.b16 %v2597
  %v2670 = vunpack.c.h.b16 %v2597
  %v2671 = vunpack.c.l.b16 %v2598
  %v2672 = vunpack.c.h.b16 %v2598
  %v2673 = vunpack.c.l.b16 %v2599
  %v2674 = vunpack.c.h.b16 %v2599
  %v2675 = vunpack.c.l.b16 %v2600
  %v2676 = vunpack.c.h.b16 %v2600
  %v2677 = vunpack.c.l.b16 %v2601
  %v2678 = vunpack.c.h.b16 %v2601
  %v2679 = vunpack.c.l.b16 %v2602
  %v2680 = vunpack.c.h.b16 %v2602
  %v2681 = vunpack.c.l.b16 %v2603
  %v2682 = vunpack.c.h.b16 %v2603
  %v2683 = vunpack.c.l.b16 %v2604
  %v2684 = vunpack.c.h.b16 %v2604
  %v2685 = vunpack.c.l.b16 %v2605
  %v2686 = vunpack.c.h.b16 %v2605
  %v2687 = vunpack.c.l.b16 %v2606
  %v2688 = vunpack.c.h.b16 %v2606
  %v2689 = vunpack.c.l.b16 %v2607
  %v2690 = vunpack.c.h.b16 %v2607
  %v2691 = vunpack.c.l.b16 %v2608
  %v2692 = vunpack.c.h.b16 %v2608
  %v2693 = vunpack.c.l.b16 %v2609
  %v2694 = vunpack.c.h.b16 %v2609
  %v2695 = vunpack.c.l.b16 %v2610
  %v2696 = vunpack.c.h.b16 %v2610
  %v2697 = vunpack.c.l.b16 %v2611
  %v2698 = vunpack.c.h.b16 %v2611
  %v2699 = vunpack.c.l.b16 %v2612
  %v2700 = vunpack.c.h.b16 %v2612
  %v2701 = vunpack.c.l.b16 %v2613
  %v2702 = vunpack.c.h.b16 %v2613
  %v2703 = vunpack.c.l.b16 %v2614
  %v2704 = vunpack.c.h.b16 %v2614
  %v2705 = vunpack.c.l.b16 %v2615
  %v2706 = vunpack.c.h.b16 %v2615
  %v2707 = vunpack.c.l.b16 %v2616
  %v2708 = vunpack.c.h.b16 %v2616
  %v2709 = vunpack.c.l.b16 %v2617
  %v2710 = vunpack.c.h.b16 %v2617
  %v2711 = vunpack.c.l.b16 %v2618
  %v2712 = vunpack.c.h.b16 %v2618
  %v2713 = vunpack.c.l.b16 %v2619
  %v2714 = vunpack.c.h.b16 %v2619
  %v2715 = vunpack.c.l.b16 %v2620
  %v2716 = vunpack.c.h.b16 %v2620
  %v2717 = vpack.c.b16 %v2655, %v2653
  %v2718 = vpack.c.b16 %v2656, %v2654
  %v2719 = vpack.c.b16 %v2659, %v2657
  %v2720 = vpack.c.b16 %v2660, %v2658
  %v2721 = vpack.c.b16 %v2663, %v2661
  %v2722 = vpack.c.b16 %v2664, %v2662
  %v2723 = vpack.c.b16 %v2667, %v2665
  %v2724 = vpack.c.b16 %v2668, %v2666
  %v2725 = vpack.c.b16 %v2671, %v2669
  %v2726 = vpack.c.b16 %v2672, %v2670
  %v2727 = vpack.c.b16 %v2675, %v2673
  %v2728 = vpack.c.b16 %v2676, %v2674
  %v2729 = vpack.c.b16 %v2679, %v2677
  %v2730 = vpack.c.b16 %v2680, %v2678
  %v2731 = vpack.c.b16 %v2683, %v2681
  %v2732 = vpack.c.b16 %v2684, %v2682
  %v2733 = vpack.c.b16 %v2687, %v2685
  %v2734 = vpack.c.b16 %v2688, %v2686
  %v2735 = vpack.c.b16 %v2691, %v2689
  %v2736 = vpack.c.b16 %v2692, %v2690
  %v2737 = vpack.c.b16 %v2695, %v2693
  %v2738 = vpack.c.b16 %v2696, %v2694
  %v2739 = vpack.c.b16 %v2699, %v2697
  %v2740 = vpack.c.b16 %v2700, %v2698
  %v2741 = vpack.c.b16 %v2703, %v2701
  %v2742 = vpack.c.b16 %v2704, %v2702
  %v2743 = vpack.c.b16 %v2707, %v2705
  %v2744 = vpack.c.b16 %v2708, %v2706
  %v2745 = vpack.c.b16 %v2711, %v2709
  %v2746 = vpack.c.b16 %v2712, %v2710
  %v2747 = vpack.c.b16 %v2715, %v2713
  %v2748 = vpack.c.b16 %v2716, %v2714
  %2781 = vmatprep.subr.bf16.mxu0 0
  %2782 = vmatpush1.bf16.msra.mxu0 %v306
  %2783 = vmatprep.subr.bf16.mxu0 0
  %2784 = vmatpush1.bf16.msra.mxu0 %v307
  %2785 = vmatprep.subr.bf16.mxu0 0
  %2786 = vmatpush1.bf16.msra.mxu0 %v308
  %2787 = vmatprep.subr.bf16.mxu0 0
  %2788 = vmatpush1.bf16.msra.mxu0 %v309
  %2789 = vmatprep.subr.bf16.mxu0 0
  %2790 = vmatpush1.bf16.msra.mxu0 %v310
  %2791 = vmatprep.subr.bf16.mxu0 0
  %2792 = vmatpush1.bf16.msra.mxu0 %v311
  %2793 = vmatprep.subr.bf16.mxu0 0
  %2794 = vmatpush1.bf16.msra.mxu0 %v312
  %2795 = vmatprep.subr.bf16.mxu0 0
  %2796 = vmatpush1.bf16.msra.mxu0 %v313
  %2797 = vmatprep.subr.bf16.mxu0 0
  %2798 = vmatpush1.bf16.msra.mxu0 %v314
  %2799 = vmatprep.subr.bf16.mxu0 0
  %2800 = vmatpush1.bf16.msra.mxu0 %v315
  %2801 = vmatprep.subr.bf16.mxu0 0
  %2802 = vmatpush1.bf16.msra.mxu0 %v316
  %2803 = vmatprep.subr.bf16.mxu0 0
  %2804 = vmatpush1.bf16.msra.mxu0 %v317
  %2805 = vmatprep.subr.bf16.mxu0 0
  %2806 = vmatpush1.bf16.msra.mxu0 %v318
  %2807 = vmatprep.subr.bf16.mxu0 0
  %2808 = vmatpush1.bf16.msra.mxu0 %v319
  %2809 = vmatprep.subr.bf16.mxu0 0
  %2810 = vmatpush1.bf16.msra.mxu0 %v320
  %2811 = vmatprep.subr.bf16.mxu0 0
  %2812 = vmatpush1.bf16.msra.mxu0 %v321
  %2813 = vmatprep.mubr.bf16.mxu0 %v2718
  %2814 = vmatmul.mubr.bf16.gmra.mrb[0].mxu0 %v2717
  %v2815 = vpop.f32.mrb[0].mxu0
  %v2816 = vadd.f32 0.0, %v2815
  %v2817 = vpop.f32.mrb[0].mxu0
  %v2818 = vpop.f32.mrb[0].mxu0
  %v2819 = vadd.f32 0.0, %v2818
  %v2820 = vpop.f32.mrb[0].mxu0
  %2821 = vmatprep.mubr.bf16.mxu0 %v2720
  %2822 = vmatmul.mubr.bf16.gmra.mrb[0].mxu0 %v2719
  %v2823 = vpop.f32.mrb[0].mxu0
  %v2824 = vadd.f32 0.0, %v2823
  %v2825 = vpop.f32.mrb[0].mxu0
  %v2826 = vpop.f32.mrb[0].mxu0
  %v2827 = vadd.f32 0.0, %v2826
  %v2828 = vpop.f32.mrb[0].mxu0
  %2829 = vmatprep.mubr.bf16.mxu0 %v2722
  %2830 = vmatmul.mubr.bf16.gmra.mrb[0].mxu0 %v2721
  %v2831 = vpop.f32.mrb[0].mxu0
  %v2832 = vadd.f32 0.0, %v2831
  %v2833 = vpop.f32.mrb[0].mxu0
  %v2834 = vpop.f32.mrb[0].mxu0
  %v2835 = vadd.f32 0.0, %v2834
  %v2836 = vpop.f32.mrb[0].mxu0
  %2837 = vmatprep.mubr.bf16.mxu0 %v2724
  %2838 = vmatmul.mubr.bf16.gmra.mrb[0].mxu0 %v2723
  %v2839 = vpop.f32.mrb[0].mxu0
  %v2840 = vadd.f32 0.0, %v2839
  %v2841 = vpop.f32.mrb[0].mxu0
  %v2842 = vpop.f32.mrb[0].mxu0
  %v2843 = vadd.f32 0.0, %v2842
  %v2844 = vpop.f32.mrb[0].mxu0
  %2845 = vmatprep.mubr.bf16.mxu0 %v2726
  %2846 = vmatmul.mubr.bf16.gmra.mrb[0].mxu0 %v2725
  %v2847 = vpop.f32.mrb[0].mxu0
  %v2848 = vadd.f32 0.0, %v2847
  %v2849 = vpop.f32.mrb[0].mxu0
  %v2850 = vpop.f32.mrb[0].mxu0
  %v2851 = vadd.f32 0.0, %v2850
  %v2852 = vpop.f32.mrb[0].mxu0
  %2853 = vmatprep.mubr.bf16.mxu0 %v2728
  %2854 = vmatmul.mubr.bf16.gmra.mrb[0].mxu0 %v2727
  %v2855 = vpop.f32.mrb[0].mxu0
  %v2856 = vadd.f32 0.0, %v2855
  %v2857 = vpop.f32.mrb[0].mxu0
  %v2858 = vpop.f32.mrb[0].mxu0
  %v2859 = vadd.f32 0.0, %v2858
  %v2860 = vpop.f32.mrb[0].mxu0
  %2861 = vmatprep.mubr.bf16.mxu0 %v2730
  %2862 = vmatmul.mubr.bf16.gmra.mrb[0].mxu0 %v2729
  %v2863 = vpop.f32.mrb[0].mxu0
  %v2864 = vadd.f32 0.0, %v2863
  %v2865 = vpop.f32.mrb[0].mxu0
  %v2866 = vpop.f32.mrb[0].mxu0
  %v2867 = vadd.f32 0.0, %v2866
  %v2868 = vpop.f32.mrb[0].mxu0
  %2869 = vmatprep.mubr.bf16.mxu0 %v2732
  %2870 = vmatmul.mubr.bf16.gmra.mrb[0].mxu0 %v2731
  %v2871 = vpop.f32.mrb[0].mxu0
  %v2872 = vadd.f32 0.0, %v2871
  %v2873 = vpop.f32.mrb[0].mxu0
  %v2874 = vpop.f32.mrb[0].mxu0
  %v2875 = vadd.f32 0.0, %v2874
  %v2876 = vpop.f32.mrb[0].mxu0
  %2877 = vmatprep.mubr.bf16.mxu0 %v2734
  %2878 = vmatmul.mubr.bf16.gmra.mrb[0].mxu0 %v2733
  %v2879 = vpop.f32.mrb[0].mxu0
  %v2880 = vadd.f32 0.0, %v2879
  %v2881 = vpop.f32.mrb[0].mxu0
  %v2882 = vpop.f32.mrb[0].mxu0
  %v2883 = vadd.f32 0.0, %v2882
  %v2884 = vpop.f32.mrb[0].mxu0
  %2885 = vmatprep.mubr.bf16.mxu0 %v2736
  %2886 = vmatmul.mubr.bf16.gmra.mrb[0].mxu0 %v2735
  %v2887 = vpop.f32.mrb[0].mxu0
  %v2888 = vadd.f32 0.0, %v2887
  %v2889 = vpop.f32.mrb[0].mxu0
  %v2890 = vpop.f32.mrb[0].mxu0
  %v2891 = vadd.f32 0.0, %v2890
  %v2892 = vpop.f32.mrb[0].mxu0
  %2893 = vmatprep.mubr.bf16.mxu0 %v2738
  %2894 = vmatmul.mubr.bf16.gmra.mrb[0].mxu0 %v2737
  %v2895 = vpop.f32.mrb[0].mxu0
  %v2896 = vadd.f32 0.0, %v2895
  %v2897 = vpop.f32.mrb[0].mxu0
  %v2898 = vpop.f32.mrb[0].mxu0
  %v2899 = vadd.f32 0.0, %v2898
  %v2900 = vpop.f32.mrb[0].mxu0
  %2901 = vmatprep.mubr.bf16.mxu0 %v2740
  %2902 = vmatmul.mubr.bf16.gmra.mrb[0].mxu0 %v2739
  %v2903 = vpop.f32.mrb[0].mxu0
  %v2904 = vadd.f32 0.0, %v2903
  %v2905 = vpop.f32.mrb[0].mxu0
  %v2906 = vpop.f32.mrb[0].mxu0
  %v2907 = vadd.f32 0.0, %v2906
  %v2908 = vpop.f32.mrb[0].mxu0
  %2909 = vmatprep.mubr.bf16.mxu0 %v2742
  %2910 = vmatmul.mubr.bf16.gmra.mrb[0].mxu0 %v2741
  %v2911 = vpop.f32.mrb[0].mxu0
  %v2912 = vadd.f32 0.0, %v2911
  %v2913 = vpop.f32.mrb[0].mxu0
  %v2914 = vpop.f32.mrb[0].mxu0
  %v2915 = vadd.f32 0.0, %v2914
  %v2916 = vpop.f32.mrb[0].mxu0
  %2917 = vmatprep.mubr.bf16.mxu0 %v2744
  %2918 = vmatmul.mubr.bf16.gmra.mrb[0].mxu0 %v2743
  %v2919 = vpop.f32.mrb[0].mxu0
  %v2920 = vadd.f32 0.0, %v2919
  %v2921 = vpop.f32.mrb[0].mxu0
  %v2922 = vpop.f32.mrb[0].mxu0
  %v2923 = vadd.f32 0.0, %v2922
  %v2924 = vpop.f32.mrb[0].mxu0
  %2925 = vmatprep.mubr.bf16.mxu0 %v2746
  %2926 = vmatmul.mubr.bf16.gmra.mrb[0].mxu0 %v2745
  %v2927 = vpop.f32.mrb[0].mxu0
  %v2928 = vadd.f32 0.0, %v2927
  %v2929 = vpop.f32.mrb[0].mxu0
  %v2930 = vpop.f32.mrb[0].mxu0
  %v2931 = vadd.f32 0.0, %v2930
  %v2932 = vpop.f32.mrb[0].mxu0
  %2933 = vmatprep.mubr.bf16.mxu0 %v2748
  %2934 = vmatmul.mubr.bf16.gmra.mrb[0].mxu0 %v2747
  %v2935 = vpop.f32.mrb[0].mxu0
  %v2936 = vadd.f32 0.0, %v2935
  %v2937 = vpop.f32.mrb[0].mxu0
  %v2938 = vpop.f32.mrb[0].mxu0
  %v2939 = vadd.f32 0.0, %v2938
  %v2940 = vpop.f32.mrb[0].mxu0
  %2941 = vdwg.mxu0
  %s2942 = scalar_lea.vmem %s1, 1024
  %v2943 = vld [vmem:[%s2942] sm:$0xff]
  %v2944 = vld [vmem:[%s2942 + $0x8] sm:$0xff]
  %v2945 = vld [vmem:[%s2942 + $0x10] sm:$0xff]
  %v2946 = vld [vmem:[%s2942 + $0x18] sm:$0xff]
  %v2947 = vld [vmem:[%s2942 + $0x20] sm:$0xff]
  %v2948 = vld [vmem:[%s2942 + $0x28] sm:$0xff]
  %v2949 = vld [vmem:[%s2942 + $0x30] sm:$0xff]
  %v2950 = vld [vmem:[%s2942 + $0x38] sm:$0xff]
  %v2951 = vld [vmem:[%s2942 + $0x40] sm:$0xff]
  %v2952 = vld [vmem:[%s2942 + $0x48] sm:$0xff]
  %v2953 = vld [vmem:[%s2942 + $0x50] sm:$0xff]
  %v2954 = vld [vmem:[%s2942 + $0x58] sm:$0xff]
  %v2955 = vld [vmem:[%s2942 + $0x60] sm:$0xff]
  %v2956 = vld [vmem:[%s2942 + $0x68] sm:$0xff]
  %v2957 = vld [vmem:[%s2942 + $0x70] sm:$0xff]
  %v2958 = vld [vmem:[%s2942 + $0x78] sm:$0xff]
  %v2959 = vld [vmem:[%s2942 + $0x80] sm:$0xff]
  %v2960 = vld [vmem:[%s2942 + $0x88] sm:$0xff]
  %v2961 = vld [vmem:[%s2942 + $0x90] sm:$0xff]
  %v2962 = vld [vmem:[%s2942 + $0x98] sm:$0xff]
  %v2963 = vld [vmem:[%s2942 + $0xa0] sm:$0xff]
  %v2964 = vld [vmem:[%s2942 + $0xa8] sm:$0xff]
  %v2965 = vld [vmem:[%s2942 + $0xb0] sm:$0xff]
  %v2966 = vld [vmem:[%s2942 + $0xb8] sm:$0xff]
  %v2967 = vld [vmem:[%s2942 + $0xc0] sm:$0xff]
  %v2968 = vld [vmem:[%s2942 + $0xc8] sm:$0xff]
  %v2969 = vld [vmem:[%s2942 + $0xd0] sm:$0xff]
  %v2970 = vld [vmem:[%s2942 + $0xd8] sm:$0xff]
  %v2971 = vld [vmem:[%s2942 + $0xe0] sm:$0xff]
  %v2972 = vld [vmem:[%s2942 + $0xe8] sm:$0xff]
  %v2973 = vld [vmem:[%s2942 + $0xf0] sm:$0xff]
  %v2974 = vld [vmem:[%s2942 + $0xf8] sm:$0xff]
  %2976 = vset.pattern.permute.xlu0 0
  %2977 = vperm.xlu0 %2976, %v2943
  %v2978 = vpop.permute.xlu0 %2977
  %2981 = vset.pattern.permute.xlu0 0
  %2982 = vperm.xlu0 %2981, %v2944
  %v2983 = vpop.permute.xlu0 %2982
  %2986 = vset.pattern.permute.xlu0 0
  %2987 = vperm.xlu0 %2986, %v2945
  %v2988 = vpop.permute.xlu0 %2987
  %2991 = vset.pattern.permute.xlu0 0
  %2992 = vperm.xlu0 %2991, %v2946
  %v2993 = vpop.permute.xlu0 %2992
  %2996 = vset.pattern.permute.xlu0 0
  %2997 = vperm.xlu0 %2996, %v2947
  %v2998 = vpop.permute.xlu0 %2997
  %3001 = vset.pattern.permute.xlu0 0
  %3002 = vperm.xlu0 %3001, %v2948
  %v3003 = vpop.permute.xlu0 %3002
  %3006 = vset.pattern.permute.xlu0 0
  %3007 = vperm.xlu0 %3006, %v2949
  %v3008 = vpop.permute.xlu0 %3007
  %3011 = vset.pattern.permute.xlu0 0
  %3012 = vperm.xlu0 %3011, %v2950
  %v3013 = vpop.permute.xlu0 %3012
  %3016 = vset.pattern.permute.xlu0 0
  %3017 = vperm.xlu0 %3016, %v2951
  %v3018 = vpop.permute.xlu0 %3017
  %3021 = vset.pattern.permute.xlu0 0
  %3022 = vperm.xlu0 %3021, %v2952
  %v3023 = vpop.permute.xlu0 %3022
  %3026 = vset.pattern.permute.xlu0 0
  %3027 = vperm.xlu0 %3026, %v2953
  %v3028 = vpop.permute.xlu0 %3027
  %3031 = vset.pattern.permute.xlu0 0
  %3032 = vperm.xlu0 %3031, %v2954
  %v3033 = vpop.permute.xlu0 %3032
  %3036 = vset.pattern.permute.xlu0 0
  %3037 = vperm.xlu0 %3036, %v2955
  %v3038 = vpop.permute.xlu0 %3037
  %3041 = vset.pattern.permute.xlu0 0
  %3042 = vperm.xlu0 %3041, %v2956
  %v3043 = vpop.permute.xlu0 %3042
  %3046 = vset.pattern.permute.xlu0 0
  %3047 = vperm.xlu0 %3046, %v2957
  %v3048 = vpop.permute.xlu0 %3047
  %3051 = vset.pattern.permute.xlu0 0
  %3052 = vperm.xlu0 %3051, %v2958
  %v3053 = vpop.permute.xlu0 %3052
  %3056 = vset.pattern.permute.xlu0 0
  %3057 = vperm.xlu0 %3056, %v2959
  %v3058 = vpop.permute.xlu0 %3057
  %3061 = vset.pattern.permute.xlu0 0
  %3062 = vperm.xlu0 %3061, %v2960
  %v3063 = vpop.permute.xlu0 %3062
  %3066 = vset.pattern.permute.xlu0 0
  %3067 = vperm.xlu0 %3066, %v2961
  %v3068 = vpop.permute.xlu0 %3067
  %3071 = vset.pattern.permute.xlu0 0
  %3072 = vperm.xlu0 %3071, %v2962
  %v3073 = vpop.permute.xlu0 %3072
  %3076 = vset.pattern.permute.xlu0 0
  %3077 = vperm.xlu0 %3076, %v2963
  %v3078 = vpop.permute.xlu0 %3077
  %3081 = vset.pattern.permute.xlu0 0
  %3082 = vperm.xlu0 %3081, %v2964
  %v3083 = vpop.permute.xlu0 %3082
  %3086 = vset.pattern.permute.xlu0 0
  %3087 = vperm.xlu0 %3086, %v2965
  %v3088 = vpop.permute.xlu0 %3087
  %3091 = vset.pattern.permute.xlu0 0
  %3092 = vperm.xlu0 %3091, %v2966
  %v3093 = vpop.permute.xlu0 %3092
  %3096 = vset.pattern.permute.xlu0 0
  %3097 = vperm.xlu0 %3096, %v2967
  %v3098 = vpop.permute.xlu0 %3097
  %3101 = vset.pattern.permute.xlu0 0
  %3102 = vperm.xlu0 %3101, %v2968
  %v3103 = vpop.permute.xlu0 %3102
  %3106 = vset.pattern.permute.xlu0 0
  %3107 = vperm.xlu0 %3106, %v2969
  %v3108 = vpop.permute.xlu0 %3107
  %3111 = vset.pattern.permute.xlu0 0
  %3112 = vperm.xlu0 %3111, %v2970
  %v3113 = vpop.permute.xlu0 %3112
  %3116 = vset.pattern.permute.xlu0 0
  %3117 = vperm.xlu0 %3116, %v2971
  %v3118 = vpop.permute.xlu0 %3117
  %3121 = vset.pattern.permute.xlu0 0
  %3122 = vperm.xlu0 %3121, %v2972
  %v3123 = vpop.permute.xlu0 %3122
  %3126 = vset.pattern.permute.xlu0 0
  %3127 = vperm.xlu0 %3126, %v2973
  %v3128 = vpop.permute.xlu0 %3127
  %3131 = vset.pattern.permute.xlu0 0
  %3132 = vperm.xlu0 %3131, %v2974
  %v3133 = vpop.permute.xlu0 %3132
  %v3135 = vmul.f32 %v2816, %v2978
  %v3136 = vmul.f32 %v2819, %v2983
  %v3137 = vmul.f32 %v2824, %v2988
  %v3138 = vmul.f32 %v2827, %v2993
  %v3139 = vmul.f32 %v2832, %v2998
  %v3140 = vmul.f32 %v2835, %v3003
  %v3141 = vmul.f32 %v2840, %v3008
  %v3142 = vmul.f32 %v2843, %v3013
  %v3143 = vmul.f32 %v2848, %v3018
  %v3144 = vmul.f32 %v2851, %v3023
  %v3145 = vmul.f32 %v2856, %v3028
  %v3146 = vmul.f32 %v2859, %v3033
  %v3147 = vmul.f32 %v2864, %v3038
  %v3148 = vmul.f32 %v2867, %v3043
  %v3149 = vmul.f32 %v2872, %v3048
  %v3150 = vmul.f32 %v2875, %v3053
  %v3151 = vmul.f32 %v2880, %v3058
  %v3152 = vmul.f32 %v2883, %v3063
  %v3153 = vmul.f32 %v2888, %v3068
  %v3154 = vmul.f32 %v2891, %v3073
  %v3155 = vmul.f32 %v2896, %v3078
  %v3156 = vmul.f32 %v2899, %v3083
  %v3157 = vmul.f32 %v2904, %v3088
  %v3158 = vmul.f32 %v2907, %v3093
  %v3159 = vmul.f32 %v2912, %v3098
  %v3160 = vmul.f32 %v2915, %v3103
  %v3161 = vmul.f32 %v2920, %v3108
  %v3162 = vmul.f32 %v2923, %v3113
  %v3163 = vmul.f32 %v2928, %v3118
  %v3164 = vmul.f32 %v2931, %v3123
  %v3165 = vmul.f32 %v2936, %v3128
  %v3166 = vmul.f32 %v2939, %v3133
  %v3167 = vpack.c.bf16 %v3136, %v3135
  %v3168 = vpack.c.bf16 %v3138, %v3137
  %v3169 = vpack.c.bf16 %v3140, %v3139
  %v3170 = vpack.c.bf16 %v3142, %v3141
  %v3171 = vpack.c.bf16 %v3144, %v3143
  %v3172 = vpack.c.bf16 %v3146, %v3145
  %v3173 = vpack.c.bf16 %v3148, %v3147
  %v3174 = vpack.c.bf16 %v3150, %v3149
  %v3175 = vpack.c.bf16 %v3152, %v3151
  %v3176 = vpack.c.bf16 %v3154, %v3153
  %v3177 = vpack.c.bf16 %v3156, %v3155
  %v3178 = vpack.c.bf16 %v3158, %v3157
  %v3179 = vpack.c.bf16 %v3160, %v3159
  %v3180 = vpack.c.bf16 %v3162, %v3161
  %v3181 = vpack.c.bf16 %v3164, %v3163
  %v3182 = vpack.c.bf16 %v3166, %v3165
  %3183 = vst [vmem:[#allocation2 + $0x20] sm:$0xff] %v3167
  %3184 = vst [vmem:[#allocation2 + $0x48] sm:$0xff] %v3168
  %3185 = vst [vmem:[#allocation2 + $0x70] sm:$0xff] %v3169
  %3186 = vst [vmem:[#allocation2 + $0x98] sm:$0xff] %v3170
  %3187 = vst [vmem:[#allocation2 + $0xc0] sm:$0xff] %v3171
  %3188 = vst [vmem:[#allocation2 + $0xe8] sm:$0xff] %v3172
  %3189 = vst [vmem:[#allocation2 + $0x110] sm:$0xff] %v3173
  %3190 = vst [vmem:[#allocation2 + $0x138] sm:$0xff] %v3174
  %3191 = vst [vmem:[#allocation2 + $0x160] sm:$0xff] %v3175
  %3192 = vst [vmem:[#allocation2 + $0x188] sm:$0xff] %v3176
  %3193 = vst [vmem:[#allocation2 + $0x1b0] sm:$0xff] %v3177
  %3194 = vst [vmem:[#allocation2 + $0x1d8] sm:$0xff] %v3178
  %3195 = vst [vmem:[#allocation2 + $0x200] sm:$0xff] %v3179
  %3196 = vst [vmem:[#allocation2 + $0x228] sm:$0xff] %v3180
  %3197 = vst [vmem:[#allocation2 + $0x250] sm:$0xff] %v3181
  %3198 = vst [vmem:[#allocation2 + $0x278] sm:$0xff] %v3182
  %v3199 = vld [vmem:[#allocation2] sm:$0xff]
  %v3200 = vld [vmem:[#allocation2 + $0x8] sm:$0xff]
  %v3201 = vld [vmem:[#allocation2 + $0x10] sm:$0xff]
  %v3202 = vld [vmem:[#allocation2 + $0x18] sm:$0xff]
  %v3203 = vld [vmem:[#allocation2 + $0x20] sm:$0xff]
  %v3204 = vld [vmem:[#allocation2 + $0x28] sm:$0xff]
  %v3205 = vld [vmem:[#allocation2 + $0x30] sm:$0xff]
  %v3206 = vld [vmem:[#allocation2 + $0x38] sm:$0xff]
  %v3207 = vld [vmem:[#allocation2 + $0x40] sm:$0xff]
  %v3208 = vld [vmem:[#allocation2 + $0x48] sm:$0xff]
  %v3209 = vld [vmem:[#allocation2 + $0x50] sm:$0xff]
  %v3210 = vld [vmem:[#allocation2 + $0x58] sm:$0xff]
  %v3211 = vld [vmem:[#allocation2 + $0x60] sm:$0xff]
  %v3212 = vld [vmem:[#allocation2 + $0x68] sm:$0xff]
  %v3213 = vld [vmem:[#allocation2 + $0x70] sm:$0xff]
  %v3214 = vld [vmem:[#allocation2 + $0x78] sm:$0xff]
  %v3215 = vld [vmem:[#allocation2 + $0x80] sm:$0xff]
  %v3216 = vld [vmem:[#allocation2 + $0x88] sm:$0xff]
  %v3217 = vld [vmem:[#allocation2 + $0x90] sm:$0xff]
  %v3218 = vld [vmem:[#allocation2 + $0x98] sm:$0xff]
  %v3219 = vld [vmem:[#allocation2 + $0xa0] sm:$0xff]
  %v3220 = vld [vmem:[#allocation2 + $0xa8] sm:$0xff]
  %v3221 = vld [vmem:[#allocation2 + $0xb0] sm:$0xff]
  %v3222 = vld [vmem:[#allocation2 + $0xb8] sm:$0xff]
  %v3223 = vld [vmem:[#allocation2 + $0xc0] sm:$0xff]
  %v3224 = vld [vmem:[#allocation2 + $0xc8] sm:$0xff]
  %v3225 = vld [vmem:[#allocation2 + $0xd0] sm:$0xff]
  %v3226 = vld [vmem:[#allocation2 + $0xd8] sm:$0xff]
  %v3227 = vld [vmem:[#allocation2 + $0xe0] sm:$0xff]
  %v3228 = vld [vmem:[#allocation2 + $0xe8] sm:$0xff]
  %v3229 = vld [vmem:[#allocation2 + $0xf0] sm:$0xff]
  %v3230 = vld [vmem:[#allocation2 + $0xf8] sm:$0xff]
  %v3231 = vld [vmem:[#allocation2 + $0x100] sm:$0xff]
  %v3232 = vld [vmem:[#allocation2 + $0x108] sm:$0xff]
  %v3233 = vld [vmem:[#allocation2 + $0x110] sm:$0xff]
  %v3234 = vld [vmem:[#allocation2 + $0x118] sm:$0xff]
  %v3235 = vld [vmem:[#allocation2 + $0x120] sm:$0xff]
  %v3236 = vld [vmem:[#allocation2 + $0x128] sm:$0xff]
  %v3237 = vld [vmem:[#allocation2 + $0x130] sm:$0xff]
  %v3238 = vld [vmem:[#allocation2 + $0x138] sm:$0xff]
  %v3239 = vld [vmem:[#allocation2 + $0x140] sm:$0xff]
  %v3240 = vld [vmem:[#allocation2 + $0x148] sm:$0xff]
  %v3241 = vld [vmem:[#allocation2 + $0x150] sm:$0xff]
  %v3242 = vld [vmem:[#allocation2 + $0x158] sm:$0xff]
  %v3243 = vld [vmem:[#allocation2 + $0x160] sm:$0xff]
  %v3244 = vld [vmem:[#allocation2 + $0x168] sm:$0xff]
  %v3245 = vld [vmem:[#allocation2 + $0x170] sm:$0xff]
  %v3246 = vld [vmem:[#allocation2 + $0x178] sm:$0xff]
  %v3247 = vld [vmem:[#allocation2 + $0x180] sm:$0xff]
  %v3248 = vld [vmem:[#allocation2 + $0x188] sm:$0xff]
  %v3249 = vld [vmem:[#allocation2 + $0x190] sm:$0xff]
  %v3250 = vld [vmem:[#allocation2 + $0x198] sm:$0xff]
  %v3251 = vld [vmem:[#allocation2 + $0x1a0] sm:$0xff]
  %v3252 = vld [vmem:[#allocation2 + $0x1a8] sm:$0xff]
  %v3253 = vld [vmem:[#allocation2 + $0x1b0] sm:$0xff]
  %v3254 = vld [vmem:[#allocation2 + $0x1b8] sm:$0xff]
  %v3255 = vld [vmem:[#allocation2 + $0x1c0] sm:$0xff]
  %v3256 = vld [vmem:[#allocation2 + $0x1c8] sm:$0xff]
  %v3257 = vld [vmem:[#allocation2 + $0x1d0] sm:$0xff]
  %v3258 = vld [vmem:[#allocation2 + $0x1d8] sm:$0xff]
  %v3259 = vld [vmem:[#allocation2 + $0x1e0] sm:$0xff]
  %v3260 = vld [vmem:[#allocation2 + $0x1e8] sm:$0xff]
  %v3261 = vld [vmem:[#allocation2 + $0x1f0] sm:$0xff]
  %v3262 = vld [vmem:[#allocation2 + $0x1f8] sm:$0xff]
  %v3263 = vld [vmem:[#allocation2 + $0x200] sm:$0xff]
  %v3264 = vld [vmem:[#allocation2 + $0x208] sm:$0xff]
  %v3265 = vld [vmem:[#allocation2 + $0x210] sm:$0xff]
  %v3266 = vld [vmem:[#allocation2 + $0x218] sm:$0xff]
  %v3267 = vld [vmem:[#allocation2 + $0x220] sm:$0xff]
  %v3268 = vld [vmem:[#allocation2 + $0x228] sm:$0xff]
  %v3269 = vld [vmem:[#allocation2 + $0x230] sm:$0xff]
  %v3270 = vld [vmem:[#allocation2 + $0x238] sm:$0xff]
  %v3271 = vld [vmem:[#allocation2 + $0x240] sm:$0xff]
  %v3272 = vld [vmem:[#allocation2 + $0x248] sm:$0xff]
  %v3273 = vld [vmem:[#allocation2 + $0x250] sm:$0xff]
  %v3274 = vld [vmem:[#allocation2 + $0x258] sm:$0xff]
  %v3275 = vld [vmem:[#allocation2 + $0x260] sm:$0xff]
  %v3276 = vld [vmem:[#allocation2 + $0x268] sm:$0xff]
  %v3277 = vld [vmem:[#allocation2 + $0x270] sm:$0xff]
  %v3278 = vld [vmem:[#allocation2 + $0x278] sm:$0xff]
  %v3279 = vld [vmem:[%s3] sm:$0xf]
  %v3280 = vld [vmem:[%s3 + $0x4] sm:$0xf]
  %v3281 = vld [vmem:[%s3 + $0x8] sm:$0xf]
  %v3282 = vld [vmem:[%s3 + $0xc] sm:$0xf]
  %v3283 = vld [vmem:[%s3 + $0x10] sm:$0xf]
  %v3284 = vld [vmem:[%s3 + $0x14] sm:$0xf]
  %v3285 = vld [vmem:[%s3 + $0x18] sm:$0xf]
  %v3286 = vld [vmem:[%s3 + $0x1c] sm:$0xf]
  %v3287 = vld [vmem:[%s3 + $0x20] sm:$0xf]
  %v3288 = vld [vmem:[%s3 + $0x24] sm:$0xf]
  %v3289 = vld [vmem:[%s3 + $0x28] sm:$0xf]
  %v3290 = vld [vmem:[%s3 + $0x2c] sm:$0xf]
  %v3291 = vld [vmem:[%s3 + $0x30] sm:$0xf]
  %v3292 = vld [vmem:[%s3 + $0x34] sm:$0xf]
  %v3293 = vld [vmem:[%s3 + $0x38] sm:$0xf]
  %v3294 = vld [vmem:[%s3 + $0x3c] sm:$0xf]
  %v3295 = vld [vmem:[%s3 + $0x40] sm:$0xf]
  %v3296 = vld [vmem:[%s3 + $0x44] sm:$0xf]
  %v3297 = vld [vmem:[%s3 + $0x48] sm:$0xf]
  %v3298 = vld [vmem:[%s3 + $0x4c] sm:$0xf]
  %v3299 = vld [vmem:[%s3 + $0x50] sm:$0xf]
  %v3300 = vld [vmem:[%s3 + $0x54] sm:$0xf]
  %v3301 = vld [vmem:[%s3 + $0x58] sm:$0xf]
  %v3302 = vld [vmem:[%s3 + $0x5c] sm:$0xf]
  %v3303 = vld [vmem:[%s3 + $0x60] sm:$0xf]
  %v3304 = vld [vmem:[%s3 + $0x64] sm:$0xf]
  %v3305 = vld [vmem:[%s3 + $0x68] sm:$0xf]
  %v3306 = vld [vmem:[%s3 + $0x6c] sm:$0xf]
  %v3307 = vld [vmem:[%s3 + $0x70] sm:$0xf]
  %v3308 = vld [vmem:[%s3 + $0x74] sm:$0xf]
  %v3309 = vld [vmem:[%s3 + $0x78] sm:$0xf]
  %v3310 = vld [vmem:[%s3 + $0x7c] sm:$0xf]
  %v3311 = vld [vmem:[%s3 + $0x80] sm:$0xf]
  %v3312 = vld [vmem:[%s3 + $0x84] sm:$0xf]
  %v3313 = vld [vmem:[%s3 + $0x88] sm:$0xf]
  %v3314 = vld [vmem:[%s3 + $0x8c] sm:$0xf]
  %v3315 = vld [vmem:[%s3 + $0x90] sm:$0xf]
  %v3316 = vld [vmem:[%s3 + $0x94] sm:$0xf]
  %v3317 = vld [vmem:[%s3 + $0x98] sm:$0xf]
  %v3318 = vld [vmem:[%s3 + $0x9c] sm:$0xf]
  %v3319 = vld [vmem:[%s3 + $0xa0] sm:$0xf]
  %v3320 = vld [vmem:[%s3 + $0xa4] sm:$0xf]
  %v3321 = vld [vmem:[%s3 + $0xa8] sm:$0xf]
  %v3322 = vld [vmem:[%s3 + $0xac] sm:$0xf]
  %v3323 = vld [vmem:[%s3 + $0xb0] sm:$0xf]
  %v3324 = vld [vmem:[%s3 + $0xb4] sm:$0xf]
  %v3325 = vld [vmem:[%s3 + $0xb8] sm:$0xf]
  %v3326 = vld [vmem:[%s3 + $0xbc] sm:$0xf]
  %v3327 = vld [vmem:[%s3 + $0xc0] sm:$0xf]
  %v3328 = vld [vmem:[%s3 + $0xc4] sm:$0xf]
  %v3329 = vld [vmem:[%s3 + $0xc8] sm:$0xf]
  %v3330 = vld [vmem:[%s3 + $0xcc] sm:$0xf]
  %v3331 = vld [vmem:[%s3 + $0xd0] sm:$0xf]
  %v3332 = vld [vmem:[%s3 + $0xd4] sm:$0xf]
  %v3333 = vld [vmem:[%s3 + $0xd8] sm:$0xf]
  %v3334 = vld [vmem:[%s3 + $0xdc] sm:$0xf]
  %v3335 = vld [vmem:[%s3 + $0xe0] sm:$0xf]
  %v3336 = vld [vmem:[%s3 + $0xe4] sm:$0xf]
  %v3337 = vld [vmem:[%s3 + $0xe8] sm:$0xf]
  %v3338 = vld [vmem:[%s3 + $0xec] sm:$0xf]
  %v3339 = vld [vmem:[%s3 + $0xf0] sm:$0xf]
  %v3340 = vld [vmem:[%s3 + $0xf4] sm:$0xf]
  %v3341 = vld [vmem:[%s3 + $0xf8] sm:$0xf]
  %v3342 = vld [vmem:[%s3 + $0xfc] sm:$0xf]
  %v3343 = vld [vmem:[%s3 + $0x100] sm:$0xf]
  %v3344 = vld [vmem:[%s3 + $0x104] sm:$0xf]
  %v3345 = vld [vmem:[%s3 + $0x108] sm:$0xf]
  %v3346 = vld [vmem:[%s3 + $0x10c] sm:$0xf]
  %v3347 = vld [vmem:[%s3 + $0x110] sm:$0xf]
  %v3348 = vld [vmem:[%s3 + $0x114] sm:$0xf]
  %v3349 = vld [vmem:[%s3 + $0x118] sm:$0xf]
  %v3350 = vld [vmem:[%s3 + $0x11c] sm:$0xf]
  %v3351 = vld [vmem:[%s3 + $0x120] sm:$0xf]
  %v3352 = vld [vmem:[%s3 + $0x124] sm:$0xf]
  %v3353 = vld [vmem:[%s3 + $0x128] sm:$0xf]
  %v3354 = vld [vmem:[%s3 + $0x12c] sm:$0xf]
  %v3355 = vld [vmem:[%s3 + $0x130] sm:$0xf]
  %v3356 = vld [vmem:[%s3 + $0x134] sm:$0xf]
  %v3357 = vld [vmem:[%s3 + $0x138] sm:$0xf]
  %v3358 = vld [vmem:[%s3 + $0x13c] sm:$0xf]
  %v3439 = vunpack.c.l.b16 %v3279
  %v3440 = vunpack.c.l.b16 %v3280
  %v3441 = vunpack.c.l.b16 %v3281
  %v3442 = vunpack.c.l.b16 %v3282
  %v3443 = vunpack.c.l.b16 %v3283
  %v3444 = vunpack.c.l.b16 %v3284
  %v3445 = vunpack.c.l.b16 %v3285
  %v3446 = vunpack.c.l.b16 %v3286
  %v3447 = vunpack.c.l.b16 %v3287
  %v3448 = vunpack.c.l.b16 %v3288
  %v3449 = vunpack.c.l.b16 %v3289
  %v3450 = vunpack.c.l.b16 %v3290
  %v3451 = vunpack.c.l.b16 %v3291
  %v3452 = vunpack.c.l.b16 %v3292
  %v3453 = vunpack.c.l.b16 %v3293
  %v3454 = vunpack.c.l.b16 %v3294
  %v3455 = vunpack.c.l.b16 %v3295
  %v3456 = vunpack.c.l.b16 %v3296
  %v3457 = vunpack.c.l.b16 %v3297
  %v3458 = vunpack.c.l.b16 %v3298
  %v3459 = vunpack.c.l.b16 %v3299
  %v3460 = vunpack.c.l.b16 %v3300
  %v3461 = vunpack.c.l.b16 %v3301
  %v3462 = vunpack.c.l.b16 %v3302
  %v3463 = vunpack.c.l.b16 %v3303
  %v3464 = vunpack.c.l.b16 %v3304
  %v3465 = vunpack.c.l.b16 %v3305
  %v3466 = vunpack.c.l.b16 %v3306
  %v3467 = vunpack.c.l.b16 %v3307
  %v3468 = vunpack.c.l.b16 %v3308
  %v3469 = vunpack.c.l.b16 %v3309
  %v3470 = vunpack.c.l.b16 %v3310
  %v3471 = vunpack.c.l.b16 %v3311
  %v3472 = vunpack.c.l.b16 %v3312
  %v3473 = vunpack.c.l.b16 %v3313
  %v3474 = vunpack.c.l.b16 %v3314
  %v3475 = vunpack.c.l.b16 %v3315
  %v3476 = vunpack.c.l.b16 %v3316
  %v3477 = vunpack.c.l.b16 %v3317
  %v3478 = vunpack.c.l.b16 %v3318
  %v3479 = vunpack.c.l.b16 %v3319
  %v3480 = vunpack.c.l.b16 %v3320
  %v3481 = vunpack.c.l.b16 %v3321
  %v3482 = vunpack.c.l.b16 %v3322
  %v3483 = vunpack.c.l.b16 %v3323
  %v3484 = vunpack.c.l.b16 %v3324
  %v3485 = vunpack.c.l.b16 %v3325
  %v3486 = vunpack.c.l.b16 %v3326
  %v3487 = vunpack.c.l.b16 %v3327
  %v3488 = vunpack.c.l.b16 %v3328
  %v3489 = vunpack.c.l.b16 %v3329
  %v3490 = vunpack.c.l.b16 %v3330
  %v3491 = vunpack.c.l.b16 %v3331
  %v3492 = vunpack.c.l.b16 %v3332
  %v3493 = vunpack.c.l.b16 %v3333
  %v3494 = vunpack.c.l.b16 %v3334
  %v3495 = vunpack.c.l.b16 %v3335
  %v3496 = vunpack.c.l.b16 %v3336
  %v3497 = vunpack.c.l.b16 %v3337
  %v3498 = vunpack.c.l.b16 %v3338
  %v3499 = vunpack.c.l.b16 %v3339
  %v3500 = vunpack.c.l.b16 %v3340
  %v3501 = vunpack.c.l.b16 %v3341
  %v3502 = vunpack.c.l.b16 %v3342
  %v3503 = vunpack.c.l.b16 %v3343
  %v3504 = vunpack.c.l.b16 %v3344
  %v3505 = vunpack.c.l.b16 %v3345
  %v3506 = vunpack.c.l.b16 %v3346
  %v3507 = vunpack.c.l.b16 %v3347
  %v3508 = vunpack.c.l.b16 %v3348
  %v3509 = vunpack.c.l.b16 %v3349
  %v3510 = vunpack.c.l.b16 %v3350
  %v3511 = vunpack.c.l.b16 %v3351
  %v3512 = vunpack.c.l.b16 %v3352
  %v3513 = vunpack.c.l.b16 %v3353
  %v3514 = vunpack.c.l.b16 %v3354
  %v3515 = vunpack.c.l.b16 %v3355
  %v3516 = vunpack.c.l.b16 %v3356
  %v3517 = vunpack.c.l.b16 %v3357
  %v3518 = vunpack.c.l.b16 %v3358
  %v3519 = vpack.c.b16 %v3440, %v3439
  %v3520 = vpack.c.b16 %v3442, %v3441
  %v3521 = vpack.c.b16 %v3444, %v3443
  %v3522 = vpack.c.b16 %v3446, %v3445
  %v3523 = vpack.c.b16 %v3448, %v3447
  %v3524 = vpack.c.b16 %v3450, %v3449
  %v3525 = vpack.c.b16 %v3452, %v3451
  %v3526 = vpack.c.b16 %v3454, %v3453
  %v3527 = vpack.c.b16 %v3456, %v3455
  %v3528 = vpack.c.b16 %v3458, %v3457
  %v3529 = vpack.c.b16 %v3460, %v3459
  %v3530 = vpack.c.b16 %v3462, %v3461
  %v3531 = vpack.c.b16 %v3464, %v3463
  %v3532 = vpack.c.b16 %v3466, %v3465
  %v3533 = vpack.c.b16 %v3468, %v3467
  %v3534 = vpack.c.b16 %v3470, %v3469
  %v3535 = vpack.c.b16 %v3472, %v3471
  %v3536 = vpack.c.b16 %v3474, %v3473
  %v3537 = vpack.c.b16 %v3476, %v3475
  %v3538 = vpack.c.b16 %v3478, %v3477
  %v3539 = vpack.c.b16 %v3480, %v3479
  %v3540 = vpack.c.b16 %v3482, %v3481
  %v3541 = vpack.c.b16 %v3484, %v3483
  %v3542 = vpack.c.b16 %v3486, %v3485
  %v3543 = vpack.c.b16 %v3488, %v3487
  %v3544 = vpack.c.b16 %v3490, %v3489
  %v3545 = vpack.c.b16 %v3492, %v3491
  %v3546 = vpack.c.b16 %v3494, %v3493
  %v3547 = vpack.c.b16 %v3496, %v3495
  %v3548 = vpack.c.b16 %v3498, %v3497
  %v3549 = vpack.c.b16 %v3500, %v3499
  %v3550 = vpack.c.b16 %v3502, %v3501
  %v3551 = vpack.c.b16 %v3504, %v3503
  %v3552 = vpack.c.b16 %v3506, %v3505
  %v3553 = vpack.c.b16 %v3508, %v3507
  %v3554 = vpack.c.b16 %v3510, %v3509
  %v3555 = vpack.c.b16 %v3512, %v3511
  %v3556 = vpack.c.b16 %v3514, %v3513
  %v3557 = vpack.c.b16 %v3516, %v3515
  %v3558 = vpack.c.b16 %v3518, %v3517
  %3599 = vmatprep.subr.bf16.mxu0 0
  %3600 = vmatpush1.bf16.msra.mxu0 %v3519
  %3601 = vmatprep.subr.bf16.mxu0 0
  %3602 = vmatpush1.bf16.msra.mxu0 %v3520
  %3603 = vmatprep.subr.bf16.mxu0 0
  %3604 = vmatpush1.bf16.msra.mxu0 %v3521
  %3605 = vmatprep.subr.bf16.mxu0 0
  %3606 = vmatpush1.bf16.msra.mxu0 %v3522
  %3607 = vmatprep.subr.bf16.mxu0 0
  %3608 = vmatpush1.bf16.msra.mxu0 %v3523
  %3609 = vmatprep.subr.bf16.mxu0 0
  %3610 = vmatpush1.bf16.msra.mxu0 %v3524
  %3611 = vmatprep.subr.bf16.mxu0 0
  %3612 = vmatpush1.bf16.msra.mxu0 %v3525
  %3613 = vmatprep.subr.bf16.mxu0 0
  %3614 = vmatpush1.bf16.msra.mxu0 %v3526
  %3615 = vmatprep.subr.bf16.mxu0 0
  %3616 = vmatpush1.bf16.msra.mxu0 %v3527
  %3617 = vmatprep.subr.bf16.mxu0 0
  %3618 = vmatpush1.bf16.msra.mxu0 %v3528
  %3619 = vmatprep.subr.bf16.mxu0 0
  %3620 = vmatpush1.bf16.msra.mxu0 %v3529
  %3621 = vmatprep.subr.bf16.mxu0 0
  %3622 = vmatpush1.bf16.msra.mxu0 %v3530
  %3623 = vmatprep.subr.bf16.mxu0 0
  %3624 = vmatpush1.bf16.msra.mxu0 %v3531
  %3625 = vmatprep.subr.bf16.mxu0 0
  %3626 = vmatpush1.bf16.msra.mxu0 %v3532
  %3627 = vmatprep.subr.bf16.mxu0 0
  %3628 = vmatpush1.bf16.msra.mxu0 %v3533
  %3629 = vmatprep.subr.bf16.mxu0 0
  %3630 = vmatpush1.bf16.msra.mxu0 %v3534
  %3631 = vmatprep.mubr.bf16.mxu0 %v3200
  %3632 = vmatmul.mubr.bf16.gmra.mrb[0].mxu0 %v3199
  %v3633 = vpop.f32.mrb[0].mxu0
  %v3634 = vadd.f32 0.0, %v3633
  %v3635 = vpop.f32.mrb[0].mxu0
  %v3636 = vpop.f32.mrb[0].mxu0
  %v3637 = vadd.f32 0.0, %v3636
  %v3638 = vpop.f32.mrb[0].mxu0
  %3639 = vmatprep.mubr.bf16.mxu0 %v3205
  %3640 = vmatmul.mubr.bf16.gmra.mrb[0].mxu0 %v3204
  %v3641 = vpop.f32.mrb[0].mxu0
  %v3642 = vadd.f32 0.0, %v3641
  %v3643 = vpop.f32.mrb[0].mxu0
  %v3644 = vpop.f32.mrb[0].mxu0
  %v3645 = vadd.f32 0.0, %v3644
  %v3646 = vpop.f32.mrb[0].mxu0
  %3647 = vmatprep.mubr.bf16.mxu0 %v3210
  %3648 = vmatmul.mubr.bf16.gmra.mrb[0].mxu0 %v3209
  %v3649 = vpop.f32.mrb[0].mxu0
  %v3650 = vadd.f32 0.0, %v3649
  %v3651 = vpop.f32.mrb[0].mxu0
  %v3652 = vpop.f32.mrb[0].mxu0
  %v3653 = vadd.f32 0.0, %v3652
  %v3654 = vpop.f32.mrb[0].mxu0
  %3655 = vmatprep.mubr.bf16.mxu0 %v3215
  %3656 = vmatmul.mubr.bf16.gmra.mrb[0].mxu0 %v3214
  %v3657 = vpop.f32.mrb[0].mxu0
  %v3658 = vadd.f32 0.0, %v3657
  %v3659 = vpop.f32.mrb[0].mxu0
  %v3660 = vpop.f32.mrb[0].mxu0
  %v3661 = vadd.f32 0.0, %v3660
  %v3662 = vpop.f32.mrb[0].mxu0
  %3663 = vmatprep.mubr.bf16.mxu0 %v3220
  %3664 = vmatmul.mubr.bf16.gmra.mrb[0].mxu0 %v3219
  %v3665 = vpop.f32.mrb[0].mxu0
  %v3666 = vadd.f32 0.0, %v3665
  %v3667 = vpop.f32.mrb[0].mxu0
  %v3668 = vpop.f32.mrb[0].mxu0
  %v3669 = vadd.f32 0.0, %v3668
  %v3670 = vpop.f32.mrb[0].mxu0
  %3671 = vmatprep.mubr.bf16.mxu0 %v3225
  %3672 = vmatmul.mubr.bf16.gmra.mrb[0].mxu0 %v3224
  %v3673 = vpop.f32.mrb[0].mxu0
  %v3674 = vadd.f32 0.0, %v3673
  %v3675 = vpop.f32.mrb[0].mxu0
  %v3676 = vpop.f32.mrb[0].mxu0
  %v3677 = vadd.f32 0.0, %v3676
  %v3678 = vpop.f32.mrb[0].mxu0
  %3679 = vmatprep.mubr.bf16.mxu0 %v3230
  %3680 = vmatmul.mubr.bf16.gmra.mrb[0].mxu0 %v3229
  %v3681 = vpop.f32.mrb[0].mxu0
  %v3682 = vadd.f32 0.0, %v3681
  %v3683 = vpop.f32.mrb[0].mxu0
  %v3684 = vpop.f32.mrb[0].mxu0
  %v3685 = vadd.f32 0.0, %v3684
  %v3686 = vpop.f32.mrb[0].mxu0
  %3687 = vmatprep.mubr.bf16.mxu0 %v3235
  %3688 = vmatmul.mubr.bf16.gmra.mrb[0].mxu0 %v3234
  %v3689 = vpop.f32.mrb[0].mxu0
  %v3690 = vadd.f32 0.0, %v3689
  %v3691 = vpop.f32.mrb[0].mxu0
  %v3692 = vpop.f32.mrb[0].mxu0
  %v3693 = vadd.f32 0.0, %v3692
  %v3694 = vpop.f32.mrb[0].mxu0
  %3695 = vmatprep.mubr.bf16.mxu0 %v3240
  %3696 = vmatmul.mubr.bf16.gmra.mrb[0].mxu0 %v3239
  %v3697 = vpop.f32.mrb[0].mxu0
  %v3698 = vadd.f32 0.0, %v3697
  %v3699 = vpop.f32.mrb[0].mxu0
  %v3700 = vpop.f32.mrb[0].mxu0
  %v3701 = vadd.f32 0.0, %v3700
  %v3702 = vpop.f32.mrb[0].mxu0
  %3703 = vmatprep.mubr.bf16.mxu0 %v3245
  %3704 = vmatmul.mubr.bf16.gmra.mrb[0].mxu0 %v3244
  %v3705 = vpop.f32.mrb[0].mxu0
  %v3706 = vadd.f32 0.0, %v3705
  %v3707 = vpop.f32.mrb[0].mxu0
  %v3708 = vpop.f32.mrb[0].mxu0
  %v3709 = vadd.f32 0.0, %v3708
  %v3710 = vpop.f32.mrb[0].mxu0
  %3711 = vmatprep.mubr.bf16.mxu0 %v3250
  %3712 = vmatmul.mubr.bf16.gmra.mrb[0].mxu0 %v3249
  %v3713 = vpop.f32.mrb[0].mxu0
  %v3714 = vadd.f32 0.0, %v3713
  %v3715 = vpop.f32.mrb[0].mxu0
  %v3716 = vpop.f32.mrb[0].mxu0
  %v3717 = vadd.f32 0.0, %v3716
  %v3718 = vpop.f32.mrb[0].mxu0
  %3719 = vmatprep.mubr.bf16.mxu0 %v3255
  %3720 = vmatmul.mubr.bf16.gmra.mrb[0].mxu0 %v3254
  %v3721 = vpop.f32.mrb[0].mxu0
  %v3722 = vadd.f32 0.0, %v3721
  %v3723 = vpop.f32.mrb[0].mxu0
  %v3724 = vpop.f32.mrb[0].mxu0
  %v3725 = vadd.f32 0.0, %v3724
  %v3726 = vpop.f32.mrb[0].mxu0
  %3727 = vmatprep.mubr.bf16.mxu0 %v3260
  %3728 = vmatmul.mubr.bf16.gmra.mrb[0].mxu0 %v3259
  %v3729 = vpop.f32.mrb[0].mxu0
  %v3730 = vadd.f32 0.0, %v3729
  %v3731 = vpop.f32.mrb[0].mxu0
  %v3732 = vpop.f32.mrb[0].mxu0
  %v3733 = vadd.f32 0.0, %v3732
  %v3734 = vpop.f32.mrb[0].mxu0
  %3735 = vmatprep.mubr.bf16.mxu0 %v3265
  %3736 = vmatmul.mubr.bf16.gmra.mrb[0].mxu0 %v3264
  %v3737 = vpop.f32.mrb[0].mxu0
  %v3738 = vadd.f32 0.0, %v3737
  %v3739 = vpop.f32.mrb[0].mxu0
  %v3740 = vpop.f32.mrb[0].mxu0
  %v3741 = vadd.f32 0.0, %v3740
  %v3742 = vpop.f32.mrb[0].mxu0
  %3743 = vmatprep.mubr.bf16.mxu0 %v3270
  %3744 = vmatmul.mubr.bf16.gmra.mrb[0].mxu0 %v3269
  %v3745 = vpop.f32.mrb[0].mxu0
  %v3746 = vadd.f32 0.0, %v3745
  %v3747 = vpop.f32.mrb[0].mxu0
  %v3748 = vpop.f32.mrb[0].mxu0
  %v3749 = vadd.f32 0.0, %v3748
  %v3750 = vpop.f32.mrb[0].mxu0
  %3751 = vmatprep.mubr.bf16.mxu0 %v3275
  %3752 = vmatmul.mubr.bf16.gmra.mrb[0].mxu0 %v3274
  %v3753 = vpop.f32.mrb[0].mxu0
  %v3754 = vadd.f32 0.0, %v3753
  %v3755 = vpop.f32.mrb[0].mxu0
  %v3756 = vpop.f32.mrb[0].mxu0
  %v3757 = vadd.f32 0.0, %v3756
  %v3758 = vpop.f32.mrb[0].mxu0
  %3759 = vdwg.mxu0
  %3760 = vmatprep.subr.bf16.mxu0 0
  %3761 = vmatpush1.bf16.msra.mxu0 %v3535
  %3762 = vmatprep.subr.bf16.mxu0 0
  %3763 = vmatpush1.bf16.msra.mxu0 %v3536
  %3764 = vmatprep.subr.bf16.mxu0 0
  %3765 = vmatpush1.bf16.msra.mxu0 %v3537
  %3766 = vmatprep.subr.bf16.mxu0 0
  %3767 = vmatpush1.bf16.msra.mxu0 %v3538
  %3768 = vmatprep.subr.bf16.mxu0 0
  %3769 = vmatpush1.bf16.msra.mxu0 %v3539
  %3770 = vmatprep.subr.bf16.mxu0 0
  %3771 = vmatpush1.bf16.msra.mxu0 %v3540
  %3772 = vmatprep.subr.bf16.mxu0 0
  %3773 = vmatpush1.bf16.msra.mxu0 %v3541
  %3774 = vmatprep.subr.bf16.mxu0 0
  %3775 = vmatpush1.bf16.msra.mxu0 %v3542
  %3776 = vmatprep.subr.bf16.mxu0 0
  %3777 = vmatpush1.bf16.msra.mxu0 %v3543
  %3778 = vmatprep.subr.bf16.mxu0 0
  %3779 = vmatpush1.bf16.msra.mxu0 %v3544
  %3780 = vmatprep.subr.bf16.mxu0 0
  %3781 = vmatpush1.bf16.msra.mxu0 %v3545
  %3782 = vmatprep.subr.bf16.mxu0 0
  %3783 = vmatpush1.bf16.msra.mxu0 %v3546
  %3784 = vmatprep.subr.bf16.mxu0 0
  %3785 = vmatpush1.bf16.msra.mxu0 %v3547
  %3786 = vmatprep.subr.bf16.mxu0 0
  %3787 = vmatpush1.bf16.msra.mxu0 %v3548
  %3788 = vmatprep.subr.bf16.mxu0 0
  %3789 = vmatpush1.bf16.msra.mxu0 %v3549
  %3790 = vmatprep.subr.bf16.mxu0 0
  %3791 = vmatpush1.bf16.msra.mxu0 %v3550
  %3792 = vmatprep.mubr.bf16.mxu0 %v3202
  %3793 = vmatmul.mubr.bf16.gmra.mrb[0].mxu0 %v3201
  %v3794 = vpop.f32.mrb[0].mxu0
  %v3795 = vadd.f32 %v3634, %v3794
  %v3796 = vpop.f32.mrb[0].mxu0
  %v3797 = vpop.f32.mrb[0].mxu0
  %v3798 = vadd.f32 %v3637, %v3797
  %v3799 = vpop.f32.mrb[0].mxu0
  %3800 = vmatprep.mubr.bf16.mxu0 %v3207
  %3801 = vmatmul.mubr.bf16.gmra.mrb[0].mxu0 %v3206
  %v3802 = vpop.f32.mrb[0].mxu0
  %v3803 = vadd.f32 %v3642, %v3802
  %v3804 = vpop.f32.mrb[0].mxu0
  %v3805 = vpop.f32.mrb[0].mxu0
  %v3806 = vadd.f32 %v3645, %v3805
  %v3807 = vpop.f32.mrb[0].mxu0
  %3808 = vmatprep.mubr.bf16.mxu0 %v3212
  %3809 = vmatmul.mubr.bf16.gmra.mrb[0].mxu0 %v3211
  %v3810 = vpop.f32.mrb[0].mxu0
  %v3811 = vadd.f32 %v3650, %v3810
  %v3812 = vpop.f32.mrb[0].mxu0
  %v3813 = vpop.f32.mrb[0].mxu0
  %v3814 = vadd.f32 %v3653, %v3813
  %v3815 = vpop.f32.mrb[0].mxu0
  %3816 = vmatprep.mubr.bf16.mxu0 %v3217
  %3817 = vmatmul.mubr.bf16.gmra.mrb[0].mxu0 %v3216
  %v3818 = vpop.f32.mrb[0].mxu0
  %v3819 = vadd.f32 %v3658, %v3818
  %v3820 = vpop.f32.mrb[0].mxu0
  %v3821 = vpop.f32.mrb[0].mxu0
  %v3822 = vadd.f32 %v3661, %v3821
  %v3823 = vpop.f32.mrb[0].mxu0
  %3824 = vmatprep.mubr.bf16.mxu0 %v3222
  %3825 = vmatmul.mubr.bf16.gmra.mrb[0].mxu0 %v3221
  %v3826 = vpop.f32.mrb[0].mxu0
  %v3827 = vadd.f32 %v3666, %v3826
  %v3828 = vpop.f32.mrb[0].mxu0
  %v3829 = vpop.f32.mrb[0].mxu0
  %v3830 = vadd.f32 %v3669, %v3829
  %v3831 = vpop.f32.mrb[0].mxu0
  %3832 = vmatprep.mubr.bf16.mxu0 %v3227
  %3833 = vmatmul.mubr.bf16.gmra.mrb[0].mxu0 %v3226
  %v3834 = vpop.f32.mrb[0].mxu0
  %v3835 = vadd.f32 %v3674, %v3834
  %v3836 = vpop.f32.mrb[0].mxu0
  %v3837 = vpop.f32.mrb[0].mxu0
  %v3838 = vadd.f32 %v3677, %v3837
  %v3839 = vpop.f32.mrb[0].mxu0
  %3840 = vmatprep.mubr.bf16.mxu0 %v3232
  %3841 = vmatmul.mubr.bf16.gmra.mrb[0].mxu0 %v3231
  %v3842 = vpop.f32.mrb[0].mxu0
  %v3843 = vadd.f32 %v3682, %v3842
  %v3844 = vpop.f32.mrb[0].mxu0
  %v3845 = vpop.f32.mrb[0].mxu0
  %v3846 = vadd.f32 %v3685, %v3845
  %v3847 = vpop.f32.mrb[0].mxu0
  %3848 = vmatprep.mubr.bf16.mxu0 %v3237
  %3849 = vmatmul.mubr.bf16.gmra.mrb[0].mxu0 %v3236
  %v3850 = vpop.f32.mrb[0].mxu0
  %v3851 = vadd.f32 %v3690, %v3850
  %v3852 = vpop.f32.mrb[0].mxu0
  %v3853 = vpop.f32.mrb[0].mxu0
  %v3854 = vadd.f32 %v3693, %v3853
  %v3855 = vpop.f32.mrb[0].mxu0
  %3856 = vmatprep.mubr.bf16.mxu0 %v3242
  %3857 = vmatmul.mubr.bf16.gmra.mrb[0].mxu0 %v3241
  %v3858 = vpop.f32.mrb[0].mxu0
  %v3859 = vadd.f32 %v3698, %v3858
  %v3860 = vpop.f32.mrb[0].mxu0
  %v3861 = vpop.f32.mrb[0].mxu0
  %v3862 = vadd.f32 %v3701, %v3861
  %v3863 = vpop.f32.mrb[0].mxu0
  %3864 = vmatprep.mubr.bf16.mxu0 %v3247
  %3865 = vmatmul.mubr.bf16.gmra.mrb[0].mxu0 %v3246
  %v3866 = vpop.f32.mrb[0].mxu0
  %v3867 = vadd.f32 %v3706, %v3866
  %v3868 = vpop.f32.mrb[0].mxu0
  %v3869 = vpop.f32.mrb[0].mxu0
  %v3870 = vadd.f32 %v3709, %v3869
  %v3871 = vpop.f32.mrb[0].mxu0
  %3872 = vmatprep.mubr.bf16.mxu0 %v3252
  %3873 = vmatmul.mubr.bf16.gmra.mrb[0].mxu0 %v3251
  %v3874 = vpop.f32.mrb[0].mxu0
  %v3875 = vadd.f32 %v3714, %v3874
  %v3876 = vpop.f32.mrb[0].mxu0
  %v3877 = vpop.f32.mrb[0].mxu0
  %v3878 = vadd.f32 %v3717, %v3877
  %v3879 = vpop.f32.mrb[0].mxu0
  %3880 = vmatprep.mubr.bf16.mxu0 %v3257
  %3881 = vmatmul.mubr.bf16.gmra.mrb[0].mxu0 %v3256
  %v3882 = vpop.f32.mrb[0].mxu0
  %v3883 = vadd.f32 %v3722, %v3882
  %v3884 = vpop.f32.mrb[0].mxu0
  %v3885 = vpop.f32.mrb[0].mxu0
  %v3886 = vadd.f32 %v3725, %v3885
  %v3887 = vpop.f32.mrb[0].mxu0
  %3888 = vmatprep.mubr.bf16.mxu0 %v3262
  %3889 = vmatmul.mubr.bf16.gmra.mrb[0].mxu0 %v3261
  %v3890 = vpop.f32.mrb[0].mxu0
  %v3891 = vadd.f32 %v3730, %v3890
  %v3892 = vpop.f32.mrb[0].mxu0
  %v3893 = vpop.f32.mrb[0].mxu0
  %v3894 = vadd.f32 %v3733, %v3893
  %v3895 = vpop.f32.mrb[0].mxu0
  %3896 = vmatprep.mubr.bf16.mxu0 %v3267
  %3897 = vmatmul.mubr.bf16.gmra.mrb[0].mxu0 %v3266
  %v3898 = vpop.f32.mrb[0].mxu0
  %v3899 = vadd.f32 %v3738, %v3898
  %v3900 = vpop.f32.mrb[0].mxu0
  %v3901 = vpop.f32.mrb[0].mxu0
  %v3902 = vadd.f32 %v3741, %v3901
  %v3903 = vpop.f32.mrb[0].mxu0
  %3904 = vmatprep.mubr.bf16.mxu0 %v3272
  %3905 = vmatmul.mubr.bf16.gmra.mrb[0].mxu0 %v3271
  %v3906 = vpop.f32.mrb[0].mxu0
  %v3907 = vadd.f32 %v3746, %v3906
  %v3908 = vpop.f32.mrb[0].mxu0
  %v3909 = vpop.f32.mrb[0].mxu0
  %v3910 = vadd.f32 %v3749, %v3909
  %v3911 = vpop.f32.mrb[0].mxu0
  %3912 = vmatprep.mubr.bf16.mxu0 %v3277
  %3913 = vmatmul.mubr.bf16.gmra.mrb[0].mxu0 %v3276
  %v3914 = vpop.f32.mrb[0].mxu0
  %v3915 = vadd.f32 %v3754, %v3914
  %v3916 = vpop.f32.mrb[0].mxu0
  %v3917 = vpop.f32.mrb[0].mxu0
  %v3918 = vadd.f32 %v3757, %v3917
  %v3919 = vpop.f32.mrb[0].mxu0
  %3920 = vdwg.mxu0
  %3921 = vmatprep.subr.bf16.mxu0 0
  %3922 = vmatpush1.bf16.msra.mxu0 %v3551
  %3923 = vmatprep.subr.bf16.mxu0 0
  %3924 = vmatpush1.bf16.msra.mxu0 %v3552
  %3925 = vmatprep.subr.bf16.mxu0 0
  %3926 = vmatpush1.bf16.msra.mxu0 %v3553
  %3927 = vmatprep.subr.bf16.mxu0 0
  %3928 = vmatpush1.bf16.msra.mxu0 %v3554
  %3929 = vmatprep.subr.bf16.mxu0 0
  %3930 = vmatpush1.bf16.msra.mxu0 %v3555
  %3931 = vmatprep.subr.bf16.mxu0 0
  %3932 = vmatpush1.bf16.msra.mxu0 %v3556
  %3933 = vmatprep.subr.bf16.mxu0 0
  %3934 = vmatpush1.bf16.msra.mxu0 %v3557
  %3935 = vmatprep.subr.bf16.mxu0 0
  %3936 = vmatpush1.bf16.msra.mxu0 %v3558
  %3937 = vmatprep.subr.bf16.mxu0 0
  %3938 = vmatpush1.bf16.msra.mxu0 0
  %3939 = vmatprep.subr.bf16.mxu0 0
  %3940 = vmatpush1.bf16.msra.mxu0 0
  %3941 = vmatprep.subr.bf16.mxu0 0
  %3942 = vmatpush1.bf16.msra.mxu0 0
  %3943 = vmatprep.subr.bf16.mxu0 0
  %3944 = vmatpush1.bf16.msra.mxu0 0
  %3945 = vmatprep.subr.bf16.mxu0 0
  %3946 = vmatpush1.bf16.msra.mxu0 0
  %3947 = vmatprep.subr.bf16.mxu0 0
  %3948 = vmatpush1.bf16.msra.mxu0 0
  %3949 = vmatprep.subr.bf16.mxu0 0
  %3950 = vmatpush1.bf16.msra.mxu0 0
  %3951 = vmatprep.subr.bf16.mxu0 0
  %3952 = vmatpush1.bf16.msra.mxu0 0
  %3953 = vmatprep.mubr.bf16.mxu0 0
  %3954 = vmatmul.mubr.bf16.gmra.mrb[0].mxu0 %v3203
  %v3955 = vpop.f32.mrb[0].mxu0
  %v3956 = vadd.f32 %v3795, %v3955
  %v3957 = vpop.f32.mrb[0].mxu0
  %v3958 = vpop.f32.mrb[0].mxu0
  %v3959 = vadd.f32 %v3798, %v3958
  %v3960 = vpop.f32.mrb[0].mxu0
  %3961 = vmatprep.mubr.bf16.mxu0 0
  %3962 = vmatmul.mubr.bf16.gmra.mrb[0].mxu0 %v3208
  %v3963 = vpop.f32.mrb[0].mxu0
  %v3964 = vadd.f32 %v3803, %v3963
  %v3965 = vpop.f32.mrb[0].mxu0
  %v3966 = vpop.f32.mrb[0].mxu0
  %v3967 = vadd.f32 %v3806, %v3966
  %v3968 = vpop.f32.mrb[0].mxu0
  %3969 = vmatprep.mubr.bf16.mxu0 0
  %3970 = vmatmul.mubr.bf16.gmra.mrb[0].mxu0 %v3213
  %v3971 = vpop.f32.mrb[0].mxu0
  %v3972 = vadd.f32 %v3811, %v3971
  %v3973 = vpop.f32.mrb[0].mxu0
  %v3974 = vpop.f32.mrb[0].mxu0
  %v3975 = vadd.f32 %v3814, %v3974
  %v3976 = vpop.f32.mrb[0].mxu0
  %3977 = vmatprep.mubr.bf16.mxu0 0
  %3978 = vmatmul.mubr.bf16.gmra.mrb[0].mxu0 %v3218
  %v3979 = vpop.f32.mrb[0].mxu0
  %v3980 = vadd.f32 %v3819, %v3979
  %v3981 = vpop.f32.mrb[0].mxu0
  %v3982 = vpop.f32.mrb[0].mxu0
  %v3983 = vadd.f32 %v3822, %v3982
  %v3984 = vpop.f32.mrb[0].mxu0
  %3985 = vmatprep.mubr.bf16.mxu0 0
  %3986 = vmatmul.mubr.bf16.gmra.mrb[0].mxu0 %v3223
  %v3987 = vpop.f32.mrb[0].mxu0
  %v3988 = vadd.f32 %v3827, %v3987
  %v3989 = vpop.f32.mrb[0].mxu0
  %v3990 = vpop.f32.mrb[0].mxu0
  %v3991 = vadd.f32 %v3830, %v3990
  %v3992 = vpop.f32.mrb[0].mxu0
  %3993 = vmatprep.mubr.bf16.mxu0 0
  %3994 = vmatmul.mubr.bf16.gmra.mrb[0].mxu0 %v3228
  %v3995 = vpop.f32.mrb[0].mxu0
  %v3996 = vadd.f32 %v3835, %v3995
  %v3997 = vpop.f32.mrb[0].mxu0
  %v3998 = vpop.f32.mrb[0].mxu0
  %v3999 = vadd.f32 %v3838, %v3998
  %v4000 = vpop.f32.mrb[0].mxu0
  %4001 = vmatprep.mubr.bf16.mxu0 0
  %4002 = vmatmul.mubr.bf16.gmra.mrb[0].mxu0 %v3233
  %v4003 = vpop.f32.mrb[0].mxu0
  %v4004 = vadd.f32 %v3843, %v4003
  %v4005 = vpop.f32.mrb[0].mxu0
  %v4006 = vpop.f32.mrb[0].mxu0
  %v4007 = vadd.f32 %v3846, %v4006
  %v4008 = vpop.f32.mrb[0].mxu0
  %4009 = vmatprep.mubr.bf16.mxu0 0
  %4010 = vmatmul.mubr.bf16.gmra.mrb[0].mxu0 %v3238
  %v4011 = vpop.f32.mrb[0].mxu0
  %v4012 = vadd.f32 %v3851, %v4011
  %v4013 = vpop.f32.mrb[0].mxu0
  %v4014 = vpop.f32.mrb[0].mxu0
  %v4015 = vadd.f32 %v3854, %v4014
  %v4016 = vpop.f32.mrb[0].mxu0
  %4017 = vmatprep.mubr.bf16.mxu0 0
  %4018 = vmatmul.mubr.bf16.gmra.mrb[0].mxu0 %v3243
  %v4019 = vpop.f32.mrb[0].mxu0
  %v4020 = vadd.f32 %v3859, %v4019
  %v4021 = vpop.f32.mrb[0].mxu0
  %v4022 = vpop.f32.mrb[0].mxu0
  %v4023 = vadd.f32 %v3862, %v4022
  %v4024 = vpop.f32.mrb[0].mxu0
  %4025 = vmatprep.mubr.bf16.mxu0 0
  %4026 = vmatmul.mubr.bf16.gmra.mrb[0].mxu0 %v3248
  %v4027 = vpop.f32.mrb[0].mxu0
  %v4028 = vadd.f32 %v3867, %v4027
  %v4029 = vpop.f32.mrb[0].mxu0
  %v4030 = vpop.f32.mrb[0].mxu0
  %v4031 = vadd.f32 %v3870, %v4030
  %v4032 = vpop.f32.mrb[0].mxu0
  %4033 = vmatprep.mubr.bf16.mxu0 0
  %4034 = vmatmul.mubr.bf16.gmra.mrb[0].mxu0 %v3253
  %v4035 = vpop.f32.mrb[0].mxu0
  %v4036 = vadd.f32 %v3875, %v4035
  %v4037 = vpop.f32.mrb[0].mxu0
  %v4038 = vpop.f32.mrb[0].mxu0
  %v4039 = vadd.f32 %v3878, %v4038
  %v4040 = vpop.f32.mrb[0].mxu0
  %4041 = vmatprep.mubr.bf16.mxu0 0
  %4042 = vmatmul.mubr.bf16.gmra.mrb[0].mxu0 %v3258
  %v4043 = vpop.f32.mrb[0].mxu0
  %v4044 = vadd.f32 %v3883, %v4043
  %v4045 = vpop.f32.mrb[0].mxu0
  %v4046 = vpop.f32.mrb[0].mxu0
  %v4047 = vadd.f32 %v3886, %v4046
  %v4048 = vpop.f32.mrb[0].mxu0
  %4049 = vmatprep.mubr.bf16.mxu0 0
  %4050 = vmatmul.mubr.bf16.gmra.mrb[0].mxu0 %v3263
  %v4051 = vpop.f32.mrb[0].mxu0
  %v4052 = vadd.f32 %v3891, %v4051
  %v4053 = vpop.f32.mrb[0].mxu0
  %v4054 = vpop.f32.mrb[0].mxu0
  %v4055 = vadd.f32 %v3894, %v4054
  %v4056 = vpop.f32.mrb[0].mxu0
  %4057 = vmatprep.mubr.bf16.mxu0 0
  %4058 = vmatmul.mubr.bf16.gmra.mrb[0].mxu0 %v3268
  %v4059 = vpop.f32.mrb[0].mxu0
  %v4060 = vadd.f32 %v3899, %v4059
  %v4061 = vpop.f32.mrb[0].mxu0
  %v4062 = vpop.f32.mrb[0].mxu0
  %v4063 = vadd.f32 %v3902, %v4062
  %v4064 = vpop.f32.mrb[0].mxu0
  %4065 = vmatprep.mubr.bf16.mxu0 0
  %4066 = vmatmul.mubr.bf16.gmra.mrb[0].mxu0 %v3273
  %v4067 = vpop.f32.mrb[0].mxu0
  %v4068 = vadd.f32 %v3907, %v4067
  %v4069 = vpop.f32.mrb[0].mxu0
  %v4070 = vpop.f32.mrb[0].mxu0
  %v4071 = vadd.f32 %v3910, %v4070
  %v4072 = vpop.f32.mrb[0].mxu0
  %4073 = vmatprep.mubr.bf16.mxu0 0
  %4074 = vmatmul.mubr.bf16.gmra.mrb[0].mxu0 %v3278
  %v4075 = vpop.f32.mrb[0].mxu0
  %v4076 = vadd.f32 %v3915, %v4075
  %v4077 = vpop.f32.mrb[0].mxu0
  %v4078 = vpop.f32.mrb[0].mxu0
  %v4079 = vadd.f32 %v3918, %v4078
  %v4080 = vpop.f32.mrb[0].mxu0
  %4081 = vdwg.mxu0
  %v4082 = vpack.c.bf16 %v3959, %v3956
  %v4083 = vpack.c.bf16 %v3967, %v3964
  %v4084 = vpack.c.bf16 %v3975, %v3972
  %v4085 = vpack.c.bf16 %v3983, %v3980
  %v4086 = vpack.c.bf16 %v3991, %v3988
  %v4087 = vpack.c.bf16 %v3999, %v3996
  %v4088 = vpack.c.bf16 %v4007, %v4004
  %v4089 = vpack.c.bf16 %v4015, %v4012
  %v4090 = vpack.c.bf16 %v4023, %v4020
  %v4091 = vpack.c.bf16 %v4031, %v4028
  %v4092 = vpack.c.bf16 %v4039, %v4036
  %v4093 = vpack.c.bf16 %v4047, %v4044
  %v4094 = vpack.c.bf16 %v4055, %v4052
  %v4095 = vpack.c.bf16 %v4063, %v4060
  %v4096 = vpack.c.bf16 %v4071, %v4068
  %v4097 = vpack.c.bf16 %v4079, %v4076
  %v4114 = vunpack.c.l.b16 %v4082
  %v4115 = vunpack.c.h.b16 %v4082
  %v4116 = vunpack.c.l.b16 %v4083
  %v4117 = vunpack.c.h.b16 %v4083
  %v4118 = vunpack.c.l.b16 %v4084
  %v4119 = vunpack.c.h.b16 %v4084
  %v4120 = vunpack.c.l.b16 %v4085
  %v4121 = vunpack.c.h.b16 %v4085
  %v4122 = vunpack.c.l.b16 %v4086
  %v4123 = vunpack.c.h.b16 %v4086
  %v4124 = vunpack.c.l.b16 %v4087
  %v4125 = vunpack.c.h.b16 %v4087
  %v4126 = vunpack.c.l.b16 %v4088
  %v4127 = vunpack.c.h.b16 %v4088
  %v4128 = vunpack.c.l.b16 %v4089
  %v4129 = vunpack.c.h.b16 %v4089
  %v4130 = vunpack.c.l.b16 %v4090
  %v4131 = vunpack.c.h.b16 %v4090
  %v4132 = vunpack.c.l.b16 %v4091
  %v4133 = vunpack.c.h.b16 %v4091
  %v4134 = vunpack.c.l.b16 %v4092
  %v4135 = vunpack.c.h.b16 %v4092
  %v4136 = vunpack.c.l.b16 %v4093
  %v4137 = vunpack.c.h.b16 %v4093
  %v4138 = vunpack.c.l.b16 %v4094
  %v4139 = vunpack.c.h.b16 %v4094
  %v4140 = vunpack.c.l.b16 %v4095
  %v4141 = vunpack.c.h.b16 %v4095
  %v4142 = vunpack.c.l.b16 %v4096
  %v4143 = vunpack.c.h.b16 %v4096
  %v4144 = vunpack.c.l.b16 %v4097
  %v4145 = vunpack.c.h.b16 %v4097
  %v4146 = vpack.c.b16 %v4114, %v4114
  %v4147 = vpack.c.b16 %v4115, %v4115
  %v4148 = vpack.c.b16 %v4116, %v4116
  %v4149 = vpack.c.b16 %v4117, %v4117
  %v4150 = vpack.c.b16 %v4118, %v4118
  %v4151 = vpack.c.b16 %v4119, %v4119
  %v4152 = vpack.c.b16 %v4120, %v4120
  %v4153 = vpack.c.b16 %v4121, %v4121
  %v4154 = vpack.c.b16 %v4122, %v4122
  %v4155 = vpack.c.b16 %v4123, %v4123
  %v4156 = vpack.c.b16 %v4124, %v4124
  %v4157 = vpack.c.b16 %v4125, %v4125
  %v4158 = vpack.c.b16 %v4126, %v4126
  %v4159 = vpack.c.b16 %v4127, %v4127
  %v4160 = vpack.c.b16 %v4128, %v4128
  %v4161 = vpack.c.b16 %v4129, %v4129
  %v4162 = vpack.c.b16 %v4130, %v4130
  %v4163 = vpack.c.b16 %v4131, %v4131
  %v4164 = vpack.c.b16 %v4132, %v4132
  %v4165 = vpack.c.b16 %v4133, %v4133
  %v4166 = vpack.c.b16 %v4134, %v4134
  %v4167 = vpack.c.b16 %v4135, %v4135
  %v4168 = vpack.c.b16 %v4136, %v4136
  %v4169 = vpack.c.b16 %v4137, %v4137
  %v4170 = vpack.c.b16 %v4138, %v4138
  %v4171 = vpack.c.b16 %v4139, %v4139
  %v4172 = vpack.c.b16 %v4140, %v4140
  %v4173 = vpack.c.b16 %v4141, %v4141
  %v4174 = vpack.c.b16 %v4142, %v4142
  %v4175 = vpack.c.b16 %v4143, %v4143
  %v4176 = vpack.c.b16 %v4144, %v4144
  %v4177 = vpack.c.b16 %v4145, %v4145
  %4210 = vst [vmem:[%s4] sm:$0xf] %v4146
  %4211 = vst [vmem:[%s4 + $0x4] sm:$0xf] %v4147
  %4212 = vst [vmem:[%s4 + $0x8] sm:$0xf] %v4148
  %4213 = vst [vmem:[%s4 + $0xc] sm:$0xf] %v4149
  %4214 = vst [vmem:[%s4 + $0x10] sm:$0xf] %v4150
  %4215 = vst [vmem:[%s4 + $0x14] sm:$0xf] %v4151
  %4216 = vst [vmem:[%s4 + $0x18] sm:$0xf] %v4152
  %4217 = vst [vmem:[%s4 + $0x1c] sm:$0xf] %v4153
  %4218 = vst [vmem:[%s4 + $0x20] sm:$0xf] %v4154
  %4219 = vst [vmem:[%s4 + $0x24] sm:$0xf] %v4155
  %4220 = vst [vmem:[%s4 + $0x28] sm:$0xf] %v4156
  %4221 = vst [vmem:[%s4 + $0x2c] sm:$0xf] %v4157
  %4222 = vst [vmem:[%s4 + $0x30] sm:$0xf] %v4158
  %4223 = vst [vmem:[%s4 + $0x34] sm:$0xf] %v4159
  %4224 = vst [vmem:[%s4 + $0x38] sm:$0xf] %v4160
  %4225 = vst [vmem:[%s4 + $0x3c] sm:$0xf] %v4161
  %4226 = vst [vmem:[%s4 + $0x40] sm:$0xf] %v4162
  %4227 = vst [vmem:[%s4 + $0x44] sm:$0xf] %v4163
  %4228 = vst [vmem:[%s4 + $0x48] sm:$0xf] %v4164
  %4229 = vst [vmem:[%s4 + $0x4c] sm:$0xf] %v4165
  %4230 = vst [vmem:[%s4 + $0x50] sm:$0xf] %v4166
  %4231 = vst [vmem:[%s4 + $0x54] sm:$0xf] %v4167
  %4232 = vst [vmem:[%s4 + $0x58] sm:$0xf] %v4168
  %4233 = vst [vmem:[%s4 + $0x5c] sm:$0xf] %v4169
  %4234 = vst [vmem:[%s4 + $0x60] sm:$0xf] %v4170
  %4235 = vst [vmem:[%s4 + $0x64] sm:$0xf] %v4171
  %4236 = vst [vmem:[%s4 + $0x68] sm:$0xf] %v4172
  %4237 = vst [vmem:[%s4 + $0x6c] sm:$0xf] %v4173
  %4238 = vst [vmem:[%s4 + $0x70] sm:$0xf] %v4174
  %4239 = vst [vmem:[%s4 + $0x74] sm:$0xf] %v4175
  %4240 = vst [vmem:[%s4 + $0x78] sm:$0xf] %v4176
  %4241 = vst [vmem:[%s4 + $0x7c] sm:$0xf] %v4177
  // Predicated region
  $region18: #{graph_res_block_forward.9} parent=0 // pred_check
    _
  $region19: #{graph_res_block_forward.9} parent=0 // pred_check_branch
    %4243 = sbr.rel (0) target = $region21
  $region20: #{graph_res_block_forward.9} parent=0 // pred_region
    _
  $region21: #{graph_res_block_forward.9} parent=0 // pred_fallthru
    _
  // Predicated region
  $region22: #{graph_res_block_forward.9} parent=0 // pred_check
    _
  $region23: #{graph_res_block_forward.9} parent=0 // pred_check_branch
    %4245 = sbr.rel (0) target = $region25
  $region24: #{graph_res_block_forward.9} parent=0 // pred_region
    _
  $region25: #{graph_res_block_forward.9} parent=0 // pred_fallthru
    _

// kernel: graph_res_block_forward.12
$region0: #{graph_res_block_forward.12}
  #allocation0 [shape = 'u32[]', space=smem, size = 0x4, offset = 0x4, fixed_abs, tag = 'smem constant byte address 0x4 - core index']
  #allocation1 [shape = 'u32[144,128]{1,0:T(1,128)}', space=vmem, size = 0x12000, scoped, tag = 'internal scratch']
  #allocation2 [shape = 'bf16[256,640]{1,0:T(16,128)(2,1)}', space=vmem, size = 0x50000, scoped, tag = 'scratch operand']
  %s0 = inlined_call_operand.vmem [shape: bf16[5,256,256], index: 0, kind: input, shape index: {}]
  %s1 = inlined_call_operand.vmem [shape: f32[5,256,1], index: 1, kind: input, shape index: {}]
  %s2 = inlined_call_operand.vmem [shape: bf16[256,128], index: 2, kind: input, shape index: {}]
  %s3 = inlined_call_operand.vmem [shape: bf16[640,128], index: 3, kind: input, shape index: {}]
  %s4 = inlined_call_operand.vmem [shape: f32[256,128], index: 4, kind: output, shape index: {}]
  %s5 = sld [smem:[#allocation0]]
  $region26: #{graph_res_block_forward.12} parent=0
    _
  %s7 = ssub.s32 1, %s5
  %s8 = scalar_select 0, %s7, %s5
  // Predicated region
  $region2: #{graph_res_block_forward.12} parent=0 // pred_check
    _
  $region3: #{graph_res_block_forward.12} parent=0 // pred_check_branch
    %10 = sbr.rel (0) target = $region5
  $region4: #{graph_res_block_forward.12} parent=0 // pred_region
    _
  $region5: #{graph_res_block_forward.12} parent=0 // pred_fallthru
    _
  // Predicated region
  $region6: #{graph_res_block_forward.12} parent=0 // pred_check
    _
  $region7: #{graph_res_block_forward.12} parent=0 // pred_check_branch
    %12 = sbr.rel (0) target = $region9
  $region8: #{graph_res_block_forward.12} parent=0 // pred_region
    _
  $region9: #{graph_res_block_forward.12} parent=0 // pred_fallthru
    _
  // Predicated region
  $region10: #{graph_res_block_forward.12} parent=0 // pred_check
    _
  $region11: #{graph_res_block_forward.12} parent=0 // pred_check_branch
    %14 = sbr.rel (0) target = $region13
  $region12: #{graph_res_block_forward.12} parent=0 // pred_region
    _
  $region13: #{graph_res_block_forward.12} parent=0 // pred_fallthru
    _
  // Predicated region
  $region14: #{graph_res_block_forward.12} parent=0 // pred_check
    _
  $region15: #{graph_res_block_forward.12} parent=0 // pred_check_branch
    %16 = sbr.rel (0) target = $region17
  $region16: #{graph_res_block_forward.12} parent=0 // pred_region
    _
  $region17: #{graph_res_block_forward.12} parent=0 // pred_fallthru
    _
  %v18 = vld [vmem:[%s2] sm:$0xf]
  %v19 = vld [vmem:[%s2 + $0x4] sm:$0xf]
  %v20 = vld [vmem:[%s2 + $0x8] sm:$0xf]
  %v21 = vld [vmem:[%s2 + $0xc] sm:$0xf]
  %v22 = vld [vmem:[%s2 + $0x10] sm:$0xf]
  %v23 = vld [vmem:[%s2 + $0x14] sm:$0xf]
  %v24 = vld [vmem:[%s2 + $0x18] sm:$0xf]
  %v25 = vld [vmem:[%s2 + $0x1c] sm:$0xf]
  %v26 = vld [vmem:[%s2 + $0x20] sm:$0xf]
  %v27 = vld [vmem:[%s2 + $0x24] sm:$0xf]
  %v28 = vld [vmem:[%s2 + $0x28] sm:$0xf]
  %v29 = vld [vmem:[%s2 + $0x2c] sm:$0xf]
  %v30 = vld [vmem:[%s2 + $0x30] sm:$0xf]
  %v31 = vld [vmem:[%s2 + $0x34] sm:$0xf]
  %v32 = vld [vmem:[%s2 + $0x38] sm:$0xf]
  %v33 = vld [vmem:[%s2 + $0x3c] sm:$0xf]
  %v34 = vld [vmem:[%s2 + $0x40] sm:$0xf]
  %v35 = vld [vmem:[%s2 + $0x44] sm:$0xf]
  %v36 = vld [vmem:[%s2 + $0x48] sm:$0xf]
  %v37 = vld [vmem:[%s2 + $0x4c] sm:$0xf]
  %v38 = vld [vmem:[%s2 + $0x50] sm:$0xf]
  %v39 = vld [vmem:[%s2 + $0x54] sm:$0xf]
  %v40 = vld [vmem:[%s2 + $0x58] sm:$0xf]
  %v41 = vld [vmem:[%s2 + $0x5c] sm:$0xf]
  %v42 = vld [vmem:[%s2 + $0x60] sm:$0xf]
  %v43 = vld [vmem:[%s2 + $0x64] sm:$0xf]
  %v44 = vld [vmem:[%s2 + $0x68] sm:$0xf]
  %v45 = vld [vmem:[%s2 + $0x6c] sm:$0xf]
  %v46 = vld [vmem:[%s2 + $0x70] sm:$0xf]
  %v47 = vld [vmem:[%s2 + $0x74] sm:$0xf]
  %v48 = vld [vmem:[%s2 + $0x78] sm:$0xf]
  %v49 = vld [vmem:[%s2 + $0x7c] sm:$0xf]
  %v50 = vld [vmem:[%s0] sm:$0xff]
  %v51 = vld [vmem:[%s0 + $0x8] sm:$0xff]
  %v52 = vld [vmem:[%s0 + $0x10] sm:$0xff]
  %v53 = vld [vmem:[%s0 + $0x18] sm:$0xff]
  %v54 = vld [vmem:[%s0 + $0x20] sm:$0xff]
  %v55 = vld [vmem:[%s0 + $0x28] sm:$0xff]
  %v56 = vld [vmem:[%s0 + $0x30] sm:$0xff]
  %v57 = vld [vmem:[%s0 + $0x38] sm:$0xff]
  %v58 = vld [vmem:[%s0 + $0x40] sm:$0xff]
  %v59 = vld [vmem:[%s0 + $0x48] sm:$0xff]
  %v60 = vld [vmem:[%s0 + $0x50] sm:$0xff]
  %v61 = vld [vmem:[%s0 + $0x58] sm:$0xff]
  %v62 = vld [vmem:[%s0 + $0x60] sm:$0xff]
  %v63 = vld [vmem:[%s0 + $0x68] sm:$0xff]
  %v64 = vld [vmem:[%s0 + $0x70] sm:$0xff]
  %v65 = vld [vmem:[%s0 + $0x78] sm:$0xff]
  %v66 = vld [vmem:[%s0 + $0x80] sm:$0xff]
  %v67 = vld [vmem:[%s0 + $0x88] sm:$0xff]
  %v68 = vld [vmem:[%s0 + $0x90] sm:$0xff]
  %v69 = vld [vmem:[%s0 + $0x98] sm:$0xff]
  %v70 = vld [vmem:[%s0 + $0xa0] sm:$0xff]
  %v71 = vld [vmem:[%s0 + $0xa8] sm:$0xff]
  %v72 = vld [vmem:[%s0 + $0xb0] sm:$0xff]
  %v73 = vld [vmem:[%s0 + $0xb8] sm:$0xff]
  %v74 = vld [vmem:[%s0 + $0xc0] sm:$0xff]
  %v75 = vld [vmem:[%s0 + $0xc8] sm:$0xff]
  %v76 = vld [vmem:[%s0 + $0xd0] sm:$0xff]
  %v77 = vld [vmem:[%s0 + $0xd8] sm:$0xff]
  %v78 = vld [vmem:[%s0 + $0xe0] sm:$0xff]
  %v79 = vld [vmem:[%s0 + $0xe8] sm:$0xff]
  %v80 = vld [vmem:[%s0 + $0xf0] sm:$0xff]
  %v81 = vld [vmem:[%s0 + $0xf8] sm:$0xff]
  %v114 = vunpack.c.l.b16 %v50
  %v115 = vunpack.c.h.b16 %v50
  %v116 = vunpack.c.l.b16 %v51
  %v117 = vunpack.c.h.b16 %v51
  %v118 = vunpack.c.l.b16 %v52
  %v119 = vunpack.c.h.b16 %v52
  %v120 = vunpack.c.l.b16 %v53
  %v121 = vunpack.c.h.b16 %v53
  %v122 = vunpack.c.l.b16 %v54
  %v123 = vunpack.c.h.b16 %v54
  %v124 = vunpack.c.l.b16 %v55
  %v125 = vunpack.c.h.b16 %v55
  %v126 = vunpack.c.l.b16 %v56
  %v127 = vunpack.c.h.b16 %v56
  %v128 = vunpack.c.l.b16 %v57
  %v129 = vunpack.c.h.b16 %v57
  %v130 = vunpack.c.l.b16 %v58
  %v131 = vunpack.c.h.b16 %v58
  %v132 = vunpack.c.l.b16 %v59
  %v133 = vunpack.c.h.b16 %v59
  %v134 = vunpack.c.l.b16 %v60
  %v135 = vunpack.c.h.b16 %v60
  %v136 = vunpack.c.l.b16 %v61
  %v137 = vunpack.c.h.b16 %v61
  %v138 = vunpack.c.l.b16 %v62
  %v139 = vunpack.c.h.b16 %v62
  %v140 = vunpack.c.l.b16 %v63
  %v141 = vunpack.c.h.b16 %v63
  %v142 = vunpack.c.l.b16 %v64
  %v143 = vunpack.c.h.b16 %v64
  %v144 = vunpack.c.l.b16 %v65
  %v145 = vunpack.c.h.b16 %v65
  %v146 = vunpack.c.l.b16 %v66
  %v147 = vunpack.c.h.b16 %v66
  %v148 = vunpack.c.l.b16 %v67
  %v149 = vunpack.c.h.b16 %v67
  %v150 = vunpack.c.l.b16 %v68
  %v151 = vunpack.c.h.b16 %v68
  %v152 = vunpack.c.l.b16 %v69
  %v153 = vunpack.c.h.b16 %v69
  %v154 = vunpack.c.l.b16 %v70
  %v155 = vunpack.c.h.b16 %v70
  %v156 = vunpack.c.l.b16 %v71
  %v157 = vunpack.c.h.b16 %v71
  %v158 = vunpack.c.l.b16 %v72
  %v159 = vunpack.c.h.b16 %v72
  %v160 = vunpack.c.l.b16 %v73
  %v161 = vunpack.c.h.b16 %v73
  %v162 = vunpack.c.l.b16 %v74
  %v163 = vunpack.c.h.b16 %v74
  %v164 = vunpack.c.l.b16 %v75
  %v165 = vunpack.c.h.b16 %v75
  %v166 = vunpack.c.l.b16 %v76
  %v167 = vunpack.c.h.b16 %v76
  %v168 = vunpack.c.l.b16 %v77
  %v169 = vunpack.c.h.b16 %v77
  %v170 = vunpack.c.l.b16 %v78
  %v171 = vunpack.c.h.b16 %v78
  %v172 = vunpack.c.l.b16 %v79
  %v173 = vunpack.c.h.b16 %v79
  %v174 = vunpack.c.l.b16 %v80
  %v175 = vunpack.c.h.b16 %v80
  %v176 = vunpack.c.l.b16 %v81
  %v177 = vunpack.c.h.b16 %v81
  %v178 = vpack.c.b16 %v116, %v114
  %v179 = vpack.c.b16 %v117, %v115
  %v180 = vpack.c.b16 %v120, %v118
  %v181 = vpack.c.b16 %v121, %v119
  %v182 = vpack.c.b16 %v124, %v122
  %v183 = vpack.c.b16 %v125, %v123
  %v184 = vpack.c.b16 %v128, %v126
  %v185 = vpack.c.b16 %v129, %v127
  %v186 = vpack.c.b16 %v132, %v130
  %v187 = vpack.c.b16 %v133, %v131
  %v188 = vpack.c.b16 %v136, %v134
  %v189 = vpack.c.b16 %v137, %v135
  %v190 = vpack.c.b16 %v140, %v138
  %v191 = vpack.c.b16 %v141, %v139
  %v192 = vpack.c.b16 %v144, %v142
  %v193 = vpack.c.b16 %v145, %v143
  %v194 = vpack.c.b16 %v148, %v146
  %v195 = vpack.c.b16 %v149, %v147
  %v196 = vpack.c.b16 %v152, %v150
  %v197 = vpack.c.b16 %v153, %v151
  %v198 = vpack.c.b16 %v156, %v154
  %v199 = vpack.c.b16 %v157, %v155
  %v200 = vpack.c.b16 %v160, %v158
  %v201 = vpack.c.b16 %v161, %v159
  %v202 = vpack.c.b16 %v164, %v162
  %v203 = vpack.c.b16 %v165, %v163
  %v204 = vpack.c.b16 %v168, %v166
  %v205 = vpack.c.b16 %v169, %v167
  %v206 = vpack.c.b16 %v172, %v170
  %v207 = vpack.c.b16 %v173, %v171
  %v208 = vpack.c.b16 %v176, %v174
  %v209 = vpack.c.b16 %v177, %v175
  %v274 = vunpack.c.l.b16 %v18
  %v275 = vunpack.c.l.b16 %v19
  %v276 = vunpack.c.l.b16 %v20
  %v277 = vunpack.c.l.b16 %v21
  %v278 = vunpack.c.l.b16 %v22
  %v279 = vunpack.c.l.b16 %v23
  %v280 = vunpack.c.l.b16 %v24
  %v281 = vunpack.c.l.b16 %v25
  %v282 = vunpack.c.l.b16 %v26
  %v283 = vunpack.c.l.b16 %v27
  %v284 = vunpack.c.l.b16 %v28
  %v285 = vunpack.c.l.b16 %v29
  %v286 = vunpack.c.l.b16 %v30
  %v287 = vunpack.c.l.b16 %v31
  %v288 = vunpack.c.l.b16 %v32
  %v289 = vunpack.c.l.b16 %v33
  %v290 = vunpack.c.l.b16 %v34
  %v291 = vunpack.c.l.b16 %v35
  %v292 = vunpack.c.l.b16 %v36
  %v293 = vunpack.c.l.b16 %v37
  %v294 = vunpack.c.l.b16 %v38
  %v295 = vunpack.c.l.b16 %v39
  %v296 = vunpack.c.l.b16 %v40
  %v297 = vunpack.c.l.b16 %v41
  %v298 = vunpack.c.l.b16 %v42
  %v299 = vunpack.c.l.b16 %v43
  %v300 = vunpack.c.l.b16 %v44
  %v301 = vunpack.c.l.b16 %v45
  %v302 = vunpack.c.l.b16 %v46
  %v303 = vunpack.c.l.b16 %v47
  %v304 = vunpack.c.l.b16 %v48
  %v305 = vunpack.c.l.b16 %v49
  %v306 = vpack.c.b16 %v275, %v274
  %v307 = vpack.c.b16 %v277, %v276
  %v308 = vpack.c.b16 %v279, %v278
  %v309 = vpack.c.b16 %v281, %v280
  %v310 = vpack.c.b16 %v283, %v282
  %v311 = vpack.c.b16 %v285, %v284
  %v312 = vpack.c.b16 %v287, %v286
  %v313 = vpack.c.b16 %v289, %v288
  %v314 = vpack.c.b16 %v291, %v290
  %v315 = vpack.c.b16 %v293, %v292
  %v316 = vpack.c.b16 %v295, %v294
  %v317 = vpack.c.b16 %v297, %v296
  %v318 = vpack.c.b16 %v299, %v298
  %v319 = vpack.c.b16 %v301, %v300
  %v320 = vpack.c.b16 %v303, %v302
  %v321 = vpack.c.b16 %v305, %v304
  %338 = vmatprep.subr.bf16.mxu0 0
  %339 = vmatpush1.bf16.msra.mxu0 %v306
  %340 = vmatprep.subr.bf16.mxu0 0
  %341 = vmatpush1.bf16.msra.mxu0 %v307
  %342 = vmatprep.subr.bf16.mxu0 0
  %343 = vmatpush1.bf16.msra.mxu0 %v308
  %344 = vmatprep.subr.bf16.mxu0 0
  %345 = vmatpush1.bf16.msra.mxu0 %v309
  %346 = vmatprep.subr.bf16.mxu0 0
  %347 = vmatpush1.bf16.msra.mxu0 %v310
  %348 = vmatprep.subr.bf16.mxu0 0
  %349 = vmatpush1.bf16.msra.mxu0 %v311
  %350 = vmatprep.subr.bf16.mxu0 0
  %351 = vmatpush1.bf16.msra.mxu0 %v312
  %352 = vmatprep.subr.bf16.mxu0 0
  %353 = vmatpush1.bf16.msra.mxu0 %v313
  %354 = vmatprep.subr.bf16.mxu0 0
  %355 = vmatpush1.bf16.msra.mxu0 %v314
  %356 = vmatprep.subr.bf16.mxu0 0
  %357 = vmatpush1.bf16.msra.mxu0 %v315
  %358 = vmatprep.subr.bf16.mxu0 0
  %359 = vmatpush1.bf16.msra.mxu0 %v316
  %360 = vmatprep.subr.bf16.mxu0 0
  %361 = vmatpush1.bf16.msra.mxu0 %v317
  %362 = vmatprep.subr.bf16.mxu0 0
  %363 = vmatpush1.bf16.msra.mxu0 %v318
  %364 = vmatprep.subr.bf16.mxu0 0
  %365 = vmatpush1.bf16.msra.mxu0 %v319
  %366 = vmatprep.subr.bf16.mxu0 0
  %367 = vmatpush1.bf16.msra.mxu0 %v320
  %368 = vmatprep.subr.bf16.mxu0 0
  %369 = vmatpush1.bf16.msra.mxu0 %v321
  %370 = vmatprep.mubr.bf16.mxu0 %v179
  %371 = vmatmul.mubr.bf16.gmra.mrb[0].mxu0 %v178
  %v372 = vpop.f32.mrb[0].mxu0
  %v373 = vadd.f32 0.0, %v372
  %v374 = vpop.f32.mrb[0].mxu0
  %v375 = vpop.f32.mrb[0].mxu0
  %v376 = vadd.f32 0.0, %v375
  %v377 = vpop.f32.mrb[0].mxu0
  %378 = vmatprep.mubr.bf16.mxu0 %v181
  %379 = vmatmul.mubr.bf16.gmra.mrb[0].mxu0 %v180
  %v380 = vpop.f32.mrb[0].mxu0
  %v381 = vadd.f32 0.0, %v380
  %v382 = vpop.f32.mrb[0].mxu0
  %v383 = vpop.f32.mrb[0].mxu0
  %v384 = vadd.f32 0.0, %v383
  %v385 = vpop.f32.mrb[0].mxu0
  %386 = vmatprep.mubr.bf16.mxu0 %v183
  %387 = vmatmul.mubr.bf16.gmra.mrb[0].mxu0 %v182
  %v388 = vpop.f32.mrb[0].mxu0
  %v389 = vadd.f32 0.0, %v388
  %v390 = vpop.f32.mrb[0].mxu0
  %v391 = vpop.f32.mrb[0].mxu0
  %v392 = vadd.f32 0.0, %v391
  %v393 = vpop.f32.mrb[0].mxu0
  %394 = vmatprep.mubr.bf16.mxu0 %v185
  %395 = vmatmul.mubr.bf16.gmra.mrb[0].mxu0 %v184
  %v396 = vpop.f32.mrb[0].mxu0
  %v397 = vadd.f32 0.0, %v396
  %v398 = vpop.f32.mrb[0].mxu0
  %v399 = vpop.f32.mrb[0].mxu0
  %v400 = vadd.f32 0.0, %v399
  %v401 = vpop.f32.mrb[0].mxu0
  %402 = vmatprep.mubr.bf16.mxu0 %v187
  %403 = vmatmul.mubr.bf16.gmra.mrb[0].mxu0 %v186
  %v404 = vpop.f32.mrb[0].mxu0
  %v405 = vadd.f32 0.0, %v404
  %v406 = vpop.f32.mrb[0].mxu0
  %v407 = vpop.f32.mrb[0].mxu0
  %v408 = vadd.f32 0.0, %v407
  %v409 = vpop.f32.mrb[0].mxu0
  %410 = vmatprep.mubr.bf16.mxu0 %v189
  %411 = vmatmul.mubr.bf16.gmra.mrb[0].mxu0 %v188
  %v412 = vpop.f32.mrb[0].mxu0
  %v413 = vadd.f32 0.0, %v412
  %v414 = vpop.f32.mrb[0].mxu0
  %v415 = vpop.f32.mrb[0].mxu0
  %v416 = vadd.f32 0.0, %v415
  %v417 = vpop.f32.mrb[0].mxu0
  %418 = vmatprep.mubr.bf16.mxu0 %v191
  %419 = vmatmul.mubr.bf16.gmra.mrb[0].mxu0 %v190
  %v420 = vpop.f32.mrb[0].mxu0
  %v421 = vadd.f32 0.0, %v420
  %v422 = vpop.f32.mrb[0].mxu0
  %v423 = vpop.f32.mrb[0].mxu0
  %v424 = vadd.f32 0.0, %v423
  %v425 = vpop.f32.mrb[0].mxu0
  %426 = vmatprep.mubr.bf16.mxu0 %v193
  %427 = vmatmul.mubr.bf16.gmra.mrb[0].mxu0 %v192
  %v428 = vpop.f32.mrb[0].mxu0
  %v429 = vadd.f32 0.0, %v428
  %v430 = vpop.f32.mrb[0].mxu0
  %v431 = vpop.f32.mrb[0].mxu0
  %v432 = vadd.f32 0.0, %v431
  %v433 = vpop.f32.mrb[0].mxu0
  %434 = vmatprep.mubr.bf16.mxu0 %v195
  %435 = vmatmul.mubr.bf16.gmra.mrb[0].mxu0 %v194
  %v436 = vpop.f32.mrb[0].mxu0
  %v437 = vadd.f32 0.0, %v436
  %v438 = vpop.f32.mrb[0].mxu0
  %v439 = vpop.f32.mrb[0].mxu0
  %v440 = vadd.f32 0.0, %v439
  %v441 = vpop.f32.mrb[0].mxu0
  %442 = vmatprep.mubr.bf16.mxu0 %v197
  %443 = vmatmul.mubr.bf16.gmra.mrb[0].mxu0 %v196
  %v444 = vpop.f32.mrb[0].mxu0
  %v445 = vadd.f32 0.0, %v444
  %v446 = vpop.f32.mrb[0].mxu0
  %v447 = vpop.f32.mrb[0].mxu0
  %v448 = vadd.f32 0.0, %v447
  %v449 = vpop.f32.mrb[0].mxu0
  %450 = vmatprep.mubr.bf16.mxu0 %v199
  %451 = vmatmul.mubr.bf16.gmra.mrb[0].mxu0 %v198
  %v452 = vpop.f32.mrb[0].mxu0
  %v453 = vadd.f32 0.0, %v452
  %v454 = vpop.f32.mrb[0].mxu0
  %v455 = vpop.f32.mrb[0].mxu0
  %v456 = vadd.f32 0.0, %v455
  %v457 = vpop.f32.mrb[0].mxu0
  %458 = vmatprep.mubr.bf16.mxu0 %v201
  %459 = vmatmul.mubr.bf16.gmra.mrb[0].mxu0 %v200
  %v460 = vpop.f32.mrb[0].mxu0
  %v461 = vadd.f32 0.0, %v460
  %v462 = vpop.f32.mrb[0].mxu0
  %v463 = vpop.f32.mrb[0].mxu0
  %v464 = vadd.f32 0.0, %v463
  %v465 = vpop.f32.mrb[0].mxu0
  %466 = vmatprep.mubr.bf16.mxu0 %v203
  %467 = vmatmul.mubr.bf16.gmra.mrb[0].mxu0 %v202
  %v468 = vpop.f32.mrb[0].mxu0
  %v469 = vadd.f32 0.0, %v468
  %v470 = vpop.f32.mrb[0].mxu0
  %v471 = vpop.f32.mrb[0].mxu0
  %v472 = vadd.f32 0.0, %v471
  %v473 = vpop.f32.mrb[0].mxu0
  %474 = vmatprep.mubr.bf16.mxu0 %v205
  %475 = vmatmul.mubr.bf16.gmra.mrb[0].mxu0 %v204
  %v476 = vpop.f32.mrb[0].mxu0
  %v477 = vadd.f32 0.0, %v476
  %v478 = vpop.f32.mrb[0].mxu0
  %v479 = vpop.f32.mrb[0].mxu0
  %v480 = vadd.f32 0.0, %v479
  %v481 = vpop.f32.mrb[0].mxu0
  %482 = vmatprep.mubr.bf16.mxu0 %v207
  %483 = vmatmul.mubr.bf16.gmra.mrb[0].mxu0 %v206
  %v484 = vpop.f32.mrb[0].mxu0
  %v485 = vadd.f32 0.0, %v484
  %v486 = vpop.f32.mrb[0].mxu0
  %v487 = vpop.f32.mrb[0].mxu0
  %v488 = vadd.f32 0.0, %v487
  %v489 = vpop.f32.mrb[0].mxu0
  %490 = vmatprep.mubr.bf16.mxu0 %v209
  %491 = vmatmul.mubr.bf16.gmra.mrb[0].mxu0 %v208
  %v492 = vpop.f32.mrb[0].mxu0
  %v493 = vadd.f32 0.0, %v492
  %v494 = vpop.f32.mrb[0].mxu0
  %v495 = vpop.f32.mrb[0].mxu0
  %v496 = vadd.f32 0.0, %v495
  %v497 = vpop.f32.mrb[0].mxu0
  %498 = vdwg.mxu0
  %v499 = vld [vmem:[%s1] sm:$0xff]
  %v500 = vld [vmem:[%s1 + $0x8] sm:$0xff]
  %v501 = vld [vmem:[%s1 + $0x10] sm:$0xff]
  %v502 = vld [vmem:[%s1 + $0x18] sm:$0xff]
  %v503 = vld [vmem:[%s1 + $0x20] sm:$0xff]
  %v504 = vld [vmem:[%s1 + $0x28] sm:$0xff]
  %v505 = vld [vmem:[%s1 + $0x30] sm:$0xff]
  %v506 = vld [vmem:[%s1 + $0x38] sm:$0xff]
  %v507 = vld [vmem:[%s1 + $0x40] sm:$0xff]
  %v508 = vld [vmem:[%s1 + $0x48] sm:$0xff]
  %v509 = vld [vmem:[%s1 + $0x50] sm:$0xff]
  %v510 = vld [vmem:[%s1 + $0x58] sm:$0xff]
  %v511 = vld [vmem:[%s1 + $0x60] sm:$0xff]
  %v512 = vld [vmem:[%s1 + $0x68] sm:$0xff]
  %v513 = vld [vmem:[%s1 + $0x70] sm:$0xff]
  %v514 = vld [vmem:[%s1 + $0x78] sm:$0xff]
  %v515 = vld [vmem:[%s1 + $0x80] sm:$0xff]
  %v516 = vld [vmem:[%s1 + $0x88] sm:$0xff]
  %v517 = vld [vmem:[%s1 + $0x90] sm:$0xff]
  %v518 = vld [vmem:[%s1 + $0x98] sm:$0xff]
  %v519 = vld [vmem:[%s1 + $0xa0] sm:$0xff]
  %v520 = vld [vmem:[%s1 + $0xa8] sm:$0xff]
  %v521 = vld [vmem:[%s1 + $0xb0] sm:$0xff]
  %v522 = vld [vmem:[%s1 + $0xb8] sm:$0xff]
  %v523 = vld [vmem:[%s1 + $0xc0] sm:$0xff]
  %v524 = vld [vmem:[%s1 + $0xc8] sm:$0xff]
  %v525 = vld [vmem:[%s1 + $0xd0] sm:$0xff]
  %v526 = vld [vmem:[%s1 + $0xd8] sm:$0xff]
  %v527 = vld [vmem:[%s1 + $0xe0] sm:$0xff]
  %v528 = vld [vmem:[%s1 + $0xe8] sm:$0xff]
  %v529 = vld [vmem:[%s1 + $0xf0] sm:$0xff]
  %v530 = vld [vmem:[%s1 + $0xf8] sm:$0xff]
  %532 = vset.pattern.permute.xlu0 0
  %533 = vperm.xlu0 %532, %v499
  %v534 = vpop.permute.xlu0 %533
  %537 = vset.pattern.permute.xlu0 0
  %538 = vperm.xlu0 %537, %v500
  %v539 = vpop.permute.xlu0 %538
  %542 = vset.pattern.permute.xlu0 0
  %543 = vperm.xlu0 %542, %v501
  %v544 = vpop.permute.xlu0 %543
  %547 = vset.pattern.permute.xlu0 0
  %548 = vperm.xlu0 %547, %v502
  %v549 = vpop.permute.xlu0 %548
  %552 = vset.pattern.permute.xlu0 0
  %553 = vperm.xlu0 %552, %v503
  %v554 = vpop.permute.xlu0 %553
  %557 = vset.pattern.permute.xlu0 0
  %558 = vperm.xlu0 %557, %v504
  %v559 = vpop.permute.xlu0 %558
  %562 = vset.pattern.permute.xlu0 0
  %563 = vperm.xlu0 %562, %v505
  %v564 = vpop.permute.xlu0 %563
  %567 = vset.pattern.permute.xlu0 0
  %568 = vperm.xlu0 %567, %v506
  %v569 = vpop.permute.xlu0 %568
  %572 = vset.pattern.permute.xlu0 0
  %573 = vperm.xlu0 %572, %v507
  %v574 = vpop.permute.xlu0 %573
  %577 = vset.pattern.permute.xlu0 0
  %578 = vperm.xlu0 %577, %v508
  %v579 = vpop.permute.xlu0 %578
  %582 = vset.pattern.permute.xlu0 0
  %583 = vperm.xlu0 %582, %v509
  %v584 = vpop.permute.xlu0 %583
  %587 = vset.pattern.permute.xlu0 0
  %588 = vperm.xlu0 %587, %v510
  %v589 = vpop.permute.xlu0 %588
  %592 = vset.pattern.permute.xlu0 0
  %593 = vperm.xlu0 %592, %v511
  %v594 = vpop.permute.xlu0 %593
  %597 = vset.pattern.permute.xlu0 0
  %598 = vperm.xlu0 %597, %v512
  %v599 = vpop.permute.xlu0 %598
  %602 = vset.pattern.permute.xlu0 0
  %603 = vperm.xlu0 %602, %v513
  %v604 = vpop.permute.xlu0 %603
  %607 = vset.pattern.permute.xlu0 0
  %608 = vperm.xlu0 %607, %v514
  %v609 = vpop.permute.xlu0 %608
  %612 = vset.pattern.permute.xlu0 0
  %613 = vperm.xlu0 %612, %v515
  %v614 = vpop.permute.xlu0 %613
  %617 = vset.pattern.permute.xlu0 0
  %618 = vperm.xlu0 %617, %v516
  %v619 = vpop.permute.xlu0 %618
  %622 = vset.pattern.permute.xlu0 0
  %623 = vperm.xlu0 %622, %v517
  %v624 = vpop.permute.xlu0 %623
  %627 = vset.pattern.permute.xlu0 0
  %628 = vperm.xlu0 %627, %v518
  %v629 = vpop.permute.xlu0 %628
  %632 = vset.pattern.permute.xlu0 0
  %633 = vperm.xlu0 %632, %v519
  %v634 = vpop.permute.xlu0 %633
  %637 = vset.pattern.permute.xlu0 0
  %638 = vperm.xlu0 %637, %v520
  %v639 = vpop.permute.xlu0 %638
  %642 = vset.pattern.permute.xlu0 0
  %643 = vperm.xlu0 %642, %v521
  %v644 = vpop.permute.xlu0 %643
  %647 = vset.pattern.permute.xlu0 0
  %648 = vperm.xlu0 %647, %v522
  %v649 = vpop.permute.xlu0 %648
  %652 = vset.pattern.permute.xlu0 0
  %653 = vperm.xlu0 %652, %v523
  %v654 = vpop.permute.xlu0 %653
  %657 = vset.pattern.permute.xlu0 0
  %658 = vperm.xlu0 %657, %v524
  %v659 = vpop.permute.xlu0 %658
  %662 = vset.pattern.permute.xlu0 0
  %663 = vperm.xlu0 %662, %v525
  %v664 = vpop.permute.xlu0 %663
  %667 = vset.pattern.permute.xlu0 0
  %668 = vperm.xlu0 %667, %v526
  %v669 = vpop.permute.xlu0 %668
  %672 = vset.pattern.permute.xlu0 0
  %673 = vperm.xlu0 %672, %v527
  %v674 = vpop.permute.xlu0 %673
  %677 = vset.pattern.permute.xlu0 0
  %678 = vperm.xlu0 %677, %v528
  %v679 = vpop.permute.xlu0 %678
  %682 = vset.pattern.permute.xlu0 0
  %683 = vperm.xlu0 %682, %v529
  %v684 = vpop.permute.xlu0 %683
  %687 = vset.pattern.permute.xlu0 0
  %688 = vperm.xlu0 %687, %v530
  %v689 = vpop.permute.xlu0 %688
  %v691 = vmul.f32 %v373, %v534
  %v692 = vmul.f32 %v376, %v539
  %v693 = vmul.f32 %v381, %v544
  %v694 = vmul.f32 %v384, %v549
  %v695 = vmul.f32 %v389, %v554
  %v696 = vmul.f32 %v392, %v559
  %v697 = vmul.f32 %v397, %v564
  %v698 = vmul.f32 %v400, %v569
  %v699 = vmul.f32 %v405, %v574
  %v700 = vmul.f32 %v408, %v579
  %v701 = vmul.f32 %v413, %v584
  %v702 = vmul.f32 %v416, %v589
  %v703 = vmul.f32 %v421, %v594
  %v704 = vmul.f32 %v424, %v599
  %v705 = vmul.f32 %v429, %v604
  %v706 = vmul.f32 %v432, %v609
  %v707 = vmul.f32 %v437, %v614
  %v708 = vmul.f32 %v440, %v619
  %v709 = vmul.f32 %v445, %v624
  %v710 = vmul.f32 %v448, %v629
  %v711 = vmul.f32 %v453, %v634
  %v712 = vmul.f32 %v456, %v639
  %v713 = vmul.f32 %v461, %v644
  %v714 = vmul.f32 %v464, %v649
  %v715 = vmul.f32 %v469, %v654
  %v716 = vmul.f32 %v472, %v659
  %v717 = vmul.f32 %v477, %v664
  %v718 = vmul.f32 %v480, %v669
  %v719 = vmul.f32 %v485, %v674
  %v720 = vmul.f32 %v488, %v679
  %v721 = vmul.f32 %v493, %v684
  %v722 = vmul.f32 %v496, %v689
  %v723 = vpack.c.bf16 %v692, %v691
  %v724 = vpack.c.bf16 %v694, %v693
  %v725 = vpack.c.bf16 %v696, %v695
  %v726 = vpack.c.bf16 %v698, %v697
  %v727 = vpack.c.bf16 %v700, %v699
  %v728 = vpack.c.bf16 %v702, %v701
  %v729 = vpack.c.bf16 %v704, %v703
  %v730 = vpack.c.bf16 %v706, %v705
  %v731 = vpack.c.bf16 %v708, %v707
  %v732 = vpack.c.bf16 %v710, %v709
  %v733 = vpack.c.bf16 %v712, %v711
  %v734 = vpack.c.bf16 %v714, %v713
  %v735 = vpack.c.bf16 %v716, %v715
  %v736 = vpack.c.bf16 %v718, %v717
  %v737 = vpack.c.bf16 %v720, %v719
  %v738 = vpack.c.bf16 %v722, %v721
  %739 = vst [vmem:[#allocation2] sm:$0xff] %v723
  %740 = vst [vmem:[#allocation2 + $0x28] sm:$0xff] %v724
  %741 = vst [vmem:[#allocation2 + $0x50] sm:$0xff] %v725
  %742 = vst [vmem:[#allocation2 + $0x78] sm:$0xff] %v726
  %743 = vst [vmem:[#allocation2 + $0xa0] sm:$0xff] %v727
  %744 = vst [vmem:[#allocation2 + $0xc8] sm:$0xff] %v728
  %745 = vst [vmem:[#allocation2 + $0xf0] sm:$0xff] %v729
  %746 = vst [vmem:[#allocation2 + $0x118] sm:$0xff] %v730
  %747 = vst [vmem:[#allocation2 + $0x140] sm:$0xff] %v731
  %748 = vst [vmem:[#allocation2 + $0x168] sm:$0xff] %v732
  %749 = vst [vmem:[#allocation2 + $0x190] sm:$0xff] %v733
  %750 = vst [vmem:[#allocation2 + $0x1b8] sm:$0xff] %v734
  %751 = vst [vmem:[#allocation2 + $0x1e0] sm:$0xff] %v735
  %752 = vst [vmem:[#allocation2 + $0x208] sm:$0xff] %v736
  %753 = vst [vmem:[#allocation2 + $0x230] sm:$0xff] %v737
  %754 = vst [vmem:[#allocation2 + $0x258] sm:$0xff] %v738
  %s755 = scalar_lea.vmem %s0, 256
  %v756 = vld [vmem:[%s755] sm:$0xff]
  %v757 = vld [vmem:[%s755 + $0x8] sm:$0xff]
  %v758 = vld [vmem:[%s755 + $0x10] sm:$0xff]
  %v759 = vld [vmem:[%s755 + $0x18] sm:$0xff]
  %v760 = vld [vmem:[%s755 + $0x20] sm:$0xff]
  %v761 = vld [vmem:[%s755 + $0x28] sm:$0xff]
  %v762 = vld [vmem:[%s755 + $0x30] sm:$0xff]
  %v763 = vld [vmem:[%s755 + $0x38] sm:$0xff]
  %v764 = vld [vmem:[%s755 + $0x40] sm:$0xff]
  %v765 = vld [vmem:[%s755 + $0x48] sm:$0xff]
  %v766 = vld [vmem:[%s755 + $0x50] sm:$0xff]
  %v767 = vld [vmem:[%s755 + $0x58] sm:$0xff]
  %v768 = vld [vmem:[%s755 + $0x60] sm:$0xff]
  %v769 = vld [vmem:[%s755 + $0x68] sm:$0xff]
  %v770 = vld [vmem:[%s755 + $0x70] sm:$0xff]
  %v771 = vld [vmem:[%s755 + $0x78] sm:$0xff]
  %v772 = vld [vmem:[%s755 + $0x80] sm:$0xff]
  %v773 = vld [vmem:[%s755 + $0x88] sm:$0xff]
  %v774 = vld [vmem:[%s755 + $0x90] sm:$0xff]
  %v775 = vld [vmem:[%s755 + $0x98] sm:$0xff]
  %v776 = vld [vmem:[%s755 + $0xa0] sm:$0xff]
  %v777 = vld [vmem:[%s755 + $0xa8] sm:$0xff]
  %v778 = vld [vmem:[%s755 + $0xb0] sm:$0xff]
  %v779 = vld [vmem:[%s755 + $0xb8] sm:$0xff]
  %v780 = vld [vmem:[%s755 + $0xc0] sm:$0xff]
  %v781 = vld [vmem:[%s755 + $0xc8] sm:$0xff]
  %v782 = vld [vmem:[%s755 + $0xd0] sm:$0xff]
  %v783 = vld [vmem:[%s755 + $0xd8] sm:$0xff]
  %v784 = vld [vmem:[%s755 + $0xe0] sm:$0xff]
  %v785 = vld [vmem:[%s755 + $0xe8] sm:$0xff]
  %v786 = vld [vmem:[%s755 + $0xf0] sm:$0xff]
  %v787 = vld [vmem:[%s755 + $0xf8] sm:$0xff]
  %v820 = vunpack.c.l.b16 %v756
  %v821 = vunpack.c.h.b16 %v756
  %v822 = vunpack.c.l.b16 %v757
  %v823 = vunpack.c.h.b16 %v757
  %v824 = vunpack.c.l.b16 %v758
  %v825 = vunpack.c.h.b16 %v758
  %v826 = vunpack.c.l.b16 %v759
  %v827 = vunpack.c.h.b16 %v759
  %v828 = vunpack.c.l.b16 %v760
  %v829 = vunpack.c.h.b16 %v760
  %v830 = vunpack.c.l.b16 %v761
  %v831 = vunpack.c.h.b16 %v761
  %v832 = vunpack.c.l.b16 %v762
  %v833 = vunpack.c.h.b16 %v762
  %v834 = vunpack.c.l.b16 %v763
  %v835 = vunpack.c.h.b16 %v763
  %v836 = vunpack.c.l.b16 %v764
  %v837 = vunpack.c.h.b16 %v764
  %v838 = vunpack.c.l.b16 %v765
  %v839 = vunpack.c.h.b16 %v765
  %v840 = vunpack.c.l.b16 %v766
  %v841 = vunpack.c.h.b16 %v766
  %v842 = vunpack.c.l.b16 %v767
  %v843 = vunpack.c.h.b16 %v767
  %v844 = vunpack.c.l.b16 %v768
  %v845 = vunpack.c.h.b16 %v768
  %v846 = vunpack.c.l.b16 %v769
  %v847 = vunpack.c.h.b16 %v769
  %v848 = vunpack.c.l.b16 %v770
  %v849 = vunpack.c.h.b16 %v770
  %v850 = vunpack.c.l.b16 %v771
  %v851 = vunpack.c.h.b16 %v771
  %v852 = vunpack.c.l.b16 %v772
  %v853 = vunpack.c.h.b16 %v772
  %v854 = vunpack.c.l.b16 %v773
  %v855 = vunpack.c.h.b16 %v773
  %v856 = vunpack.c.l.b16 %v774
  %v857 = vunpack.c.h.b16 %v774
  %v858 = vunpack.c.l.b16 %v775
  %v859 = vunpack.c.h.b16 %v775
  %v860 = vunpack.c.l.b16 %v776
  %v861 = vunpack.c.h.b16 %v776
  %v862 = vunpack.c.l.b16 %v777
  %v863 = vunpack.c.h.b16 %v777
  %v864 = vunpack.c.l.b16 %v778
  %v865 = vunpack.c.h.b16 %v778
  %v866 = vunpack.c.l.b16 %v779
  %v867 = vunpack.c.h.b16 %v779
  %v868 = vunpack.c.l.b16 %v780
  %v869 = vunpack.c.h.b16 %v780
  %v870 = vunpack.c.l.b16 %v781
  %v871 = vunpack.c.h.b16 %v781
  %v872 = vunpack.c.l.b16 %v782
  %v873 = vunpack.c.h.b16 %v782
  %v874 = vunpack.c.l.b16 %v783
  %v875 = vunpack.c.h.b16 %v783
  %v876 = vunpack.c.l.b16 %v784
  %v877 = vunpack.c.h.b16 %v784
  %v878 = vunpack.c.l.b16 %v785
  %v879 = vunpack.c.h.b16 %v785
  %v880 = vunpack.c.l.b16 %v786
  %v881 = vunpack.c.h.b16 %v786
  %v882 = vunpack.c.l.b16 %v787
  %v883 = vunpack.c.h.b16 %v787
  %v884 = vpack.c.b16 %v822, %v820
  %v885 = vpack.c.b16 %v823, %v821
  %v886 = vpack.c.b16 %v826, %v824
  %v887 = vpack.c.b16 %v827, %v825
  %v888 = vpack.c.b16 %v830, %v828
  %v889 = vpack.c.b16 %v831, %v829
  %v890 = vpack.c.b16 %v834, %v832
  %v891 = vpack.c.b16 %v835, %v833
  %v892 = vpack.c.b16 %v838, %v836
  %v893 = vpack.c.b16 %v839, %v837
  %v894 = vpack.c.b16 %v842, %v840
  %v895 = vpack.c.b16 %v843, %v841
  %v896 = vpack.c.b16 %v846, %v844
  %v897 = vpack.c.b16 %v847, %v845
  %v898 = vpack.c.b16 %v850, %v848
  %v899 = vpack.c.b16 %v851, %v849
  %v900 = vpack.c.b16 %v854, %v852
  %v901 = vpack.c.b16 %v855, %v853
  %v902 = vpack.c.b16 %v858, %v856
  %v903 = vpack.c.b16 %v859, %v857
  %v904 = vpack.c.b16 %v862, %v860
  %v905 = vpack.c.b16 %v863, %v861
  %v906 = vpack.c.b16 %v866, %v864
  %v907 = vpack.c.b16 %v867, %v865
  %v908 = vpack.c.b16 %v870, %v868
  %v909 = vpack.c.b16 %v871, %v869
  %v910 = vpack.c.b16 %v874, %v872
  %v911 = vpack.c.b16 %v875, %v873
  %v912 = vpack.c.b16 %v878, %v876
  %v913 = vpack.c.b16 %v879, %v877
  %v914 = vpack.c.b16 %v882, %v880
  %v915 = vpack.c.b16 %v883, %v881
  %948 = vmatprep.subr.bf16.mxu0 0
  %949 = vmatpush1.bf16.msra.mxu0 %v306
  %950 = vmatprep.subr.bf16.mxu0 0
  %951 = vmatpush1.bf16.msra.mxu0 %v307
  %952 = vmatprep.subr.bf16.mxu0 0
  %953 = vmatpush1.bf16.msra.mxu0 %v308
  %954 = vmatprep.subr.bf16.mxu0 0
  %955 = vmatpush1.bf16.msra.mxu0 %v309
  %956 = vmatprep.subr.bf16.mxu0 0
  %957 = vmatpush1.bf16.msra.mxu0 %v310
  %958 = vmatprep.subr.bf16.mxu0 0
  %959 = vmatpush1.bf16.msra.mxu0 %v311
  %960 = vmatprep.subr.bf16.mxu0 0
  %961 = vmatpush1.bf16.msra.mxu0 %v312
  %962 = vmatprep.subr.bf16.mxu0 0
  %963 = vmatpush1.bf16.msra.mxu0 %v313
  %964 = vmatprep.subr.bf16.mxu0 0
  %965 = vmatpush1.bf16.msra.mxu0 %v314
  %966 = vmatprep.subr.bf16.mxu0 0
  %967 = vmatpush1.bf16.msra.mxu0 %v315
  %968 = vmatprep.subr.bf16.mxu0 0
  %969 = vmatpush1.bf16.msra.mxu0 %v316
  %970 = vmatprep.subr.bf16.mxu0 0
  %971 = vmatpush1.bf16.msra.mxu0 %v317
  %972 = vmatprep.subr.bf16.mxu0 0
  %973 = vmatpush1.bf16.msra.mxu0 %v318
  %974 = vmatprep.subr.bf16.mxu0 0
  %975 = vmatpush1.bf16.msra.mxu0 %v319
  %976 = vmatprep.subr.bf16.mxu0 0
  %977 = vmatpush1.bf16.msra.mxu0 %v320
  %978 = vmatprep.subr.bf16.mxu0 0
  %979 = vmatpush1.bf16.msra.mxu0 %v321
  %980 = vmatprep.mubr.bf16.mxu0 %v885
  %981 = vmatmul.mubr.bf16.gmra.mrb[0].mxu0 %v884
  %v982 = vpop.f32.mrb[0].mxu0
  %v983 = vadd.f32 0.0, %v982
  %v984 = vpop.f32.mrb[0].mxu0
  %v985 = vpop.f32.mrb[0].mxu0
  %v986 = vadd.f32 0.0, %v985
  %v987 = vpop.f32.mrb[0].mxu0
  %988 = vmatprep.mubr.bf16.mxu0 %v887
  %989 = vmatmul.mubr.bf16.gmra.mrb[0].mxu0 %v886
  %v990 = vpop.f32.mrb[0].mxu0
  %v991 = vadd.f32 0.0, %v990
  %v992 = vpop.f32.mrb[0].mxu0
  %v993 = vpop.f32.mrb[0].mxu0
  %v994 = vadd.f32 0.0, %v993
  %v995 = vpop.f32.mrb[0].mxu0
  %996 = vmatprep.mubr.bf16.mxu0 %v889
  %997 = vmatmul.mubr.bf16.gmra.mrb[0].mxu0 %v888
  %v998 = vpop.f32.mrb[0].mxu0
  %v999 = vadd.f32 0.0, %v998
  %v1000 = vpop.f32.mrb[0].mxu0
  %v1001 = vpop.f32.mrb[0].mxu0
  %v1002 = vadd.f32 0.0, %v1001
  %v1003 = vpop.f32.mrb[0].mxu0
  %1004 = vmatprep.mubr.bf16.mxu0 %v891
  %1005 = vmatmul.mubr.bf16.gmra.mrb[0].mxu0 %v890
  %v1006 = vpop.f32.mrb[0].mxu0
  %v1007 = vadd.f32 0.0, %v1006
  %v1008 = vpop.f32.mrb[0].mxu0
  %v1009 = vpop.f32.mrb[0].mxu0
  %v1010 = vadd.f32 0.0, %v1009
  %v1011 = vpop.f32.mrb[0].mxu0
  %1012 = vmatprep.mubr.bf16.mxu0 %v893
  %1013 = vmatmul.mubr.bf16.gmra.mrb[0].mxu0 %v892
  %v1014 = vpop.f32.mrb[0].mxu0
  %v1015 = vadd.f32 0.0, %v1014
  %v1016 = vpop.f32.mrb[0].mxu0
  %v1017 = vpop.f32.mrb[0].mxu0
  %v1018 = vadd.f32 0.0, %v1017
  %v1019 = vpop.f32.mrb[0].mxu0
  %1020 = vmatprep.mubr.bf16.mxu0 %v895
  %1021 = vmatmul.mubr.bf16.gmra.mrb[0].mxu0 %v894
  %v1022 = vpop.f32.mrb[0].mxu0
  %v1023 = vadd.f32 0.0, %v1022
  %v1024 = vpop.f32.mrb[0].mxu0
  %v1025 = vpop.f32.mrb[0].mxu0
  %v1026 = vadd.f32 0.0, %v1025
  %v1027 = vpop.f32.mrb[0].mxu0
  %1028 = vmatprep.mubr.bf16.mxu0 %v897
  %1029 = vmatmul.mubr.bf16.gmra.mrb[0].mxu0 %v896
  %v1030 = vpop.f32.mrb[0].mxu0
  %v1031 = vadd.f32 0.0, %v1030
  %v1032 = vpop.f32.mrb[0].mxu0
  %v1033 = vpop.f32.mrb[0].mxu0
  %v1034 = vadd.f32 0.0, %v1033
  %v1035 = vpop.f32.mrb[0].mxu0
  %1036 = vmatprep.mubr.bf16.mxu0 %v899
  %1037 = vmatmul.mubr.bf16.gmra.mrb[0].mxu0 %v898
  %v1038 = vpop.f32.mrb[0].mxu0
  %v1039 = vadd.f32 0.0, %v1038
  %v1040 = vpop.f32.mrb[0].mxu0
  %v1041 = vpop.f32.mrb[0].mxu0
  %v1042 = vadd.f32 0.0, %v1041
  %v1043 = vpop.f32.mrb[0].mxu0
  %1044 = vmatprep.mubr.bf16.mxu0 %v901
  %1045 = vmatmul.mubr.bf16.gmra.mrb[0].mxu0 %v900
  %v1046 = vpop.f32.mrb[0].mxu0
  %v1047 = vadd.f32 0.0, %v1046
  %v1048 = vpop.f32.mrb[0].mxu0
  %v1049 = vpop.f32.mrb[0].mxu0
  %v1050 = vadd.f32 0.0, %v1049
  %v1051 = vpop.f32.mrb[0].mxu0
  %1052 = vmatprep.mubr.bf16.mxu0 %v903
  %1053 = vmatmul.mubr.bf16.gmra.mrb[0].mxu0 %v902
  %v1054 = vpop.f32.mrb[0].mxu0
  %v1055 = vadd.f32 0.0, %v1054
  %v1056 = vpop.f32.mrb[0].mxu0
  %v1057 = vpop.f32.mrb[0].mxu0
  %v1058 = vadd.f32 0.0, %v1057
  %v1059 = vpop.f32.mrb[0].mxu0
  %1060 = vmatprep.mubr.bf16.mxu0 %v905
  %1061 = vmatmul.mubr.bf16.gmra.mrb[0].mxu0 %v904
  %v1062 = vpop.f32.mrb[0].mxu0
  %v1063 = vadd.f32 0.0, %v1062
  %v1064 = vpop.f32.mrb[0].mxu0
  %v1065 = vpop.f32.mrb[0].mxu0
  %v1066 = vadd.f32 0.0, %v1065
  %v1067 = vpop.f32.mrb[0].mxu0
  %1068 = vmatprep.mubr.bf16.mxu0 %v907
  %1069 = vmatmul.mubr.bf16.gmra.mrb[0].mxu0 %v906
  %v1070 = vpop.f32.mrb[0].mxu0
  %v1071 = vadd.f32 0.0, %v1070
  %v1072 = vpop.f32.mrb[0].mxu0
  %v1073 = vpop.f32.mrb[0].mxu0
  %v1074 = vadd.f32 0.0, %v1073
  %v1075 = vpop.f32.mrb[0].mxu0
  %1076 = vmatprep.mubr.bf16.mxu0 %v909
  %1077 = vmatmul.mubr.bf16.gmra.mrb[0].mxu0 %v908
  %v1078 = vpop.f32.mrb[0].mxu0
  %v1079 = vadd.f32 0.0, %v1078
  %v1080 = vpop.f32.mrb[0].mxu0
  %v1081 = vpop.f32.mrb[0].mxu0
  %v1082 = vadd.f32 0.0, %v1081
  %v1083 = vpop.f32.mrb[0].mxu0
  %1084 = vmatprep.mubr.bf16.mxu0 %v911
  %1085 = vmatmul.mubr.bf16.gmra.mrb[0].mxu0 %v910
  %v1086 = vpop.f32.mrb[0].mxu0
  %v1087 = vadd.f32 0.0, %v1086
  %v1088 = vpop.f32.mrb[0].mxu0
  %v1089 = vpop.f32.mrb[0].mxu0
  %v1090 = vadd.f32 0.0, %v1089
  %v1091 = vpop.f32.mrb[0].mxu0
  %1092 = vmatprep.mubr.bf16.mxu0 %v913
  %1093 = vmatmul.mubr.bf16.gmra.mrb[0].mxu0 %v912
  %v1094 = vpop.f32.mrb[0].mxu0
  %v1095 = vadd.f32 0.0, %v1094
  %v1096 = vpop.f32.mrb[0].mxu0
  %v1097 = vpop.f32.mrb[0].mxu0
  %v1098 = vadd.f32 0.0, %v1097
  %v1099 = vpop.f32.mrb[0].mxu0
  %1100 = vmatprep.mubr.bf16.mxu0 %v915
  %1101 = vmatmul.mubr.bf16.gmra.mrb[0].mxu0 %v914
  %v1102 = vpop.f32.mrb[0].mxu0
  %v1103 = vadd.f32 0.0, %v1102
  %v1104 = vpop.f32.mrb[0].mxu0
  %v1105 = vpop.f32.mrb[0].mxu0
  %v1106 = vadd.f32 0.0, %v1105
  %v1107 = vpop.f32.mrb[0].mxu0
  %1108 = vdwg.mxu0
  %s1109 = scalar_lea.vmem %s1, 256
  %v1110 = vld [vmem:[%s1109] sm:$0xff]
  %v1111 = vld [vmem:[%s1109 + $0x8] sm:$0xff]
  %v1112 = vld [vmem:[%s1109 + $0x10] sm:$0xff]
  %v1113 = vld [vmem:[%s1109 + $0x18] sm:$0xff]
  %v1114 = vld [vmem:[%s1109 + $0x20] sm:$0xff]
  %v1115 = vld [vmem:[%s1109 + $0x28] sm:$0xff]
  %v1116 = vld [vmem:[%s1109 + $0x30] sm:$0xff]
  %v1117 = vld [vmem:[%s1109 + $0x38] sm:$0xff]
  %v1118 = vld [vmem:[%s1109 + $0x40] sm:$0xff]
  %v1119 = vld [vmem:[%s1109 + $0x48] sm:$0xff]
  %v1120 = vld [vmem:[%s1109 + $0x50] sm:$0xff]
  %v1121 = vld [vmem:[%s1109 + $0x58] sm:$0xff]
  %v1122 = vld [vmem:[%s1109 + $0x60] sm:$0xff]
  %v1123 = vld [vmem:[%s1109 + $0x68] sm:$0xff]
  %v1124 = vld [vmem:[%s1109 + $0x70] sm:$0xff]
  %v1125 = vld [vmem:[%s1109 + $0x78] sm:$0xff]
  %v1126 = vld [vmem:[%s1109 + $0x80] sm:$0xff]
  %v1127 = vld [vmem:[%s1109 + $0x88] sm:$0xff]
  %v1128 = vld [vmem:[%s1109 + $0x90] sm:$0xff]
  %v1129 = vld [vmem:[%s1109 + $0x98] sm:$0xff]
  %v1130 = vld [vmem:[%s1109 + $0xa0] sm:$0xff]
  %v1131 = vld [vmem:[%s1109 + $0xa8] sm:$0xff]
  %v1132 = vld [vmem:[%s1109 + $0xb0] sm:$0xff]
  %v1133 = vld [vmem:[%s1109 + $0xb8] sm:$0xff]
  %v1134 = vld [vmem:[%s1109 + $0xc0] sm:$0xff]
  %v1135 = vld [vmem:[%s1109 + $0xc8] sm:$0xff]
  %v1136 = vld [vmem:[%s1109 + $0xd0] sm:$0xff]
  %v1137 = vld [vmem:[%s1109 + $0xd8] sm:$0xff]
  %v1138 = vld [vmem:[%s1109 + $0xe0] sm:$0xff]
  %v1139 = vld [vmem:[%s1109 + $0xe8] sm:$0xff]
  %v1140 = vld [vmem:[%s1109 + $0xf0] sm:$0xff]
  %v1141 = vld [vmem:[%s1109 + $0xf8] sm:$0xff]
  %1143 = vset.pattern.permute.xlu0 0
  %1144 = vperm.xlu0 %1143, %v1110
  %v1145 = vpop.permute.xlu0 %1144
  %1148 = vset.pattern.permute.xlu0 0
  %1149 = vperm.xlu0 %1148, %v1111
  %v1150 = vpop.permute.xlu0 %1149
  %1153 = vset.pattern.permute.xlu0 0
  %1154 = vperm.xlu0 %1153, %v1112
  %v1155 = vpop.permute.xlu0 %1154
  %1158 = vset.pattern.permute.xlu0 0
  %1159 = vperm.xlu0 %1158, %v1113
  %v1160 = vpop.permute.xlu0 %1159
  %1163 = vset.pattern.permute.xlu0 0
  %1164 = vperm.xlu0 %1163, %v1114
  %v1165 = vpop.permute.xlu0 %1164
  %1168 = vset.pattern.permute.xlu0 0
  %1169 = vperm.xlu0 %1168, %v1115
  %v1170 = vpop.permute.xlu0 %1169
  %1173 = vset.pattern.permute.xlu0 0
  %1174 = vperm.xlu0 %1173, %v1116
  %v1175 = vpop.permute.xlu0 %1174
  %1178 = vset.pattern.permute.xlu0 0
  %1179 = vperm.xlu0 %1178, %v1117
  %v1180 = vpop.permute.xlu0 %1179
  %1183 = vset.pattern.permute.xlu0 0
  %1184 = vperm.xlu0 %1183, %v1118
  %v1185 = vpop.permute.xlu0 %1184
  %1188 = vset.pattern.permute.xlu0 0
  %1189 = vperm.xlu0 %1188, %v1119
  %v1190 = vpop.permute.xlu0 %1189
  %1193 = vset.pattern.permute.xlu0 0
  %1194 = vperm.xlu0 %1193, %v1120
  %v1195 = vpop.permute.xlu0 %1194
  %1198 = vset.pattern.permute.xlu0 0
  %1199 = vperm.xlu0 %1198, %v1121
  %v1200 = vpop.permute.xlu0 %1199
  %1203 = vset.pattern.permute.xlu0 0
  %1204 = vperm.xlu0 %1203, %v1122
  %v1205 = vpop.permute.xlu0 %1204
  %1208 = vset.pattern.permute.xlu0 0
  %1209 = vperm.xlu0 %1208, %v1123
  %v1210 = vpop.permute.xlu0 %1209
  %1213 = vset.pattern.permute.xlu0 0
  %1214 = vperm.xlu0 %1213, %v1124
  %v1215 = vpop.permute.xlu0 %1214
  %1218 = vset.pattern.permute.xlu0 0
  %1219 = vperm.xlu0 %1218, %v1125
  %v1220 = vpop.permute.xlu0 %1219
  %1223 = vset.pattern.permute.xlu0 0
  %1224 = vperm.xlu0 %1223, %v1126
  %v1225 = vpop.permute.xlu0 %1224
  %1228 = vset.pattern.permute.xlu0 0
  %1229 = vperm.xlu0 %1228, %v1127
  %v1230 = vpop.permute.xlu0 %1229
  %1233 = vset.pattern.permute.xlu0 0
  %1234 = vperm.xlu0 %1233, %v1128
  %v1235 = vpop.permute.xlu0 %1234
  %1238 = vset.pattern.permute.xlu0 0
  %1239 = vperm.xlu0 %1238, %v1129
  %v1240 = vpop.permute.xlu0 %1239
  %1243 = vset.pattern.permute.xlu0 0
  %1244 = vperm.xlu0 %1243, %v1130
  %v1245 = vpop.permute.xlu0 %1244
  %1248 = vset.pattern.permute.xlu0 0
  %1249 = vperm.xlu0 %1248, %v1131
  %v1250 = vpop.permute.xlu0 %1249
  %1253 = vset.pattern.permute.xlu0 0
  %1254 = vperm.xlu0 %1253, %v1132
  %v1255 = vpop.permute.xlu0 %1254
  %1258 = vset.pattern.permute.xlu0 0
  %1259 = vperm.xlu0 %1258, %v1133
  %v1260 = vpop.permute.xlu0 %1259
  %1263 = vset.pattern.permute.xlu0 0
  %1264 = vperm.xlu0 %1263, %v1134
  %v1265 = vpop.permute.xlu0 %1264
  %1268 = vset.pattern.permute.xlu0 0
  %1269 = vperm.xlu0 %1268, %v1135
  %v1270 = vpop.permute.xlu0 %1269
  %1273 = vset.pattern.permute.xlu0 0
  %1274 = vperm.xlu0 %1273, %v1136
  %v1275 = vpop.permute.xlu0 %1274
  %1278 = vset.pattern.permute.xlu0 0
  %1279 = vperm.xlu0 %1278, %v1137
  %v1280 = vpop.permute.xlu0 %1279
  %1283 = vset.pattern.permute.xlu0 0
  %1284 = vperm.xlu0 %1283, %v1138
  %v1285 = vpop.permute.xlu0 %1284
  %1288 = vset.pattern.permute.xlu0 0
  %1289 = vperm.xlu0 %1288, %v1139
  %v1290 = vpop.permute.xlu0 %1289
  %1293 = vset.pattern.permute.xlu0 0
  %1294 = vperm.xlu0 %1293, %v1140
  %v1295 = vpop.permute.xlu0 %1294
  %1298 = vset.pattern.permute.xlu0 0
  %1299 = vperm.xlu0 %1298, %v1141
  %v1300 = vpop.permute.xlu0 %1299
  %v1302 = vmul.f32 %v983, %v1145
  %v1303 = vmul.f32 %v986, %v1150
  %v1304 = vmul.f32 %v991, %v1155
  %v1305 = vmul.f32 %v994, %v1160
  %v1306 = vmul.f32 %v999, %v1165
  %v1307 = vmul.f32 %v1002, %v1170
  %v1308 = vmul.f32 %v1007, %v1175
  %v1309 = vmul.f32 %v1010, %v1180
  %v1310 = vmul.f32 %v1015, %v1185
  %v1311 = vmul.f32 %v1018, %v1190
  %v1312 = vmul.f32 %v1023, %v1195
  %v1313 = vmul.f32 %v1026, %v1200
  %v1314 = vmul.f32 %v1031, %v1205
  %v1315 = vmul.f32 %v1034, %v1210
  %v1316 = vmul.f32 %v1039, %v1215
  %v1317 = vmul.f32 %v1042, %v1220
  %v1318 = vmul.f32 %v1047, %v1225
  %v1319 = vmul.f32 %v1050, %v1230
  %v1320 = vmul.f32 %v1055, %v1235
  %v1321 = vmul.f32 %v1058, %v1240
  %v1322 = vmul.f32 %v1063, %v1245
  %v1323 = vmul.f32 %v1066, %v1250
  %v1324 = vmul.f32 %v1071, %v1255
  %v1325 = vmul.f32 %v1074, %v1260
  %v1326 = vmul.f32 %v1079, %v1265
  %v1327 = vmul.f32 %v1082, %v1270
  %v1328 = vmul.f32 %v1087, %v1275
  %v1329 = vmul.f32 %v1090, %v1280
  %v1330 = vmul.f32 %v1095, %v1285
  %v1331 = vmul.f32 %v1098, %v1290
  %v1332 = vmul.f32 %v1103, %v1295
  %v1333 = vmul.f32 %v1106, %v1300
  %v1334 = vpack.c.bf16 %v1303, %v1302
  %v1335 = vpack.c.bf16 %v1305, %v1304
  %v1336 = vpack.c.bf16 %v1307, %v1306
  %v1337 = vpack.c.bf16 %v1309, %v1308
  %v1338 = vpack.c.bf16 %v1311, %v1310
  %v1339 = vpack.c.bf16 %v1313, %v1312
  %v1340 = vpack.c.bf16 %v1315, %v1314
  %v1341 = vpack.c.bf16 %v1317, %v1316
  %v1342 = vpack.c.bf16 %v1319, %v1318
  %v1343 = vpack.c.bf16 %v1321, %v1320
  %v1344 = vpack.c.bf16 %v1323, %v1322
  %v1345 = vpack.c.bf16 %v1325, %v1324
  %v1346 = vpack.c.bf16 %v1327, %v1326
  %v1347 = vpack.c.bf16 %v1329, %v1328
  %v1348 = vpack.c.bf16 %v1331, %v1330
  %v1349 = vpack.c.bf16 %v1333, %v1332
  %1350 = vst [vmem:[#allocation2 + $0x8] sm:$0xff] %v1334
  %1351 = vst [vmem:[#allocation2 + $0x30] sm:$0xff] %v1335
  %1352 = vst [vmem:[#allocation2 + $0x58] sm:$0xff] %v1336
  %1353 = vst [vmem:[#allocation2 + $0x80] sm:$0xff] %v1337
  %1354 = vst [vmem:[#allocation2 + $0xa8] sm:$0xff] %v1338
  %1355 = vst [vmem:[#allocation2 + $0xd0] sm:$0xff] %v1339
  %1356 = vst [vmem:[#allocation2 + $0xf8] sm:$0xff] %v1340
  %1357 = vst [vmem:[#allocation2 + $0x120] sm:$0xff] %v1341
  %1358 = vst [vmem:[#allocation2 + $0x148] sm:$0xff] %v1342
  %1359 = vst [vmem:[#allocation2 + $0x170] sm:$0xff] %v1343
  %1360 = vst [vmem:[#allocation2 + $0x198] sm:$0xff] %v1344
  %1361 = vst [vmem:[#allocation2 + $0x1c0] sm:$0xff] %v1345
  %1362 = vst [vmem:[#allocation2 + $0x1e8] sm:$0xff] %v1346
  %1363 = vst [vmem:[#allocation2 + $0x210] sm:$0xff] %v1347
  %1364 = vst [vmem:[#allocation2 + $0x238] sm:$0xff] %v1348
  %1365 = vst [vmem:[#allocation2 + $0x260] sm:$0xff] %v1349
  %s1366 = scalar_lea.vmem %s0, 512
  %v1367 = vld [vmem:[%s1366] sm:$0xff]
  %v1368 = vld [vmem:[%s1366 + $0x8] sm:$0xff]
  %v1369 = vld [vmem:[%s1366 + $0x10] sm:$0xff]
  %v1370 = vld [vmem:[%s1366 + $0x18] sm:$0xff]
  %v1371 = vld [vmem:[%s1366 + $0x20] sm:$0xff]
  %v1372 = vld [vmem:[%s1366 + $0x28] sm:$0xff]
  %v1373 = vld [vmem:[%s1366 + $0x30] sm:$0xff]
  %v1374 = vld [vmem:[%s1366 + $0x38] sm:$0xff]
  %v1375 = vld [vmem:[%s1366 + $0x40] sm:$0xff]
  %v1376 = vld [vmem:[%s1366 + $0x48] sm:$0xff]
  %v1377 = vld [vmem:[%s1366 + $0x50] sm:$0xff]
  %v1378 = vld [vmem:[%s1366 + $0x58] sm:$0xff]
  %v1379 = vld [vmem:[%s1366 + $0x60] sm:$0xff]
  %v1380 = vld [vmem:[%s1366 + $0x68] sm:$0xff]
  %v1381 = vld [vmem:[%s1366 + $0x70] sm:$0xff]
  %v1382 = vld [vmem:[%s1366 + $0x78] sm:$0xff]
  %v1383 = vld [vmem:[%s1366 + $0x80] sm:$0xff]
  %v1384 = vld [vmem:[%s1366 + $0x88] sm:$0xff]
  %v1385 = vld [vmem:[%s1366 + $0x90] sm:$0xff]
  %v1386 = vld [vmem:[%s1366 + $0x98] sm:$0xff]
  %v1387 = vld [vmem:[%s1366 + $0xa0] sm:$0xff]
  %v1388 = vld [vmem:[%s1366 + $0xa8] sm:$0xff]
  %v1389 = vld [vmem:[%s1366 + $0xb0] sm:$0xff]
  %v1390 = vld [vmem:[%s1366 + $0xb8] sm:$0xff]
  %v1391 = vld [vmem:[%s1366 + $0xc0] sm:$0xff]
  %v1392 = vld [vmem:[%s1366 + $0xc8] sm:$0xff]
  %v1393 = vld [vmem:[%s1366 + $0xd0] sm:$0xff]
  %v1394 = vld [vmem:[%s1366 + $0xd8] sm:$0xff]
  %v1395 = vld [vmem:[%s1366 + $0xe0] sm:$0xff]
  %v1396 = vld [vmem:[%s1366 + $0xe8] sm:$0xff]
  %v1397 = vld [vmem:[%s1366 + $0xf0] sm:$0xff]
  %v1398 = vld [vmem:[%s1366 + $0xf8] sm:$0xff]
  %v1431 = vunpack.c.l.b16 %v1367
  %v1432 = vunpack.c.h.b16 %v1367
  %v1433 = vunpack.c.l.b16 %v1368
  %v1434 = vunpack.c.h.b16 %v1368
  %v1435 = vunpack.c.l.b16 %v1369
  %v1436 = vunpack.c.h.b16 %v1369
  %v1437 = vunpack.c.l.b16 %v1370
  %v1438 = vunpack.c.h.b16 %v1370
  %v1439 = vunpack.c.l.b16 %v1371
  %v1440 = vunpack.c.h.b16 %v1371
  %v1441 = vunpack.c.l.b16 %v1372
  %v1442 = vunpack.c.h.b16 %v1372
  %v1443 = vunpack.c.l.b16 %v1373
  %v1444 = vunpack.c.h.b16 %v1373
  %v1445 = vunpack.c.l.b16 %v1374
  %v1446 = vunpack.c.h.b16 %v1374
  %v1447 = vunpack.c.l.b16 %v1375
  %v1448 = vunpack.c.h.b16 %v1375
  %v1449 = vunpack.c.l.b16 %v1376
  %v1450 = vunpack.c.h.b16 %v1376
  %v1451 = vunpack.c.l.b16 %v1377
  %v1452 = vunpack.c.h.b16 %v1377
  %v1453 = vunpack.c.l.b16 %v1378
  %v1454 = vunpack.c.h.b16 %v1378
  %v1455 = vunpack.c.l.b16 %v1379
  %v1456 = vunpack.c.h.b16 %v1379
  %v1457 = vunpack.c.l.b16 %v1380
  %v1458 = vunpack.c.h.b16 %v1380
  %v1459 = vunpack.c.l.b16 %v1381
  %v1460 = vunpack.c.h.b16 %v1381
  %v1461 = vunpack.c.l.b16 %v1382
  %v1462 = vunpack.c.h.b16 %v1382
  %v1463 = vunpack.c.l.b16 %v1383
  %v1464 = vunpack.c.h.b16 %v1383
  %v1465 = vunpack.c.l.b16 %v1384
  %v1466 = vunpack.c.h.b16 %v1384
  %v1467 = vunpack.c.l.b16 %v1385
  %v1468 = vunpack.c.h.b16 %v1385
  %v1469 = vunpack.c.l.b16 %v1386
  %v1470 = vunpack.c.h.b16 %v1386
  %v1471 = vunpack.c.l.b16 %v1387
  %v1472 = vunpack.c.h.b16 %v1387
  %v1473 = vunpack.c.l.b16 %v1388
  %v1474 = vunpack.c.h.b16 %v1388
  %v1475 = vunpack.c.l.b16 %v1389
  %v1476 = vunpack.c.h.b16 %v1389
  %v1477 = vunpack.c.l.b16 %v1390
  %v1478 = vunpack.c.h.b16 %v1390
  %v1479 = vunpack.c.l.b16 %v1391
  %v1480 = vunpack.c.h.b16 %v1391
  %v1481 = vunpack.c.l.b16 %v1392
  %v1482 = vunpack.c.h.b16 %v1392
  %v1483 = vunpack.c.l.b16 %v1393
  %v1484 = vunpack.c.h.b16 %v1393
  %v1485 = vunpack.c.l.b16 %v1394
  %v1486 = vunpack.c.h.b16 %v1394
  %v1487 = vunpack.c.l.b16 %v1395
  %v1488 = vunpack.c.h.b16 %v1395
  %v1489 = vunpack.c.l.b16 %v1396
  %v1490 = vunpack.c.h.b16 %v1396
  %v1491 = vunpack.c.l.b16 %v1397
  %v1492 = vunpack.c.h.b16 %v1397
  %v1493 = vunpack.c.l.b16 %v1398
  %v1494 = vunpack.c.h.b16 %v1398
  %v1495 = vpack.c.b16 %v1433, %v1431
  %v1496 = vpack.c.b16 %v1434, %v1432
  %v1497 = vpack.c.b16 %v1437, %v1435
  %v1498 = vpack.c.b16 %v1438, %v1436
  %v1499 = vpack.c.b16 %v1441, %v1439
  %v1500 = vpack.c.b16 %v1442, %v1440
  %v1501 = vpack.c.b16 %v1445, %v1443
  %v1502 = vpack.c.b16 %v1446, %v1444
  %v1503 = vpack.c.b16 %v1449, %v1447
  %v1504 = vpack.c.b16 %v1450, %v1448
  %v1505 = vpack.c.b16 %v1453, %v1451
  %v1506 = vpack.c.b16 %v1454, %v1452
  %v1507 = vpack.c.b16 %v1457, %v1455
  %v1508 = vpack.c.b16 %v1458, %v1456
  %v1509 = vpack.c.b16 %v1461, %v1459
  %v1510 = vpack.c.b16 %v1462, %v1460
  %v1511 = vpack.c.b16 %v1465, %v1463
  %v1512 = vpack.c.b16 %v1466, %v1464
  %v1513 = vpack.c.b16 %v1469, %v1467
  %v1514 = vpack.c.b16 %v1470, %v1468
  %v1515 = vpack.c.b16 %v1473, %v1471
  %v1516 = vpack.c.b16 %v1474, %v1472
  %v1517 = vpack.c.b16 %v1477, %v1475
  %v1518 = vpack.c.b16 %v1478, %v1476
  %v1519 = vpack.c.b16 %v1481, %v1479
  %v1520 = vpack.c.b16 %v1482, %v1480
  %v1521 = vpack.c.b16 %v1485, %v1483
  %v1522 = vpack.c.b16 %v1486, %v1484
  %v1523 = vpack.c.b16 %v1489, %v1487
  %v1524 = vpack.c.b16 %v1490, %v1488
  %v1525 = vpack.c.b16 %v1493, %v1491
  %v1526 = vpack.c.b16 %v1494, %v1492
  %1559 = vmatprep.subr.bf16.mxu0 0
  %1560 = vmatpush1.bf16.msra.mxu0 %v306
  %1561 = vmatprep.subr.bf16.mxu0 0
  %1562 = vmatpush1.bf16.msra.mxu0 %v307
  %1563 = vmatprep.subr.bf16.mxu0 0
  %1564 = vmatpush1.bf16.msra.mxu0 %v308
  %1565 = vmatprep.subr.bf16.mxu0 0
  %1566 = vmatpush1.bf16.msra.mxu0 %v309
  %1567 = vmatprep.subr.bf16.mxu0 0
  %1568 = vmatpush1.bf16.msra.mxu0 %v310
  %1569 = vmatprep.subr.bf16.mxu0 0
  %1570 = vmatpush1.bf16.msra.mxu0 %v311
  %1571 = vmatprep.subr.bf16.mxu0 0
  %1572 = vmatpush1.bf16.msra.mxu0 %v312
  %1573 = vmatprep.subr.bf16.mxu0 0
  %1574 = vmatpush1.bf16.msra.mxu0 %v313
  %1575 = vmatprep.subr.bf16.mxu0 0
  %1576 = vmatpush1.bf16.msra.mxu0 %v314
  %1577 = vmatprep.subr.bf16.mxu0 0
  %1578 = vmatpush1.bf16.msra.mxu0 %v315
  %1579 = vmatprep.subr.bf16.mxu0 0
  %1580 = vmatpush1.bf16.msra.mxu0 %v316
  %1581 = vmatprep.subr.bf16.mxu0 0
  %1582 = vmatpush1.bf16.msra.mxu0 %v317
  %1583 = vmatprep.subr.bf16.mxu0 0
  %1584 = vmatpush1.bf16.msra.mxu0 %v318
  %1585 = vmatprep.subr.bf16.mxu0 0
  %1586 = vmatpush1.bf16.msra.mxu0 %v319
  %1587 = vmatprep.subr.bf16.mxu0 0
  %1588 = vmatpush1.bf16.msra.mxu0 %v320
  %1589 = vmatprep.subr.bf16.mxu0 0
  %1590 = vmatpush1.bf16.msra.mxu0 %v321
  %1591 = vmatprep.mubr.bf16.mxu0 %v1496
  %1592 = vmatmul.mubr.bf16.gmra.mrb[0].mxu0 %v1495
  %v1593 = vpop.f32.mrb[0].mxu0
  %v1594 = vadd.f32 0.0, %v1593
  %v1595 = vpop.f32.mrb[0].mxu0
  %v1596 = vpop.f32.mrb[0].mxu0
  %v1597 = vadd.f32 0.0, %v1596
  %v1598 = vpop.f32.mrb[0].mxu0
  %1599 = vmatprep.mubr.bf16.mxu0 %v1498
  %1600 = vmatmul.mubr.bf16.gmra.mrb[0].mxu0 %v1497
  %v1601 = vpop.f32.mrb[0].mxu0
  %v1602 = vadd.f32 0.0, %v1601
  %v1603 = vpop.f32.mrb[0].mxu0
  %v1604 = vpop.f32.mrb[0].mxu0
  %v1605 = vadd.f32 0.0, %v1604
  %v1606 = vpop.f32.mrb[0].mxu0
  %1607 = vmatprep.mubr.bf16.mxu0 %v1500
  %1608 = vmatmul.mubr.bf16.gmra.mrb[0].mxu0 %v1499
  %v1609 = vpop.f32.mrb[0].mxu0
  %v1610 = vadd.f32 0.0, %v1609
  %v1611 = vpop.f32.mrb[0].mxu0
  %v1612 = vpop.f32.mrb[0].mxu0
  %v1613 = vadd.f32 0.0, %v1612
  %v1614 = vpop.f32.mrb[0].mxu0
  %1615 = vmatprep.mubr.bf16.mxu0 %v1502
  %1616 = vmatmul.mubr.bf16.gmra.mrb[0].mxu0 %v1501
  %v1617 = vpop.f32.mrb[0].mxu0
  %v1618 = vadd.f32 0.0, %v1617
  %v1619 = vpop.f32.mrb[0].mxu0
  %v1620 = vpop.f32.mrb[0].mxu0
  %v1621 = vadd.f32 0.0, %v1620
  %v1622 = vpop.f32.mrb[0].mxu0
  %1623 = vmatprep.mubr.bf16.mxu0 %v1504
  %1624 = vmatmul.mubr.bf16.gmra.mrb[0].mxu0 %v1503
  %v1625 = vpop.f32.mrb[0].mxu0
  %v1626 = vadd.f32 0.0, %v1625
  %v1627 = vpop.f32.mrb[0].mxu0
  %v1628 = vpop.f32.mrb[0].mxu0
  %v1629 = vadd.f32 0.0, %v1628
  %v1630 = vpop.f32.mrb[0].mxu0
  %1631 = vmatprep.mubr.bf16.mxu0 %v1506
  %1632 = vmatmul.mubr.bf16.gmra.mrb[0].mxu0 %v1505
  %v1633 = vpop.f32.mrb[0].mxu0
  %v1634 = vadd.f32 0.0, %v1633
  %v1635 = vpop.f32.mrb[0].mxu0
  %v1636 = vpop.f32.mrb[0].mxu0
  %v1637 = vadd.f32 0.0, %v1636
  %v1638 = vpop.f32.mrb[0].mxu0
  %1639 = vmatprep.mubr.bf16.mxu0 %v1508
  %1640 = vmatmul.mubr.bf16.gmra.mrb[0].mxu0 %v1507
  %v1641 = vpop.f32.mrb[0].mxu0
  %v1642 = vadd.f32 0.0, %v1641
  %v1643 = vpop.f32.mrb[0].mxu0
  %v1644 = vpop.f32.mrb[0].mxu0
  %v1645 = vadd.f32 0.0, %v1644
  %v1646 = vpop.f32.mrb[0].mxu0
  %1647 = vmatprep.mubr.bf16.mxu0 %v1510
  %1648 = vmatmul.mubr.bf16.gmra.mrb[0].mxu0 %v1509
  %v1649 = vpop.f32.mrb[0].mxu0
  %v1650 = vadd.f32 0.0, %v1649
  %v1651 = vpop.f32.mrb[0].mxu0
  %v1652 = vpop.f32.mrb[0].mxu0
  %v1653 = vadd.f32 0.0, %v1652
  %v1654 = vpop.f32.mrb[0].mxu0
  %1655 = vmatprep.mubr.bf16.mxu0 %v1512
  %1656 = vmatmul.mubr.bf16.gmra.mrb[0].mxu0 %v1511
  %v1657 = vpop.f32.mrb[0].mxu0
  %v1658 = vadd.f32 0.0, %v1657
  %v1659 = vpop.f32.mrb[0].mxu0
  %v1660 = vpop.f32.mrb[0].mxu0
  %v1661 = vadd.f32 0.0, %v1660
  %v1662 = vpop.f32.mrb[0].mxu0
  %1663 = vmatprep.mubr.bf16.mxu0 %v1514
  %1664 = vmatmul.mubr.bf16.gmra.mrb[0].mxu0 %v1513
  %v1665 = vpop.f32.mrb[0].mxu0
  %v1666 = vadd.f32 0.0, %v1665
  %v1667 = vpop.f32.mrb[0].mxu0
  %v1668 = vpop.f32.mrb[0].mxu0
  %v1669 = vadd.f32 0.0, %v1668
  %v1670 = vpop.f32.mrb[0].mxu0
  %1671 = vmatprep.mubr.bf16.mxu0 %v1516
  %1672 = vmatmul.mubr.bf16.gmra.mrb[0].mxu0 %v1515
  %v1673 = vpop.f32.mrb[0].mxu0
  %v1674 = vadd.f32 0.0, %v1673
  %v1675 = vpop.f32.mrb[0].mxu0
  %v1676 = vpop.f32.mrb[0].mxu0
  %v1677 = vadd.f32 0.0, %v1676
  %v1678 = vpop.f32.mrb[0].mxu0
  %1679 = vmatprep.mubr.bf16.mxu0 %v1518
  %1680 = vmatmul.mubr.bf16.gmra.mrb[0].mxu0 %v1517
  %v1681 = vpop.f32.mrb[0].mxu0
  %v1682 = vadd.f32 0.0, %v1681
  %v1683 = vpop.f32.mrb[0].mxu0
  %v1684 = vpop.f32.mrb[0].mxu0
  %v1685 = vadd.f32 0.0, %v1684
  %v1686 = vpop.f32.mrb[0].mxu0
  %1687 = vmatprep.mubr.bf16.mxu0 %v1520
  %1688 = vmatmul.mubr.bf16.gmra.mrb[0].mxu0 %v1519
  %v1689 = vpop.f32.mrb[0].mxu0
  %v1690 = vadd.f32 0.0, %v1689
  %v1691 = vpop.f32.mrb[0].mxu0
  %v1692 = vpop.f32.mrb[0].mxu0
  %v1693 = vadd.f32 0.0, %v1692
  %v1694 = vpop.f32.mrb[0].mxu0
  %1695 = vmatprep.mubr.bf16.mxu0 %v1522
  %1696 = vmatmul.mubr.bf16.gmra.mrb[0].mxu0 %v1521
  %v1697 = vpop.f32.mrb[0].mxu0
  %v1698 = vadd.f32 0.0, %v1697
  %v1699 = vpop.f32.mrb[0].mxu0
  %v1700 = vpop.f32.mrb[0].mxu0
  %v1701 = vadd.f32 0.0, %v1700
  %v1702 = vpop.f32.mrb[0].mxu0
  %1703 = vmatprep.mubr.bf16.mxu0 %v1524
  %1704 = vmatmul.mubr.bf16.gmra.mrb[0].mxu0 %v1523
  %v1705 = vpop.f32.mrb[0].mxu0
  %v1706 = vadd.f32 0.0, %v1705
  %v1707 = vpop.f32.mrb[0].mxu0
  %v1708 = vpop.f32.mrb[0].mxu0
  %v1709 = vadd.f32 0.0, %v1708
  %v1710 = vpop.f32.mrb[0].mxu0
  %1711 = vmatprep.mubr.bf16.mxu0 %v1526
  %1712 = vmatmul.mubr.bf16.gmra.mrb[0].mxu0 %v1525
  %v1713 = vpop.f32.mrb[0].mxu0
  %v1714 = vadd.f32 0.0, %v1713
  %v1715 = vpop.f32.mrb[0].mxu0
  %v1716 = vpop.f32.mrb[0].mxu0
  %v1717 = vadd.f32 0.0, %v1716
  %v1718 = vpop.f32.mrb[0].mxu0
  %1719 = vdwg.mxu0
  %s1720 = scalar_lea.vmem %s1, 512
  %v1721 = vld [vmem:[%s1720] sm:$0xff]
  %v1722 = vld [vmem:[%s1720 + $0x8] sm:$0xff]
  %v1723 = vld [vmem:[%s1720 + $0x10] sm:$0xff]
  %v1724 = vld [vmem:[%s1720 + $0x18] sm:$0xff]
  %v1725 = vld [vmem:[%s1720 + $0x20] sm:$0xff]
  %v1726 = vld [vmem:[%s1720 + $0x28] sm:$0xff]
  %v1727 = vld [vmem:[%s1720 + $0x30] sm:$0xff]
  %v1728 = vld [vmem:[%s1720 + $0x38] sm:$0xff]
  %v1729 = vld [vmem:[%s1720 + $0x40] sm:$0xff]
  %v1730 = vld [vmem:[%s1720 + $0x48] sm:$0xff]
  %v1731 = vld [vmem:[%s1720 + $0x50] sm:$0xff]
  %v1732 = vld [vmem:[%s1720 + $0x58] sm:$0xff]
  %v1733 = vld [vmem:[%s1720 + $0x60] sm:$0xff]
  %v1734 = vld [vmem:[%s1720 + $0x68] sm:$0xff]
  %v1735 = vld [vmem:[%s1720 + $0x70] sm:$0xff]
  %v1736 = vld [vmem:[%s1720 + $0x78] sm:$0xff]
  %v1737 = vld [vmem:[%s1720 + $0x80] sm:$0xff]
  %v1738 = vld [vmem:[%s1720 + $0x88] sm:$0xff]
  %v1739 = vld [vmem:[%s1720 + $0x90] sm:$0xff]
  %v1740 = vld [vmem:[%s1720 + $0x98] sm:$0xff]
  %v1741 = vld [vmem:[%s1720 + $0xa0] sm:$0xff]
  %v1742 = vld [vmem:[%s1720 + $0xa8] sm:$0xff]
  %v1743 = vld [vmem:[%s1720 + $0xb0] sm:$0xff]
  %v1744 = vld [vmem:[%s1720 + $0xb8] sm:$0xff]
  %v1745 = vld [vmem:[%s1720 + $0xc0] sm:$0xff]
  %v1746 = vld [vmem:[%s1720 + $0xc8] sm:$0xff]
  %v1747 = vld [vmem:[%s1720 + $0xd0] sm:$0xff]
  %v1748 = vld [vmem:[%s1720 + $0xd8] sm:$0xff]
  %v1749 = vld [vmem:[%s1720 + $0xe0] sm:$0xff]
  %v1750 = vld [vmem:[%s1720 + $0xe8] sm:$0xff]
  %v1751 = vld [vmem:[%s1720 + $0xf0] sm:$0xff]
  %v1752 = vld [vmem:[%s1720 + $0xf8] sm:$0xff]
  %1754 = vset.pattern.permute.xlu0 0
  %1755 = vperm.xlu0 %1754, %v1721
  %v1756 = vpop.permute.xlu0 %1755
  %1759 = vset.pattern.permute.xlu0 0
  %1760 = vperm.xlu0 %1759, %v1722
  %v1761 = vpop.permute.xlu0 %1760
  %1764 = vset.pattern.permute.xlu0 0
  %1765 = vperm.xlu0 %1764, %v1723
  %v1766 = vpop.permute.xlu0 %1765
  %1769 = vset.pattern.permute.xlu0 0
  %1770 = vperm.xlu0 %1769, %v1724
  %v1771 = vpop.permute.xlu0 %1770
  %1774 = vset.pattern.permute.xlu0 0
  %1775 = vperm.xlu0 %1774, %v1725
  %v1776 = vpop.permute.xlu0 %1775
  %1779 = vset.pattern.permute.xlu0 0
  %1780 = vperm.xlu0 %1779, %v1726
  %v1781 = vpop.permute.xlu0 %1780
  %1784 = vset.pattern.permute.xlu0 0
  %1785 = vperm.xlu0 %1784, %v1727
  %v1786 = vpop.permute.xlu0 %1785
  %1789 = vset.pattern.permute.xlu0 0
  %1790 = vperm.xlu0 %1789, %v1728
  %v1791 = vpop.permute.xlu0 %1790
  %1794 = vset.pattern.permute.xlu0 0
  %1795 = vperm.xlu0 %1794, %v1729
  %v1796 = vpop.permute.xlu0 %1795
  %1799 = vset.pattern.permute.xlu0 0
  %1800 = vperm.xlu0 %1799, %v1730
  %v1801 = vpop.permute.xlu0 %1800
  %1804 = vset.pattern.permute.xlu0 0
  %1805 = vperm.xlu0 %1804, %v1731
  %v1806 = vpop.permute.xlu0 %1805
  %1809 = vset.pattern.permute.xlu0 0
  %1810 = vperm.xlu0 %1809, %v1732
  %v1811 = vpop.permute.xlu0 %1810
  %1814 = vset.pattern.permute.xlu0 0
  %1815 = vperm.xlu0 %1814, %v1733
  %v1816 = vpop.permute.xlu0 %1815
  %1819 = vset.pattern.permute.xlu0 0
  %1820 = vperm.xlu0 %1819, %v1734
  %v1821 = vpop.permute.xlu0 %1820
  %1824 = vset.pattern.permute.xlu0 0
  %1825 = vperm.xlu0 %1824, %v1735
  %v1826 = vpop.permute.xlu0 %1825
  %1829 = vset.pattern.permute.xlu0 0
  %1830 = vperm.xlu0 %1829, %v1736
  %v1831 = vpop.permute.xlu0 %1830
  %1834 = vset.pattern.permute.xlu0 0
  %1835 = vperm.xlu0 %1834, %v1737
  %v1836 = vpop.permute.xlu0 %1835
  %1839 = vset.pattern.permute.xlu0 0
  %1840 = vperm.xlu0 %1839, %v1738
  %v1841 = vpop.permute.xlu0 %1840
  %1844 = vset.pattern.permute.xlu0 0
  %1845 = vperm.xlu0 %1844, %v1739
  %v1846 = vpop.permute.xlu0 %1845
  %1849 = vset.pattern.permute.xlu0 0
  %1850 = vperm.xlu0 %1849, %v1740
  %v1851 = vpop.permute.xlu0 %1850
  %1854 = vset.pattern.permute.xlu0 0
  %1855 = vperm.xlu0 %1854, %v1741
  %v1856 = vpop.permute.xlu0 %1855
  %1859 = vset.pattern.permute.xlu0 0
  %1860 = vperm.xlu0 %1859, %v1742
  %v1861 = vpop.permute.xlu0 %1860
  %1864 = vset.pattern.permute.xlu0 0
  %1865 = vperm.xlu0 %1864, %v1743
  %v1866 = vpop.permute.xlu0 %1865
  %1869 = vset.pattern.permute.xlu0 0
  %1870 = vperm.xlu0 %1869, %v1744
  %v1871 = vpop.permute.xlu0 %1870
  %1874 = vset.pattern.permute.xlu0 0
  %1875 = vperm.xlu0 %1874, %v1745
  %v1876 = vpop.permute.xlu0 %1875
  %1879 = vset.pattern.permute.xlu0 0
  %1880 = vperm.xlu0 %1879, %v1746
  %v1881 = vpop.permute.xlu0 %1880
  %1884 = vset.pattern.permute.xlu0 0
  %1885 = vperm.xlu0 %1884, %v1747
  %v1886 = vpop.permute.xlu0 %1885
  %1889 = vset.pattern.permute.xlu0 0
  %1890 = vperm.xlu0 %1889, %v1748
  %v1891 = vpop.permute.xlu0 %1890
  %1894 = vset.pattern.permute.xlu0 0
  %1895 = vperm.xlu0 %1894, %v1749
  %v1896 = vpop.permute.xlu0 %1895
  %1899 = vset.pattern.permute.xlu0 0
  %1900 = vperm.xlu0 %1899, %v1750
  %v1901 = vpop.permute.xlu0 %1900
  %1904 = vset.pattern.permute.xlu0 0
  %1905 = vperm.xlu0 %1904, %v1751
  %v1906 = vpop.permute.xlu0 %1905
  %1909 = vset.pattern.permute.xlu0 0
  %1910 = vperm.xlu0 %1909, %v1752
  %v1911 = vpop.permute.xlu0 %1910
  %v1913 = vmul.f32 %v1594, %v1756
  %v1914 = vmul.f32 %v1597, %v1761
  %v1915 = vmul.f32 %v1602, %v1766
  %v1916 = vmul.f32 %v1605, %v1771
  %v1917 = vmul.f32 %v1610, %v1776
  %v1918 = vmul.f32 %v1613, %v1781
  %v1919 = vmul.f32 %v1618, %v1786
  %v1920 = vmul.f32 %v1621, %v1791
  %v1921 = vmul.f32 %v1626, %v1796
  %v1922 = vmul.f32 %v1629, %v1801
  %v1923 = vmul.f32 %v1634, %v1806
  %v1924 = vmul.f32 %v1637, %v1811
  %v1925 = vmul.f32 %v1642, %v1816
  %v1926 = vmul.f32 %v1645, %v1821
  %v1927 = vmul.f32 %v1650, %v1826
  %v1928 = vmul.f32 %v1653, %v1831
  %v1929 = vmul.f32 %v1658, %v1836
  %v1930 = vmul.f32 %v1661, %v1841
  %v1931 = vmul.f32 %v1666, %v1846
  %v1932 = vmul.f32 %v1669, %v1851
  %v1933 = vmul.f32 %v1674, %v1856
  %v1934 = vmul.f32 %v1677, %v1861
  %v1935 = vmul.f32 %v1682, %v1866
  %v1936 = vmul.f32 %v1685, %v1871
  %v1937 = vmul.f32 %v1690, %v1876
  %v1938 = vmul.f32 %v1693, %v1881
  %v1939 = vmul.f32 %v1698, %v1886
  %v1940 = vmul.f32 %v1701, %v1891
  %v1941 = vmul.f32 %v1706, %v1896
  %v1942 = vmul.f32 %v1709, %v1901
  %v1943 = vmul.f32 %v1714, %v1906
  %v1944 = vmul.f32 %v1717, %v1911
  %v1945 = vpack.c.bf16 %v1914, %v1913
  %v1946 = vpack.c.bf16 %v1916, %v1915
  %v1947 = vpack.c.bf16 %v1918, %v1917
  %v1948 = vpack.c.bf16 %v1920, %v1919
  %v1949 = vpack.c.bf16 %v1922, %v1921
  %v1950 = vpack.c.bf16 %v1924, %v1923
  %v1951 = vpack.c.bf16 %v1926, %v1925
  %v1952 = vpack.c.bf16 %v1928, %v1927
  %v1953 = vpack.c.bf16 %v1930, %v1929
  %v1954 = vpack.c.bf16 %v1932, %v1931
  %v1955 = vpack.c.bf16 %v1934, %v1933
  %v1956 = vpack.c.bf16 %v1936, %v1935
  %v1957 = vpack.c.bf16 %v1938, %v1937
  %v1958 = vpack.c.bf16 %v1940, %v1939
  %v1959 = vpack.c.bf16 %v1942, %v1941
  %v1960 = vpack.c.bf16 %v1944, %v1943
  %1961 = vst [vmem:[#allocation2 + $0x10] sm:$0xff] %v1945
  %1962 = vst [vmem:[#allocation2 + $0x38] sm:$0xff] %v1946
  %1963 = vst [vmem:[#allocation2 + $0x60] sm:$0xff] %v1947
  %1964 = vst [vmem:[#allocation2 + $0x88] sm:$0xff] %v1948
  %1965 = vst [vmem:[#allocation2 + $0xb0] sm:$0xff] %v1949
  %1966 = vst [vmem:[#allocation2 + $0xd8] sm:$0xff] %v1950
  %1967 = vst [vmem:[#allocation2 + $0x100] sm:$0xff] %v1951
  %1968 = vst [vmem:[#allocation2 + $0x128] sm:$0xff] %v1952
  %1969 = vst [vmem:[#allocation2 + $0x150] sm:$0xff] %v1953
  %1970 = vst [vmem:[#allocation2 + $0x178] sm:$0xff] %v1954
  %1971 = vst [vmem:[#allocation2 + $0x1a0] sm:$0xff] %v1955
  %1972 = vst [vmem:[#allocation2 + $0x1c8] sm:$0xff] %v1956
  %1973 = vst [vmem:[#allocation2 + $0x1f0] sm:$0xff] %v1957
  %1974 = vst [vmem:[#allocation2 + $0x218] sm:$0xff] %v1958
  %1975 = vst [vmem:[#allocation2 + $0x240] sm:$0xff] %v1959
  %1976 = vst [vmem:[#allocation2 + $0x268] sm:$0xff] %v1960
  %s1977 = scalar_lea.vmem %s0, 768
  %v1978 = vld [vmem:[%s1977] sm:$0xff]
  %v1979 = vld [vmem:[%s1977 + $0x8] sm:$0xff]
  %v1980 = vld [vmem:[%s1977 + $0x10] sm:$0xff]
  %v1981 = vld [vmem:[%s1977 + $0x18] sm:$0xff]
  %v1982 = vld [vmem:[%s1977 + $0x20] sm:$0xff]
  %v1983 = vld [vmem:[%s1977 + $0x28] sm:$0xff]
  %v1984 = vld [vmem:[%s1977 + $0x30] sm:$0xff]
  %v1985 = vld [vmem:[%s1977 + $0x38] sm:$0xff]
  %v1986 = vld [vmem:[%s1977 + $0x40] sm:$0xff]
  %v1987 = vld [vmem:[%s1977 + $0x48] sm:$0xff]
  %v1988 = vld [vmem:[%s1977 + $0x50] sm:$0xff]
  %v1989 = vld [vmem:[%s1977 + $0x58] sm:$0xff]
  %v1990 = vld [vmem:[%s1977 + $0x60] sm:$0xff]
  %v1991 = vld [vmem:[%s1977 + $0x68] sm:$0xff]
  %v1992 = vld [vmem:[%s1977 + $0x70] sm:$0xff]
  %v1993 = vld [vmem:[%s1977 + $0x78] sm:$0xff]
  %v1994 = vld [vmem:[%s1977 + $0x80] sm:$0xff]
  %v1995 = vld [vmem:[%s1977 + $0x88] sm:$0xff]
  %v1996 = vld [vmem:[%s1977 + $0x90] sm:$0xff]
  %v1997 = vld [vmem:[%s1977 + $0x98] sm:$0xff]
  %v1998 = vld [vmem:[%s1977 + $0xa0] sm:$0xff]
  %v1999 = vld [vmem:[%s1977 + $0xa8] sm:$0xff]
  %v2000 = vld [vmem:[%s1977 + $0xb0] sm:$0xff]
  %v2001 = vld [vmem:[%s1977 + $0xb8] sm:$0xff]
  %v2002 = vld [vmem:[%s1977 + $0xc0] sm:$0xff]
  %v2003 = vld [vmem:[%s1977 + $0xc8] sm:$0xff]
  %v2004 = vld [vmem:[%s1977 + $0xd0] sm:$0xff]
  %v2005 = vld [vmem:[%s1977 + $0xd8] sm:$0xff]
  %v2006 = vld [vmem:[%s1977 + $0xe0] sm:$0xff]
  %v2007 = vld [vmem:[%s1977 + $0xe8] sm:$0xff]
  %v2008 = vld [vmem:[%s1977 + $0xf0] sm:$0xff]
  %v2009 = vld [vmem:[%s1977 + $0xf8] sm:$0xff]
  %v2042 = vunpack.c.l.b16 %v1978
  %v2043 = vunpack.c.h.b16 %v1978
  %v2044 = vunpack.c.l.b16 %v1979
  %v2045 = vunpack.c.h.b16 %v1979
  %v2046 = vunpack.c.l.b16 %v1980
  %v2047 = vunpack.c.h.b16 %v1980
  %v2048 = vunpack.c.l.b16 %v1981
  %v2049 = vunpack.c.h.b16 %v1981
  %v2050 = vunpack.c.l.b16 %v1982
  %v2051 = vunpack.c.h.b16 %v1982
  %v2052 = vunpack.c.l.b16 %v1983
  %v2053 = vunpack.c.h.b16 %v1983
  %v2054 = vunpack.c.l.b16 %v1984
  %v2055 = vunpack.c.h.b16 %v1984
  %v2056 = vunpack.c.l.b16 %v1985
  %v2057 = vunpack.c.h.b16 %v1985
  %v2058 = vunpack.c.l.b16 %v1986
  %v2059 = vunpack.c.h.b16 %v1986
  %v2060 = vunpack.c.l.b16 %v1987
  %v2061 = vunpack.c.h.b16 %v1987
  %v2062 = vunpack.c.l.b16 %v1988
  %v2063 = vunpack.c.h.b16 %v1988
  %v2064 = vunpack.c.l.b16 %v1989
  %v2065 = vunpack.c.h.b16 %v1989
  %v2066 = vunpack.c.l.b16 %v1990
  %v2067 = vunpack.c.h.b16 %v1990
  %v2068 = vunpack.c.l.b16 %v1991
  %v2069 = vunpack.c.h.b16 %v1991
  %v2070 = vunpack.c.l.b16 %v1992
  %v2071 = vunpack.c.h.b16 %v1992
  %v2072 = vunpack.c.l.b16 %v1993
  %v2073 = vunpack.c.h.b16 %v1993
  %v2074 = vunpack.c.l.b16 %v1994
  %v2075 = vunpack.c.h.b16 %v1994
  %v2076 = vunpack.c.l.b16 %v1995
  %v2077 = vunpack.c.h.b16 %v1995
  %v2078 = vunpack.c.l.b16 %v1996
  %v2079 = vunpack.c.h.b16 %v1996
  %v2080 = vunpack.c.l.b16 %v1997
  %v2081 = vunpack.c.h.b16 %v1997
  %v2082 = vunpack.c.l.b16 %v1998
  %v2083 = vunpack.c.h.b16 %v1998
  %v2084 = vunpack.c.l.b16 %v1999
  %v2085 = vunpack.c.h.b16 %v1999
  %v2086 = vunpack.c.l.b16 %v2000
  %v2087 = vunpack.c.h.b16 %v2000
  %v2088 = vunpack.c.l.b16 %v2001
  %v2089 = vunpack.c.h.b16 %v2001
  %v2090 = vunpack.c.l.b16 %v2002
  %v2091 = vunpack.c.h.b16 %v2002
  %v2092 = vunpack.c.l.b16 %v2003
  %v2093 = vunpack.c.h.b16 %v2003
  %v2094 = vunpack.c.l.b16 %v2004
  %v2095 = vunpack.c.h.b16 %v2004
  %v2096 = vunpack.c.l.b16 %v2005
  %v2097 = vunpack.c.h.b16 %v2005
  %v2098 = vunpack.c.l.b16 %v2006
  %v2099 = vunpack.c.h.b16 %v2006
  %v2100 = vunpack.c.l.b16 %v2007
  %v2101 = vunpack.c.h.b16 %v2007
  %v2102 = vunpack.c.l.b16 %v2008
  %v2103 = vunpack.c.h.b16 %v2008
  %v2104 = vunpack.c.l.b16 %v2009
  %v2105 = vunpack.c.h.b16 %v2009
  %v2106 = vpack.c.b16 %v2044, %v2042
  %v2107 = vpack.c.b16 %v2045, %v2043
  %v2108 = vpack.c.b16 %v2048, %v2046
  %v2109 = vpack.c.b16 %v2049, %v2047
  %v2110 = vpack.c.b16 %v2052, %v2050
  %v2111 = vpack.c.b16 %v2053, %v2051
  %v2112 = vpack.c.b16 %v2056, %v2054
  %v2113 = vpack.c.b16 %v2057, %v2055
  %v2114 = vpack.c.b16 %v2060, %v2058
  %v2115 = vpack.c.b16 %v2061, %v2059
  %v2116 = vpack.c.b16 %v2064, %v2062
  %v2117 = vpack.c.b16 %v2065, %v2063
  %v2118 = vpack.c.b16 %v2068, %v2066
  %v2119 = vpack.c.b16 %v2069, %v2067
  %v2120 = vpack.c.b16 %v2072, %v2070
  %v2121 = vpack.c.b16 %v2073, %v2071
  %v2122 = vpack.c.b16 %v2076, %v2074
  %v2123 = vpack.c.b16 %v2077, %v2075
  %v2124 = vpack.c.b16 %v2080, %v2078
  %v2125 = vpack.c.b16 %v2081, %v2079
  %v2126 = vpack.c.b16 %v2084, %v2082
  %v2127 = vpack.c.b16 %v2085, %v2083
  %v2128 = vpack.c.b16 %v2088, %v2086
  %v2129 = vpack.c.b16 %v2089, %v2087
  %v2130 = vpack.c.b16 %v2092, %v2090
  %v2131 = vpack.c.b16 %v2093, %v2091
  %v2132 = vpack.c.b16 %v2096, %v2094
  %v2133 = vpack.c.b16 %v2097, %v2095
  %v2134 = vpack.c.b16 %v2100, %v2098
  %v2135 = vpack.c.b16 %v2101, %v2099
  %v2136 = vpack.c.b16 %v2104, %v2102
  %v2137 = vpack.c.b16 %v2105, %v2103
  %2170 = vmatprep.subr.bf16.mxu0 0
  %2171 = vmatpush1.bf16.msra.mxu0 %v306
  %2172 = vmatprep.subr.bf16.mxu0 0
  %2173 = vmatpush1.bf16.msra.mxu0 %v307
  %2174 = vmatprep.subr.bf16.mxu0 0
  %2175 = vmatpush1.bf16.msra.mxu0 %v308
  %2176 = vmatprep.subr.bf16.mxu0 0
  %2177 = vmatpush1.bf16.msra.mxu0 %v309
  %2178 = vmatprep.subr.bf16.mxu0 0
  %2179 = vmatpush1.bf16.msra.mxu0 %v310
  %2180 = vmatprep.subr.bf16.mxu0 0
  %2181 = vmatpush1.bf16.msra.mxu0 %v311
  %2182 = vmatprep.subr.bf16.mxu0 0
  %2183 = vmatpush1.bf16.msra.mxu0 %v312
  %2184 = vmatprep.subr.bf16.mxu0 0
  %2185 = vmatpush1.bf16.msra.mxu0 %v313
  %2186 = vmatprep.subr.bf16.mxu0 0
  %2187 = vmatpush1.bf16.msra.mxu0 %v314
  %2188 = vmatprep.subr.bf16.mxu0 0
  %2189 = vmatpush1.bf16.msra.mxu0 %v315
  %2190 = vmatprep.subr.bf16.mxu0 0
  %2191 = vmatpush1.bf16.msra.mxu0 %v316
  %2192 = vmatprep.subr.bf16.mxu0 0
  %2193 = vmatpush1.bf16.msra.mxu0 %v317
  %2194 = vmatprep.subr.bf16.mxu0 0
  %2195 = vmatpush1.bf16.msra.mxu0 %v318
  %2196 = vmatprep.subr.bf16.mxu0 0
  %2197 = vmatpush1.bf16.msra.mxu0 %v319
  %2198 = vmatprep.subr.bf16.mxu0 0
  %2199 = vmatpush1.bf16.msra.mxu0 %v320
  %2200 = vmatprep.subr.bf16.mxu0 0
  %2201 = vmatpush1.bf16.msra.mxu0 %v321
  %2202 = vmatprep.mubr.bf16.mxu0 %v2107
  %2203 = vmatmul.mubr.bf16.gmra.mrb[0].mxu0 %v2106
  %v2204 = vpop.f32.mrb[0].mxu0
  %v2205 = vadd.f32 0.0, %v2204
  %v2206 = vpop.f32.mrb[0].mxu0
  %v2207 = vpop.f32.mrb[0].mxu0
  %v2208 = vadd.f32 0.0, %v2207
  %v2209 = vpop.f32.mrb[0].mxu0
  %2210 = vmatprep.mubr.bf16.mxu0 %v2109
  %2211 = vmatmul.mubr.bf16.gmra.mrb[0].mxu0 %v2108
  %v2212 = vpop.f32.mrb[0].mxu0
  %v2213 = vadd.f32 0.0, %v2212
  %v2214 = vpop.f32.mrb[0].mxu0
  %v2215 = vpop.f32.mrb[0].mxu0
  %v2216 = vadd.f32 0.0, %v2215
  %v2217 = vpop.f32.mrb[0].mxu0
  %2218 = vmatprep.mubr.bf16.mxu0 %v2111
  %2219 = vmatmul.mubr.bf16.gmra.mrb[0].mxu0 %v2110
  %v2220 = vpop.f32.mrb[0].mxu0
  %v2221 = vadd.f32 0.0, %v2220
  %v2222 = vpop.f32.mrb[0].mxu0
  %v2223 = vpop.f32.mrb[0].mxu0
  %v2224 = vadd.f32 0.0, %v2223
  %v2225 = vpop.f32.mrb[0].mxu0
  %2226 = vmatprep.mubr.bf16.mxu0 %v2113
  %2227 = vmatmul.mubr.bf16.gmra.mrb[0].mxu0 %v2112
  %v2228 = vpop.f32.mrb[0].mxu0
  %v2229 = vadd.f32 0.0, %v2228
  %v2230 = vpop.f32.mrb[0].mxu0
  %v2231 = vpop.f32.mrb[0].mxu0
  %v2232 = vadd.f32 0.0, %v2231
  %v2233 = vpop.f32.mrb[0].mxu0
  %2234 = vmatprep.mubr.bf16.mxu0 %v2115
  %2235 = vmatmul.mubr.bf16.gmra.mrb[0].mxu0 %v2114
  %v2236 = vpop.f32.mrb[0].mxu0
  %v2237 = vadd.f32 0.0, %v2236
  %v2238 = vpop.f32.mrb[0].mxu0
  %v2239 = vpop.f32.mrb[0].mxu0
  %v2240 = vadd.f32 0.0, %v2239
  %v2241 = vpop.f32.mrb[0].mxu0
  %2242 = vmatprep.mubr.bf16.mxu0 %v2117
  %2243 = vmatmul.mubr.bf16.gmra.mrb[0].mxu0 %v2116
  %v2244 = vpop.f32.mrb[0].mxu0
  %v2245 = vadd.f32 0.0, %v2244
  %v2246 = vpop.f32.mrb[0].mxu0
  %v2247 = vpop.f32.mrb[0].mxu0
  %v2248 = vadd.f32 0.0, %v2247
  %v2249 = vpop.f32.mrb[0].mxu0
  %2250 = vmatprep.mubr.bf16.mxu0 %v2119
  %2251 = vmatmul.mubr.bf16.gmra.mrb[0].mxu0 %v2118
  %v2252 = vpop.f32.mrb[0].mxu0
  %v2253 = vadd.f32 0.0, %v2252
  %v2254 = vpop.f32.mrb[0].mxu0
  %v2255 = vpop.f32.mrb[0].mxu0
  %v2256 = vadd.f32 0.0, %v2255
  %v2257 = vpop.f32.mrb[0].mxu0
  %2258 = vmatprep.mubr.bf16.mxu0 %v2121
  %2259 = vmatmul.mubr.bf16.gmra.mrb[0].mxu0 %v2120
  %v2260 = vpop.f32.mrb[0].mxu0
  %v2261 = vadd.f32 0.0, %v2260
  %v2262 = vpop.f32.mrb[0].mxu0
  %v2263 = vpop.f32.mrb[0].mxu0
  %v2264 = vadd.f32 0.0, %v2263
  %v2265 = vpop.f32.mrb[0].mxu0
  %2266 = vmatprep.mubr.bf16.mxu0 %v2123
  %2267 = vmatmul.mubr.bf16.gmra.mrb[0].mxu0 %v2122
  %v2268 = vpop.f32.mrb[0].mxu0
  %v2269 = vadd.f32 0.0, %v2268
  %v2270 = vpop.f32.mrb[0].mxu0
  %v2271 = vpop.f32.mrb[0].mxu0
  %v2272 = vadd.f32 0.0, %v2271
  %v2273 = vpop.f32.mrb[0].mxu0
  %2274 = vmatprep.mubr.bf16.mxu0 %v2125
  %2275 = vmatmul.mubr.bf16.gmra.mrb[0].mxu0 %v2124
  %v2276 = vpop.f32.mrb[0].mxu0
  %v2277 = vadd.f32 0.0, %v2276
  %v2278 = vpop.f32.mrb[0].mxu0
  %v2279 = vpop.f32.mrb[0].mxu0
  %v2280 = vadd.f32 0.0, %v2279
  %v2281 = vpop.f32.mrb[0].mxu0
  %2282 = vmatprep.mubr.bf16.mxu0 %v2127
  %2283 = vmatmul.mubr.bf16.gmra.mrb[0].mxu0 %v2126
  %v2284 = vpop.f32.mrb[0].mxu0
  %v2285 = vadd.f32 0.0, %v2284
  %v2286 = vpop.f32.mrb[0].mxu0
  %v2287 = vpop.f32.mrb[0].mxu0
  %v2288 = vadd.f32 0.0, %v2287
  %v2289 = vpop.f32.mrb[0].mxu0
  %2290 = vmatprep.mubr.bf16.mxu0 %v2129
  %2291 = vmatmul.mubr.bf16.gmra.mrb[0].mxu0 %v2128
  %v2292 = vpop.f32.mrb[0].mxu0
  %v2293 = vadd.f32 0.0, %v2292
  %v2294 = vpop.f32.mrb[0].mxu0
  %v2295 = vpop.f32.mrb[0].mxu0
  %v2296 = vadd.f32 0.0, %v2295
  %v2297 = vpop.f32.mrb[0].mxu0
  %2298 = vmatprep.mubr.bf16.mxu0 %v2131
  %2299 = vmatmul.mubr.bf16.gmra.mrb[0].mxu0 %v2130
  %v2300 = vpop.f32.mrb[0].mxu0
  %v2301 = vadd.f32 0.0, %v2300
  %v2302 = vpop.f32.mrb[0].mxu0
  %v2303 = vpop.f32.mrb[0].mxu0
  %v2304 = vadd.f32 0.0, %v2303
  %v2305 = vpop.f32.mrb[0].mxu0
  %2306 = vmatprep.mubr.bf16.mxu0 %v2133
  %2307 = vmatmul.mubr.bf16.gmra.mrb[0].mxu0 %v2132
  %v2308 = vpop.f32.mrb[0].mxu0
  %v2309 = vadd.f32 0.0, %v2308
  %v2310 = vpop.f32.mrb[0].mxu0
  %v2311 = vpop.f32.mrb[0].mxu0
  %v2312 = vadd.f32 0.0, %v2311
  %v2313 = vpop.f32.mrb[0].mxu0
  %2314 = vmatprep.mubr.bf16.mxu0 %v2135
  %2315 = vmatmul.mubr.bf16.gmra.mrb[0].mxu0 %v2134
  %v2316 = vpop.f32.mrb[0].mxu0
  %v2317 = vadd.f32 0.0, %v2316
  %v2318 = vpop.f32.mrb[0].mxu0
  %v2319 = vpop.f32.mrb[0].mxu0
  %v2320 = vadd.f32 0.0, %v2319
  %v2321 = vpop.f32.mrb[0].mxu0
  %2322 = vmatprep.mubr.bf16.mxu0 %v2137
  %2323 = vmatmul.mubr.bf16.gmra.mrb[0].mxu0 %v2136
  %v2324 = vpop.f32.mrb[0].mxu0
  %v2325 = vadd.f32 0.0, %v2324
  %v2326 = vpop.f32.mrb[0].mxu0
  %v2327 = vpop.f32.mrb[0].mxu0
  %v2328 = vadd.f32 0.0, %v2327
  %v2329 = vpop.f32.mrb[0].mxu0
  %2330 = vdwg.mxu0
  %s2331 = scalar_lea.vmem %s1, 768
  %v2332 = vld [vmem:[%s2331] sm:$0xff]
  %v2333 = vld [vmem:[%s2331 + $0x8] sm:$0xff]
  %v2334 = vld [vmem:[%s2331 + $0x10] sm:$0xff]
  %v2335 = vld [vmem:[%s2331 + $0x18] sm:$0xff]
  %v2336 = vld [vmem:[%s2331 + $0x20] sm:$0xff]
  %v2337 = vld [vmem:[%s2331 + $0x28] sm:$0xff]
  %v2338 = vld [vmem:[%s2331 + $0x30] sm:$0xff]
  %v2339 = vld [vmem:[%s2331 + $0x38] sm:$0xff]
  %v2340 = vld [vmem:[%s2331 + $0x40] sm:$0xff]
  %v2341 = vld [vmem:[%s2331 + $0x48] sm:$0xff]
  %v2342 = vld [vmem:[%s2331 + $0x50] sm:$0xff]
  %v2343 = vld [vmem:[%s2331 + $0x58] sm:$0xff]
  %v2344 = vld [vmem:[%s2331 + $0x60] sm:$0xff]
  %v2345 = vld [vmem:[%s2331 + $0x68] sm:$0xff]
  %v2346 = vld [vmem:[%s2331 + $0x70] sm:$0xff]
  %v2347 = vld [vmem:[%s2331 + $0x78] sm:$0xff]
  %v2348 = vld [vmem:[%s2331 + $0x80] sm:$0xff]
  %v2349 = vld [vmem:[%s2331 + $0x88] sm:$0xff]
  %v2350 = vld [vmem:[%s2331 + $0x90] sm:$0xff]
  %v2351 = vld [vmem:[%s2331 + $0x98] sm:$0xff]
  %v2352 = vld [vmem:[%s2331 + $0xa0] sm:$0xff]
  %v2353 = vld [vmem:[%s2331 + $0xa8] sm:$0xff]
  %v2354 = vld [vmem:[%s2331 + $0xb0] sm:$0xff]
  %v2355 = vld [vmem:[%s2331 + $0xb8] sm:$0xff]
  %v2356 = vld [vmem:[%s2331 + $0xc0] sm:$0xff]
  %v2357 = vld [vmem:[%s2331 + $0xc8] sm:$0xff]
  %v2358 = vld [vmem:[%s2331 + $0xd0] sm:$0xff]
  %v2359 = vld [vmem:[%s2331 + $0xd8] sm:$0xff]
  %v2360 = vld [vmem:[%s2331 + $0xe0] sm:$0xff]
  %v2361 = vld [vmem:[%s2331 + $0xe8] sm:$0xff]
  %v2362 = vld [vmem:[%s2331 + $0xf0] sm:$0xff]
  %v2363 = vld [vmem:[%s2331 + $0xf8] sm:$0xff]
  %2365 = vset.pattern.permute.xlu0 0
  %2366 = vperm.xlu0 %2365, %v2332
  %v2367 = vpop.permute.xlu0 %2366
  %2370 = vset.pattern.permute.xlu0 0
  %2371 = vperm.xlu0 %2370, %v2333
  %v2372 = vpop.permute.xlu0 %2371
  %2375 = vset.pattern.permute.xlu0 0
  %2376 = vperm.xlu0 %2375, %v2334
  %v2377 = vpop.permute.xlu0 %2376
  %2380 = vset.pattern.permute.xlu0 0
  %2381 = vperm.xlu0 %2380, %v2335
  %v2382 = vpop.permute.xlu0 %2381
  %2385 = vset.pattern.permute.xlu0 0
  %2386 = vperm.xlu0 %2385, %v2336
  %v2387 = vpop.permute.xlu0 %2386
  %2390 = vset.pattern.permute.xlu0 0
  %2391 = vperm.xlu0 %2390, %v2337
  %v2392 = vpop.permute.xlu0 %2391
  %2395 = vset.pattern.permute.xlu0 0
  %2396 = vperm.xlu0 %2395, %v2338
  %v2397 = vpop.permute.xlu0 %2396
  %2400 = vset.pattern.permute.xlu0 0
  %2401 = vperm.xlu0 %2400, %v2339
  %v2402 = vpop.permute.xlu0 %2401
  %2405 = vset.pattern.permute.xlu0 0
  %2406 = vperm.xlu0 %2405, %v2340
  %v2407 = vpop.permute.xlu0 %2406
  %2410 = vset.pattern.permute.xlu0 0
  %2411 = vperm.xlu0 %2410, %v2341
  %v2412 = vpop.permute.xlu0 %2411
  %2415 = vset.pattern.permute.xlu0 0
  %2416 = vperm.xlu0 %2415, %v2342
  %v2417 = vpop.permute.xlu0 %2416
  %2420 = vset.pattern.permute.xlu0 0
  %2421 = vperm.xlu0 %2420, %v2343
  %v2422 = vpop.permute.xlu0 %2421
  %2425 = vset.pattern.permute.xlu0 0
  %2426 = vperm.xlu0 %2425, %v2344
  %v2427 = vpop.permute.xlu0 %2426
  %2430 = vset.pattern.permute.xlu0 0
  %2431 = vperm.xlu0 %2430, %v2345
  %v2432 = vpop.permute.xlu0 %2431
  %2435 = vset.pattern.permute.xlu0 0
  %2436 = vperm.xlu0 %2435, %v2346
  %v2437 = vpop.permute.xlu0 %2436
  %2440 = vset.pattern.permute.xlu0 0
  %2441 = vperm.xlu0 %2440, %v2347
  %v2442 = vpop.permute.xlu0 %2441
  %2445 = vset.pattern.permute.xlu0 0
  %2446 = vperm.xlu0 %2445, %v2348
  %v2447 = vpop.permute.xlu0 %2446
  %2450 = vset.pattern.permute.xlu0 0
  %2451 = vperm.xlu0 %2450, %v2349
  %v2452 = vpop.permute.xlu0 %2451
  %2455 = vset.pattern.permute.xlu0 0
  %2456 = vperm.xlu0 %2455, %v2350
  %v2457 = vpop.permute.xlu0 %2456
  %2460 = vset.pattern.permute.xlu0 0
  %2461 = vperm.xlu0 %2460, %v2351
  %v2462 = vpop.permute.xlu0 %2461
  %2465 = vset.pattern.permute.xlu0 0
  %2466 = vperm.xlu0 %2465, %v2352
  %v2467 = vpop.permute.xlu0 %2466
  %2470 = vset.pattern.permute.xlu0 0
  %2471 = vperm.xlu0 %2470, %v2353
  %v2472 = vpop.permute.xlu0 %2471
  %2475 = vset.pattern.permute.xlu0 0
  %2476 = vperm.xlu0 %2475, %v2354
  %v2477 = vpop.permute.xlu0 %2476
  %2480 = vset.pattern.permute.xlu0 0
  %2481 = vperm.xlu0 %2480, %v2355
  %v2482 = vpop.permute.xlu0 %2481
  %2485 = vset.pattern.permute.xlu0 0
  %2486 = vperm.xlu0 %2485, %v2356
  %v2487 = vpop.permute.xlu0 %2486
  %2490 = vset.pattern.permute.xlu0 0
  %2491 = vperm.xlu0 %2490, %v2357
  %v2492 = vpop.permute.xlu0 %2491
  %2495 = vset.pattern.permute.xlu0 0
  %2496 = vperm.xlu0 %2495, %v2358
  %v2497 = vpop.permute.xlu0 %2496
  %2500 = vset.pattern.permute.xlu0 0
  %2501 = vperm.xlu0 %2500, %v2359
  %v2502 = vpop.permute.xlu0 %2501
  %2505 = vset.pattern.permute.xlu0 0
  %2506 = vperm.xlu0 %2505, %v2360
  %v2507 = vpop.permute.xlu0 %2506
  %2510 = vset.pattern.permute.xlu0 0
  %2511 = vperm.xlu0 %2510, %v2361
  %v2512 = vpop.permute.xlu0 %2511
  %2515 = vset.pattern.permute.xlu0 0
  %2516 = vperm.xlu0 %2515, %v2362
  %v2517 = vpop.permute.xlu0 %2516
  %2520 = vset.pattern.permute.xlu0 0
  %2521 = vperm.xlu0 %2520, %v2363
  %v2522 = vpop.permute.xlu0 %2521
  %v2524 = vmul.f32 %v2205, %v2367
  %v2525 = vmul.f32 %v2208, %v2372
  %v2526 = vmul.f32 %v2213, %v2377
  %v2527 = vmul.f32 %v2216, %v2382
  %v2528 = vmul.f32 %v2221, %v2387
  %v2529 = vmul.f32 %v2224, %v2392
  %v2530 = vmul.f32 %v2229, %v2397
  %v2531 = vmul.f32 %v2232, %v2402
  %v2532 = vmul.f32 %v2237, %v2407
  %v2533 = vmul.f32 %v2240, %v2412
  %v2534 = vmul.f32 %v2245, %v2417
  %v2535 = vmul.f32 %v2248, %v2422
  %v2536 = vmul.f32 %v2253, %v2427
  %v2537 = vmul.f32 %v2256, %v2432
  %v2538 = vmul.f32 %v2261, %v2437
  %v2539 = vmul.f32 %v2264, %v2442
  %v2540 = vmul.f32 %v2269, %v2447
  %v2541 = vmul.f32 %v2272, %v2452
  %v2542 = vmul.f32 %v2277, %v2457
  %v2543 = vmul.f32 %v2280, %v2462
  %v2544 = vmul.f32 %v2285, %v2467
  %v2545 = vmul.f32 %v2288, %v2472
  %v2546 = vmul.f32 %v2293, %v2477
  %v2547 = vmul.f32 %v2296, %v2482
  %v2548 = vmul.f32 %v2301, %v2487
  %v2549 = vmul.f32 %v2304, %v2492
  %v2550 = vmul.f32 %v2309, %v2497
  %v2551 = vmul.f32 %v2312, %v2502
  %v2552 = vmul.f32 %v2317, %v2507
  %v2553 = vmul.f32 %v2320, %v2512
  %v2554 = vmul.f32 %v2325, %v2517
  %v2555 = vmul.f32 %v2328, %v2522
  %v2556 = vpack.c.bf16 %v2525, %v2524
  %v2557 = vpack.c.bf16 %v2527, %v2526
  %v2558 = vpack.c.bf16 %v2529, %v2528
  %v2559 = vpack.c.bf16 %v2531, %v2530
  %v2560 = vpack.c.bf16 %v2533, %v2532
  %v2561 = vpack.c.bf16 %v2535, %v2534
  %v2562 = vpack.c.bf16 %v2537, %v2536
  %v2563 = vpack.c.bf16 %v2539, %v2538
  %v2564 = vpack.c.bf16 %v2541, %v2540
  %v2565 = vpack.c.bf16 %v2543, %v2542
  %v2566 = vpack.c.bf16 %v2545, %v2544
  %v2567 = vpack.c.bf16 %v2547, %v2546
  %v2568 = vpack.c.bf16 %v2549, %v2548
  %v2569 = vpack.c.bf16 %v2551, %v2550
  %v2570 = vpack.c.bf16 %v2553, %v2552
  %v2571 = vpack.c.bf16 %v2555, %v2554
  %2572 = vst [vmem:[#allocation2 + $0x18] sm:$0xff] %v2556
  %2573 = vst [vmem:[#allocation2 + $0x40] sm:$0xff] %v2557
  %2574 = vst [vmem:[#allocation2 + $0x68] sm:$0xff] %v2558
  %2575 = vst [vmem:[#allocation2 + $0x90] sm:$0xff] %v2559
  %2576 = vst [vmem:[#allocation2 + $0xb8] sm:$0xff] %v2560
  %2577 = vst [vmem:[#allocation2 + $0xe0] sm:$0xff] %v2561
  %2578 = vst [vmem:[#allocation2 + $0x108] sm:$0xff] %v2562
  %2579 = vst [vmem:[#allocation2 + $0x130] sm:$0xff] %v2563
  %2580 = vst [vmem:[#allocation2 + $0x158] sm:$0xff] %v2564
  %2581 = vst [vmem:[#allocation2 + $0x180] sm:$0xff] %v2565
  %2582 = vst [vmem:[#allocation2 + $0x1a8] sm:$0xff] %v2566
  %2583 = vst [vmem:[#allocation2 + $0x1d0] sm:$0xff] %v2567
  %2584 = vst [vmem:[#allocation2 + $0x1f8] sm:$0xff] %v2568
  %2585 = vst [vmem:[#allocation2 + $0x220] sm:$0xff] %v2569
  %2586 = vst [vmem:[#allocation2 + $0x248] sm:$0xff] %v2570
  %2587 = vst [vmem:[#allocation2 + $0x270] sm:$0xff] %v2571
  %s2588 = scalar_lea.vmem %s0, 1024
  %v2589 = vld [vmem:[%s2588] sm:$0xff]
  %v2590 = vld [vmem:[%s2588 + $0x8] sm:$0xff]
  %v2591 = vld [vmem:[%s2588 + $0x10] sm:$0xff]
  %v2592 = vld [vmem:[%s2588 + $0x18] sm:$0xff]
  %v2593 = vld [vmem:[%s2588 + $0x20] sm:$0xff]
  %v2594 = vld [vmem:[%s2588 + $0x28] sm:$0xff]
  %v2595 = vld [vmem:[%s2588 + $0x30] sm:$0xff]
  %v2596 = vld [vmem:[%s2588 + $0x38] sm:$0xff]
  %v2597 = vld [vmem:[%s2588 + $0x40] sm:$0xff]
  %v2598 = vld [vmem:[%s2588 + $0x48] sm:$0xff]
  %v2599 = vld [vmem:[%s2588 + $0x50] sm:$0xff]
  %v2600 = vld [vmem:[%s2588 + $0x58] sm:$0xff]
  %v2601 = vld [vmem:[%s2588 + $0x60] sm:$0xff]
  %v2602 = vld [vmem:[%s2588 + $0x68] sm:$0xff]
  %v2603 = vld [vmem:[%s2588 + $0x70] sm:$0xff]
  %v2604 = vld [vmem:[%s2588 + $0x78] sm:$0xff]
  %v2605 = vld [vmem:[%s2588 + $0x80] sm:$0xff]
  %v2606 = vld [vmem:[%s2588 + $0x88] sm:$0xff]
  %v2607 = vld [vmem:[%s2588 + $0x90] sm:$0xff]
  %v2608 = vld [vmem:[%s2588 + $0x98] sm:$0xff]
  %v2609 = vld [vmem:[%s2588 + $0xa0] sm:$0xff]
  %v2610 = vld [vmem:[%s2588 + $0xa8] sm:$0xff]
  %v2611 = vld [vmem:[%s2588 + $0xb0] sm:$0xff]
  %v2612 = vld [vmem:[%s2588 + $0xb8] sm:$0xff]
  %v2613 = vld [vmem:[%s2588 + $0xc0] sm:$0xff]
  %v2614 = vld [vmem:[%s2588 + $0xc8] sm:$0xff]
  %v2615 = vld [vmem:[%s2588 + $0xd0] sm:$0xff]
  %v2616 = vld [vmem:[%s2588 + $0xd8] sm:$0xff]
  %v2617 = vld [vmem:[%s2588 + $0xe0] sm:$0xff]
  %v2618 = vld [vmem:[%s2588 + $0xe8] sm:$0xff]
  %v2619 = vld [vmem:[%s2588 + $0xf0] sm:$0xff]
  %v2620 = vld [vmem:[%s2588 + $0xf8] sm:$0xff]
  %v2653 = vunpack.c.l.b16 %v2589
  %v2654 = vunpack.c.h.b16 %v2589
  %v2655 = vunpack.c.l.b16 %v2590
  %v2656 = vunpack.c.h.b16 %v2590
  %v2657 = vunpack.c.l.b16 %v2591
  %v2658 = vunpack.c.h.b16 %v2591
  %v2659 = vunpack.c.l.b16 %v2592
  %v2660 = vunpack.c.h.b16 %v2592
  %v2661 = vunpack.c.l.b16 %v2593
  %v2662 = vunpack.c.h.b16 %v2593
  %v2663 = vunpack.c.l.b16 %v2594
  %v2664 = vunpack.c.h.b16 %v2594
  %v2665 = vunpack.c.l.b16 %v2595
  %v2666 = vunpack.c.h.b16 %v2595
  %v2667 = vunpack.c.l.b16 %v2596
  %v2668 = vunpack.c.h.b16 %v2596
  %v2669 = vunpack.c.l.b16 %v2597
  %v2670 = vunpack.c.h.b16 %v2597
  %v2671 = vunpack.c.l.b16 %v2598
  %v2672 = vunpack.c.h.b16 %v2598
  %v2673 = vunpack.c.l.b16 %v2599
  %v2674 = vunpack.c.h.b16 %v2599
  %v2675 = vunpack.c.l.b16 %v2600
  %v2676 = vunpack.c.h.b16 %v2600
  %v2677 = vunpack.c.l.b16 %v2601
  %v2678 = vunpack.c.h.b16 %v2601
  %v2679 = vunpack.c.l.b16 %v2602
  %v2680 = vunpack.c.h.b16 %v2602
  %v2681 = vunpack.c.l.b16 %v2603
  %v2682 = vunpack.c.h.b16 %v2603
  %v2683 = vunpack.c.l.b16 %v2604
  %v2684 = vunpack.c.h.b16 %v2604
  %v2685 = vunpack.c.l.b16 %v2605
  %v2686 = vunpack.c.h.b16 %v2605
  %v2687 = vunpack.c.l.b16 %v2606
  %v2688 = vunpack.c.h.b16 %v2606
  %v2689 = vunpack.c.l.b16 %v2607
  %v2690 = vunpack.c.h.b16 %v2607
  %v2691 = vunpack.c.l.b16 %v2608
  %v2692 = vunpack.c.h.b16 %v2608
  %v2693 = vunpack.c.l.b16 %v2609
  %v2694 = vunpack.c.h.b16 %v2609
  %v2695 = vunpack.c.l.b16 %v2610
  %v2696 = vunpack.c.h.b16 %v2610
  %v2697 = vunpack.c.l.b16 %v2611
  %v2698 = vunpack.c.h.b16 %v2611
  %v2699 = vunpack.c.l.b16 %v2612
  %v2700 = vunpack.c.h.b16 %v2612
  %v2701 = vunpack.c.l.b16 %v2613
  %v2702 = vunpack.c.h.b16 %v2613
  %v2703 = vunpack.c.l.b16 %v2614
  %v2704 = vunpack.c.h.b16 %v2614
  %v2705 = vunpack.c.l.b16 %v2615
  %v2706 = vunpack.c.h.b16 %v2615
  %v2707 = vunpack.c.l.b16 %v2616
  %v2708 = vunpack.c.h.b16 %v2616
  %v2709 = vunpack.c.l.b16 %v2617
  %v2710 = vunpack.c.h.b16 %v2617
  %v2711 = vunpack.c.l.b16 %v2618
  %v2712 = vunpack.c.h.b16 %v2618
  %v2713 = vunpack.c.l.b16 %v2619
  %v2714 = vunpack.c.h.b16 %v2619
  %v2715 = vunpack.c.l.b16 %v2620
  %v2716 = vunpack.c.h.b16 %v2620
  %v2717 = vpack.c.b16 %v2655, %v2653
  %v2718 = vpack.c.b16 %v2656, %v2654
  %v2719 = vpack.c.b16 %v2659, %v2657
  %v2720 = vpack.c.b16 %v2660, %v2658
  %v2721 = vpack.c.b16 %v2663, %v2661
  %v2722 = vpack.c.b16 %v2664, %v2662
  %v2723 = vpack.c.b16 %v2667, %v2665
  %v2724 = vpack.c.b16 %v2668, %v2666
  %v2725 = vpack.c.b16 %v2671, %v2669
  %v2726 = vpack.c.b16 %v2672, %v2670
  %v2727 = vpack.c.b16 %v2675, %v2673
  %v2728 = vpack.c.b16 %v2676, %v2674
  %v2729 = vpack.c.b16 %v2679, %v2677
  %v2730 = vpack.c.b16 %v2680, %v2678
  %v2731 = vpack.c.b16 %v2683, %v2681
  %v2732 = vpack.c.b16 %v2684, %v2682
  %v2733 = vpack.c.b16 %v2687, %v2685
  %v2734 = vpack.c.b16 %v2688, %v2686
  %v2735 = vpack.c.b16 %v2691, %v2689
  %v2736 = vpack.c.b16 %v2692, %v2690
  %v2737 = vpack.c.b16 %v2695, %v2693
  %v2738 = vpack.c.b16 %v2696, %v2694
  %v2739 = vpack.c.b16 %v2699, %v2697
  %v2740 = vpack.c.b16 %v2700, %v2698
  %v2741 = vpack.c.b16 %v2703, %v2701
  %v2742 = vpack.c.b16 %v2704, %v2702
  %v2743 = vpack.c.b16 %v2707, %v2705
  %v2744 = vpack.c.b16 %v2708, %v2706
  %v2745 = vpack.c.b16 %v2711, %v2709
  %v2746 = vpack.c.b16 %v2712, %v2710
  %v2747 = vpack.c.b16 %v2715, %v2713
  %v2748 = vpack.c.b16 %v2716, %v2714
  %2781 = vmatprep.subr.bf16.mxu0 0
  %2782 = vmatpush1.bf16.msra.mxu0 %v306
  %2783 = vmatprep.subr.bf16.mxu0 0
  %2784 = vmatpush1.bf16.msra.mxu0 %v307
  %2785 = vmatprep.subr.bf16.mxu0 0
  %2786 = vmatpush1.bf16.msra.mxu0 %v308
  %2787 = vmatprep.subr.bf16.mxu0 0
  %2788 = vmatpush1.bf16.msra.mxu0 %v309
  %2789 = vmatprep.subr.bf16.mxu0 0
  %2790 = vmatpush1.bf16.msra.mxu0 %v310
  %2791 = vmatprep.subr.bf16.mxu0 0
  %2792 = vmatpush1.bf16.msra.mxu0 %v311
  %2793 = vmatprep.subr.bf16.mxu0 0
  %2794 = vmatpush1.bf16.msra.mxu0 %v312
  %2795 = vmatprep.subr.bf16.mxu0 0
  %2796 = vmatpush1.bf16.msra.mxu0 %v313
  %2797 = vmatprep.subr.bf16.mxu0 0
  %2798 = vmatpush1.bf16.msra.mxu0 %v314
  %2799 = vmatprep.subr.bf16.mxu0 0
  %2800 = vmatpush1.bf16.msra.mxu0 %v315
  %2801 = vmatprep.subr.bf16.mxu0 0
  %2802 = vmatpush1.bf16.msra.mxu0 %v316
  %2803 = vmatprep.subr.bf16.mxu0 0
  %2804 = vmatpush1.bf16.msra.mxu0 %v317
  %2805 = vmatprep.subr.bf16.mxu0 0
  %2806 = vmatpush1.bf16.msra.mxu0 %v318
  %2807 = vmatprep.subr.bf16.mxu0 0
  %2808 = vmatpush1.bf16.msra.mxu0 %v319
  %2809 = vmatprep.subr.bf16.mxu0 0
  %2810 = vmatpush1.bf16.msra.mxu0 %v320
  %2811 = vmatprep.subr.bf16.mxu0 0
  %2812 = vmatpush1.bf16.msra.mxu0 %v321
  %2813 = vmatprep.mubr.bf16.mxu0 %v2718
  %2814 = vmatmul.mubr.bf16.gmra.mrb[0].mxu0 %v2717
  %v2815 = vpop.f32.mrb[0].mxu0
  %v2816 = vadd.f32 0.0, %v2815
  %v2817 = vpop.f32.mrb[0].mxu0
  %v2818 = vpop.f32.mrb[0].mxu0
  %v2819 = vadd.f32 0.0, %v2818
  %v2820 = vpop.f32.mrb[0].mxu0
  %2821 = vmatprep.mubr.bf16.mxu0 %v2720
  %2822 = vmatmul.mubr.bf16.gmra.mrb[0].mxu0 %v2719
  %v2823 = vpop.f32.mrb[0].mxu0
  %v2824 = vadd.f32 0.0, %v2823
  %v2825 = vpop.f32.mrb[0].mxu0
  %v2826 = vpop.f32.mrb[0].mxu0
  %v2827 = vadd.f32 0.0, %v2826
  %v2828 = vpop.f32.mrb[0].mxu0
  %2829 = vmatprep.mubr.bf16.mxu0 %v2722
  %2830 = vmatmul.mubr.bf16.gmra.mrb[0].mxu0 %v2721
  %v2831 = vpop.f32.mrb[0].mxu0
  %v2832 = vadd.f32 0.0, %v2831
  %v2833 = vpop.f32.mrb[0].mxu0
  %v2834 = vpop.f32.mrb[0].mxu0
  %v2835 = vadd.f32 0.0, %v2834
  %v2836 = vpop.f32.mrb[0].mxu0
  %2837 = vmatprep.mubr.bf16.mxu0 %v2724
  %2838 = vmatmul.mubr.bf16.gmra.mrb[0].mxu0 %v2723
  %v2839 = vpop.f32.mrb[0].mxu0
  %v2840 = vadd.f32 0.0, %v2839
  %v2841 = vpop.f32.mrb[0].mxu0
  %v2842 = vpop.f32.mrb[0].mxu0
  %v2843 = vadd.f32 0.0, %v2842
  %v2844 = vpop.f32.mrb[0].mxu0
  %2845 = vmatprep.mubr.bf16.mxu0 %v2726
  %2846 = vmatmul.mubr.bf16.gmra.mrb[0].mxu0 %v2725
  %v2847 = vpop.f32.mrb[0].mxu0
  %v2848 = vadd.f32 0.0, %v2847
  %v2849 = vpop.f32.mrb[0].mxu0
  %v2850 = vpop.f32.mrb[0].mxu0
  %v2851 = vadd.f32 0.0, %v2850
  %v2852 = vpop.f32.mrb[0].mxu0
  %2853 = vmatprep.mubr.bf16.mxu0 %v2728
  %2854 = vmatmul.mubr.bf16.gmra.mrb[0].mxu0 %v2727
  %v2855 = vpop.f32.mrb[0].mxu0
  %v2856 = vadd.f32 0.0, %v2855
  %v2857 = vpop.f32.mrb[0].mxu0
  %v2858 = vpop.f32.mrb[0].mxu0
  %v2859 = vadd.f32 0.0, %v2858
  %v2860 = vpop.f32.mrb[0].mxu0
  %2861 = vmatprep.mubr.bf16.mxu0 %v2730
  %2862 = vmatmul.mubr.bf16.gmra.mrb[0].mxu0 %v2729
  %v2863 = vpop.f32.mrb[0].mxu0
  %v2864 = vadd.f32 0.0, %v2863
  %v2865 = vpop.f32.mrb[0].mxu0
  %v2866 = vpop.f32.mrb[0].mxu0
  %v2867 = vadd.f32 0.0, %v2866
  %v2868 = vpop.f32.mrb[0].mxu0
  %2869 = vmatprep.mubr.bf16.mxu0 %v2732
  %2870 = vmatmul.mubr.bf16.gmra.mrb[0].mxu0 %v2731
  %v2871 = vpop.f32.mrb[0].mxu0
  %v2872 = vadd.f32 0.0, %v2871
  %v2873 = vpop.f32.mrb[0].mxu0
  %v2874 = vpop.f32.mrb[0].mxu0
  %v2875 = vadd.f32 0.0, %v2874
  %v2876 = vpop.f32.mrb[0].mxu0
  %2877 = vmatprep.mubr.bf16.mxu0 %v2734
  %2878 = vmatmul.mubr.bf16.gmra.mrb[0].mxu0 %v2733
  %v2879 = vpop.f32.mrb[0].mxu0
  %v2880 = vadd.f32 0.0, %v2879
  %v2881 = vpop.f32.mrb[0].mxu0
  %v2882 = vpop.f32.mrb[0].mxu0
  %v2883 = vadd.f32 0.0, %v2882
  %v2884 = vpop.f32.mrb[0].mxu0
  %2885 = vmatprep.mubr.bf16.mxu0 %v2736
  %2886 = vmatmul.mubr.bf16.gmra.mrb[0].mxu0 %v2735
  %v2887 = vpop.f32.mrb[0].mxu0
  %v2888 = vadd.f32 0.0, %v2887
  %v2889 = vpop.f32.mrb[0].mxu0
  %v2890 = vpop.f32.mrb[0].mxu0
  %v2891 = vadd.f32 0.0, %v2890
  %v2892 = vpop.f32.mrb[0].mxu0
  %2893 = vmatprep.mubr.bf16.mxu0 %v2738
  %2894 = vmatmul.mubr.bf16.gmra.mrb[0].mxu0 %v2737
  %v2895 = vpop.f32.mrb[0].mxu0
  %v2896 = vadd.f32 0.0, %v2895
  %v2897 = vpop.f32.mrb[0].mxu0
  %v2898 = vpop.f32.mrb[0].mxu0
  %v2899 = vadd.f32 0.0, %v2898
  %v2900 = vpop.f32.mrb[0].mxu0
  %2901 = vmatprep.mubr.bf16.mxu0 %v2740
  %2902 = vmatmul.mubr.bf16.gmra.mrb[0].mxu0 %v2739
  %v2903 = vpop.f32.mrb[0].mxu0
  %v2904 = vadd.f32 0.0, %v2903
  %v2905 = vpop.f32.mrb[0].mxu0
  %v2906 = vpop.f32.mrb[0].mxu0
  %v2907 = vadd.f32 0.0, %v2906
  %v2908 = vpop.f32.mrb[0].mxu0
  %2909 = vmatprep.mubr.bf16.mxu0 %v2742
  %2910 = vmatmul.mubr.bf16.gmra.mrb[0].mxu0 %v2741
  %v2911 = vpop.f32.mrb[0].mxu0
  %v2912 = vadd.f32 0.0, %v2911
  %v2913 = vpop.f32.mrb[0].mxu0
  %v2914 = vpop.f32.mrb[0].mxu0
  %v2915 = vadd.f32 0.0, %v2914
  %v2916 = vpop.f32.mrb[0].mxu0
  %2917 = vmatprep.mubr.bf16.mxu0 %v2744
  %2918 = vmatmul.mubr.bf16.gmra.mrb[0].mxu0 %v2743
  %v2919 = vpop.f32.mrb[0].mxu0
  %v2920 = vadd.f32 0.0, %v2919
  %v2921 = vpop.f32.mrb[0].mxu0
  %v2922 = vpop.f32.mrb[0].mxu0
  %v2923 = vadd.f32 0.0, %v2922
  %v2924 = vpop.f32.mrb[0].mxu0
  %2925 = vmatprep.mubr.bf16.mxu0 %v2746
  %2926 = vmatmul.mubr.bf16.gmra.mrb[0].mxu0 %v2745
  %v2927 = vpop.f32.mrb[0].mxu0
  %v2928 = vadd.f32 0.0, %v2927
  %v2929 = vpop.f32.mrb[0].mxu0
  %v2930 = vpop.f32.mrb[0].mxu0
  %v2931 = vadd.f32 0.0, %v2930
  %v2932 = vpop.f32.mrb[0].mxu0
  %2933 = vmatprep.mubr.bf16.mxu0 %v2748
  %2934 = vmatmul.mubr.bf16.gmra.mrb[0].mxu0 %v2747
  %v2935 = vpop.f32.mrb[0].mxu0
  %v2936 = vadd.f32 0.0, %v2935
  %v2937 = vpop.f32.mrb[0].mxu0
  %v2938 = vpop.f32.mrb[0].mxu0
  %v2939 = vadd.f32 0.0, %v2938
  %v2940 = vpop.f32.mrb[0].mxu0
  %2941 = vdwg.mxu0
  %s2942 = scalar_lea.vmem %s1, 1024
  %v2943 = vld [vmem:[%s2942] sm:$0xff]
  %v2944 = vld [vmem:[%s2942 + $0x8] sm:$0xff]
  %v2945 = vld [vmem:[%s2942 + $0x10] sm:$0xff]
  %v2946 = vld [vmem:[%s2942 + $0x18] sm:$0xff]
  %v2947 = vld [vmem:[%s2942 + $0x20] sm:$0xff]
  %v2948 = vld [vmem:[%s2942 + $0x28] sm:$0xff]
  %v2949 = vld [vmem:[%s2942 + $0x30] sm:$0xff]
  %v2950 = vld [vmem:[%s2942 + $0x38] sm:$0xff]
  %v2951 = vld [vmem:[%s2942 + $0x40] sm:$0xff]
  %v2952 = vld [vmem:[%s2942 + $0x48] sm:$0xff]
  %v2953 = vld [vmem:[%s2942 + $0x50] sm:$0xff]
  %v2954 = vld [vmem:[%s2942 + $0x58] sm:$0xff]
  %v2955 = vld [vmem:[%s2942 + $0x60] sm:$0xff]
  %v2956 = vld [vmem:[%s2942 + $0x68] sm:$0xff]
  %v2957 = vld [vmem:[%s2942 + $0x70] sm:$0xff]
  %v2958 = vld [vmem:[%s2942 + $0x78] sm:$0xff]
  %v2959 = vld [vmem:[%s2942 + $0x80] sm:$0xff]
  %v2960 = vld [vmem:[%s2942 + $0x88] sm:$0xff]
  %v2961 = vld [vmem:[%s2942 + $0x90] sm:$0xff]
  %v2962 = vld [vmem:[%s2942 + $0x98] sm:$0xff]
  %v2963 = vld [vmem:[%s2942 + $0xa0] sm:$0xff]
  %v2964 = vld [vmem:[%s2942 + $0xa8] sm:$0xff]
  %v2965 = vld [vmem:[%s2942 + $0xb0] sm:$0xff]
  %v2966 = vld [vmem:[%s2942 + $0xb8] sm:$0xff]
  %v2967 = vld [vmem:[%s2942 + $0xc0] sm:$0xff]
  %v2968 = vld [vmem:[%s2942 + $0xc8] sm:$0xff]
  %v2969 = vld [vmem:[%s2942 + $0xd0] sm:$0xff]
  %v2970 = vld [vmem:[%s2942 + $0xd8] sm:$0xff]
  %v2971 = vld [vmem:[%s2942 + $0xe0] sm:$0xff]
  %v2972 = vld [vmem:[%s2942 + $0xe8] sm:$0xff]
  %v2973 = vld [vmem:[%s2942 + $0xf0] sm:$0xff]
  %v2974 = vld [vmem:[%s2942 + $0xf8] sm:$0xff]
  %2976 = vset.pattern.permute.xlu0 0
  %2977 = vperm.xlu0 %2976, %v2943
  %v2978 = vpop.permute.xlu0 %2977
  %2981 = vset.pattern.permute.xlu0 0
  %2982 = vperm.xlu0 %2981, %v2944
  %v2983 = vpop.permute.xlu0 %2982
  %2986 = vset.pattern.permute.xlu0 0
  %2987 = vperm.xlu0 %2986, %v2945
  %v2988 = vpop.permute.xlu0 %2987
  %2991 = vset.pattern.permute.xlu0 0
  %2992 = vperm.xlu0 %2991, %v2946
  %v2993 = vpop.permute.xlu0 %2992
  %2996 = vset.pattern.permute.xlu0 0
  %2997 = vperm.xlu0 %2996, %v2947
  %v2998 = vpop.permute.xlu0 %2997
  %3001 = vset.pattern.permute.xlu0 0
  %3002 = vperm.xlu0 %3001, %v2948
  %v3003 = vpop.permute.xlu0 %3002
  %3006 = vset.pattern.permute.xlu0 0
  %3007 = vperm.xlu0 %3006, %v2949
  %v3008 = vpop.permute.xlu0 %3007
  %3011 = vset.pattern.permute.xlu0 0
  %3012 = vperm.xlu0 %3011, %v2950
  %v3013 = vpop.permute.xlu0 %3012
  %3016 = vset.pattern.permute.xlu0 0
  %3017 = vperm.xlu0 %3016, %v2951
  %v3018 = vpop.permute.xlu0 %3017
  %3021 = vset.pattern.permute.xlu0 0
  %3022 = vperm.xlu0 %3021, %v2952
  %v3023 = vpop.permute.xlu0 %3022
  %3026 = vset.pattern.permute.xlu0 0
  %3027 = vperm.xlu0 %3026, %v2953
  %v3028 = vpop.permute.xlu0 %3027
  %3031 = vset.pattern.permute.xlu0 0
  %3032 = vperm.xlu0 %3031, %v2954
  %v3033 = vpop.permute.xlu0 %3032
  %3036 = vset.pattern.permute.xlu0 0
  %3037 = vperm.xlu0 %3036, %v2955
  %v3038 = vpop.permute.xlu0 %3037
  %3041 = vset.pattern.permute.xlu0 0
  %3042 = vperm.xlu0 %3041, %v2956
  %v3043 = vpop.permute.xlu0 %3042
  %3046 = vset.pattern.permute.xlu0 0
  %3047 = vperm.xlu0 %3046, %v2957
  %v3048 = vpop.permute.xlu0 %3047
  %3051 = vset.pattern.permute.xlu0 0
  %3052 = vperm.xlu0 %3051, %v2958
  %v3053 = vpop.permute.xlu0 %3052
  %3056 = vset.pattern.permute.xlu0 0
  %3057 = vperm.xlu0 %3056, %v2959
  %v3058 = vpop.permute.xlu0 %3057
  %3061 = vset.pattern.permute.xlu0 0
  %3062 = vperm.xlu0 %3061, %v2960
  %v3063 = vpop.permute.xlu0 %3062
  %3066 = vset.pattern.permute.xlu0 0
  %3067 = vperm.xlu0 %3066, %v2961
  %v3068 = vpop.permute.xlu0 %3067
  %3071 = vset.pattern.permute.xlu0 0
  %3072 = vperm.xlu0 %3071, %v2962
  %v3073 = vpop.permute.xlu0 %3072
  %3076 = vset.pattern.permute.xlu0 0
  %3077 = vperm.xlu0 %3076, %v2963
  %v3078 = vpop.permute.xlu0 %3077
  %3081 = vset.pattern.permute.xlu0 0
  %3082 = vperm.xlu0 %3081, %v2964
  %v3083 = vpop.permute.xlu0 %3082
  %3086 = vset.pattern.permute.xlu0 0
  %3087 = vperm.xlu0 %3086, %v2965
  %v3088 = vpop.permute.xlu0 %3087
  %3091 = vset.pattern.permute.xlu0 0
  %3092 = vperm.xlu0 %3091, %v2966
  %v3093 = vpop.permute.xlu0 %3092
  %3096 = vset.pattern.permute.xlu0 0
  %3097 = vperm.xlu0 %3096, %v2967
  %v3098 = vpop.permute.xlu0 %3097
  %3101 = vset.pattern.permute.xlu0 0
  %3102 = vperm.xlu0 %3101, %v2968
  %v3103 = vpop.permute.xlu0 %3102
  %3106 = vset.pattern.permute.xlu0 0
  %3107 = vperm.xlu0 %3106, %v2969
  %v3108 = vpop.permute.xlu0 %3107
  %3111 = vset.pattern.permute.xlu0 0
  %3112 = vperm.xlu0 %3111, %v2970
  %v3113 = vpop.permute.xlu0 %3112
  %3116 = vset.pattern.permute.xlu0 0
  %3117 = vperm.xlu0 %3116, %v2971
  %v3118 = vpop.permute.xlu0 %3117
  %3121 = vset.pattern.permute.xlu0 0
  %3122 = vperm.xlu0 %3121, %v2972
  %v3123 = vpop.permute.xlu0 %3122
  %3126 = vset.pattern.permute.xlu0 0
  %3127 = vperm.xlu0 %3126, %v2973
  %v3128 = vpop.permute.xlu0 %3127
  %3131 = vset.pattern.permute.xlu0 0
  %3132 = vperm.xlu0 %3131, %v2974
  %v3133 = vpop.permute.xlu0 %3132
  %v3135 = vmul.f32 %v2816, %v2978
  %v3136 = vmul.f32 %v2819, %v2983
  %v3137 = vmul.f32 %v2824, %v2988
  %v3138 = vmul.f32 %v2827, %v2993
  %v3139 = vmul.f32 %v2832, %v2998
  %v3140 = vmul.f32 %v2835, %v3003
  %v3141 = vmul.f32 %v2840, %v3008
  %v3142 = vmul.f32 %v2843, %v3013
  %v3143 = vmul.f32 %v2848, %v3018
  %v3144 = vmul.f32 %v2851, %v3023
  %v3145 = vmul.f32 %v2856, %v3028
  %v3146 = vmul.f32 %v2859, %v3033
  %v3147 = vmul.f32 %v2864, %v3038
  %v3148 = vmul.f32 %v2867, %v3043
  %v3149 = vmul.f32 %v2872, %v3048
  %v3150 = vmul.f32 %v2875, %v3053
  %v3151 = vmul.f32 %v2880, %v3058
  %v3152 = vmul.f32 %v2883, %v3063
  %v3153 = vmul.f32 %v2888, %v3068
  %v3154 = vmul.f32 %v2891, %v3073
  %v3155 = vmul.f32 %v2896, %v3078
  %v3156 = vmul.f32 %v2899, %v3083
  %v3157 = vmul.f32 %v2904, %v3088
  %v3158 = vmul.f32 %v2907, %v3093
  %v3159 = vmul.f32 %v2912, %v3098
  %v3160 = vmul.f32 %v2915, %v3103
  %v3161 = vmul.f32 %v2920, %v3108
  %v3162 = vmul.f32 %v2923, %v3113
  %v3163 = vmul.f32 %v2928, %v3118
  %v3164 = vmul.f32 %v2931, %v3123
  %v3165 = vmul.f32 %v2936, %v3128
  %v3166 = vmul.f32 %v2939, %v3133
  %v3167 = vpack.c.bf16 %v3136, %v3135
  %v3168 = vpack.c.bf16 %v3138, %v3137
  %v3169 = vpack.c.bf16 %v3140, %v3139
  %v3170 = vpack.c.bf16 %v3142, %v3141
  %v3171 = vpack.c.bf16 %v3144, %v3143
  %v3172 = vpack.c.bf16 %v3146, %v3145
  %v3173 = vpack.c.bf16 %v3148, %v3147
  %v3174 = vpack.c.bf16 %v3150, %v3149
  %v3175 = vpack.c.bf16 %v3152, %v3151
  %v3176 = vpack.c.bf16 %v3154, %v3153
  %v3177 = vpack.c.bf16 %v3156, %v3155
  %v3178 = vpack.c.bf16 %v3158, %v3157
  %v3179 = vpack.c.bf16 %v3160, %v3159
  %v3180 = vpack.c.bf16 %v3162, %v3161
  %v3181 = vpack.c.bf16 %v3164, %v3163
  %v3182 = vpack.c.bf16 %v3166, %v3165
  %3183 = vst [vmem:[#allocation2 + $0x20] sm:$0xff] %v3167
  %3184 = vst [vmem:[#allocation2 + $0x48] sm:$0xff] %v3168
  %3185 = vst [vmem:[#allocation2 + $0x70] sm:$0xff] %v3169
  %3186 = vst [vmem:[#allocation2 + $0x98] sm:$0xff] %v3170
  %3187 = vst [vmem:[#allocation2 + $0xc0] sm:$0xff] %v3171
  %3188 = vst [vmem:[#allocation2 + $0xe8] sm:$0xff] %v3172
  %3189 = vst [vmem:[#allocation2 + $0x110] sm:$0xff] %v3173
  %3190 = vst [vmem:[#allocation2 + $0x138] sm:$0xff] %v3174
  %3191 = vst [vmem:[#allocation2 + $0x160] sm:$0xff] %v3175
  %3192 = vst [vmem:[#allocation2 + $0x188] sm:$0xff] %v3176
  %3193 = vst [vmem:[#allocation2 + $0x1b0] sm:$0xff] %v3177
  %3194 = vst [vmem:[#allocation2 + $0x1d8] sm:$0xff] %v3178
  %3195 = vst [vmem:[#allocation2 + $0x200] sm:$0xff] %v3179
  %3196 = vst [vmem:[#allocation2 + $0x228] sm:$0xff] %v3180
  %3197 = vst [vmem:[#allocation2 + $0x250] sm:$0xff] %v3181
  %3198 = vst [vmem:[#allocation2 + $0x278] sm:$0xff] %v3182
  %v3199 = vld [vmem:[#allocation2] sm:$0xff]
  %v3200 = vld [vmem:[#allocation2 + $0x8] sm:$0xff]
  %v3201 = vld [vmem:[#allocation2 + $0x10] sm:$0xff]
  %v3202 = vld [vmem:[#allocation2 + $0x18] sm:$0xff]
  %v3203 = vld [vmem:[#allocation2 + $0x20] sm:$0xff]
  %v3204 = vld [vmem:[#allocation2 + $0x28] sm:$0xff]
  %v3205 = vld [vmem:[#allocation2 + $0x30] sm:$0xff]
  %v3206 = vld [vmem:[#allocation2 + $0x38] sm:$0xff]
  %v3207 = vld [vmem:[#allocation2 + $0x40] sm:$0xff]
  %v3208 = vld [vmem:[#allocation2 + $0x48] sm:$0xff]
  %v3209 = vld [vmem:[#allocation2 + $0x50] sm:$0xff]
  %v3210 = vld [vmem:[#allocation2 + $0x58] sm:$0xff]
  %v3211 = vld [vmem:[#allocation2 + $0x60] sm:$0xff]
  %v3212 = vld [vmem:[#allocation2 + $0x68] sm:$0xff]
  %v3213 = vld [vmem:[#allocation2 + $0x70] sm:$0xff]
  %v3214 = vld [vmem:[#allocation2 + $0x78] sm:$0xff]
  %v3215 = vld [vmem:[#allocation2 + $0x80] sm:$0xff]
  %v3216 = vld [vmem:[#allocation2 + $0x88] sm:$0xff]
  %v3217 = vld [vmem:[#allocation2 + $0x90] sm:$0xff]
  %v3218 = vld [vmem:[#allocation2 + $0x98] sm:$0xff]
  %v3219 = vld [vmem:[#allocation2 + $0xa0] sm:$0xff]
  %v3220 = vld [vmem:[#allocation2 + $0xa8] sm:$0xff]
  %v3221 = vld [vmem:[#allocation2 + $0xb0] sm:$0xff]
  %v3222 = vld [vmem:[#allocation2 + $0xb8] sm:$0xff]
  %v3223 = vld [vmem:[#allocation2 + $0xc0] sm:$0xff]
  %v3224 = vld [vmem:[#allocation2 + $0xc8] sm:$0xff]
  %v3225 = vld [vmem:[#allocation2 + $0xd0] sm:$0xff]
  %v3226 = vld [vmem:[#allocation2 + $0xd8] sm:$0xff]
  %v3227 = vld [vmem:[#allocation2 + $0xe0] sm:$0xff]
  %v3228 = vld [vmem:[#allocation2 + $0xe8] sm:$0xff]
  %v3229 = vld [vmem:[#allocation2 + $0xf0] sm:$0xff]
  %v3230 = vld [vmem:[#allocation2 + $0xf8] sm:$0xff]
  %v3231 = vld [vmem:[#allocation2 + $0x100] sm:$0xff]
  %v3232 = vld [vmem:[#allocation2 + $0x108] sm:$0xff]
  %v3233 = vld [vmem:[#allocation2 + $0x110] sm:$0xff]
  %v3234 = vld [vmem:[#allocation2 + $0x118] sm:$0xff]
  %v3235 = vld [vmem:[#allocation2 + $0x120] sm:$0xff]
  %v3236 = vld [vmem:[#allocation2 + $0x128] sm:$0xff]
  %v3237 = vld [vmem:[#allocation2 + $0x130] sm:$0xff]
  %v3238 = vld [vmem:[#allocation2 + $0x138] sm:$0xff]
  %v3239 = vld [vmem:[#allocation2 + $0x140] sm:$0xff]
  %v3240 = vld [vmem:[#allocation2 + $0x148] sm:$0xff]
  %v3241 = vld [vmem:[#allocation2 + $0x150] sm:$0xff]
  %v3242 = vld [vmem:[#allocation2 + $0x158] sm:$0xff]
  %v3243 = vld [vmem:[#allocation2 + $0x160] sm:$0xff]
  %v3244 = vld [vmem:[#allocation2 + $0x168] sm:$0xff]
  %v3245 = vld [vmem:[#allocation2 + $0x170] sm:$0xff]
  %v3246 = vld [vmem:[#allocation2 + $0x178] sm:$0xff]
  %v3247 = vld [vmem:[#allocation2 + $0x180] sm:$0xff]
  %v3248 = vld [vmem:[#allocation2 + $0x188] sm:$0xff]
  %v3249 = vld [vmem:[#allocation2 + $0x190] sm:$0xff]
  %v3250 = vld [vmem:[#allocation2 + $0x198] sm:$0xff]
  %v3251 = vld [vmem:[#allocation2 + $0x1a0] sm:$0xff]
  %v3252 = vld [vmem:[#allocation2 + $0x1a8] sm:$0xff]
  %v3253 = vld [vmem:[#allocation2 + $0x1b0] sm:$0xff]
  %v3254 = vld [vmem:[#allocation2 + $0x1b8] sm:$0xff]
  %v3255 = vld [vmem:[#allocation2 + $0x1c0] sm:$0xff]
  %v3256 = vld [vmem:[#allocation2 + $0x1c8] sm:$0xff]
  %v3257 = vld [vmem:[#allocation2 + $0x1d0] sm:$0xff]
  %v3258 = vld [vmem:[#allocation2 + $0x1d8] sm:$0xff]
  %v3259 = vld [vmem:[#allocation2 + $0x1e0] sm:$0xff]
  %v3260 = vld [vmem:[#allocation2 + $0x1e8] sm:$0xff]
  %v3261 = vld [vmem:[#allocation2 + $0x1f0] sm:$0xff]
  %v3262 = vld [vmem:[#allocation2 + $0x1f8] sm:$0xff]
  %v3263 = vld [vmem:[#allocation2 + $0x200] sm:$0xff]
  %v3264 = vld [vmem:[#allocation2 + $0x208] sm:$0xff]
  %v3265 = vld [vmem:[#allocation2 + $0x210] sm:$0xff]
  %v3266 = vld [vmem:[#allocation2 + $0x218] sm:$0xff]
  %v3267 = vld [vmem:[#allocation2 + $0x220] sm:$0xff]
  %v3268 = vld [vmem:[#allocation2 + $0x228] sm:$0xff]
  %v3269 = vld [vmem:[#allocation2 + $0x230] sm:$0xff]
  %v3270 = vld [vmem:[#allocation2 + $0x238] sm:$0xff]
  %v3271 = vld [vmem:[#allocation2 + $0x240] sm:$0xff]
  %v3272 = vld [vmem:[#allocation2 + $0x248] sm:$0xff]
  %v3273 = vld [vmem:[#allocation2 + $0x250] sm:$0xff]
  %v3274 = vld [vmem:[#allocation2 + $0x258] sm:$0xff]
  %v3275 = vld [vmem:[#allocation2 + $0x260] sm:$0xff]
  %v3276 = vld [vmem:[#allocation2 + $0x268] sm:$0xff]
  %v3277 = vld [vmem:[#allocation2 + $0x270] sm:$0xff]
  %v3278 = vld [vmem:[#allocation2 + $0x278] sm:$0xff]
  %v3279 = vld [vmem:[%s3] sm:$0xf]
  %v3280 = vld [vmem:[%s3 + $0x4] sm:$0xf]
  %v3281 = vld [vmem:[%s3 + $0x8] sm:$0xf]
  %v3282 = vld [vmem:[%s3 + $0xc] sm:$0xf]
  %v3283 = vld [vmem:[%s3 + $0x10] sm:$0xf]
  %v3284 = vld [vmem:[%s3 + $0x14] sm:$0xf]
  %v3285 = vld [vmem:[%s3 + $0x18] sm:$0xf]
  %v3286 = vld [vmem:[%s3 + $0x1c] sm:$0xf]
  %v3287 = vld [vmem:[%s3 + $0x20] sm:$0xf]
  %v3288 = vld [vmem:[%s3 + $0x24] sm:$0xf]
  %v3289 = vld [vmem:[%s3 + $0x28] sm:$0xf]
  %v3290 = vld [vmem:[%s3 + $0x2c] sm:$0xf]
  %v3291 = vld [vmem:[%s3 + $0x30] sm:$0xf]
  %v3292 = vld [vmem:[%s3 + $0x34] sm:$0xf]
  %v3293 = vld [vmem:[%s3 + $0x38] sm:$0xf]
  %v3294 = vld [vmem:[%s3 + $0x3c] sm:$0xf]
  %v3295 = vld [vmem:[%s3 + $0x40] sm:$0xf]
  %v3296 = vld [vmem:[%s3 + $0x44] sm:$0xf]
  %v3297 = vld [vmem:[%s3 + $0x48] sm:$0xf]
  %v3298 = vld [vmem:[%s3 + $0x4c] sm:$0xf]
  %v3299 = vld [vmem:[%s3 + $0x50] sm:$0xf]
  %v3300 = vld [vmem:[%s3 + $0x54] sm:$0xf]
  %v3301 = vld [vmem:[%s3 + $0x58] sm:$0xf]
  %v3302 = vld [vmem:[%s3 + $0x5c] sm:$0xf]
  %v3303 = vld [vmem:[%s3 + $0x60] sm:$0xf]
  %v3304 = vld [vmem:[%s3 + $0x64] sm:$0xf]
  %v3305 = vld [vmem:[%s3 + $0x68] sm:$0xf]
  %v3306 = vld [vmem:[%s3 + $0x6c] sm:$0xf]
  %v3307 = vld [vmem:[%s3 + $0x70] sm:$0xf]
  %v3308 = vld [vmem:[%s3 + $0x74] sm:$0xf]
  %v3309 = vld [vmem:[%s3 + $0x78] sm:$0xf]
  %v3310 = vld [vmem:[%s3 + $0x7c] sm:$0xf]
  %v3311 = vld [vmem:[%s3 + $0x80] sm:$0xf]
  %v3312 = vld [vmem:[%s3 + $0x84] sm:$0xf]
  %v3313 = vld [vmem:[%s3 + $0x88] sm:$0xf]
  %v3314 = vld [vmem:[%s3 + $0x8c] sm:$0xf]
  %v3315 = vld [vmem:[%s3 + $0x90] sm:$0xf]
  %v3316 = vld [vmem:[%s3 + $0x94] sm:$0xf]
  %v3317 = vld [vmem:[%s3 + $0x98] sm:$0xf]
  %v3318 = vld [vmem:[%s3 + $0x9c] sm:$0xf]
  %v3319 = vld [vmem:[%s3 + $0xa0] sm:$0xf]
  %v3320 = vld [vmem:[%s3 + $0xa4] sm:$0xf]
  %v3321 = vld [vmem:[%s3 + $0xa8] sm:$0xf]
  %v3322 = vld [vmem:[%s3 + $0xac] sm:$0xf]
  %v3323 = vld [vmem:[%s3 + $0xb0] sm:$0xf]
  %v3324 = vld [vmem:[%s3 + $0xb4] sm:$0xf]
  %v3325 = vld [vmem:[%s3 + $0xb8] sm:$0xf]
  %v3326 = vld [vmem:[%s3 + $0xbc] sm:$0xf]
  %v3327 = vld [vmem:[%s3 + $0xc0] sm:$0xf]
  %v3328 = vld [vmem:[%s3 + $0xc4] sm:$0xf]
  %v3329 = vld [vmem:[%s3 + $0xc8] sm:$0xf]
  %v3330 = vld [vmem:[%s3 + $0xcc] sm:$0xf]
  %v3331 = vld [vmem:[%s3 + $0xd0] sm:$0xf]
  %v3332 = vld [vmem:[%s3 + $0xd4] sm:$0xf]
  %v3333 = vld [vmem:[%s3 + $0xd8] sm:$0xf]
  %v3334 = vld [vmem:[%s3 + $0xdc] sm:$0xf]
  %v3335 = vld [vmem:[%s3 + $0xe0] sm:$0xf]
  %v3336 = vld [vmem:[%s3 + $0xe4] sm:$0xf]
  %v3337 = vld [vmem:[%s3 + $0xe8] sm:$0xf]
  %v3338 = vld [vmem:[%s3 + $0xec] sm:$0xf]
  %v3339 = vld [vmem:[%s3 + $0xf0] sm:$0xf]
  %v3340 = vld [vmem:[%s3 + $0xf4] sm:$0xf]
  %v3341 = vld [vmem:[%s3 + $0xf8] sm:$0xf]
  %v3342 = vld [vmem:[%s3 + $0xfc] sm:$0xf]
  %v3343 = vld [vmem:[%s3 + $0x100] sm:$0xf]
  %v3344 = vld [vmem:[%s3 + $0x104] sm:$0xf]
  %v3345 = vld [vmem:[%s3 + $0x108] sm:$0xf]
  %v3346 = vld [vmem:[%s3 + $0x10c] sm:$0xf]
  %v3347 = vld [vmem:[%s3 + $0x110] sm:$0xf]
  %v3348 = vld [vmem:[%s3 + $0x114] sm:$0xf]
  %v3349 = vld [vmem:[%s3 + $0x118] sm:$0xf]
  %v3350 = vld [vmem:[%s3 + $0x11c] sm:$0xf]
  %v3351 = vld [vmem:[%s3 + $0x120] sm:$0xf]
  %v3352 = vld [vmem:[%s3 + $0x124] sm:$0xf]
  %v3353 = vld [vmem:[%s3 + $0x128] sm:$0xf]
  %v3354 = vld [vmem:[%s3 + $0x12c] sm:$0xf]
  %v3355 = vld [vmem:[%s3 + $0x130] sm:$0xf]
  %v3356 = vld [vmem:[%s3 + $0x134] sm:$0xf]
  %v3357 = vld [vmem:[%s3 + $0x138] sm:$0xf]
  %v3358 = vld [vmem:[%s3 + $0x13c] sm:$0xf]
  %v3439 = vunpack.c.l.b16 %v3279
  %v3440 = vunpack.c.l.b16 %v3280
  %v3441 = vunpack.c.l.b16 %v3281
  %v3442 = vunpack.c.l.b16 %v3282
  %v3443 = vunpack.c.l.b16 %v3283
  %v3444 = vunpack.c.l.b16 %v3284
  %v3445 = vunpack.c.l.b16 %v3285
  %v3446 = vunpack.c.l.b16 %v3286
  %v3447 = vunpack.c.l.b16 %v3287
  %v3448 = vunpack.c.l.b16 %v3288
  %v3449 = vunpack.c.l.b16 %v3289
  %v3450 = vunpack.c.l.b16 %v3290
  %v3451 = vunpack.c.l.b16 %v3291
  %v3452 = vunpack.c.l.b16 %v3292
  %v3453 = vunpack.c.l.b16 %v3293
  %v3454 = vunpack.c.l.b16 %v3294
  %v3455 = vunpack.c.l.b16 %v3295
  %v3456 = vunpack.c.l.b16 %v3296
  %v3457 = vunpack.c.l.b16 %v3297
  %v3458 = vunpack.c.l.b16 %v3298
  %v3459 = vunpack.c.l.b16 %v3299
  %v3460 = vunpack.c.l.b16 %v3300
  %v3461 = vunpack.c.l.b16 %v3301
  %v3462 = vunpack.c.l.b16 %v3302
  %v3463 = vunpack.c.l.b16 %v3303
  %v3464 = vunpack.c.l.b16 %v3304
  %v3465 = vunpack.c.l.b16 %v3305
  %v3466 = vunpack.c.l.b16 %v3306
  %v3467 = vunpack.c.l.b16 %v3307
  %v3468 = vunpack.c.l.b16 %v3308
  %v3469 = vunpack.c.l.b16 %v3309
  %v3470 = vunpack.c.l.b16 %v3310
  %v3471 = vunpack.c.l.b16 %v3311
  %v3472 = vunpack.c.l.b16 %v3312
  %v3473 = vunpack.c.l.b16 %v3313
  %v3474 = vunpack.c.l.b16 %v3314
  %v3475 = vunpack.c.l.b16 %v3315
  %v3476 = vunpack.c.l.b16 %v3316
  %v3477 = vunpack.c.l.b16 %v3317
  %v3478 = vunpack.c.l.b16 %v3318
  %v3479 = vunpack.c.l.b16 %v3319
  %v3480 = vunpack.c.l.b16 %v3320
  %v3481 = vunpack.c.l.b16 %v3321
  %v3482 = vunpack.c.l.b16 %v3322
  %v3483 = vunpack.c.l.b16 %v3323
  %v3484 = vunpack.c.l.b16 %v3324
  %v3485 = vunpack.c.l.b16 %v3325
  %v3486 = vunpack.c.l.b16 %v3326
  %v3487 = vunpack.c.l.b16 %v3327
  %v3488 = vunpack.c.l.b16 %v3328
  %v3489 = vunpack.c.l.b16 %v3329
  %v3490 = vunpack.c.l.b16 %v3330
  %v3491 = vunpack.c.l.b16 %v3331
  %v3492 = vunpack.c.l.b16 %v3332
  %v3493 = vunpack.c.l.b16 %v3333
  %v3494 = vunpack.c.l.b16 %v3334
  %v3495 = vunpack.c.l.b16 %v3335
  %v3496 = vunpack.c.l.b16 %v3336
  %v3497 = vunpack.c.l.b16 %v3337
  %v3498 = vunpack.c.l.b16 %v3338
  %v3499 = vunpack.c.l.b16 %v3339
  %v3500 = vunpack.c.l.b16 %v3340
  %v3501 = vunpack.c.l.b16 %v3341
  %v3502 = vunpack.c.l.b16 %v3342
  %v3503 = vunpack.c.l.b16 %v3343
  %v3504 = vunpack.c.l.b16 %v3344
  %v3505 = vunpack.c.l.b16 %v3345
  %v3506 = vunpack.c.l.b16 %v3346
  %v3507 = vunpack.c.l.b16 %v3347
  %v3508 = vunpack.c.l.b16 %v3348
  %v3509 = vunpack.c.l.b16 %v3349
  %v3510 = vunpack.c.l.b16 %v3350
  %v3511 = vunpack.c.l.b16 %v3351
  %v3512 = vunpack.c.l.b16 %v3352
  %v3513 = vunpack.c.l.b16 %v3353
  %v3514 = vunpack.c.l.b16 %v3354
  %v3515 = vunpack.c.l.b16 %v3355
  %v3516 = vunpack.c.l.b16 %v3356
  %v3517 = vunpack.c.l.b16 %v3357
  %v3518 = vunpack.c.l.b16 %v3358
  %v3519 = vpack.c.b16 %v3440, %v3439
  %v3520 = vpack.c.b16 %v3442, %v3441
  %v3521 = vpack.c.b16 %v3444, %v3443
  %v3522 = vpack.c.b16 %v3446, %v3445
  %v3523 = vpack.c.b16 %v3448, %v3447
  %v3524 = vpack.c.b16 %v3450, %v3449
  %v3525 = vpack.c.b16 %v3452, %v3451
  %v3526 = vpack.c.b16 %v3454, %v3453
  %v3527 = vpack.c.b16 %v3456, %v3455
  %v3528 = vpack.c.b16 %v3458, %v3457
  %v3529 = vpack.c.b16 %v3460, %v3459
  %v3530 = vpack.c.b16 %v3462, %v3461
  %v3531 = vpack.c.b16 %v3464, %v3463
  %v3532 = vpack.c.b16 %v3466, %v3465
  %v3533 = vpack.c.b16 %v3468, %v3467
  %v3534 = vpack.c.b16 %v3470, %v3469
  %v3535 = vpack.c.b16 %v3472, %v3471
  %v3536 = vpack.c.b16 %v3474, %v3473
  %v3537 = vpack.c.b16 %v3476, %v3475
  %v3538 = vpack.c.b16 %v3478, %v3477
  %v3539 = vpack.c.b16 %v3480, %v3479
  %v3540 = vpack.c.b16 %v3482, %v3481
  %v3541 = vpack.c.b16 %v3484, %v3483
  %v3542 = vpack.c.b16 %v3486, %v3485
  %v3543 = vpack.c.b16 %v3488, %v3487
  %v3544 = vpack.c.b16 %v3490, %v3489
  %v3545 = vpack.c.b16 %v3492, %v3491
  %v3546 = vpack.c.b16 %v3494, %v3493
  %v3547 = vpack.c.b16 %v3496, %v3495
  %v3548 = vpack.c.b16 %v3498, %v3497
  %v3549 = vpack.c.b16 %v3500, %v3499
  %v3550 = vpack.c.b16 %v3502, %v3501
  %v3551 = vpack.c.b16 %v3504, %v3503
  %v3552 = vpack.c.b16 %v3506, %v3505
  %v3553 = vpack.c.b16 %v3508, %v3507
  %v3554 = vpack.c.b16 %v3510, %v3509
  %v3555 = vpack.c.b16 %v3512, %v3511
  %v3556 = vpack.c.b16 %v3514, %v3513
  %v3557 = vpack.c.b16 %v3516, %v3515
  %v3558 = vpack.c.b16 %v3518, %v3517
  %3599 = vmatprep.subr.bf16.mxu0 0
  %3600 = vmatpush1.bf16.msra.mxu0 %v3519
  %3601 = vmatprep.subr.bf16.mxu0 0
  %3602 = vmatpush1.bf16.msra.mxu0 %v3520
  %3603 = vmatprep.subr.bf16.mxu0 0
  %3604 = vmatpush1.bf16.msra.mxu0 %v3521
  %3605 = vmatprep.subr.bf16.mxu0 0
  %3606 = vmatpush1.bf16.msra.mxu0 %v3522
  %3607 = vmatprep.subr.bf16.mxu0 0
  %3608 = vmatpush1.bf16.msra.mxu0 %v3523
  %3609 = vmatprep.subr.bf16.mxu0 0
  %3610 = vmatpush1.bf16.msra.mxu0 %v3524
  %3611 = vmatprep.subr.bf16.mxu0 0
  %3612 = vmatpush1.bf16.msra.mxu0 %v3525
  %3613 = vmatprep.subr.bf16.mxu0 0
  %3614 = vmatpush1.bf16.msra.mxu0 %v3526
  %3615 = vmatprep.subr.bf16.mxu0 0
  %3616 = vmatpush1.bf16.msra.mxu0 %v3527
  %3617 = vmatprep.subr.bf16.mxu0 0
  %3618 = vmatpush1.bf16.msra.mxu0 %v3528
  %3619 = vmatprep.subr.bf16.mxu0 0
  %3620 = vmatpush1.bf16.msra.mxu0 %v3529
  %3621 = vmatprep.subr.bf16.mxu0 0
  %3622 = vmatpush1.bf16.msra.mxu0 %v3530
  %3623 = vmatprep.subr.bf16.mxu0 0
  %3624 = vmatpush1.bf16.msra.mxu0 %v3531
  %3625 = vmatprep.subr.bf16.mxu0 0
  %3626 = vmatpush1.bf16.msra.mxu0 %v3532
  %3627 = vmatprep.subr.bf16.mxu0 0
  %3628 = vmatpush1.bf16.msra.mxu0 %v3533
  %3629 = vmatprep.subr.bf16.mxu0 0
  %3630 = vmatpush1.bf16.msra.mxu0 %v3534
  %3631 = vmatprep.mubr.bf16.mxu0 %v3200
  %3632 = vmatmul.mubr.bf16.gmra.mrb[0].mxu0 %v3199
  %v3633 = vpop.f32.mrb[0].mxu0
  %v3634 = vadd.f32 0.0, %v3633
  %v3635 = vpop.f32.mrb[0].mxu0
  %v3636 = vpop.f32.mrb[0].mxu0
  %v3637 = vadd.f32 0.0, %v3636
  %v3638 = vpop.f32.mrb[0].mxu0
  %3639 = vmatprep.mubr.bf16.mxu0 %v3205
  %3640 = vmatmul.mubr.bf16.gmra.mrb[0].mxu0 %v3204
  %v3641 = vpop.f32.mrb[0].mxu0
  %v3642 = vadd.f32 0.0, %v3641
  %v3643 = vpop.f32.mrb[0].mxu0
  %v3644 = vpop.f32.mrb[0].mxu0
  %v3645 = vadd.f32 0.0, %v3644
  %v3646 = vpop.f32.mrb[0].mxu0
  %3647 = vmatprep.mubr.bf16.mxu0 %v3210
  %3648 = vmatmul.mubr.bf16.gmra.mrb[0].mxu0 %v3209
  %v3649 = vpop.f32.mrb[0].mxu0
  %v3650 = vadd.f32 0.0, %v3649
  %v3651 = vpop.f32.mrb[0].mxu0
  %v3652 = vpop.f32.mrb[0].mxu0
  %v3653 = vadd.f32 0.0, %v3652
  %v3654 = vpop.f32.mrb[0].mxu0
  %3655 = vmatprep.mubr.bf16.mxu0 %v3215
  %3656 = vmatmul.mubr.bf16.gmra.mrb[0].mxu0 %v3214
  %v3657 = vpop.f32.mrb[0].mxu0
  %v3658 = vadd.f32 0.0, %v3657
  %v3659 = vpop.f32.mrb[0].mxu0
  %v3660 = vpop.f32.mrb[0].mxu0
  %v3661 = vadd.f32 0.0, %v3660
  %v3662 = vpop.f32.mrb[0].mxu0
  %3663 = vmatprep.mubr.bf16.mxu0 %v3220
  %3664 = vmatmul.mubr.bf16.gmra.mrb[0].mxu0 %v3219
  %v3665 = vpop.f32.mrb[0].mxu0
  %v3666 = vadd.f32 0.0, %v3665
  %v3667 = vpop.f32.mrb[0].mxu0
  %v3668 = vpop.f32.mrb[0].mxu0
  %v3669 = vadd.f32 0.0, %v3668
  %v3670 = vpop.f32.mrb[0].mxu0
  %3671 = vmatprep.mubr.bf16.mxu0 %v3225
  %3672 = vmatmul.mubr.bf16.gmra.mrb[0].mxu0 %v3224
  %v3673 = vpop.f32.mrb[0].mxu0
  %v3674 = vadd.f32 0.0, %v3673
  %v3675 = vpop.f32.mrb[0].mxu0
  %v3676 = vpop.f32.mrb[0].mxu0
  %v3677 = vadd.f32 0.0, %v3676
  %v3678 = vpop.f32.mrb[0].mxu0
  %3679 = vmatprep.mubr.bf16.mxu0 %v3230
  %3680 = vmatmul.mubr.bf16.gmra.mrb[0].mxu0 %v3229
  %v3681 = vpop.f32.mrb[0].mxu0
  %v3682 = vadd.f32 0.0, %v3681
  %v3683 = vpop.f32.mrb[0].mxu0
  %v3684 = vpop.f32.mrb[0].mxu0
  %v3685 = vadd.f32 0.0, %v3684
  %v3686 = vpop.f32.mrb[0].mxu0
  %3687 = vmatprep.mubr.bf16.mxu0 %v3235
  %3688 = vmatmul.mubr.bf16.gmra.mrb[0].mxu0 %v3234
  %v3689 = vpop.f32.mrb[0].mxu0
  %v3690 = vadd.f32 0.0, %v3689
  %v3691 = vpop.f32.mrb[0].mxu0
  %v3692 = vpop.f32.mrb[0].mxu0
  %v3693 = vadd.f32 0.0, %v3692
  %v3694 = vpop.f32.mrb[0].mxu0
  %3695 = vmatprep.mubr.bf16.mxu0 %v3240
  %3696 = vmatmul.mubr.bf16.gmra.mrb[0].mxu0 %v3239
  %v3697 = vpop.f32.mrb[0].mxu0
  %v3698 = vadd.f32 0.0, %v3697
  %v3699 = vpop.f32.mrb[0].mxu0
  %v3700 = vpop.f32.mrb[0].mxu0
  %v3701 = vadd.f32 0.0, %v3700
  %v3702 = vpop.f32.mrb[0].mxu0
  %3703 = vmatprep.mubr.bf16.mxu0 %v3245
  %3704 = vmatmul.mubr.bf16.gmra.mrb[0].mxu0 %v3244
  %v3705 = vpop.f32.mrb[0].mxu0
  %v3706 = vadd.f32 0.0, %v3705
  %v3707 = vpop.f32.mrb[0].mxu0
  %v3708 = vpop.f32.mrb[0].mxu0
  %v3709 = vadd.f32 0.0, %v3708
  %v3710 = vpop.f32.mrb[0].mxu0
  %3711 = vmatprep.mubr.bf16.mxu0 %v3250
  %3712 = vmatmul.mubr.bf16.gmra.mrb[0].mxu0 %v3249
  %v3713 = vpop.f32.mrb[0].mxu0
  %v3714 = vadd.f32 0.0, %v3713
  %v3715 = vpop.f32.mrb[0].mxu0
  %v3716 = vpop.f32.mrb[0].mxu0
  %v3717 = vadd.f32 0.0, %v3716
  %v3718 = vpop.f32.mrb[0].mxu0
  %3719 = vmatprep.mubr.bf16.mxu0 %v3255
  %3720 = vmatmul.mubr.bf16.gmra.mrb[0].mxu0 %v3254
  %v3721 = vpop.f32.mrb[0].mxu0
  %v3722 = vadd.f32 0.0, %v3721
  %v3723 = vpop.f32.mrb[0].mxu0
  %v3724 = vpop.f32.mrb[0].mxu0
  %v3725 = vadd.f32 0.0, %v3724
  %v3726 = vpop.f32.mrb[0].mxu0
  %3727 = vmatprep.mubr.bf16.mxu0 %v3260
  %3728 = vmatmul.mubr.bf16.gmra.mrb[0].mxu0 %v3259
  %v3729 = vpop.f32.mrb[0].mxu0
  %v3730 = vadd.f32 0.0, %v3729
  %v3731 = vpop.f32.mrb[0].mxu0
  %v3732 = vpop.f32.mrb[0].mxu0
  %v3733 = vadd.f32 0.0, %v3732
  %v3734 = vpop.f32.mrb[0].mxu0
  %3735 = vmatprep.mubr.bf16.mxu0 %v3265
  %3736 = vmatmul.mubr.bf16.gmra.mrb[0].mxu0 %v3264
  %v3737 = vpop.f32.mrb[0].mxu0
  %v3738 = vadd.f32 0.0, %v3737
  %v3739 = vpop.f32.mrb[0].mxu0
  %v3740 = vpop.f32.mrb[0].mxu0
  %v3741 = vadd.f32 0.0, %v3740
  %v3742 = vpop.f32.mrb[0].mxu0
  %3743 = vmatprep.mubr.bf16.mxu0 %v3270
  %3744 = vmatmul.mubr.bf16.gmra.mrb[0].mxu0 %v3269
  %v3745 = vpop.f32.mrb[0].mxu0
  %v3746 = vadd.f32 0.0, %v3745
  %v3747 = vpop.f32.mrb[0].mxu0
  %v3748 = vpop.f32.mrb[0].mxu0
  %v3749 = vadd.f32 0.0, %v3748
  %v3750 = vpop.f32.mrb[0].mxu0
  %3751 = vmatprep.mubr.bf16.mxu0 %v3275
  %3752 = vmatmul.mubr.bf16.gmra.mrb[0].mxu0 %v3274
  %v3753 = vpop.f32.mrb[0].mxu0
  %v3754 = vadd.f32 0.0, %v3753
  %v3755 = vpop.f32.mrb[0].mxu0
  %v3756 = vpop.f32.mrb[0].mxu0
  %v3757 = vadd.f32 0.0, %v3756
  %v3758 = vpop.f32.mrb[0].mxu0
  %3759 = vdwg.mxu0
  %3760 = vmatprep.subr.bf16.mxu0 0
  %3761 = vmatpush1.bf16.msra.mxu0 %v3535
  %3762 = vmatprep.subr.bf16.mxu0 0
  %3763 = vmatpush1.bf16.msra.mxu0 %v3536
  %3764 = vmatprep.subr.bf16.mxu0 0
  %3765 = vmatpush1.bf16.msra.mxu0 %v3537
  %3766 = vmatprep.subr.bf16.mxu0 0
  %3767 = vmatpush1.bf16.msra.mxu0 %v3538
  %3768 = vmatprep.subr.bf16.mxu0 0
  %3769 = vmatpush1.bf16.msra.mxu0 %v3539
  %3770 = vmatprep.subr.bf16.mxu0 0
  %3771 = vmatpush1.bf16.msra.mxu0 %v3540
  %3772 = vmatprep.subr.bf16.mxu0 0
  %3773 = vmatpush1.bf16.msra.mxu0 %v3541
  %3774 = vmatprep.subr.bf16.mxu0 0
  %3775 = vmatpush1.bf16.msra.mxu0 %v3542
  %3776 = vmatprep.subr.bf16.mxu0 0
  %3777 = vmatpush1.bf16.msra.mxu0 %v3543
  %3778 = vmatprep.subr.bf16.mxu0 0
  %3779 = vmatpush1.bf16.msra.mxu0 %v3544
  %3780 = vmatprep.subr.bf16.mxu0 0
  %3781 = vmatpush1.bf16.msra.mxu0 %v3545
  %3782 = vmatprep.subr.bf16.mxu0 0
  %3783 = vmatpush1.bf16.msra.mxu0 %v3546
  %3784 = vmatprep.subr.bf16.mxu0 0
  %3785 = vmatpush1.bf16.msra.mxu0 %v3547
  %3786 = vmatprep.subr.bf16.mxu0 0
  %3787 = vmatpush1.bf16.msra.mxu0 %v3548
  %3788 = vmatprep.subr.bf16.mxu0 0
  %3789 = vmatpush1.bf16.msra.mxu0 %v3549
  %3790 = vmatprep.subr.bf16.mxu0 0
  %3791 = vmatpush1.bf16.msra.mxu0 %v3550
  %3792 = vmatprep.mubr.bf16.mxu0 %v3202
  %3793 = vmatmul.mubr.bf16.gmra.mrb[0].mxu0 %v3201
  %v3794 = vpop.f32.mrb[0].mxu0
  %v3795 = vadd.f32 %v3634, %v3794
  %v3796 = vpop.f32.mrb[0].mxu0
  %v3797 = vpop.f32.mrb[0].mxu0
  %v3798 = vadd.f32 %v3637, %v3797
  %v3799 = vpop.f32.mrb[0].mxu0
  %3800 = vmatprep.mubr.bf16.mxu0 %v3207
  %3801 = vmatmul.mubr.bf16.gmra.mrb[0].mxu0 %v3206
  %v3802 = vpop.f32.mrb[0].mxu0
  %v3803 = vadd.f32 %v3642, %v3802
  %v3804 = vpop.f32.mrb[0].mxu0
  %v3805 = vpop.f32.mrb[0].mxu0
  %v3806 = vadd.f32 %v3645, %v3805
  %v3807 = vpop.f32.mrb[0].mxu0
  %3808 = vmatprep.mubr.bf16.mxu0 %v3212
  %3809 = vmatmul.mubr.bf16.gmra.mrb[0].mxu0 %v3211
  %v3810 = vpop.f32.mrb[0].mxu0
  %v3811 = vadd.f32 %v3650, %v3810
  %v3812 = vpop.f32.mrb[0].mxu0
  %v3813 = vpop.f32.mrb[0].mxu0
  %v3814 = vadd.f32 %v3653, %v3813
  %v3815 = vpop.f32.mrb[0].mxu0
  %3816 = vmatprep.mubr.bf16.mxu0 %v3217
  %3817 = vmatmul.mubr.bf16.gmra.mrb[0].mxu0 %v3216
  %v3818 = vpop.f32.mrb[0].mxu0
  %v3819 = vadd.f32 %v3658, %v3818
  %v3820 = vpop.f32.mrb[0].mxu0
  %v3821 = vpop.f32.mrb[0].mxu0
  %v3822 = vadd.f32 %v3661, %v3821
  %v3823 = vpop.f32.mrb[0].mxu0
  %3824 = vmatprep.mubr.bf16.mxu0 %v3222
  %3825 = vmatmul.mubr.bf16.gmra.mrb[0].mxu0 %v3221
  %v3826 = vpop.f32.mrb[0].mxu0
  %v3827 = vadd.f32 %v3666, %v3826
  %v3828 = vpop.f32.mrb[0].mxu0
  %v3829 = vpop.f32.mrb[0].mxu0
  %v3830 = vadd.f32 %v3669, %v3829
  %v3831 = vpop.f32.mrb[0].mxu0
  %3832 = vmatprep.mubr.bf16.mxu0 %v3227
  %3833 = vmatmul.mubr.bf16.gmra.mrb[0].mxu0 %v3226
  %v3834 = vpop.f32.mrb[0].mxu0
  %v3835 = vadd.f32 %v3674, %v3834
  %v3836 = vpop.f32.mrb[0].mxu0
  %v3837 = vpop.f32.mrb[0].mxu0
  %v3838 = vadd.f32 %v3677, %v3837
  %v3839 = vpop.f32.mrb[0].mxu0
  %3840 = vmatprep.mubr.bf16.mxu0 %v3232
  %3841 = vmatmul.mubr.bf16.gmra.mrb[0].mxu0 %v3231
  %v3842 = vpop.f32.mrb[0].mxu0
  %v3843 = vadd.f32 %v3682, %v3842
  %v3844 = vpop.f32.mrb[0].mxu0
  %v3845 = vpop.f32.mrb[0].mxu0
  %v3846 = vadd.f32 %v3685, %v3845
  %v3847 = vpop.f32.mrb[0].mxu0
  %3848 = vmatprep.mubr.bf16.mxu0 %v3237
  %3849 = vmatmul.mubr.bf16.gmra.mrb[0].mxu0 %v3236
  %v3850 = vpop.f32.mrb[0].mxu0
  %v3851 = vadd.f32 %v3690, %v3850
  %v3852 = vpop.f32.mrb[0].mxu0
  %v3853 = vpop.f32.mrb[0].mxu0
  %v3854 = vadd.f32 %v3693, %v3853
  %v3855 = vpop.f32.mrb[0].mxu0
  %3856 = vmatprep.mubr.bf16.mxu0 %v3242
  %3857 = vmatmul.mubr.bf16.gmra.mrb[0].mxu0 %v3241
  %v3858 = vpop.f32.mrb[0].mxu0
  %v3859 = vadd.f32 %v3698, %v3858
  %v3860 = vpop.f32.mrb[0].mxu0
  %v3861 = vpop.f32.mrb[0].mxu0
  %v3862 = vadd.f32 %v3701, %v3861
  %v3863 = vpop.f32.mrb[0].mxu0
  %3864 = vmatprep.mubr.bf16.mxu0 %v3247
  %3865 = vmatmul.mubr.bf16.gmra.mrb[0].mxu0 %v3246
  %v3866 = vpop.f32.mrb[0].mxu0
  %v3867 = vadd.f32 %v3706, %v3866
  %v3868 = vpop.f32.mrb[0].mxu0
  %v3869 = vpop.f32.mrb[0].mxu0
  %v3870 = vadd.f32 %v3709, %v3869
  %v3871 = vpop.f32.mrb[0].mxu0
  %3872 = vmatprep.mubr.bf16.mxu0 %v3252
  %3873 = vmatmul.mubr.bf16.gmra.mrb[0].mxu0 %v3251
  %v3874 = vpop.f32.mrb[0].mxu0
  %v3875 = vadd.f32 %v3714, %v3874
  %v3876 = vpop.f32.mrb[0].mxu0
  %v3877 = vpop.f32.mrb[0].mxu0
  %v3878 = vadd.f32 %v3717, %v3877
  %v3879 = vpop.f32.mrb[0].mxu0
  %3880 = vmatprep.mubr.bf16.mxu0 %v3257
  %3881 = vmatmul.mubr.bf16.gmra.mrb[0].mxu0 %v3256
  %v3882 = vpop.f32.mrb[0].mxu0
  %v3883 = vadd.f32 %v3722, %v3882
  %v3884 = vpop.f32.mrb[0].mxu0
  %v3885 = vpop.f32.mrb[0].mxu0
  %v3886 = vadd.f32 %v3725, %v3885
  %v3887 = vpop.f32.mrb[0].mxu0
  %3888 = vmatprep.mubr.bf16.mxu0 %v3262
  %3889 = vmatmul.mubr.bf16.gmra.mrb[0].mxu0 %v3261
  %v3890 = vpop.f32.mrb[0].mxu0
  %v3891 = vadd.f32 %v3730, %v3890
  %v3892 = vpop.f32.mrb[0].mxu0
  %v3893 = vpop.f32.mrb[0].mxu0
  %v3894 = vadd.f32 %v3733, %v3893
  %v3895 = vpop.f32.mrb[0].mxu0
  %3896 = vmatprep.mubr.bf16.mxu0 %v3267
  %3897 = vmatmul.mubr.bf16.gmra.mrb[0].mxu0 %v3266
  %v3898 = vpop.f32.mrb[0].mxu0
  %v3899 = vadd.f32 %v3738, %v3898
  %v3900 = vpop.f32.mrb[0].mxu0
  %v3901 = vpop.f32.mrb[0].mxu0
  %v3902 = vadd.f32 %v3741, %v3901
  %v3903 = vpop.f32.mrb[0].mxu0
  %3904 = vmatprep.mubr.bf16.mxu0 %v3272
  %3905 = vmatmul.mubr.bf16.gmra.mrb[0].mxu0 %v3271
  %v3906 = vpop.f32.mrb[0].mxu0
  %v3907 = vadd.f32 %v3746, %v3906
  %v3908 = vpop.f32.mrb[0].mxu0
  %v3909 = vpop.f32.mrb[0].mxu0
  %v3910 = vadd.f32 %v3749, %v3909
  %v3911 = vpop.f32.mrb[0].mxu0
  %3912 = vmatprep.mubr.bf16.mxu0 %v3277
  %3913 = vmatmul.mubr.bf16.gmra.mrb[0].mxu0 %v3276
  %v3914 = vpop.f32.mrb[0].mxu0
  %v3915 = vadd.f32 %v3754, %v3914
  %v3916 = vpop.f32.mrb[0].mxu0
  %v3917 = vpop.f32.mrb[0].mxu0
  %v3918 = vadd.f32 %v3757, %v3917
  %v3919 = vpop.f32.mrb[0].mxu0
  %3920 = vdwg.mxu0
  %3921 = vmatprep.subr.bf16.mxu0 0
  %3922 = vmatpush1.bf16.msra.mxu0 %v3551
  %3923 = vmatprep.subr.bf16.mxu0 0
  %3924 = vmatpush1.bf16.msra.mxu0 %v3552
  %3925 = vmatprep.subr.bf16.mxu0 0
  %3926 = vmatpush1.bf16.msra.mxu0 %v3553
  %3927 = vmatprep.subr.bf16.mxu0 0
  %3928 = vmatpush1.bf16.msra.mxu0 %v3554
  %3929 = vmatprep.subr.bf16.mxu0 0
  %3930 = vmatpush1.bf16.msra.mxu0 %v3555
  %3931 = vmatprep.subr.bf16.mxu0 0
  %3932 = vmatpush1.bf16.msra.mxu0 %v3556
  %3933 = vmatprep.subr.bf16.mxu0 0
  %3934 = vmatpush1.bf16.msra.mxu0 %v3557
  %3935 = vmatprep.subr.bf16.mxu0 0
  %3936 = vmatpush1.bf16.msra.mxu0 %v3558
  %3937 = vmatprep.subr.bf16.mxu0 0
  %3938 = vmatpush1.bf16.msra.mxu0 0
  %3939 = vmatprep.subr.bf16.mxu0 0
  %3940 = vmatpush1.bf16.msra.mxu0 0
  %3941 = vmatprep.subr.bf16.mxu0 0
  %3942 = vmatpush1.bf16.msra.mxu0 0
  %3943 = vmatprep.subr.bf16.mxu0 0
  %3944 = vmatpush1.bf16.msra.mxu0 0
  %3945 = vmatprep.subr.bf16.mxu0 0
  %3946 = vmatpush1.bf16.msra.mxu0 0
  %3947 = vmatprep.subr.bf16.mxu0 0
  %3948 = vmatpush1.bf16.msra.mxu0 0
  %3949 = vmatprep.subr.bf16.mxu0 0
  %3950 = vmatpush1.bf16.msra.mxu0 0
  %3951 = vmatprep.subr.bf16.mxu0 0
  %3952 = vmatpush1.bf16.msra.mxu0 0
  %3953 = vmatprep.mubr.bf16.mxu0 0
  %3954 = vmatmul.mubr.bf16.gmra.mrb[0].mxu0 %v3203
  %v3955 = vpop.f32.mrb[0].mxu0
  %v3956 = vadd.f32 %v3795, %v3955
  %v3957 = vpop.f32.mrb[0].mxu0
  %v3958 = vpop.f32.mrb[0].mxu0
  %v3959 = vadd.f32 %v3798, %v3958
  %v3960 = vpop.f32.mrb[0].mxu0
  %3961 = vmatprep.mubr.bf16.mxu0 0
  %3962 = vmatmul.mubr.bf16.gmra.mrb[0].mxu0 %v3208
  %v3963 = vpop.f32.mrb[0].mxu0
  %v3964 = vadd.f32 %v3803, %v3963
  %v3965 = vpop.f32.mrb[0].mxu0
  %v3966 = vpop.f32.mrb[0].mxu0
  %v3967 = vadd.f32 %v3806, %v3966
  %v3968 = vpop.f32.mrb[0].mxu0
  %3969 = vmatprep.mubr.bf16.mxu0 0
  %3970 = vmatmul.mubr.bf16.gmra.mrb[0].mxu0 %v3213
  %v3971 = vpop.f32.mrb[0].mxu0
  %v3972 = vadd.f32 %v3811, %v3971
  %v3973 = vpop.f32.mrb[0].mxu0
  %v3974 = vpop.f32.mrb[0].mxu0
  %v3975 = vadd.f32 %v3814, %v3974
  %v3976 = vpop.f32.mrb[0].mxu0
  %3977 = vmatprep.mubr.bf16.mxu0 0
  %3978 = vmatmul.mubr.bf16.gmra.mrb[0].mxu0 %v3218
  %v3979 = vpop.f32.mrb[0].mxu0
  %v3980 = vadd.f32 %v3819, %v3979
  %v3981 = vpop.f32.mrb[0].mxu0
  %v3982 = vpop.f32.mrb[0].mxu0
  %v3983 = vadd.f32 %v3822, %v3982
  %v3984 = vpop.f32.mrb[0].mxu0
  %3985 = vmatprep.mubr.bf16.mxu0 0
  %3986 = vmatmul.mubr.bf16.gmra.mrb[0].mxu0 %v3223
  %v3987 = vpop.f32.mrb[0].mxu0
  %v3988 = vadd.f32 %v3827, %v3987
  %v3989 = vpop.f32.mrb[0].mxu0
  %v3990 = vpop.f32.mrb[0].mxu0
  %v3991 = vadd.f32 %v3830, %v3990
  %v3992 = vpop.f32.mrb[0].mxu0
  %3993 = vmatprep.mubr.bf16.mxu0 0
  %3994 = vmatmul.mubr.bf16.gmra.mrb[0].mxu0 %v3228
  %v3995 = vpop.f32.mrb[0].mxu0
  %v3996 = vadd.f32 %v3835, %v3995
  %v3997 = vpop.f32.mrb[0].mxu0
  %v3998 = vpop.f32.mrb[0].mxu0
  %v3999 = vadd.f32 %v3838, %v3998
  %v4000 = vpop.f32.mrb[0].mxu0
  %4001 = vmatprep.mubr.bf16.mxu0 0
  %4002 = vmatmul.mubr.bf16.gmra.mrb[0].mxu0 %v3233
  %v4003 = vpop.f32.mrb[0].mxu0
  %v4004 = vadd.f32 %v3843, %v4003
  %v4005 = vpop.f32.mrb[0].mxu0
  %v4006 = vpop.f32.mrb[0].mxu0
  %v4007 = vadd.f32 %v3846, %v4006
  %v4008 = vpop.f32.mrb[0].mxu0
  %4009 = vmatprep.mubr.bf16.mxu0 0
  %4010 = vmatmul.mubr.bf16.gmra.mrb[0].mxu0 %v3238
  %v4011 = vpop.f32.mrb[0].mxu0
  %v4012 = vadd.f32 %v3851, %v4011
  %v4013 = vpop.f32.mrb[0].mxu0
  %v4014 = vpop.f32.mrb[0].mxu0
  %v4015 = vadd.f32 %v3854, %v4014
  %v4016 = vpop.f32.mrb[0].mxu0
  %4017 = vmatprep.mubr.bf16.mxu0 0
  %4018 = vmatmul.mubr.bf16.gmra.mrb[0].mxu0 %v3243
  %v4019 = vpop.f32.mrb[0].mxu0
  %v4020 = vadd.f32 %v3859, %v4019
  %v4021 = vpop.f32.mrb[0].mxu0
  %v4022 = vpop.f32.mrb[0].mxu0
  %v4023 = vadd.f32 %v3862, %v4022
  %v4024 = vpop.f32.mrb[0].mxu0
  %4025 = vmatprep.mubr.bf16.mxu0 0
  %4026 = vmatmul.mubr.bf16.gmra.mrb[0].mxu0 %v3248
  %v4027 = vpop.f32.mrb[0].mxu0
  %v4028 = vadd.f32 %v3867, %v4027
  %v4029 = vpop.f32.mrb[0].mxu0
  %v4030 = vpop.f32.mrb[0].mxu0
  %v4031 = vadd.f32 %v3870, %v4030
  %v4032 = vpop.f32.mrb[0].mxu0
  %4033 = vmatprep.mubr.bf16.mxu0 0
  %4034 = vmatmul.mubr.bf16.gmra.mrb[0].mxu0 %v3253
  %v4035 = vpop.f32.mrb[0].mxu0
  %v4036 = vadd.f32 %v3875, %v4035
  %v4037 = vpop.f32.mrb[0].mxu0
  %v4038 = vpop.f32.mrb[0].mxu0
  %v4039 = vadd.f32 %v3878, %v4038
  %v4040 = vpop.f32.mrb[0].mxu0
  %4041 = vmatprep.mubr.bf16.mxu0 0
  %4042 = vmatmul.mubr.bf16.gmra.mrb[0].mxu0 %v3258
  %v4043 = vpop.f32.mrb[0].mxu0
  %v4044 = vadd.f32 %v3883, %v4043
  %v4045 = vpop.f32.mrb[0].mxu0
  %v4046 = vpop.f32.mrb[0].mxu0
  %v4047 = vadd.f32 %v3886, %v4046
  %v4048 = vpop.f32.mrb[0].mxu0
  %4049 = vmatprep.mubr.bf16.mxu0 0
  %4050 = vmatmul.mubr.bf16.gmra.mrb[0].mxu0 %v3263
  %v4051 = vpop.f32.mrb[0].mxu0
  %v4052 = vadd.f32 %v3891, %v4051
  %v4053 = vpop.f32.mrb[0].mxu0
  %v4054 = vpop.f32.mrb[0].mxu0
  %v4055 = vadd.f32 %v3894, %v4054
  %v4056 = vpop.f32.mrb[0].mxu0
  %4057 = vmatprep.mubr.bf16.mxu0 0
  %4058 = vmatmul.mubr.bf16.gmra.mrb[0].mxu0 %v3268
  %v4059 = vpop.f32.mrb[0].mxu0
  %v4060 = vadd.f32 %v3899, %v4059
  %v4061 = vpop.f32.mrb[0].mxu0
  %v4062 = vpop.f32.mrb[0].mxu0
  %v4063 = vadd.f32 %v3902, %v4062
  %v4064 = vpop.f32.mrb[0].mxu0
  %4065 = vmatprep.mubr.bf16.mxu0 0
  %4066 = vmatmul.mubr.bf16.gmra.mrb[0].mxu0 %v3273
  %v4067 = vpop.f32.mrb[0].mxu0
  %v4068 = vadd.f32 %v3907, %v4067
  %v4069 = vpop.f32.mrb[0].mxu0
  %v4070 = vpop.f32.mrb[0].mxu0
  %v4071 = vadd.f32 %v3910, %v4070
  %v4072 = vpop.f32.mrb[0].mxu0
  %4073 = vmatprep.mubr.bf16.mxu0 0
  %4074 = vmatmul.mubr.bf16.gmra.mrb[0].mxu0 %v3278
  %v4075 = vpop.f32.mrb[0].mxu0
  %v4076 = vadd.f32 %v3915, %v4075
  %v4077 = vpop.f32.mrb[0].mxu0
  %v4078 = vpop.f32.mrb[0].mxu0
  %v4079 = vadd.f32 %v3918, %v4078
  %v4080 = vpop.f32.mrb[0].mxu0
  %4081 = vdwg.mxu0
  %4082 = vst [vmem:[%s4] sm:$0xff] %v3956
  %4083 = vst [vmem:[%s4 + $0x8] sm:$0xff] %v3959
  %4084 = vst [vmem:[%s4 + $0x10] sm:$0xff] %v3964
  %4085 = vst [vmem:[%s4 + $0x18] sm:$0xff] %v3967
  %4086 = vst [vmem:[%s4 + $0x20] sm:$0xff] %v3972
  %4087 = vst [vmem:[%s4 + $0x28] sm:$0xff] %v3975
  %4088 = vst [vmem:[%s4 + $0x30] sm:$0xff] %v3980
  %4089 = vst [vmem:[%s4 + $0x38] sm:$0xff] %v3983
  %4090 = vst [vmem:[%s4 + $0x40] sm:$0xff] %v3988
  %4091 = vst [vmem:[%s4 + $0x48] sm:$0xff] %v3991
  %4092 = vst [vmem:[%s4 + $0x50] sm:$0xff] %v3996
  %4093 = vst [vmem:[%s4 + $0x58] sm:$0xff] %v3999
  %4094 = vst [vmem:[%s4 + $0x60] sm:$0xff] %v4004
  %4095 = vst [vmem:[%s4 + $0x68] sm:$0xff] %v4007
  %4096 = vst [vmem:[%s4 + $0x70] sm:$0xff] %v4012
  %4097 = vst [vmem:[%s4 + $0x78] sm:$0xff] %v4015
  %4098 = vst [vmem:[%s4 + $0x80] sm:$0xff] %v4020
  %4099 = vst [vmem:[%s4 + $0x88] sm:$0xff] %v4023
  %4100 = vst [vmem:[%s4 + $0x90] sm:$0xff] %v4028
  %4101 = vst [vmem:[%s4 + $0x98] sm:$0xff] %v4031
  %4102 = vst [vmem:[%s4 + $0xa0] sm:$0xff] %v4036
  %4103 = vst [vmem:[%s4 + $0xa8] sm:$0xff] %v4039
  %4104 = vst [vmem:[%s4 + $0xb0] sm:$0xff] %v4044
  %4105 = vst [vmem:[%s4 + $0xb8] sm:$0xff] %v4047
  %4106 = vst [vmem:[%s4 + $0xc0] sm:$0xff] %v4052
  %4107 = vst [vmem:[%s4 + $0xc8] sm:$0xff] %v4055
  %4108 = vst [vmem:[%s4 + $0xd0] sm:$0xff] %v4060
  %4109 = vst [vmem:[%s4 + $0xd8] sm:$0xff] %v4063
  %4110 = vst [vmem:[%s4 + $0xe0] sm:$0xff] %v4068
  %4111 = vst [vmem:[%s4 + $0xe8] sm:$0xff] %v4071
  %4112 = vst [vmem:[%s4 + $0xf0] sm:$0xff] %v4076
  %4113 = vst [vmem:[%s4 + $0xf8] sm:$0xff] %v4079
  // Predicated region
  $region18: #{graph_res_block_forward.12} parent=0 // pred_check
    _
  $region19: #{graph_res_block_forward.12} parent=0 // pred_check_branch
    %4115 = sbr.rel (0) target = $region21
  $region20: #{graph_res_block_forward.12} parent=0 // pred_region
    _
  $region21: #{graph_res_block_forward.12} parent=0 // pred_fallthru
    _
  // Predicated region
  $region22: #{graph_res_block_forward.12} parent=0 // pred_check
    _
  $region23: #{graph_res_block_forward.12} parent=0 // pred_check_branch
    %4117 = sbr.rel (0) target = $region25
  $region24: #{graph_res_block_forward.12} parent=0 // pred_region
    _
  $region25: #{graph_res_block_forward.12} parent=0 // pred_fallthru
    _

</llo_original>
